<compile_context>
chip_gen: v7x
topology: tpu7x:2x2x1
jax: 0.10.0
libtpu: 0.0.40
codegen_flags: <defaults>
</compile_context>

<pallas_src>
import functools

import jax
import jax.numpy as jnp
from jax.experimental import pallas as pl
from jax.experimental.pallas import tpu as pltpu

EPS = 1e-5          # PyTorch InstanceNorm2d default
_HALO = 8           # left halo of the VMEM scratch -> interior store is sublane-aligned


# ------------------------------ Pallas kernel ------------------------------

def _resblock_kernel(xp_ref, w1_ref, w2_ref, o_ref, hpad_ref, *, hh, ww):
    # xp_ref : (1, hh+2, ww+2, Cp) f32   spatially zero-padded input (one sample)
    # w*_ref : (9, Cp, Cp)         bf16  tap-major conv weights
    # o_ref  : (1, hh, ww, Cp)     f32   residual output
    # hpad_ref: (hh+2, ww+16, Cp)  f32   VMEM scratch: intermediate with zero halo
    cp = o_ref.shape[-1]
    m = hh * ww

    def conv3x3(tap_fn, w_ref):
        # 3x3 conv as 9 accumulated MXU matmuls over shifted tap views (VMEM only)
        acc = jnp.zeros((m, cp), jnp.float32)
        for t in range(9):
            dy, dx = t // 3, t % 3
            tap = tap_fn(dy, dx).astype(jnp.bfloat16)
            acc = acc + jnp.dot(tap, w_ref[t], preferred_element_type=jnp.float32)
        return acc

    def instance_norm(acc):
        # per-sample, per-channel stats over the hh*ww rows (biased var, f32)
        mu = jnp.mean(acc, axis=0, keepdims=True)
        var = jnp.mean(jnp.square(acc - mu), axis=0, keepdims=True)
        return (acc - mu) * jax.lax.rsqrt(var + EPS)

    # ---- conv1 + IN + ReLU (taps sliced from the pre-padded input block) ----
    acc1 = conv3x3(
        lambda dy, dx: xp_ref[0, dy:dy + hh, dx:dx + ww, :].reshape(m, cp), w1_ref)
    h1 = jnp.maximum(instance_norm(acc1), 0.0)

    # stash h1 with a zero halo so conv2 taps can be sliced straight out of VMEM
    hpad_ref[...] = jnp.zeros(hpad_ref.shape, hpad_ref.dtype)
    hpad_ref[1:hh + 1, _HALO:_HALO + ww, :] = h1.reshape(hh, ww, cp)

    # ---- conv2 + IN ----
    acc2 = conv3x3(
        lambda dy, dx: hpad_ref[dy:dy + hh,
                                _HALO - 1 + dx:_HALO - 1 + dx + ww, :].reshape(m, cp),
        w2_ref)
    y = instance_norm(acc2)

    # ---- residual add (center of the padded input is the original x) ----
    res = xp_ref[0, 1:hh + 1, 1:ww + 1, :].reshape(m, cp)
    o_ref[...] = (res + y).reshape(1, hh, ww, cp).astype(o_ref.dtype)


# --------------------------------- wrapper ----------------------------------

def res_block_forward(x_nchw, params):
    """x_nchw: (N, C, H, W) float32 -> (N, C, H, W) float32 (PyTorch ResBlock.forward)."""
    w1, w2 = params["w1"], params["w2"]            # (9, Cp, Cp) bf16, channel-padded
    cp = w1.shape[-1]
    n, c, hh, ww = x_nchw.shape

    x = jnp.transpose(x_nchw, (0, 2, 3, 1)).astype(jnp.float32)          # NHWC
    # 1-pixel spatial halo (conv padding=1) + channel pad to lane-dense Cp
    xp = jnp.pad(x, ((0, 0), (1, 1), (1, 1), (0, cp - c)))

    kernel = functools.partial(_resblock_kernel, hh=hh, ww=ww)
    flops = 4 * 9 * n * hh * ww * cp * cp          # 2 convs x 2 flops/MAC
    bytes_accessed = int(xp.size * 4 + (w1.size + w2.size) * 2 + n * hh * ww * cp * 4)

    out = pl.pallas_call(
        kernel,
        out_shape=jax.ShapeDtypeStruct((n, hh, ww, cp), jnp.float32),
        grid_spec=pltpu.PrefetchScalarGridSpec(
            num_scalar_prefetch=0,
            grid=(n,),                                             # one sample / program
            in_specs=[
                pl.BlockSpec((1, hh + 2, ww + 2, cp), lambda i: (i, 0, 0, 0)),
                pl.BlockSpec((9, cp, cp), lambda i: (0, 0, 0)),    # weights resident
                pl.BlockSpec((9, cp, cp), lambda i: (0, 0, 0)),
            ],
            out_specs=pl.BlockSpec((1, hh, ww, cp), lambda i: (i, 0, 0, 0)),
            scratch_shapes=[pltpu.VMEM((hh + 2, ww + 2 * _HALO, cp), jnp.float32)],
        ),
        compiler_params=pltpu.CompilerParams(
            dimension_semantics=("parallel",),       # shards samples across TCs on v7x
            vmem_limit_bytes=32 * 1024 * 1024,
        ),
        cost_estimate=pl.CostEstimate(
            flops=flops, transcendentals=0, bytes_accessed=bytes_accessed),
    )(xp, w1, w2)

    out = out[..., :c]                               # drop lane padding
    return jnp.transpose(out, (0, 3, 1, 2))          # back to NCHW


# --------------------------- params / reference -----------------------------

def init_resblock_params(key, in_features):
    c = in_features
    cp = ((c + 127) // 128) * 128                    # lane-dense channel padding
    k1, k2 = jax.random.split(key)

    def conv_w(k):
        w_hwio = jax.random.normal(k, (3, 3, c, c), jnp.float32) / jnp.sqrt(9.0 * c)
        w_tap = jnp.pad(w_hwio.reshape(9, c, c), ((0, 0), (0, cp - c), (0, cp - c)))
        return w_hwio, w_tap.astype(jnp.bfloat16)

    w1_hwio, w1 = conv_w(k1)
    w2_hwio, w2 = conv_w(k2)
    # conv bias omitted: cancelled exactly by the InstanceNorm mean subtraction
    return {"w1": w1, "w2": w2, "w1_hwio": w1_hwio, "w2_hwio": w2_hwio}


def _reference_resblock(x_nchw, w1_hwio, w2_hwio):
    x = jnp.transpose(x_nchw, (0, 2, 3, 1)).astype(jnp.float32)

    def conv(a, w):
        return jax.lax.conv_general_dilated(
            a, w, (1, 1), "SAME", dimension_numbers=("NHWC", "HWIO", "NHWC"))

    def inorm(a):
        mu = jnp.mean(a, axis=(1, 2), keepdims=True)
        var = jnp.mean(jnp.square(a - mu), axis=(1, 2), keepdims=True)
        return (a - mu) * jax.lax.rsqrt(var + EPS)

    h = jnp.maximum(inorm(conv(x, w1_hwio)), 0.0)
    y = inorm(conv(h, w2_hwio))
    return jnp.transpose(x + y, (0, 3, 1, 2))


# ----------------------------------- main ------------------------------------

if __name__ == "__main__":
    key = jax.random.PRNGKey(0)
    pkey, xkey = jax.random.split(key)

    in_features = 32
    params = init_resblock_params(pkey, in_features)
    x = jax.random.normal(xkey, (2, in_features, 16, 16), jnp.float32)   # NCHW

    fwd = jax.jit(res_block_forward)
    out = jax.block_until_ready(fwd(x, params))

    assert out.shape == x.shape, out.shape
    assert bool(jnp.all(jnp.isfinite(out)))

    ref = _reference_resblock(x, params["w1_hwio"], params["w2_hwio"])
    err = float(jnp.max(jnp.abs(out - ref)))
    assert err < 0.25, f"max abs error vs reference: {err}"

    print("KERNEL_OK")
</pallas_src>

<mosaic_0001>
module attributes {stable_mosaic.version = 11 : i64} {
  func.func @_resblock_kernel(%arg0: i32, %arg1: memref<1x18x18x128xf32, #tpu.memory_space<vmem>>, %arg2: memref<9x128x128xbf16, #tpu.memory_space<vmem>>, %arg3: memref<9x128x128xbf16, #tpu.memory_space<vmem>>, %arg4: memref<1x16x16x128xf32, #tpu.memory_space<vmem>>, %arg5: memref<18x32x128xf32, #tpu.memory_space<vmem>>) attributes {dimension_semantics = [#tpu.dimension_semantics<parallel>], iteration_bounds = array<i64: 2>, scalar_prefetch = 0 : i64, scratch_operands = 1 : i64, tpu.core_type = #tpu.core_type<tc>, window_params = [{transform_indices = @transform_0, window_bounds = array<i64: 1, 18, 18, 128>}, {pipeline_mode = #tpu.pipeline_mode<synchronous>, transform_indices = @transform_1, window_bounds = array<i64: 9, 128, 128>}, {pipeline_mode = #tpu.pipeline_mode<synchronous>, transform_indices = @transform_2, window_bounds = array<i64: 9, 128, 128>}, {transform_indices = @transform_3, window_bounds = array<i64: 1, 16, 16, 128>}]} {
    %cst = arith.constant 0.000000e+00 : f32
    %0 = vector.broadcast %cst : f32 to vector<256x128xf32>
    %c0 = arith.constant 0 : index
    %c0_0 = arith.constant 0 : index
    %c0_1 = arith.constant 0 : index
    %c0_2 = arith.constant 0 : index
    %1 = vector.load %arg1[%c0, %c0_0, %c0_1, %c0_2] : memref<1x18x18x128xf32, #tpu.memory_space<vmem>>, vector<1x16x16x128xf32>
    %2 = vector.shape_cast %1 : vector<1x16x16x128xf32> to vector<16x16x128xf32>
    %3 = vector.shape_cast %2 : vector<16x16x128xf32> to vector<256x128xf32>
    %4 = arith.truncf %3 : vector<256x128xf32> to vector<256x128xbf16>
    %c0_3 = arith.constant 0 : index
    %c0_4 = arith.constant 0 : index
    %c0_5 = arith.constant 0 : index
    %5 = vector.load %arg2[%c0_3, %c0_4, %c0_5] : memref<9x128x128xbf16, #tpu.memory_space<vmem>>, vector<1x128x128xbf16>
    %6 = vector.shape_cast %5 : vector<1x128x128xbf16> to vector<128x128xbf16>
    %cst_6 = arith.constant dense<0.000000e+00> : vector<256x128xf32>
    %7 = tpu.matmul %4, %6, %cst_6 {dimension_numbers = #tpu.dot_dimension_numbers<[1], [0], [0], [1], [0, 0, 1, 1], [], []>} : vector<256x128xbf16>, vector<128x128xbf16>, vector<256x128xf32> -> vector<256x128xf32>
    %8 = arith.addf %0, %7 : vector<256x128xf32>
    %c0_7 = arith.constant 0 : index
    %c0_8 = arith.constant 0 : index
    %c1 = arith.constant 1 : index
    %c0_9 = arith.constant 0 : index
    %9 = vector.load %arg1[%c0_7, %c0_8, %c1, %c0_9] : memref<1x18x18x128xf32, #tpu.memory_space<vmem>>, vector<1x16x16x128xf32>
    %10 = vector.shape_cast %9 : vector<1x16x16x128xf32> to vector<16x16x128xf32>
    %11 = vector.shape_cast %10 : vector<16x16x128xf32> to vector<256x128xf32>
    %12 = arith.truncf %11 : vector<256x128xf32> to vector<256x128xbf16>
    %c1_10 = arith.constant 1 : index
    %c0_11 = arith.constant 0 : index
    %c0_12 = arith.constant 0 : index
    %13 = vector.load %arg2[%c1_10, %c0_11, %c0_12] : memref<9x128x128xbf16, #tpu.memory_space<vmem>>, vector<1x128x128xbf16>
    %14 = vector.shape_cast %13 : vector<1x128x128xbf16> to vector<128x128xbf16>
    %cst_13 = arith.constant dense<0.000000e+00> : vector<256x128xf32>
    %15 = tpu.matmul %12, %14, %cst_13 {dimension_numbers = #tpu.dot_dimension_numbers<[1], [0], [0], [1], [0, 0, 1, 1], [], []>} : vector<256x128xbf16>, vector<128x128xbf16>, vector<256x128xf32> -> vector<256x128xf32>
    %16 = arith.addf %8, %15 : vector<256x128xf32>
    %c0_14 = arith.constant 0 : index
    %c0_15 = arith.constant 0 : index
    %c2 = arith.constant 2 : index
    %c0_16 = arith.constant 0 : index
    %17 = vector.load %arg1[%c0_14, %c0_15, %c2, %c0_16] : memref<1x18x18x128xf32, #tpu.memory_space<vmem>>, vector<1x16x16x128xf32>
    %18 = vector.shape_cast %17 : vector<1x16x16x128xf32> to vector<16x16x128xf32>
    %19 = vector.shape_cast %18 : vector<16x16x128xf32> to vector<256x128xf32>
    %20 = arith.truncf %19 : vector<256x128xf32> to vector<256x128xbf16>
    %c2_17 = arith.constant 2 : index
    %c0_18 = arith.constant 0 : index
    %c0_19 = arith.constant 0 : index
    %21 = vector.load %arg2[%c2_17, %c0_18, %c0_19] : memref<9x128x128xbf16, #tpu.memory_space<vmem>>, vector<1x128x128xbf16>
    %22 = vector.shape_cast %21 : vector<1x128x128xbf16> to vector<128x128xbf16>
    %cst_20 = arith.constant dense<0.000000e+00> : vector<256x128xf32>
    %23 = tpu.matmul %20, %22, %cst_20 {dimension_numbers = #tpu.dot_dimension_numbers<[1], [0], [0], [1], [0, 0, 1, 1], [], []>} : vector<256x128xbf16>, vector<128x128xbf16>, vector<256x128xf32> -> vector<256x128xf32>
    %24 = arith.addf %16, %23 : vector<256x128xf32>
    %c0_21 = arith.constant 0 : index
    %c1_22 = arith.constant 1 : index
    %c0_23 = arith.constant 0 : index
    %c0_24 = arith.constant 0 : index
    %25 = vector.load %arg1[%c0_21, %c1_22, %c0_23, %c0_24] : memref<1x18x18x128xf32, #tpu.memory_space<vmem>>, vector<1x16x16x128xf32>
    %26 = vector.shape_cast %25 : vector<1x16x16x128xf32> to vector<16x16x128xf32>
    %27 = vector.shape_cast %26 : vector<16x16x128xf32> to vector<256x128xf32>
    %28 = arith.truncf %27 : vector<256x128xf32> to vector<256x128xbf16>
    %c3 = arith.constant 3 : index
    %c0_25 = arith.constant 0 : index
    %c0_26 = arith.constant 0 : index
    %29 = vector.load %arg2[%c3, %c0_25, %c0_26] : memref<9x128x128xbf16, #tpu.memory_space<vmem>>, vector<1x128x128xbf16>
    %30 = vector.shape_cast %29 : vector<1x128x128xbf16> to vector<128x128xbf16>
    %cst_27 = arith.constant dense<0.000000e+00> : vector<256x128xf32>
    %31 = tpu.matmul %28, %30, %cst_27 {dimension_numbers = #tpu.dot_dimension_numbers<[1], [0], [0], [1], [0, 0, 1, 1], [], []>} : vector<256x128xbf16>, vector<128x128xbf16>, vector<256x128xf32> -> vector<256x128xf32>
    %32 = arith.addf %24, %31 : vector<256x128xf32>
    %c0_28 = arith.constant 0 : index
    %c1_29 = arith.constant 1 : index
    %c1_30 = arith.constant 1 : index
    %c0_31 = arith.constant 0 : index
    %33 = vector.load %arg1[%c0_28, %c1_29, %c1_30, %c0_31] : memref<1x18x18x128xf32, #tpu.memory_space<vmem>>, vector<1x16x16x128xf32>
    %34 = vector.shape_cast %33 : vector<1x16x16x128xf32> to vector<16x16x128xf32>
    %35 = vector.shape_cast %34 : vector<16x16x128xf32> to vector<256x128xf32>
    %36 = arith.truncf %35 : vector<256x128xf32> to vector<256x128xbf16>
    %c4 = arith.constant 4 : index
    %c0_32 = arith.constant 0 : index
    %c0_33 = arith.constant 0 : index
    %37 = vector.load %arg2[%c4, %c0_32, %c0_33] : memref<9x128x128xbf16, #tpu.memory_space<vmem>>, vector<1x128x128xbf16>
    %38 = vector.shape_cast %37 : vector<1x128x128xbf16> to vector<128x128xbf16>
    %cst_34 = arith.constant dense<0.000000e+00> : vector<256x128xf32>
    %39 = tpu.matmul %36, %38, %cst_34 {dimension_numbers = #tpu.dot_dimension_numbers<[1], [0], [0], [1], [0, 0, 1, 1], [], []>} : vector<256x128xbf16>, vector<128x128xbf16>, vector<256x128xf32> -> vector<256x128xf32>
    %40 = arith.addf %32, %39 : vector<256x128xf32>
    %c0_35 = arith.constant 0 : index
    %c1_36 = arith.constant 1 : index
    %c2_37 = arith.constant 2 : index
    %c0_38 = arith.constant 0 : index
    %41 = vector.load %arg1[%c0_35, %c1_36, %c2_37, %c0_38] : memref<1x18x18x128xf32, #tpu.memory_space<vmem>>, vector<1x16x16x128xf32>
    %42 = vector.shape_cast %41 : vector<1x16x16x128xf32> to vector<16x16x128xf32>
    %43 = vector.shape_cast %42 : vector<16x16x128xf32> to vector<256x128xf32>
    %44 = arith.truncf %43 : vector<256x128xf32> to vector<256x128xbf16>
    %c5 = arith.constant 5 : index
    %c0_39 = arith.constant 0 : index
    %c0_40 = arith.constant 0 : index
    %45 = vector.load %arg2[%c5, %c0_39, %c0_40] : memref<9x128x128xbf16, #tpu.memory_space<vmem>>, vector<1x128x128xbf16>
    %46 = vector.shape_cast %45 : vector<1x128x128xbf16> to vector<128x128xbf16>
    %cst_41 = arith.constant dense<0.000000e+00> : vector<256x128xf32>
    %47 = tpu.matmul %44, %46, %cst_41 {dimension_numbers = #tpu.dot_dimension_numbers<[1], [0], [0], [1], [0, 0, 1, 1], [], []>} : vector<256x128xbf16>, vector<128x128xbf16>, vector<256x128xf32> -> vector<256x128xf32>
    %48 = arith.addf %40, %47 : vector<256x128xf32>
    %c0_42 = arith.constant 0 : index
    %c2_43 = arith.constant 2 : index
    %c0_44 = arith.constant 0 : index
    %c0_45 = arith.constant 0 : index
    %49 = vector.load %arg1[%c0_42, %c2_43, %c0_44, %c0_45] : memref<1x18x18x128xf32, #tpu.memory_space<vmem>>, vector<1x16x16x128xf32>
    %50 = vector.shape_cast %49 : vector<1x16x16x128xf32> to vector<16x16x128xf32>
    %51 = vector.shape_cast %50 : vector<16x16x128xf32> to vector<256x128xf32>
    %52 = arith.truncf %51 : vector<256x128xf32> to vector<256x128xbf16>
    %c6 = arith.constant 6 : index
    %c0_46 = arith.constant 0 : index
    %c0_47 = arith.constant 0 : index
    %53 = vector.load %arg2[%c6, %c0_46, %c0_47] : memref<9x128x128xbf16, #tpu.memory_space<vmem>>, vector<1x128x128xbf16>
    %54 = vector.shape_cast %53 : vector<1x128x128xbf16> to vector<128x128xbf16>
    %cst_48 = arith.constant dense<0.000000e+00> : vector<256x128xf32>
    %55 = tpu.matmul %52, %54, %cst_48 {dimension_numbers = #tpu.dot_dimension_numbers<[1], [0], [0], [1], [0, 0, 1, 1], [], []>} : vector<256x128xbf16>, vector<128x128xbf16>, vector<256x128xf32> -> vector<256x128xf32>
    %56 = arith.addf %48, %55 : vector<256x128xf32>
    %c0_49 = arith.constant 0 : index
    %c2_50 = arith.constant 2 : index
    %c1_51 = arith.constant 1 : index
    %c0_52 = arith.constant 0 : index
    %57 = vector.load %arg1[%c0_49, %c2_50, %c1_51, %c0_52] : memref<1x18x18x128xf32, #tpu.memory_space<vmem>>, vector<1x16x16x128xf32>
    %58 = vector.shape_cast %57 : vector<1x16x16x128xf32> to vector<16x16x128xf32>
    %59 = vector.shape_cast %58 : vector<16x16x128xf32> to vector<256x128xf32>
    %60 = arith.truncf %59 : vector<256x128xf32> to vector<256x128xbf16>
    %c7 = arith.constant 7 : index
    %c0_53 = arith.constant 0 : index
    %c0_54 = arith.constant 0 : index
    %61 = vector.load %arg2[%c7, %c0_53, %c0_54] : memref<9x128x128xbf16, #tpu.memory_space<vmem>>, vector<1x128x128xbf16>
    %62 = vector.shape_cast %61 : vector<1x128x128xbf16> to vector<128x128xbf16>
    %cst_55 = arith.constant dense<0.000000e+00> : vector<256x128xf32>
    %63 = tpu.matmul %60, %62, %cst_55 {dimension_numbers = #tpu.dot_dimension_numbers<[1], [0], [0], [1], [0, 0, 1, 1], [], []>} : vector<256x128xbf16>, vector<128x128xbf16>, vector<256x128xf32> -> vector<256x128xf32>
    %64 = arith.addf %56, %63 : vector<256x128xf32>
    %c0_56 = arith.constant 0 : index
    %c2_57 = arith.constant 2 : index
    %c2_58 = arith.constant 2 : index
    %c0_59 = arith.constant 0 : index
    %65 = vector.load %arg1[%c0_56, %c2_57, %c2_58, %c0_59] : memref<1x18x18x128xf32, #tpu.memory_space<vmem>>, vector<1x16x16x128xf32>
    %66 = vector.shape_cast %65 : vector<1x16x16x128xf32> to vector<16x16x128xf32>
    %67 = vector.shape_cast %66 : vector<16x16x128xf32> to vector<256x128xf32>
    %68 = arith.truncf %67 : vector<256x128xf32> to vector<256x128xbf16>
    %c8 = arith.constant 8 : index
    %c0_60 = arith.constant 0 : index
    %c0_61 = arith.constant 0 : index
    %69 = vector.load %arg2[%c8, %c0_60, %c0_61] : memref<9x128x128xbf16, #tpu.memory_space<vmem>>, vector<1x128x128xbf16>
    %70 = vector.shape_cast %69 : vector<1x128x128xbf16> to vector<128x128xbf16>
    %cst_62 = arith.constant dense<0.000000e+00> : vector<256x128xf32>
    %71 = tpu.matmul %68, %70, %cst_62 {dimension_numbers = #tpu.dot_dimension_numbers<[1], [0], [0], [1], [0, 0, 1, 1], [], []>} : vector<256x128xbf16>, vector<128x128xbf16>, vector<256x128xf32> -> vector<256x128xf32>
    %72 = arith.addf %64, %71 : vector<256x128xf32>
    %cst_63 = arith.constant dense<0.000000e+00> : vector<128xf32>
    %73 = vector.multi_reduction <add>, %72, %cst_63 [0] : vector<256x128xf32> to vector<128xf32>
    %74 = vector.shape_cast %73 : vector<128xf32> to vector<1x128xf32>
    %cst_64 = arith.constant 2.560000e+02 : f32
    %75 = vector.broadcast %cst_64 : f32 to vector<1x128xf32>
    %76 = arith.divf %74, %75 : vector<1x128xf32>
    %77 = vector.broadcast %76 : vector<1x128xf32> to vector<256x128xf32>
    %78 = arith.subf %72, %77 : vector<256x128xf32>
    %79 = arith.mulf %78, %78 : vector<256x128xf32>
    %cst_65 = arith.constant dense<0.000000e+00> : vector<128xf32>
    %80 = vector.multi_reduction <add>, %79, %cst_65 [0] : vector<256x128xf32> to vector<128xf32>
    %81 = vector.shape_cast %80 : vector<128xf32> to vector<1x128xf32>
    %cst_66 = arith.constant 2.560000e+02 : f32
    %82 = vector.broadcast %cst_66 : f32 to vector<1x128xf32>
    %83 = arith.divf %81, %82 : vector<1x128xf32>
    %84 = vector.broadcast %76 : vector<1x128xf32> to vector<256x128xf32>
    %85 = arith.subf %72, %84 : vector<256x128xf32>
    %cst_67 = arith.constant 9.99999974E-6 : f32
    %86 = vector.broadcast %cst_67 : f32 to vector<1x128xf32>
    %87 = arith.addf %83, %86 : vector<1x128xf32>
    %88 = math.rsqrt %87 : vector<1x128xf32>
    %89 = vector.broadcast %88 : vector<1x128xf32> to vector<256x128xf32>
    %90 = arith.mulf %85, %89 : vector<256x128xf32>
    %cst_68 = arith.constant 0.000000e+00 : f32
    %91 = vector.broadcast %cst_68 : f32 to vector<256x128xf32>
    %92 = arith.maximumf %90, %91 : vector<256x128xf32>
    %cst_69 = arith.constant 0.000000e+00 : f32
    %93 = vector.broadcast %cst_69 : f32 to vector<18x32x128xf32>
    %c0_70 = arith.constant 0 : index
    %c0_71 = arith.constant 0 : index
    %c0_72 = arith.constant 0 : index
    %94 = vector.load %arg5[%c0_70, %c0_71, %c0_72] : memref<18x32x128xf32, #tpu.memory_space<vmem>>, vector<18x32x128xf32>
    tpu.vector_store %arg5[%c0_70, %c0_71, %c0_72], %93 {strides = array<i32>} : memref<18x32x128xf32, #tpu.memory_space<vmem>>, vector<18x32x128xf32>,
    %95 = vector.shape_cast %92 : vector<256x128xf32> to vector<16x16x128xf32>
    %c1_73 = arith.constant 1 : index
    %c8_74 = arith.constant 8 : index
    %c0_75 = arith.constant 0 : index
    %96 = vector.load %arg5[%c1_73, %c8_74, %c0_75] : memref<18x32x128xf32, #tpu.memory_space<vmem>>, vector<16x16x128xf32>
    tpu.vector_store %arg5[%c1_73, %c8_74, %c0_75], %95 {strides = array<i32>} : memref<18x32x128xf32, #tpu.memory_space<vmem>>, vector<16x16x128xf32>,
    %cst_76 = arith.constant 0.000000e+00 : f32
    %97 = vector.broadcast %cst_76 : f32 to vector<256x128xf32>
    %c0_77 = arith.constant 0 : index
    %c7_78 = arith.constant 7 : index
    %c0_79 = arith.constant 0 : index
    %98 = vector.load %arg5[%c0_77, %c7_78, %c0_79] : memref<18x32x128xf32, #tpu.memory_space<vmem>>, vector<16x16x128xf32>
    %99 = vector.shape_cast %98 : vector<16x16x128xf32> to vector<256x128xf32>
    %100 = arith.truncf %99 : vector<256x128xf32> to vector<256x128xbf16>
    %c0_80 = arith.constant 0 : index
    %c0_81 = arith.constant 0 : index
    %c0_82 = arith.constant 0 : index
    %101 = vector.load %arg3[%c0_80, %c0_81, %c0_82] : memref<9x128x128xbf16, #tpu.memory_space<vmem>>, vector<1x128x128xbf16>
    %102 = vector.shape_cast %101 : vector<1x128x128xbf16> to vector<128x128xbf16>
    %cst_83 = arith.constant dense<0.000000e+00> : vector<256x128xf32>
    %103 = tpu.matmul %100, %102, %cst_83 {dimension_numbers = #tpu.dot_dimension_numbers<[1], [0], [0], [1], [0, 0, 1, 1], [], []>} : vector<256x128xbf16>, vector<128x128xbf16>, vector<256x128xf32> -> vector<256x128xf32>
    %104 = arith.addf %97, %103 : vector<256x128xf32>
    %c0_84 = arith.constant 0 : index
    %c8_85 = arith.constant 8 : index
    %c0_86 = arith.constant 0 : index
    %105 = vector.load %arg5[%c0_84, %c8_85, %c0_86] : memref<18x32x128xf32, #tpu.memory_space<vmem>>, vector<16x16x128xf32>
    %106 = vector.shape_cast %105 : vector<16x16x128xf32> to vector<256x128xf32>
    %107 = arith.truncf %106 : vector<256x128xf32> to vector<256x128xbf16>
    %c1_87 = arith.constant 1 : index
    %c0_88 = arith.constant 0 : index
    %c0_89 = arith.constant 0 : index
    %108 = vector.load %arg3[%c1_87, %c0_88, %c0_89] : memref<9x128x128xbf16, #tpu.memory_space<vmem>>, vector<1x128x128xbf16>
    %109 = vector.shape_cast %108 : vector<1x128x128xbf16> to vector<128x128xbf16>
    %cst_90 = arith.constant dense<0.000000e+00> : vector<256x128xf32>
    %110 = tpu.matmul %107, %109, %cst_90 {dimension_numbers = #tpu.dot_dimension_numbers<[1], [0], [0], [1], [0, 0, 1, 1], [], []>} : vector<256x128xbf16>, vector<128x128xbf16>, vector<256x128xf32> -> vector<256x128xf32>
    %111 = arith.addf %104, %110 : vector<256x128xf32>
    %c0_91 = arith.constant 0 : index
    %c9 = arith.constant 9 : index
    %c0_92 = arith.constant 0 : index
    %112 = vector.load %arg5[%c0_91, %c9, %c0_92] : memref<18x32x128xf32, #tpu.memory_space<vmem>>, vector<16x16x128xf32>
    %113 = vector.shape_cast %112 : vector<16x16x128xf32> to vector<256x128xf32>
    %114 = arith.truncf %113 : vector<256x128xf32> to vector<256x128xbf16>
    %c2_93 = arith.constant 2 : index
    %c0_94 = arith.constant 0 : index
    %c0_95 = arith.constant 0 : index
    %115 = vector.load %arg3[%c2_93, %c0_94, %c0_95] : memref<9x128x128xbf16, #tpu.memory_space<vmem>>, vector<1x128x128xbf16>
    %116 = vector.shape_cast %115 : vector<1x128x128xbf16> to vector<128x128xbf16>
    %cst_96 = arith.constant dense<0.000000e+00> : vector<256x128xf32>
    %117 = tpu.matmul %114, %116, %cst_96 {dimension_numbers = #tpu.dot_dimension_numbers<[1], [0], [0], [1], [0, 0, 1, 1], [], []>} : vector<256x128xbf16>, vector<128x128xbf16>, vector<256x128xf32> -> vector<256x128xf32>
    %118 = arith.addf %111, %117 : vector<256x128xf32>
    %c1_97 = arith.constant 1 : index
    %c7_98 = arith.constant 7 : index
    %c0_99 = arith.constant 0 : index
    %119 = vector.load %arg5[%c1_97, %c7_98, %c0_99] : memref<18x32x128xf32, #tpu.memory_space<vmem>>, vector<16x16x128xf32>
    %120 = vector.shape_cast %119 : vector<16x16x128xf32> to vector<256x128xf32>
    %121 = arith.truncf %120 : vector<256x128xf32> to vector<256x128xbf16>
    %c3_100 = arith.constant 3 : index
    %c0_101 = arith.constant 0 : index
    %c0_102 = arith.constant 0 : index
    %122 = vector.load %arg3[%c3_100, %c0_101, %c0_102] : memref<9x128x128xbf16, #tpu.memory_space<vmem>>, vector<1x128x128xbf16>
    %123 = vector.shape_cast %122 : vector<1x128x128xbf16> to vector<128x128xbf16>
    %cst_103 = arith.constant dense<0.000000e+00> : vector<256x128xf32>
    %124 = tpu.matmul %121, %123, %cst_103 {dimension_numbers = #tpu.dot_dimension_numbers<[1], [0], [0], [1], [0, 0, 1, 1], [], []>} : vector<256x128xbf16>, vector<128x128xbf16>, vector<256x128xf32> -> vector<256x128xf32>
    %125 = arith.addf %118, %124 : vector<256x128xf32>
    %c1_104 = arith.constant 1 : index
    %c8_105 = arith.constant 8 : index
    %c0_106 = arith.constant 0 : index
    %126 = vector.load %arg5[%c1_104, %c8_105, %c0_106] : memref<18x32x128xf32, #tpu.memory_space<vmem>>, vector<16x16x128xf32>
    %127 = vector.shape_cast %126 : vector<16x16x128xf32> to vector<256x128xf32>
    %128 = arith.truncf %127 : vector<256x128xf32> to vector<256x128xbf16>
    %c4_107 = arith.constant 4 : index
    %c0_108 = arith.constant 0 : index
    %c0_109 = arith.constant 0 : index
    %129 = vector.load %arg3[%c4_107, %c0_108, %c0_109] : memref<9x128x128xbf16, #tpu.memory_space<vmem>>, vector<1x128x128xbf16>
    %130 = vector.shape_cast %129 : vector<1x128x128xbf16> to vector<128x128xbf16>
    %cst_110 = arith.constant dense<0.000000e+00> : vector<256x128xf32>
    %131 = tpu.matmul %128, %130, %cst_110 {dimension_numbers = #tpu.dot_dimension_numbers<[1], [0], [0], [1], [0, 0, 1, 1], [], []>} : vector<256x128xbf16>, vector<128x128xbf16>, vector<256x128xf32> -> vector<256x128xf32>
    %132 = arith.addf %125, %131 : vector<256x128xf32>
    %c1_111 = arith.constant 1 : index
    %c9_112 = arith.constant 9 : index
    %c0_113 = arith.constant 0 : index
    %133 = vector.load %arg5[%c1_111, %c9_112, %c0_113] : memref<18x32x128xf32, #tpu.memory_space<vmem>>, vector<16x16x128xf32>
    %134 = vector.shape_cast %133 : vector<16x16x128xf32> to vector<256x128xf32>
    %135 = arith.truncf %134 : vector<256x128xf32> to vector<256x128xbf16>
    %c5_114 = arith.constant 5 : index
    %c0_115 = arith.constant 0 : index
    %c0_116 = arith.constant 0 : index
    %136 = vector.load %arg3[%c5_114, %c0_115, %c0_116] : memref<9x128x128xbf16, #tpu.memory_space<vmem>>, vector<1x128x128xbf16>
    %137 = vector.shape_cast %136 : vector<1x128x128xbf16> to vector<128x128xbf16>
    %cst_117 = arith.constant dense<0.000000e+00> : vector<256x128xf32>
    %138 = tpu.matmul %135, %137, %cst_117 {dimension_numbers = #tpu.dot_dimension_numbers<[1], [0], [0], [1], [0, 0, 1, 1], [], []>} : vector<256x128xbf16>, vector<128x128xbf16>, vector<256x128xf32> -> vector<256x128xf32>
    %139 = arith.addf %132, %138 : vector<256x128xf32>
    %c2_118 = arith.constant 2 : index
    %c7_119 = arith.constant 7 : index
    %c0_120 = arith.constant 0 : index
    %140 = vector.load %arg5[%c2_118, %c7_119, %c0_120] : memref<18x32x128xf32, #tpu.memory_space<vmem>>, vector<16x16x128xf32>
    %141 = vector.shape_cast %140 : vector<16x16x128xf32> to vector<256x128xf32>
    %142 = arith.truncf %141 : vector<256x128xf32> to vector<256x128xbf16>
    %c6_121 = arith.constant 6 : index
    %c0_122 = arith.constant 0 : index
    %c0_123 = arith.constant 0 : index
    %143 = vector.load %arg3[%c6_121, %c0_122, %c0_123] : memref<9x128x128xbf16, #tpu.memory_space<vmem>>, vector<1x128x128xbf16>
    %144 = vector.shape_cast %143 : vector<1x128x128xbf16> to vector<128x128xbf16>
    %cst_124 = arith.constant dense<0.000000e+00> : vector<256x128xf32>
    %145 = tpu.matmul %142, %144, %cst_124 {dimension_numbers = #tpu.dot_dimension_numbers<[1], [0], [0], [1], [0, 0, 1, 1], [], []>} : vector<256x128xbf16>, vector<128x128xbf16>, vector<256x128xf32> -> vector<256x128xf32>
    %146 = arith.addf %139, %145 : vector<256x128xf32>
    %c2_125 = arith.constant 2 : index
    %c8_126 = arith.constant 8 : index
    %c0_127 = arith.constant 0 : index
    %147 = vector.load %arg5[%c2_125, %c8_126, %c0_127] : memref<18x32x128xf32, #tpu.memory_space<vmem>>, vector<16x16x128xf32>
    %148 = vector.shape_cast %147 : vector<16x16x128xf32> to vector<256x128xf32>
    %149 = arith.truncf %148 : vector<256x128xf32> to vector<256x128xbf16>
    %c7_128 = arith.constant 7 : index
    %c0_129 = arith.constant 0 : index
    %c0_130 = arith.constant 0 : index
    %150 = vector.load %arg3[%c7_128, %c0_129, %c0_130] : memref<9x128x128xbf16, #tpu.memory_space<vmem>>, vector<1x128x128xbf16>
    %151 = vector.shape_cast %150 : vector<1x128x128xbf16> to vector<128x128xbf16>
    %cst_131 = arith.constant dense<0.000000e+00> : vector<256x128xf32>
    %152 = tpu.matmul %149, %151, %cst_131 {dimension_numbers = #tpu.dot_dimension_numbers<[1], [0], [0], [1], [0, 0, 1, 1], [], []>} : vector<256x128xbf16>, vector<128x128xbf16>, vector<256x128xf32> -> vector<256x128xf32>
    %153 = arith.addf %146, %152 : vector<256x128xf32>
    %c2_132 = arith.constant 2 : index
    %c9_133 = arith.constant 9 : index
    %c0_134 = arith.constant 0 : index
    %154 = vector.load %arg5[%c2_132, %c9_133, %c0_134] : memref<18x32x128xf32, #tpu.memory_space<vmem>>, vector<16x16x128xf32>
    %155 = vector.shape_cast %154 : vector<16x16x128xf32> to vector<256x128xf32>
    %156 = arith.truncf %155 : vector<256x128xf32> to vector<256x128xbf16>
    %c8_135 = arith.constant 8 : index
    %c0_136 = arith.constant 0 : index
    %c0_137 = arith.constant 0 : index
    %157 = vector.load %arg3[%c8_135, %c0_136, %c0_137] : memref<9x128x128xbf16, #tpu.memory_space<vmem>>, vector<1x128x128xbf16>
    %158 = vector.shape_cast %157 : vector<1x128x128xbf16> to vector<128x128xbf16>
    %cst_138 = arith.constant dense<0.000000e+00> : vector<256x128xf32>
    %159 = tpu.matmul %156, %158, %cst_138 {dimension_numbers = #tpu.dot_dimension_numbers<[1], [0], [0], [1], [0, 0, 1, 1], [], []>} : vector<256x128xbf16>, vector<128x128xbf16>, vector<256x128xf32> -> vector<256x128xf32>
    %160 = arith.addf %153, %159 : vector<256x128xf32>
    %cst_139 = arith.constant dense<0.000000e+00> : vector<128xf32>
    %161 = vector.multi_reduction <add>, %160, %cst_139 [0] : vector<256x128xf32> to vector<128xf32>
    %162 = vector.shape_cast %161 : vector<128xf32> to vector<1x128xf32>
    %cst_140 = arith.constant 2.560000e+02 : f32
    %163 = vector.broadcast %cst_140 : f32 to vector<1x128xf32>
    %164 = arith.divf %162, %163 : vector<1x128xf32>
    %165 = vector.broadcast %164 : vector<1x128xf32> to vector<256x128xf32>
    %166 = arith.subf %160, %165 : vector<256x128xf32>
    %167 = arith.mulf %166, %166 : vector<256x128xf32>
    %cst_141 = arith.constant dense<0.000000e+00> : vector<128xf32>
    %168 = vector.multi_reduction <add>, %167, %cst_141 [0] : vector<256x128xf32> to vector<128xf32>
    %169 = vector.shape_cast %168 : vector<128xf32> to vector<1x128xf32>
    %cst_142 = arith.constant 2.560000e+02 : f32
    %170 = vector.broadcast %cst_142 : f32 to vector<1x128xf32>
    %171 = arith.divf %169, %170 : vector<1x128xf32>
    %172 = vector.broadcast %164 : vector<1x128xf32> to vector<256x128xf32>
    %173 = arith.subf %160, %172 : vector<256x128xf32>
    %cst_143 = arith.constant 9.99999974E-6 : f32
    %174 = vector.broadcast %cst_143 : f32 to vector<1x128xf32>
    %175 = arith.addf %171, %174 : vector<1x128xf32>
    %176 = math.rsqrt %175 : vector<1x128xf32>
    %177 = vector.broadcast %176 : vector<1x128xf32> to vector<256x128xf32>
    %178 = arith.mulf %173, %177 : vector<256x128xf32>
    %c0_144 = arith.constant 0 : index
    %c1_145 = arith.constant 1 : index
    %c1_146 = arith.constant 1 : index
    %c0_147 = arith.constant 0 : index
    %179 = vector.load %arg1[%c0_144, %c1_145, %c1_146, %c0_147] : memref<1x18x18x128xf32, #tpu.memory_space<vmem>>, vector<1x16x16x128xf32>
    %180 = vector.shape_cast %179 : vector<1x16x16x128xf32> to vector<16x16x128xf32>
    %181 = vector.shape_cast %180 : vector<16x16x128xf32> to vector<256x128xf32>
    %182 = arith.addf %181, %178 : vector<256x128xf32>
    %183 = vector.shape_cast %182 : vector<256x128xf32> to vector<1x16x16x128xf32>
    %c0_148 = arith.constant 0 : index
    %c0_149 = arith.constant 0 : index
    %c0_150 = arith.constant 0 : index
    %c0_151 = arith.constant 0 : index
    %184 = vector.load %arg4[%c0_148, %c0_149, %c0_150, %c0_151] : memref<1x16x16x128xf32, #tpu.memory_space<vmem>>, vector<1x16x16x128xf32>
    tpu.vector_store %arg4[%c0_148, %c0_149, %c0_150, %c0_151], %183 {strides = array<i32>} : memref<1x16x16x128xf32, #tpu.memory_space<vmem>>, vector<1x16x16x128xf32>,
    return
  }
  func.func @transform_0(%arg0: i32) -> (i32, i32, i32, i32) {
    %c0_i32 = arith.constant 0 : i32
    %c0_i32_0 = arith.constant 0 : i32
    %c0_i32_1 = arith.constant 0 : i32
    %c0_i32_2 = arith.constant 0 : i32
    return %arg0, %c0_i32, %c0_i32_0, %c0_i32_1 : i32, i32, i32, i32
  }
  func.func @transform_1(%arg0: i32) -> (i32, i32, i32) {
    %c0_i32 = arith.constant 0 : i32
    %c0_i32_0 = arith.constant 0 : i32
    %c0_i32_1 = arith.constant 0 : i32
    %c0_i32_2 = arith.constant 0 : i32
    return %c0_i32, %c0_i32_0, %c0_i32_1 : i32, i32, i32
  }
  func.func @transform_2(%arg0: i32) -> (i32, i32, i32) {
    %c0_i32 = arith.constant 0 : i32
    %c0_i32_0 = arith.constant 0 : i32
    %c0_i32_1 = arith.constant 0 : i32
    %c0_i32_2 = arith.constant 0 : i32
    return %c0_i32, %c0_i32_0, %c0_i32_1 : i32, i32, i32
  }
  func.func @transform_3(%arg0: i32) -> (i32, i32, i32, i32) {
    %c0_i32 = arith.constant 0 : i32
    %c0_i32_0 = arith.constant 0 : i32
    %c0_i32_1 = arith.constant 0 : i32
    %c0_i32_2 = arith.constant 0 : i32
    return %arg0, %c0_i32, %c0_i32_0, %c0_i32_1 : i32, i32, i32, i32
  }
}

</mosaic_0001>

<llo_original>
// kernel: res_block_forward.1
$region0: #{res_block_forward.1}
  #allocation0 [shape = 'u32[]', space=smem, size = 0x4, offset = 0x4, fixed_abs, tag = 'smem constant byte address 0x4 - core index']
  #allocation1 [shape = 'u32[144,128]{1,0:T(1,128)}', space=vmem, size = 0x12000, scoped, tag = 'internal scratch']
  #allocation2 [shape = 'f32[18,32,128]{2,1,0:T(8,128)}', space=vmem, size = 0x48000, scoped, tag = 'scratch operand']
  %s0 = inlined_call_operand.vmem [shape: f32[2,18,18,128], index: 0, kind: input, shape index: {}]
  %s1 = inlined_call_operand.vmem [shape: bf16[9,128,128], index: 1, kind: input, shape index: {}]
  %s2 = inlined_call_operand.vmem [shape: bf16[9,128,128], index: 2, kind: input, shape index: {}]
  %s3 = inlined_call_operand.vmem [shape: f32[2,16,16,128], index: 3, kind: output, shape index: {}]
  %s4 = sld [smem:[#allocation0]]
  $region45: #{res_block_forward.1} parent=0
    _
  %s6 = ssub.s32 1, %s4
  %s7 = scalar_select 0, %s6, %s4
  loop: start=0, step=1, limit=4
  $region2: #{res_block_forward.1} parent=0 // loop_pre_header
    _
  $region3: #{res_block_forward.1} parent=0 // loop_header
    %s9 = sphi 0, %s13
    %p10 = scmp.ge.s32.totalorder %s9, 4
    %s19 = sphi 0, %s21
    %s22 = sphi 0, %s19
    %s23 = sphi 0, %s22
    %s39 = sphi 0, %s23
    %s43 = sphi 0, %s43
    %s45 = sphi 0, %s43
    %s46 = sphi 0, %s45
    %s60 = sphi 0, %s46
    %s64 = sphi 0, %s64
    %s66 = sphi 0, %s64
    %s67 = sphi 0, %s66
    %s81 = sphi 0, %s67
    %s87 = sphi 0, %s89
    %s90 = sphi 0, %s87
    %s91 = sphi 0, %s90
    %s107 = sphi 0, %s91
  $region4: #{res_block_forward.1} parent=0 // loop_header_branch
    %12 = sbr.rel (%p10) target = $region8
  $region5: #{res_block_forward.1} parent=0 // loop_body
    %s14 = ssub.s32 %s9, 1
    %s15 = ssub.s32 %s9, 2
    %s16 = sadd.s32 %s9, 1
    %s17 = ssub.s32 %s9, %s16
    %p18 = scmp.eq.s32.totalorder %s17, 0
    %s20 = sadd.s32 %s19, 1
    %s21 = scalar_select %p18, %s19, %s20
    %p24 = pneg %p18
    %p25 = scmp.eq.s32.totalorder %s9, 1
    %p26 = por %p24, %p25
    %p27 = scmp.ne.s32.totalorder %s19, %s22
    %p28 = scmp.eq.s32.totalorder %s9, 0
    %p29 = por %p27, %p28
    %p30 = scmp.ne.s32.totalorder %s19, %s22
    %p31 = scmp.eq.s32.totalorder %s14, 1
    %p32 = por %p30, %p31
    %p33 = scmp.ne.s32.totalorder %s22, %s23
    %p34 = scmp.eq.s32.totalorder %s14, 0
    %p35 = por %p33, %p34
    %p36 = scmp.ne.s32.totalorder %s22, %s23
    %p37 = scmp.eq.s32.totalorder %s15, 1
    %p38 = por %p36, %p37
    %p40 = scmp.ne.s32.totalorder %s23, %s39
    %p41 = scmp.eq.s32.totalorder %s15, 0
    %p42 = por %p40, %p41
    %s44 = sadd.s32 %s43, 1
    %p47 = scmp.eq.s32.totalorder %s9, 1
    %p48 = scmp.ne.s32.totalorder %s43, %s45
    %p49 = scmp.eq.s32.totalorder %s9, 0
    %p50 = por %p48, %p49
    %p51 = scmp.ne.s32.totalorder %s43, %s45
    %p52 = scmp.eq.s32.totalorder %s14, 1
    %p53 = por %p51, %p52
    %p54 = scmp.ne.s32.totalorder %s45, %s46
    %p55 = scmp.eq.s32.totalorder %s14, 0
    %p56 = por %p54, %p55
    %p57 = scmp.ne.s32.totalorder %s45, %s46
    %p58 = scmp.eq.s32.totalorder %s15, 1
    %p59 = por %p57, %p58
    %p61 = scmp.ne.s32.totalorder %s46, %s60
    %p62 = scmp.eq.s32.totalorder %s15, 0
    %p63 = por %p61, %p62
    %s65 = sadd.s32 %s64, 1
    %p68 = scmp.eq.s32.totalorder %s9, 1
    %p69 = scmp.ne.s32.totalorder %s64, %s66
    %p70 = scmp.eq.s32.totalorder %s9, 0
    %p71 = por %p69, %p70
    %p72 = scmp.ne.s32.totalorder %s64, %s66
    %p73 = scmp.eq.s32.totalorder %s14, 1
    %p74 = por %p72, %p73
    %p75 = scmp.ne.s32.totalorder %s66, %s67
    %p76 = scmp.eq.s32.totalorder %s14, 0
    %p77 = por %p75, %p76
    %p78 = scmp.ne.s32.totalorder %s66, %s67
    %p79 = scmp.eq.s32.totalorder %s15, 1
    %p80 = por %p78, %p79
    %p82 = scmp.ne.s32.totalorder %s67, %s81
    %p83 = scmp.eq.s32.totalorder %s15, 0
    %p84 = por %p82, %p83
    %s85 = ssub.s32 %s9, %s16
    %p86 = scmp.eq.s32.totalorder %s85, 0
    %s88 = sadd.s32 %s87, 1
    %s89 = scalar_select %p86, %s87, %s88
    %p92 = pneg %p86
    %p93 = scmp.eq.s32.totalorder %s9, 1
    %p94 = por %p92, %p93
    %p95 = scmp.ne.s32.totalorder %s87, %s90
    %p96 = scmp.eq.s32.totalorder %s9, 0
    %p97 = por %p95, %p96
    %p98 = scmp.ne.s32.totalorder %s87, %s90
    %p99 = scmp.eq.s32.totalorder %s14, 1
    %p100 = por %p98, %p99
    %p101 = scmp.ne.s32.totalorder %s90, %s91
    %p102 = scmp.eq.s32.totalorder %s14, 0
    %p103 = por %p101, %p102
    %p104 = scmp.ne.s32.totalorder %s90, %s91
    %p105 = scmp.eq.s32.totalorder %s15, 1
    %p106 = por %p104, %p105
    %p108 = scmp.ne.s32.totalorder %s91, %s107
    %p109 = scmp.eq.s32.totalorder %s15, 0
    %p110 = por %p108, %p109
    %p111 = scmp.le.s32.totalorder 1, %s9
    %p112 = scmp.lt.s32.totalorder %s9, 3
    %p113 = pnand %p111, %p112
    %p114 = pneg %p113
    // Predicated region
    $region9: #{res_block_forward.1} parent=5 // pred_check
      _
    $region10: #{res_block_forward.1} parent=5 // pred_check_branch
      %116 = sbr.rel (%p113) target = $region12
    $region11: #{res_block_forward.1} parent=5 // pred_region
      %s117 = ssub.s32 %s9, 1
      // Predicated region
      $region13: #{res_block_forward.1} parent=11 // pred_check
        %p118 = pneg %p56
      $region14: #{res_block_forward.1} parent=11 // pred_check_branch
        %120 = sbr.rel (%p118) target = $region16
      $region15: #{res_block_forward.1} parent=11 // pred_region
        _
      $region16: #{res_block_forward.1} parent=11 // pred_fallthru
        _
      // Predicated region
      $region17: #{res_block_forward.1} parent=11 // pred_check
        %p121 = pneg %p77
      $region18: #{res_block_forward.1} parent=11 // pred_check_branch
        %123 = sbr.rel (%p121) target = $region20
      $region19: #{res_block_forward.1} parent=11 // pred_region
        _
      $region20: #{res_block_forward.1} parent=11 // pred_fallthru
        _
    $region12: #{res_block_forward.1} parent=5 // pred_fallthru
      _
    %p124 = scmp.lt.s32.totalorder %s9, 2
    // Predicated region
    $region21: #{res_block_forward.1} parent=5 // pred_check
      %p125 = pneg %p124
    $region22: #{res_block_forward.1} parent=5 // pred_check_branch
      %127 = sbr.rel (%p125) target = $region24
    $region23: #{res_block_forward.1} parent=5 // pred_region
      // Predicated region
      $region25: #{res_block_forward.1} parent=23 // pred_check
        %p128 = pneg %p29
      $region26: #{res_block_forward.1} parent=23 // pred_check_branch
        %130 = sbr.rel (%p128) target = $region28
      $region27: #{res_block_forward.1} parent=23 // pred_region
        %p131 = scmp.lt.s32.totalorder %s9, 1
        %s132 = scalar_select %p131, %s9, 1
        %s133 = smul.addr %s132, 54
        %s134 = smul.addr %s133, 8
        %s135 = scalar_lea.vmem %s0, %s134
      $region28: #{res_block_forward.1} parent=23 // pred_fallthru
        _
    $region24: #{res_block_forward.1} parent=5 // pred_fallthru
      _
    %p136 = scmp.le.s32.totalorder 1, %s9
    %p137 = scmp.lt.s32.totalorder %s9, 3
    %p138 = pnand %p136, %p137
    %p139 = pneg %p138
    // Predicated region
    $region29: #{res_block_forward.1} parent=5 // pred_check
      _
    $region30: #{res_block_forward.1} parent=5 // pred_check_branch
      %141 = sbr.rel (%p138) target = $region32
    $region31: #{res_block_forward.1} parent=5 // pred_region
      %s142 = ssub.s32 %s9, 1
      %p143 = scmp.lt.s32.totalorder %s14, 1
      %s144 = scalar_select %p143, %s14, 1
      %s145 = smul.addr %s144, 54
      %s146 = smul.addr %s145, 8
      %s147 = scalar_lea.vmem %s0, %s146
      %p148 = pneg %p35
      %p149 = pneg %p32
      %p150 = pneg %p56
      %p151 = pneg %p53
      %p152 = pneg %p77
      %p153 = pneg %p74
      %p154 = pneg %p103
      %p155 = pneg %p100
      %p156 = scmp.lt.s32.totalorder %s14, 1
      %s157 = scalar_select %p156, %s14, 1
      %s158 = smul.addr %s157, 32
      %s159 = smul.addr %s158, 8
      %s160 = scalar_lea.vmem %s3, %s159
      %p161 = scmp.lt.s32.totalorder %s14, 1
      %s162 = scalar_select %p161, %s14, 1
      %s163 = smul.addr %s162, 54
      %s164 = smul.addr %s163, 8
      %s165 = scalar_lea.vmem %s0, %s164
      %p166 = scmp.lt.s32.totalorder %s14, 1
      %s167 = scalar_select %p166, %s14, 1
      %s168 = smul.addr %s167, 32
      %s169 = smul.addr %s168, 8
      %s170 = scalar_lea.vmem %s3, %s169
      %v172 = vld [vmem:[%s165] sm:$0xff]
      %v173 = vld [vmem:[%s165 + $0x8] sm:$0xff]
      %v174 = vld [vmem:[%s165 + $0x18] sm:$0xff]
      %v175 = vld [vmem:[%s165 + $0x20] sm:$0xff]
      %v176 = vld [vmem:[%s165 + $0x30] sm:$0xff]
      %v177 = vld [vmem:[%s165 + $0x38] sm:$0xff]
      %v178 = vld [vmem:[%s165 + $0x48] sm:$0xff]
      %v179 = vld [vmem:[%s165 + $0x50] sm:$0xff]
      %v180 = vld [vmem:[%s165 + $0x60] sm:$0xff]
      %v181 = vld [vmem:[%s165 + $0x68] sm:$0xff]
      %v182 = vld [vmem:[%s165 + $0x78] sm:$0xff]
      %v183 = vld [vmem:[%s165 + $0x80] sm:$0xff]
      %v184 = vld [vmem:[%s165 + $0x90] sm:$0xff]
      %v185 = vld [vmem:[%s165 + $0x98] sm:$0xff]
      %v186 = vld [vmem:[%s165 + $0xa8] sm:$0xff]
      %v187 = vld [vmem:[%s165 + $0xb0] sm:$0xff]
      %v188 = vld [vmem:[%s165 + $0xc0] sm:$0xff]
      %v189 = vld [vmem:[%s165 + $0xc8] sm:$0xff]
      %v190 = vld [vmem:[%s165 + $0xd8] sm:$0xff]
      %v191 = vld [vmem:[%s165 + $0xe0] sm:$0xff]
      %v192 = vld [vmem:[%s165 + $0xf0] sm:$0xff]
      %v193 = vld [vmem:[%s165 + $0xf8] sm:$0xff]
      %v194 = vld [vmem:[%s165 + $0x108] sm:$0xff]
      %v195 = vld [vmem:[%s165 + $0x110] sm:$0xff]
      %v196 = vld [vmem:[%s165 + $0x120] sm:$0xff]
      %v197 = vld [vmem:[%s165 + $0x128] sm:$0xff]
      %v198 = vld [vmem:[%s165 + $0x138] sm:$0xff]
      %v199 = vld [vmem:[%s165 + $0x140] sm:$0xff]
      %v200 = vld [vmem:[%s165 + $0x150] sm:$0xff]
      %v201 = vld [vmem:[%s165 + $0x158] sm:$0xff]
      %v202 = vld [vmem:[%s165 + $0x168] sm:$0xff]
      %v203 = vld [vmem:[%s165 + $0x170] sm:$0xff]
      %v204 = vpack.c.bf16 %v173, %v172
      %v205 = vpack.c.bf16 %v175, %v174
      %v206 = vpack.c.bf16 %v177, %v176
      %v207 = vpack.c.bf16 %v179, %v178
      %v208 = vpack.c.bf16 %v181, %v180
      %v209 = vpack.c.bf16 %v183, %v182
      %v210 = vpack.c.bf16 %v185, %v184
      %v211 = vpack.c.bf16 %v187, %v186
      %v212 = vpack.c.bf16 %v189, %v188
      %v213 = vpack.c.bf16 %v191, %v190
      %v214 = vpack.c.bf16 %v193, %v192
      %v215 = vpack.c.bf16 %v195, %v194
      %v216 = vpack.c.bf16 %v197, %v196
      %v217 = vpack.c.bf16 %v199, %v198
      %v218 = vpack.c.bf16 %v201, %v200
      %v219 = vpack.c.bf16 %v203, %v202
      %v220 = vld [vmem:[%s1] sm:$0xf]
      %v221 = vld [vmem:[%s1 + $0x4] sm:$0xf]
      %v222 = vld [vmem:[%s1 + $0x8] sm:$0xf]
      %v223 = vld [vmem:[%s1 + $0xc] sm:$0xf]
      %v224 = vld [vmem:[%s1 + $0x10] sm:$0xf]
      %v225 = vld [vmem:[%s1 + $0x14] sm:$0xf]
      %v226 = vld [vmem:[%s1 + $0x18] sm:$0xf]
      %v227 = vld [vmem:[%s1 + $0x1c] sm:$0xf]
      %v228 = vld [vmem:[%s1 + $0x20] sm:$0xf]
      %v229 = vld [vmem:[%s1 + $0x24] sm:$0xf]
      %v230 = vld [vmem:[%s1 + $0x28] sm:$0xf]
      %v231 = vld [vmem:[%s1 + $0x2c] sm:$0xf]
      %v232 = vld [vmem:[%s1 + $0x30] sm:$0xf]
      %v233 = vld [vmem:[%s1 + $0x34] sm:$0xf]
      %v234 = vld [vmem:[%s1 + $0x38] sm:$0xf]
      %v235 = vld [vmem:[%s1 + $0x3c] sm:$0xf]
      %v236 = vld [vmem:[%s165 + $0x1] sm:$0xff]
      %v237 = vld [vmem:[%s165 + $0x9] sm:$0xff]
      %v238 = vld [vmem:[%s165 + $0x19] sm:$0xff]
      %v239 = vld [vmem:[%s165 + $0x21] sm:$0xff]
      %v240 = vld [vmem:[%s165 + $0x31] sm:$0xff]
      %v241 = vld [vmem:[%s165 + $0x39] sm:$0xff]
      %v242 = vld [vmem:[%s165 + $0x49] sm:$0xff]
      %v243 = vld [vmem:[%s165 + $0x51] sm:$0xff]
      %v244 = vld [vmem:[%s165 + $0x61] sm:$0xff]
      %v245 = vld [vmem:[%s165 + $0x69] sm:$0xff]
      %v246 = vld [vmem:[%s165 + $0x79] sm:$0xff]
      %v247 = vld [vmem:[%s165 + $0x81] sm:$0xff]
      %v248 = vld [vmem:[%s165 + $0x91] sm:$0xff]
      %v249 = vld [vmem:[%s165 + $0x99] sm:$0xff]
      %v250 = vld [vmem:[%s165 + $0xa9] sm:$0xff]
      %v251 = vld [vmem:[%s165 + $0xb1] sm:$0xff]
      %v252 = vld [vmem:[%s165 + $0xc1] sm:$0xff]
      %v253 = vld [vmem:[%s165 + $0xc9] sm:$0xff]
      %v254 = vld [vmem:[%s165 + $0xd9] sm:$0xff]
      %v255 = vld [vmem:[%s165 + $0xe1] sm:$0xff]
      %v256 = vld [vmem:[%s165 + $0xf1] sm:$0xff]
      %v257 = vld [vmem:[%s165 + $0xf9] sm:$0xff]
      %v258 = vld [vmem:[%s165 + $0x109] sm:$0xff]
      %v259 = vld [vmem:[%s165 + $0x111] sm:$0xff]
      %v260 = vld [vmem:[%s165 + $0x121] sm:$0xff]
      %v261 = vld [vmem:[%s165 + $0x129] sm:$0xff]
      %v262 = vld [vmem:[%s165 + $0x139] sm:$0xff]
      %v263 = vld [vmem:[%s165 + $0x141] sm:$0xff]
      %v264 = vld [vmem:[%s165 + $0x151] sm:$0xff]
      %v265 = vld [vmem:[%s165 + $0x159] sm:$0xff]
      %v266 = vld [vmem:[%s165 + $0x169] sm:$0xff]
      %v267 = vld [vmem:[%s165 + $0x171] sm:$0xff]
      %v268 = vpack.c.bf16 %v237, %v236
      %v269 = vpack.c.bf16 %v239, %v238
      %v270 = vpack.c.bf16 %v241, %v240
      %v271 = vpack.c.bf16 %v243, %v242
      %v272 = vpack.c.bf16 %v245, %v244
      %v273 = vpack.c.bf16 %v247, %v246
      %v274 = vpack.c.bf16 %v249, %v248
      %v275 = vpack.c.bf16 %v251, %v250
      %v276 = vpack.c.bf16 %v253, %v252
      %v277 = vpack.c.bf16 %v255, %v254
      %v278 = vpack.c.bf16 %v257, %v256
      %v279 = vpack.c.bf16 %v259, %v258
      %v280 = vpack.c.bf16 %v261, %v260
      %v281 = vpack.c.bf16 %v263, %v262
      %v282 = vpack.c.bf16 %v265, %v264
      %v283 = vpack.c.bf16 %v267, %v266
      %s284 = scalar_lea.vmem %s1, 64
      %v285 = vld [vmem:[%s284] sm:$0xf]
      %v286 = vld [vmem:[%s284 + $0x4] sm:$0xf]
      %v287 = vld [vmem:[%s284 + $0x8] sm:$0xf]
      %v288 = vld [vmem:[%s284 + $0xc] sm:$0xf]
      %v289 = vld [vmem:[%s284 + $0x10] sm:$0xf]
      %v290 = vld [vmem:[%s284 + $0x14] sm:$0xf]
      %v291 = vld [vmem:[%s284 + $0x18] sm:$0xf]
      %v292 = vld [vmem:[%s284 + $0x1c] sm:$0xf]
      %v293 = vld [vmem:[%s284 + $0x20] sm:$0xf]
      %v294 = vld [vmem:[%s284 + $0x24] sm:$0xf]
      %v295 = vld [vmem:[%s284 + $0x28] sm:$0xf]
      %v296 = vld [vmem:[%s284 + $0x2c] sm:$0xf]
      %v297 = vld [vmem:[%s284 + $0x30] sm:$0xf]
      %v298 = vld [vmem:[%s284 + $0x34] sm:$0xf]
      %v299 = vld [vmem:[%s284 + $0x38] sm:$0xf]
      %v300 = vld [vmem:[%s284 + $0x3c] sm:$0xf]
      %v317 = vunpack.c.l.b16 %v285
      %v318 = vunpack.c.l.b16 %v286
      %v319 = vunpack.c.l.b16 %v287
      %v320 = vunpack.c.l.b16 %v288
      %v321 = vunpack.c.l.b16 %v289
      %v322 = vunpack.c.l.b16 %v290
      %v323 = vunpack.c.l.b16 %v291
      %v324 = vunpack.c.l.b16 %v292
      %v325 = vunpack.c.l.b16 %v293
      %v326 = vunpack.c.l.b16 %v294
      %v327 = vunpack.c.l.b16 %v295
      %v328 = vunpack.c.l.b16 %v296
      %v329 = vunpack.c.l.b16 %v297
      %v330 = vunpack.c.l.b16 %v298
      %v331 = vunpack.c.l.b16 %v299
      %v332 = vunpack.c.l.b16 %v300
      %v333 = vpack.c.b16 %v318, %v317
      %v334 = vpack.c.b16 %v320, %v319
      %v335 = vpack.c.b16 %v322, %v321
      %v336 = vpack.c.b16 %v324, %v323
      %v337 = vpack.c.b16 %v326, %v325
      %v338 = vpack.c.b16 %v328, %v327
      %v339 = vpack.c.b16 %v330, %v329
      %v340 = vpack.c.b16 %v332, %v331
      %349 = vmatprep.subr.bf16.mxu0 0
      %350 = vmatpush1.bf16.msra.mxu0 %v333
      %351 = vmatprep.subr.bf16.mxu0 0
      %352 = vmatpush1.bf16.msra.mxu0 %v334
      %353 = vmatprep.subr.bf16.mxu0 0
      %354 = vmatpush1.bf16.msra.mxu0 %v335
      %355 = vmatprep.subr.bf16.mxu0 0
      %356 = vmatpush1.bf16.msra.mxu0 %v336
      %357 = vmatprep.subr.bf16.mxu0 0
      %358 = vmatpush1.bf16.msra.mxu0 %v337
      %359 = vmatprep.subr.bf16.mxu0 0
      %360 = vmatpush1.bf16.msra.mxu0 %v338
      %361 = vmatprep.subr.bf16.mxu0 0
      %362 = vmatpush1.bf16.msra.mxu0 %v339
      %363 = vmatprep.subr.bf16.mxu0 0
      %364 = vmatpush1.bf16.msra.mxu0 %v340
      %365 = vmatprep.subr.bf16.mxu0 0
      %366 = vmatpush1.bf16.msra.mxu0 0
      %367 = vmatprep.subr.bf16.mxu0 0
      %368 = vmatpush1.bf16.msra.mxu0 0
      %369 = vmatprep.subr.bf16.mxu0 0
      %370 = vmatpush1.bf16.msra.mxu0 0
      %371 = vmatprep.subr.bf16.mxu0 0
      %372 = vmatpush1.bf16.msra.mxu0 0
      %373 = vmatprep.subr.bf16.mxu0 0
      %374 = vmatpush1.bf16.msra.mxu0 0
      %375 = vmatprep.subr.bf16.mxu0 0
      %376 = vmatpush1.bf16.msra.mxu0 0
      %377 = vmatprep.subr.bf16.mxu0 0
      %378 = vmatpush1.bf16.msra.mxu0 0
      %379 = vmatprep.subr.bf16.mxu0 0
      %380 = vmatpush1.bf16.msra.mxu0 0
      %381 = vmatprep.mubr.bf16.mxu0 0
      %382 = vmatmul.mubr.bf16.gmra.mrb[0].mxu0 %v268
      %v383 = vpop.f32.mrb[0].mxu0
      %v384 = vadd.f32 0.0, %v383
      %v385 = vpop.f32.mrb[0].mxu0
      %v386 = vpop.f32.mrb[0].mxu0
      %v387 = vadd.f32 0.0, %v386
      %v388 = vpop.f32.mrb[0].mxu0
      %389 = vmatprep.mubr.bf16.mxu0 0
      %390 = vmatmul.mubr.bf16.gmra.mrb[0].mxu0 %v269
      %v391 = vpop.f32.mrb[0].mxu0
      %v392 = vadd.f32 0.0, %v391
      %v393 = vpop.f32.mrb[0].mxu0
      %v394 = vpop.f32.mrb[0].mxu0
      %v395 = vadd.f32 0.0, %v394
      %v396 = vpop.f32.mrb[0].mxu0
      %397 = vmatprep.mubr.bf16.mxu0 0
      %398 = vmatmul.mubr.bf16.gmra.mrb[0].mxu0 %v270
      %v399 = vpop.f32.mrb[0].mxu0
      %v400 = vadd.f32 0.0, %v399
      %v401 = vpop.f32.mrb[0].mxu0
      %v402 = vpop.f32.mrb[0].mxu0
      %v403 = vadd.f32 0.0, %v402
      %v404 = vpop.f32.mrb[0].mxu0
      %405 = vmatprep.mubr.bf16.mxu0 0
      %406 = vmatmul.mubr.bf16.gmra.mrb[0].mxu0 %v271
      %v407 = vpop.f32.mrb[0].mxu0
      %v408 = vadd.f32 0.0, %v407
      %v409 = vpop.f32.mrb[0].mxu0
      %v410 = vpop.f32.mrb[0].mxu0
      %v411 = vadd.f32 0.0, %v410
      %v412 = vpop.f32.mrb[0].mxu0
      %413 = vmatprep.mubr.bf16.mxu0 0
      %414 = vmatmul.mubr.bf16.gmra.mrb[0].mxu0 %v272
      %v415 = vpop.f32.mrb[0].mxu0
      %v416 = vadd.f32 0.0, %v415
      %v417 = vpop.f32.mrb[0].mxu0
      %v418 = vpop.f32.mrb[0].mxu0
      %v419 = vadd.f32 0.0, %v418
      %v420 = vpop.f32.mrb[0].mxu0
      %421 = vmatprep.mubr.bf16.mxu0 0
      %422 = vmatmul.mubr.bf16.gmra.mrb[0].mxu0 %v273
      %v423 = vpop.f32.mrb[0].mxu0
      %v424 = vadd.f32 0.0, %v423
      %v425 = vpop.f32.mrb[0].mxu0
      %v426 = vpop.f32.mrb[0].mxu0
      %v427 = vadd.f32 0.0, %v426
      %v428 = vpop.f32.mrb[0].mxu0
      %429 = vmatprep.mubr.bf16.mxu0 0
      %430 = vmatmul.mubr.bf16.gmra.mrb[0].mxu0 %v274
      %v431 = vpop.f32.mrb[0].mxu0
      %v432 = vadd.f32 0.0, %v431
      %v433 = vpop.f32.mrb[0].mxu0
      %v434 = vpop.f32.mrb[0].mxu0
      %v435 = vadd.f32 0.0, %v434
      %v436 = vpop.f32.mrb[0].mxu0
      %437 = vmatprep.mubr.bf16.mxu0 0
      %438 = vmatmul.mubr.bf16.gmra.mrb[0].mxu0 %v275
      %v439 = vpop.f32.mrb[0].mxu0
      %v440 = vadd.f32 0.0, %v439
      %v441 = vpop.f32.mrb[0].mxu0
      %v442 = vpop.f32.mrb[0].mxu0
      %v443 = vadd.f32 0.0, %v442
      %v444 = vpop.f32.mrb[0].mxu0
      %445 = vmatprep.mubr.bf16.mxu0 0
      %446 = vmatmul.mubr.bf16.gmra.mrb[0].mxu0 %v276
      %v447 = vpop.f32.mrb[0].mxu0
      %v448 = vadd.f32 0.0, %v447
      %v449 = vpop.f32.mrb[0].mxu0
      %v450 = vpop.f32.mrb[0].mxu0
      %v451 = vadd.f32 0.0, %v450
      %v452 = vpop.f32.mrb[0].mxu0
      %453 = vmatprep.mubr.bf16.mxu0 0
      %454 = vmatmul.mubr.bf16.gmra.mrb[0].mxu0 %v277
      %v455 = vpop.f32.mrb[0].mxu0
      %v456 = vadd.f32 0.0, %v455
      %v457 = vpop.f32.mrb[0].mxu0
      %v458 = vpop.f32.mrb[0].mxu0
      %v459 = vadd.f32 0.0, %v458
      %v460 = vpop.f32.mrb[0].mxu0
      %461 = vmatprep.mubr.bf16.mxu0 0
      %462 = vmatmul.mubr.bf16.gmra.mrb[0].mxu0 %v278
      %v463 = vpop.f32.mrb[0].mxu0
      %v464 = vadd.f32 0.0, %v463
      %v465 = vpop.f32.mrb[0].mxu0
      %v466 = vpop.f32.mrb[0].mxu0
      %v467 = vadd.f32 0.0, %v466
      %v468 = vpop.f32.mrb[0].mxu0
      %469 = vmatprep.mubr.bf16.mxu0 0
      %470 = vmatmul.mubr.bf16.gmra.mrb[0].mxu0 %v279
      %v471 = vpop.f32.mrb[0].mxu0
      %v472 = vadd.f32 0.0, %v471
      %v473 = vpop.f32.mrb[0].mxu0
      %v474 = vpop.f32.mrb[0].mxu0
      %v475 = vadd.f32 0.0, %v474
      %v476 = vpop.f32.mrb[0].mxu0
      %477 = vmatprep.mubr.bf16.mxu0 0
      %478 = vmatmul.mubr.bf16.gmra.mrb[0].mxu0 %v280
      %v479 = vpop.f32.mrb[0].mxu0
      %v480 = vadd.f32 0.0, %v479
      %v481 = vpop.f32.mrb[0].mxu0
      %v482 = vpop.f32.mrb[0].mxu0
      %v483 = vadd.f32 0.0, %v482
      %v484 = vpop.f32.mrb[0].mxu0
      %485 = vmatprep.mubr.bf16.mxu0 0
      %486 = vmatmul.mubr.bf16.gmra.mrb[0].mxu0 %v281
      %v487 = vpop.f32.mrb[0].mxu0
      %v488 = vadd.f32 0.0, %v487
      %v489 = vpop.f32.mrb[0].mxu0
      %v490 = vpop.f32.mrb[0].mxu0
      %v491 = vadd.f32 0.0, %v490
      %v492 = vpop.f32.mrb[0].mxu0
      %493 = vmatprep.mubr.bf16.mxu0 0
      %494 = vmatmul.mubr.bf16.gmra.mrb[0].mxu0 %v282
      %v495 = vpop.f32.mrb[0].mxu0
      %v496 = vadd.f32 0.0, %v495
      %v497 = vpop.f32.mrb[0].mxu0
      %v498 = vpop.f32.mrb[0].mxu0
      %v499 = vadd.f32 0.0, %v498
      %v500 = vpop.f32.mrb[0].mxu0
      %501 = vmatprep.mubr.bf16.mxu0 0
      %502 = vmatmul.mubr.bf16.gmra.mrb[0].mxu0 %v283
      %v503 = vpop.f32.mrb[0].mxu0
      %v504 = vadd.f32 0.0, %v503
      %v505 = vpop.f32.mrb[0].mxu0
      %v506 = vpop.f32.mrb[0].mxu0
      %v507 = vadd.f32 0.0, %v506
      %v508 = vpop.f32.mrb[0].mxu0
      %509 = vdwg.mxu0
      %v526 = vunpack.c.l.b16 %v220
      %v527 = vunpack.c.l.b16 %v221
      %v528 = vunpack.c.l.b16 %v222
      %v529 = vunpack.c.l.b16 %v223
      %v530 = vunpack.c.l.b16 %v224
      %v531 = vunpack.c.l.b16 %v225
      %v532 = vunpack.c.l.b16 %v226
      %v533 = vunpack.c.l.b16 %v227
      %v534 = vunpack.c.l.b16 %v228
      %v535 = vunpack.c.l.b16 %v229
      %v536 = vunpack.c.l.b16 %v230
      %v537 = vunpack.c.l.b16 %v231
      %v538 = vunpack.c.l.b16 %v232
      %v539 = vunpack.c.l.b16 %v233
      %v540 = vunpack.c.l.b16 %v234
      %v541 = vunpack.c.l.b16 %v235
      %v542 = vpack.c.b16 %v527, %v526
      %v543 = vpack.c.b16 %v529, %v528
      %v544 = vpack.c.b16 %v531, %v530
      %v545 = vpack.c.b16 %v533, %v532
      %v546 = vpack.c.b16 %v535, %v534
      %v547 = vpack.c.b16 %v537, %v536
      %v548 = vpack.c.b16 %v539, %v538
      %v549 = vpack.c.b16 %v541, %v540
      %558 = vmatprep.subr.bf16.mxu0 0
      %559 = vmatpush1.bf16.msra.mxu0 %v542
      %560 = vmatprep.subr.bf16.mxu0 0
      %561 = vmatpush1.bf16.msra.mxu0 %v543
      %562 = vmatprep.subr.bf16.mxu0 0
      %563 = vmatpush1.bf16.msra.mxu0 %v544
      %564 = vmatprep.subr.bf16.mxu0 0
      %565 = vmatpush1.bf16.msra.mxu0 %v545
      %566 = vmatprep.subr.bf16.mxu0 0
      %567 = vmatpush1.bf16.msra.mxu0 %v546
      %568 = vmatprep.subr.bf16.mxu0 0
      %569 = vmatpush1.bf16.msra.mxu0 %v547
      %570 = vmatprep.subr.bf16.mxu0 0
      %571 = vmatpush1.bf16.msra.mxu0 %v548
      %572 = vmatprep.subr.bf16.mxu0 0
      %573 = vmatpush1.bf16.msra.mxu0 %v549
      %574 = vmatprep.subr.bf16.mxu0 0
      %575 = vmatpush1.bf16.msra.mxu0 0
      %576 = vmatprep.subr.bf16.mxu0 0
      %577 = vmatpush1.bf16.msra.mxu0 0
      %578 = vmatprep.subr.bf16.mxu0 0
      %579 = vmatpush1.bf16.msra.mxu0 0
      %580 = vmatprep.subr.bf16.mxu0 0
      %581 = vmatpush1.bf16.msra.mxu0 0
      %582 = vmatprep.subr.bf16.mxu0 0
      %583 = vmatpush1.bf16.msra.mxu0 0
      %584 = vmatprep.subr.bf16.mxu0 0
      %585 = vmatpush1.bf16.msra.mxu0 0
      %586 = vmatprep.subr.bf16.mxu0 0
      %587 = vmatpush1.bf16.msra.mxu0 0
      %588 = vmatprep.subr.bf16.mxu0 0
      %589 = vmatpush1.bf16.msra.mxu0 0
      %590 = vmatprep.mubr.bf16.mxu0 0
      %591 = vmatmul.mubr.bf16.gmra.mrb[0].mxu0 %v204
      %v592 = vpop.f32.mrb[0].mxu0
      %v593 = vadd.f32 %v384, %v592
      %v594 = vpop.f32.mrb[0].mxu0
      %v595 = vpop.f32.mrb[0].mxu0
      %v596 = vadd.f32 %v387, %v595
      %v597 = vpop.f32.mrb[0].mxu0
      %598 = vmatprep.mubr.bf16.mxu0 0
      %599 = vmatmul.mubr.bf16.gmra.mrb[0].mxu0 %v205
      %v600 = vpop.f32.mrb[0].mxu0
      %v601 = vadd.f32 %v392, %v600
      %v602 = vpop.f32.mrb[0].mxu0
      %v603 = vpop.f32.mrb[0].mxu0
      %v604 = vadd.f32 %v395, %v603
      %v605 = vpop.f32.mrb[0].mxu0
      %606 = vmatprep.mubr.bf16.mxu0 0
      %607 = vmatmul.mubr.bf16.gmra.mrb[0].mxu0 %v206
      %v608 = vpop.f32.mrb[0].mxu0
      %v609 = vadd.f32 %v400, %v608
      %v610 = vpop.f32.mrb[0].mxu0
      %v611 = vpop.f32.mrb[0].mxu0
      %v612 = vadd.f32 %v403, %v611
      %v613 = vpop.f32.mrb[0].mxu0
      %614 = vmatprep.mubr.bf16.mxu0 0
      %615 = vmatmul.mubr.bf16.gmra.mrb[0].mxu0 %v207
      %v616 = vpop.f32.mrb[0].mxu0
      %v617 = vadd.f32 %v408, %v616
      %v618 = vpop.f32.mrb[0].mxu0
      %v619 = vpop.f32.mrb[0].mxu0
      %v620 = vadd.f32 %v411, %v619
      %v621 = vpop.f32.mrb[0].mxu0
      %622 = vmatprep.mubr.bf16.mxu0 0
      %623 = vmatmul.mubr.bf16.gmra.mrb[0].mxu0 %v208
      %v624 = vpop.f32.mrb[0].mxu0
      %v625 = vadd.f32 %v416, %v624
      %v626 = vpop.f32.mrb[0].mxu0
      %v627 = vpop.f32.mrb[0].mxu0
      %v628 = vadd.f32 %v419, %v627
      %v629 = vpop.f32.mrb[0].mxu0
      %630 = vmatprep.mubr.bf16.mxu0 0
      %631 = vmatmul.mubr.bf16.gmra.mrb[0].mxu0 %v209
      %v632 = vpop.f32.mrb[0].mxu0
      %v633 = vadd.f32 %v424, %v632
      %v634 = vpop.f32.mrb[0].mxu0
      %v635 = vpop.f32.mrb[0].mxu0
      %v636 = vadd.f32 %v427, %v635
      %v637 = vpop.f32.mrb[0].mxu0
      %638 = vmatprep.mubr.bf16.mxu0 0
      %639 = vmatmul.mubr.bf16.gmra.mrb[0].mxu0 %v210
      %v640 = vpop.f32.mrb[0].mxu0
      %v641 = vadd.f32 %v432, %v640
      %v642 = vpop.f32.mrb[0].mxu0
      %v643 = vpop.f32.mrb[0].mxu0
      %v644 = vadd.f32 %v435, %v643
      %v645 = vpop.f32.mrb[0].mxu0
      %646 = vmatprep.mubr.bf16.mxu0 0
      %647 = vmatmul.mubr.bf16.gmra.mrb[0].mxu0 %v211
      %v648 = vpop.f32.mrb[0].mxu0
      %v649 = vadd.f32 %v440, %v648
      %v650 = vpop.f32.mrb[0].mxu0
      %v651 = vpop.f32.mrb[0].mxu0
      %v652 = vadd.f32 %v443, %v651
      %v653 = vpop.f32.mrb[0].mxu0
      %654 = vmatprep.mubr.bf16.mxu0 0
      %655 = vmatmul.mubr.bf16.gmra.mrb[0].mxu0 %v212
      %v656 = vpop.f32.mrb[0].mxu0
      %v657 = vadd.f32 %v448, %v656
      %v658 = vpop.f32.mrb[0].mxu0
      %v659 = vpop.f32.mrb[0].mxu0
      %v660 = vadd.f32 %v451, %v659
      %v661 = vpop.f32.mrb[0].mxu0
      %662 = vmatprep.mubr.bf16.mxu0 0
      %663 = vmatmul.mubr.bf16.gmra.mrb[0].mxu0 %v213
      %v664 = vpop.f32.mrb[0].mxu0
      %v665 = vadd.f32 %v456, %v664
      %v666 = vpop.f32.mrb[0].mxu0
      %v667 = vpop.f32.mrb[0].mxu0
      %v668 = vadd.f32 %v459, %v667
      %v669 = vpop.f32.mrb[0].mxu0
      %670 = vmatprep.mubr.bf16.mxu0 0
      %671 = vmatmul.mubr.bf16.gmra.mrb[0].mxu0 %v214
      %v672 = vpop.f32.mrb[0].mxu0
      %v673 = vadd.f32 %v464, %v672
      %v674 = vpop.f32.mrb[0].mxu0
      %v675 = vpop.f32.mrb[0].mxu0
      %v676 = vadd.f32 %v467, %v675
      %v677 = vpop.f32.mrb[0].mxu0
      %678 = vmatprep.mubr.bf16.mxu0 0
      %679 = vmatmul.mubr.bf16.gmra.mrb[0].mxu0 %v215
      %v680 = vpop.f32.mrb[0].mxu0
      %v681 = vadd.f32 %v472, %v680
      %v682 = vpop.f32.mrb[0].mxu0
      %v683 = vpop.f32.mrb[0].mxu0
      %v684 = vadd.f32 %v475, %v683
      %v685 = vpop.f32.mrb[0].mxu0
      %686 = vmatprep.mubr.bf16.mxu0 0
      %687 = vmatmul.mubr.bf16.gmra.mrb[0].mxu0 %v216
      %v688 = vpop.f32.mrb[0].mxu0
      %v689 = vadd.f32 %v480, %v688
      %v690 = vpop.f32.mrb[0].mxu0
      %v691 = vpop.f32.mrb[0].mxu0
      %v692 = vadd.f32 %v483, %v691
      %v693 = vpop.f32.mrb[0].mxu0
      %694 = vmatprep.mubr.bf16.mxu0 0
      %695 = vmatmul.mubr.bf16.gmra.mrb[0].mxu0 %v217
      %v696 = vpop.f32.mrb[0].mxu0
      %v697 = vadd.f32 %v488, %v696
      %v698 = vpop.f32.mrb[0].mxu0
      %v699 = vpop.f32.mrb[0].mxu0
      %v700 = vadd.f32 %v491, %v699
      %v701 = vpop.f32.mrb[0].mxu0
      %702 = vmatprep.mubr.bf16.mxu0 0
      %703 = vmatmul.mubr.bf16.gmra.mrb[0].mxu0 %v218
      %v704 = vpop.f32.mrb[0].mxu0
      %v705 = vadd.f32 %v496, %v704
      %v706 = vpop.f32.mrb[0].mxu0
      %v707 = vpop.f32.mrb[0].mxu0
      %v708 = vadd.f32 %v499, %v707
      %v709 = vpop.f32.mrb[0].mxu0
      %710 = vmatprep.mubr.bf16.mxu0 0
      %711 = vmatmul.mubr.bf16.gmra.mrb[0].mxu0 %v219
      %v712 = vpop.f32.mrb[0].mxu0
      %v713 = vadd.f32 %v504, %v712
      %v714 = vpop.f32.mrb[0].mxu0
      %v715 = vpop.f32.mrb[0].mxu0
      %v716 = vadd.f32 %v507, %v715
      %v717 = vpop.f32.mrb[0].mxu0
      %718 = vdwg.mxu0
      %v719 = vld [vmem:[%s165 + $0x2] sm:$0xff]
      %v720 = vld [vmem:[%s165 + $0xa] sm:$0xff]
      %v721 = vld [vmem:[%s165 + $0x1a] sm:$0xff]
      %v722 = vld [vmem:[%s165 + $0x22] sm:$0xff]
      %v723 = vld [vmem:[%s165 + $0x32] sm:$0xff]
      %v724 = vld [vmem:[%s165 + $0x3a] sm:$0xff]
      %v725 = vld [vmem:[%s165 + $0x4a] sm:$0xff]
      %v726 = vld [vmem:[%s165 + $0x52] sm:$0xff]
      %v727 = vld [vmem:[%s165 + $0x62] sm:$0xff]
      %v728 = vld [vmem:[%s165 + $0x6a] sm:$0xff]
      %v729 = vld [vmem:[%s165 + $0x7a] sm:$0xff]
      %v730 = vld [vmem:[%s165 + $0x82] sm:$0xff]
      %v731 = vld [vmem:[%s165 + $0x92] sm:$0xff]
      %v732 = vld [vmem:[%s165 + $0x9a] sm:$0xff]
      %v733 = vld [vmem:[%s165 + $0xaa] sm:$0xff]
      %v734 = vld [vmem:[%s165 + $0xb2] sm:$0xff]
      %v735 = vld [vmem:[%s165 + $0xc2] sm:$0xff]
      %v736 = vld [vmem:[%s165 + $0xca] sm:$0xff]
      %v737 = vld [vmem:[%s165 + $0xda] sm:$0xff]
      %v738 = vld [vmem:[%s165 + $0xe2] sm:$0xff]
      %v739 = vld [vmem:[%s165 + $0xf2] sm:$0xff]
      %v740 = vld [vmem:[%s165 + $0xfa] sm:$0xff]
      %v741 = vld [vmem:[%s165 + $0x10a] sm:$0xff]
      %v742 = vld [vmem:[%s165 + $0x112] sm:$0xff]
      %v743 = vld [vmem:[%s165 + $0x122] sm:$0xff]
      %v744 = vld [vmem:[%s165 + $0x12a] sm:$0xff]
      %v745 = vld [vmem:[%s165 + $0x13a] sm:$0xff]
      %v746 = vld [vmem:[%s165 + $0x142] sm:$0xff]
      %v747 = vld [vmem:[%s165 + $0x152] sm:$0xff]
      %v748 = vld [vmem:[%s165 + $0x15a] sm:$0xff]
      %v749 = vld [vmem:[%s165 + $0x16a] sm:$0xff]
      %v750 = vld [vmem:[%s165 + $0x172] sm:$0xff]
      %v751 = vpack.c.bf16 %v720, %v719
      %v752 = vpack.c.bf16 %v722, %v721
      %v753 = vpack.c.bf16 %v724, %v723
      %v754 = vpack.c.bf16 %v726, %v725
      %v755 = vpack.c.bf16 %v728, %v727
      %v756 = vpack.c.bf16 %v730, %v729
      %v757 = vpack.c.bf16 %v732, %v731
      %v758 = vpack.c.bf16 %v734, %v733
      %v759 = vpack.c.bf16 %v736, %v735
      %v760 = vpack.c.bf16 %v738, %v737
      %v761 = vpack.c.bf16 %v740, %v739
      %v762 = vpack.c.bf16 %v742, %v741
      %v763 = vpack.c.bf16 %v744, %v743
      %v764 = vpack.c.bf16 %v746, %v745
      %v765 = vpack.c.bf16 %v748, %v747
      %v766 = vpack.c.bf16 %v750, %v749
      %s767 = scalar_lea.vmem %s1, 128
      %v768 = vld [vmem:[%s767] sm:$0xf]
      %v769 = vld [vmem:[%s767 + $0x4] sm:$0xf]
      %v770 = vld [vmem:[%s767 + $0x8] sm:$0xf]
      %v771 = vld [vmem:[%s767 + $0xc] sm:$0xf]
      %v772 = vld [vmem:[%s767 + $0x10] sm:$0xf]
      %v773 = vld [vmem:[%s767 + $0x14] sm:$0xf]
      %v774 = vld [vmem:[%s767 + $0x18] sm:$0xf]
      %v775 = vld [vmem:[%s767 + $0x1c] sm:$0xf]
      %v776 = vld [vmem:[%s767 + $0x20] sm:$0xf]
      %v777 = vld [vmem:[%s767 + $0x24] sm:$0xf]
      %v778 = vld [vmem:[%s767 + $0x28] sm:$0xf]
      %v779 = vld [vmem:[%s767 + $0x2c] sm:$0xf]
      %v780 = vld [vmem:[%s767 + $0x30] sm:$0xf]
      %v781 = vld [vmem:[%s767 + $0x34] sm:$0xf]
      %v782 = vld [vmem:[%s767 + $0x38] sm:$0xf]
      %v783 = vld [vmem:[%s767 + $0x3c] sm:$0xf]
      %v800 = vunpack.c.l.b16 %v768
      %v801 = vunpack.c.l.b16 %v769
      %v802 = vunpack.c.l.b16 %v770
      %v803 = vunpack.c.l.b16 %v771
      %v804 = vunpack.c.l.b16 %v772
      %v805 = vunpack.c.l.b16 %v773
      %v806 = vunpack.c.l.b16 %v774
      %v807 = vunpack.c.l.b16 %v775
      %v808 = vunpack.c.l.b16 %v776
      %v809 = vunpack.c.l.b16 %v777
      %v810 = vunpack.c.l.b16 %v778
      %v811 = vunpack.c.l.b16 %v779
      %v812 = vunpack.c.l.b16 %v780
      %v813 = vunpack.c.l.b16 %v781
      %v814 = vunpack.c.l.b16 %v782
      %v815 = vunpack.c.l.b16 %v783
      %v816 = vpack.c.b16 %v801, %v800
      %v817 = vpack.c.b16 %v803, %v802
      %v818 = vpack.c.b16 %v805, %v804
      %v819 = vpack.c.b16 %v807, %v806
      %v820 = vpack.c.b16 %v809, %v808
      %v821 = vpack.c.b16 %v811, %v810
      %v822 = vpack.c.b16 %v813, %v812
      %v823 = vpack.c.b16 %v815, %v814
      %832 = vmatprep.subr.bf16.mxu0 0
      %833 = vmatpush1.bf16.msra.mxu0 %v816
      %834 = vmatprep.subr.bf16.mxu0 0
      %835 = vmatpush1.bf16.msra.mxu0 %v817
      %836 = vmatprep.subr.bf16.mxu0 0
      %837 = vmatpush1.bf16.msra.mxu0 %v818
      %838 = vmatprep.subr.bf16.mxu0 0
      %839 = vmatpush1.bf16.msra.mxu0 %v819
      %840 = vmatprep.subr.bf16.mxu0 0
      %841 = vmatpush1.bf16.msra.mxu0 %v820
      %842 = vmatprep.subr.bf16.mxu0 0
      %843 = vmatpush1.bf16.msra.mxu0 %v821
      %844 = vmatprep.subr.bf16.mxu0 0
      %845 = vmatpush1.bf16.msra.mxu0 %v822
      %846 = vmatprep.subr.bf16.mxu0 0
      %847 = vmatpush1.bf16.msra.mxu0 %v823
      %848 = vmatprep.subr.bf16.mxu0 0
      %849 = vmatpush1.bf16.msra.mxu0 0
      %850 = vmatprep.subr.bf16.mxu0 0
      %851 = vmatpush1.bf16.msra.mxu0 0
      %852 = vmatprep.subr.bf16.mxu0 0
      %853 = vmatpush1.bf16.msra.mxu0 0
      %854 = vmatprep.subr.bf16.mxu0 0
      %855 = vmatpush1.bf16.msra.mxu0 0
      %856 = vmatprep.subr.bf16.mxu0 0
      %857 = vmatpush1.bf16.msra.mxu0 0
      %858 = vmatprep.subr.bf16.mxu0 0
      %859 = vmatpush1.bf16.msra.mxu0 0
      %860 = vmatprep.subr.bf16.mxu0 0
      %861 = vmatpush1.bf16.msra.mxu0 0
      %862 = vmatprep.subr.bf16.mxu0 0
      %863 = vmatpush1.bf16.msra.mxu0 0
      %864 = vmatprep.mubr.bf16.mxu0 0
      %865 = vmatmul.mubr.bf16.gmra.mrb[0].mxu0 %v751
      %v866 = vpop.f32.mrb[0].mxu0
      %v867 = vadd.f32 0.0, %v866
      %v868 = vpop.f32.mrb[0].mxu0
      %v869 = vpop.f32.mrb[0].mxu0
      %v870 = vadd.f32 0.0, %v869
      %v871 = vpop.f32.mrb[0].mxu0
      %872 = vmatprep.mubr.bf16.mxu0 0
      %873 = vmatmul.mubr.bf16.gmra.mrb[0].mxu0 %v752
      %v874 = vpop.f32.mrb[0].mxu0
      %v875 = vadd.f32 0.0, %v874
      %v876 = vpop.f32.mrb[0].mxu0
      %v877 = vpop.f32.mrb[0].mxu0
      %v878 = vadd.f32 0.0, %v877
      %v879 = vpop.f32.mrb[0].mxu0
      %880 = vmatprep.mubr.bf16.mxu0 0
      %881 = vmatmul.mubr.bf16.gmra.mrb[0].mxu0 %v753
      %v882 = vpop.f32.mrb[0].mxu0
      %v883 = vadd.f32 0.0, %v882
      %v884 = vpop.f32.mrb[0].mxu0
      %v885 = vpop.f32.mrb[0].mxu0
      %v886 = vadd.f32 0.0, %v885
      %v887 = vpop.f32.mrb[0].mxu0
      %888 = vmatprep.mubr.bf16.mxu0 0
      %889 = vmatmul.mubr.bf16.gmra.mrb[0].mxu0 %v754
      %v890 = vpop.f32.mrb[0].mxu0
      %v891 = vadd.f32 0.0, %v890
      %v892 = vpop.f32.mrb[0].mxu0
      %v893 = vpop.f32.mrb[0].mxu0
      %v894 = vadd.f32 0.0, %v893
      %v895 = vpop.f32.mrb[0].mxu0
      %896 = vmatprep.mubr.bf16.mxu0 0
      %897 = vmatmul.mubr.bf16.gmra.mrb[0].mxu0 %v755
      %v898 = vpop.f32.mrb[0].mxu0
      %v899 = vadd.f32 0.0, %v898
      %v900 = vpop.f32.mrb[0].mxu0
      %v901 = vpop.f32.mrb[0].mxu0
      %v902 = vadd.f32 0.0, %v901
      %v903 = vpop.f32.mrb[0].mxu0
      %904 = vmatprep.mubr.bf16.mxu0 0
      %905 = vmatmul.mubr.bf16.gmra.mrb[0].mxu0 %v756
      %v906 = vpop.f32.mrb[0].mxu0
      %v907 = vadd.f32 0.0, %v906
      %v908 = vpop.f32.mrb[0].mxu0
      %v909 = vpop.f32.mrb[0].mxu0
      %v910 = vadd.f32 0.0, %v909
      %v911 = vpop.f32.mrb[0].mxu0
      %912 = vmatprep.mubr.bf16.mxu0 0
      %913 = vmatmul.mubr.bf16.gmra.mrb[0].mxu0 %v757
      %v914 = vpop.f32.mrb[0].mxu0
      %v915 = vadd.f32 0.0, %v914
      %v916 = vpop.f32.mrb[0].mxu0
      %v917 = vpop.f32.mrb[0].mxu0
      %v918 = vadd.f32 0.0, %v917
      %v919 = vpop.f32.mrb[0].mxu0
      %920 = vmatprep.mubr.bf16.mxu0 0
      %921 = vmatmul.mubr.bf16.gmra.mrb[0].mxu0 %v758
      %v922 = vpop.f32.mrb[0].mxu0
      %v923 = vadd.f32 0.0, %v922
      %v924 = vpop.f32.mrb[0].mxu0
      %v925 = vpop.f32.mrb[0].mxu0
      %v926 = vadd.f32 0.0, %v925
      %v927 = vpop.f32.mrb[0].mxu0
      %928 = vmatprep.mubr.bf16.mxu0 0
      %929 = vmatmul.mubr.bf16.gmra.mrb[0].mxu0 %v759
      %v930 = vpop.f32.mrb[0].mxu0
      %v931 = vadd.f32 0.0, %v930
      %v932 = vpop.f32.mrb[0].mxu0
      %v933 = vpop.f32.mrb[0].mxu0
      %v934 = vadd.f32 0.0, %v933
      %v935 = vpop.f32.mrb[0].mxu0
      %936 = vmatprep.mubr.bf16.mxu0 0
      %937 = vmatmul.mubr.bf16.gmra.mrb[0].mxu0 %v760
      %v938 = vpop.f32.mrb[0].mxu0
      %v939 = vadd.f32 0.0, %v938
      %v940 = vpop.f32.mrb[0].mxu0
      %v941 = vpop.f32.mrb[0].mxu0
      %v942 = vadd.f32 0.0, %v941
      %v943 = vpop.f32.mrb[0].mxu0
      %944 = vmatprep.mubr.bf16.mxu0 0
      %945 = vmatmul.mubr.bf16.gmra.mrb[0].mxu0 %v761
      %v946 = vpop.f32.mrb[0].mxu0
      %v947 = vadd.f32 0.0, %v946
      %v948 = vpop.f32.mrb[0].mxu0
      %v949 = vpop.f32.mrb[0].mxu0
      %v950 = vadd.f32 0.0, %v949
      %v951 = vpop.f32.mrb[0].mxu0
      %952 = vmatprep.mubr.bf16.mxu0 0
      %953 = vmatmul.mubr.bf16.gmra.mrb[0].mxu0 %v762
      %v954 = vpop.f32.mrb[0].mxu0
      %v955 = vadd.f32 0.0, %v954
      %v956 = vpop.f32.mrb[0].mxu0
      %v957 = vpop.f32.mrb[0].mxu0
      %v958 = vadd.f32 0.0, %v957
      %v959 = vpop.f32.mrb[0].mxu0
      %960 = vmatprep.mubr.bf16.mxu0 0
      %961 = vmatmul.mubr.bf16.gmra.mrb[0].mxu0 %v763
      %v962 = vpop.f32.mrb[0].mxu0
      %v963 = vadd.f32 0.0, %v962
      %v964 = vpop.f32.mrb[0].mxu0
      %v965 = vpop.f32.mrb[0].mxu0
      %v966 = vadd.f32 0.0, %v965
      %v967 = vpop.f32.mrb[0].mxu0
      %968 = vmatprep.mubr.bf16.mxu0 0
      %969 = vmatmul.mubr.bf16.gmra.mrb[0].mxu0 %v764
      %v970 = vpop.f32.mrb[0].mxu0
      %v971 = vadd.f32 0.0, %v970
      %v972 = vpop.f32.mrb[0].mxu0
      %v973 = vpop.f32.mrb[0].mxu0
      %v974 = vadd.f32 0.0, %v973
      %v975 = vpop.f32.mrb[0].mxu0
      %976 = vmatprep.mubr.bf16.mxu0 0
      %977 = vmatmul.mubr.bf16.gmra.mrb[0].mxu0 %v765
      %v978 = vpop.f32.mrb[0].mxu0
      %v979 = vadd.f32 0.0, %v978
      %v980 = vpop.f32.mrb[0].mxu0
      %v981 = vpop.f32.mrb[0].mxu0
      %v982 = vadd.f32 0.0, %v981
      %v983 = vpop.f32.mrb[0].mxu0
      %984 = vmatprep.mubr.bf16.mxu0 0
      %985 = vmatmul.mubr.bf16.gmra.mrb[0].mxu0 %v766
      %v986 = vpop.f32.mrb[0].mxu0
      %v987 = vadd.f32 0.0, %v986
      %v988 = vpop.f32.mrb[0].mxu0
      %v989 = vpop.f32.mrb[0].mxu0
      %v990 = vadd.f32 0.0, %v989
      %v991 = vpop.f32.mrb[0].mxu0
      %992 = vdwg.mxu0
      %v993 = vadd.f32 %v593, %v867
      %v994 = vadd.f32 %v596, %v870
      %v995 = vadd.f32 %v601, %v875
      %v996 = vadd.f32 %v604, %v878
      %v997 = vadd.f32 %v609, %v883
      %v998 = vadd.f32 %v612, %v886
      %v999 = vadd.f32 %v617, %v891
      %v1000 = vadd.f32 %v620, %v894
      %v1001 = vadd.f32 %v625, %v899
      %v1002 = vadd.f32 %v628, %v902
      %v1003 = vadd.f32 %v633, %v907
      %v1004 = vadd.f32 %v636, %v910
      %v1005 = vadd.f32 %v641, %v915
      %v1006 = vadd.f32 %v644, %v918
      %v1007 = vadd.f32 %v649, %v923
      %v1008 = vadd.f32 %v652, %v926
      %v1009 = vadd.f32 %v657, %v931
      %v1010 = vadd.f32 %v660, %v934
      %v1011 = vadd.f32 %v665, %v939
      %v1012 = vadd.f32 %v668, %v942
      %v1013 = vadd.f32 %v673, %v947
      %v1014 = vadd.f32 %v676, %v950
      %v1015 = vadd.f32 %v681, %v955
      %v1016 = vadd.f32 %v684, %v958
      %v1017 = vadd.f32 %v689, %v963
      %v1018 = vadd.f32 %v692, %v966
      %v1019 = vadd.f32 %v697, %v971
      %v1020 = vadd.f32 %v700, %v974
      %v1021 = vadd.f32 %v705, %v979
      %v1022 = vadd.f32 %v708, %v982
      %v1023 = vadd.f32 %v713, %v987
      %v1024 = vadd.f32 %v716, %v990
      %s1025 = scalar_lea.vmem %s165, 24
      %v1026 = vld [vmem:[%s1025] sm:$0xff]
      %v1027 = vld [vmem:[%s1025 + $0x8] sm:$0xff]
      %v1028 = vld [vmem:[%s1025 + $0x18] sm:$0xff]
      %v1029 = vld [vmem:[%s1025 + $0x20] sm:$0xff]
      %v1030 = vld [vmem:[%s1025 + $0x30] sm:$0xff]
      %v1031 = vld [vmem:[%s1025 + $0x38] sm:$0xff]
      %v1032 = vld [vmem:[%s1025 + $0x48] sm:$0xff]
      %v1033 = vld [vmem:[%s1025 + $0x50] sm:$0xff]
      %v1034 = vld [vmem:[%s1025 + $0x60] sm:$0xff]
      %v1035 = vld [vmem:[%s1025 + $0x68] sm:$0xff]
      %v1036 = vld [vmem:[%s1025 + $0x78] sm:$0xff]
      %v1037 = vld [vmem:[%s1025 + $0x80] sm:$0xff]
      %v1038 = vld [vmem:[%s1025 + $0x90] sm:$0xff]
      %v1039 = vld [vmem:[%s1025 + $0x98] sm:$0xff]
      %v1040 = vld [vmem:[%s1025 + $0xa8] sm:$0xff]
      %v1041 = vld [vmem:[%s1025 + $0xb0] sm:$0xff]
      %v1042 = vld [vmem:[%s1025 + $0xc0] sm:$0xff]
      %v1043 = vld [vmem:[%s1025 + $0xc8] sm:$0xff]
      %v1044 = vld [vmem:[%s1025 + $0xd8] sm:$0xff]
      %v1045 = vld [vmem:[%s1025 + $0xe0] sm:$0xff]
      %v1046 = vld [vmem:[%s1025 + $0xf0] sm:$0xff]
      %v1047 = vld [vmem:[%s1025 + $0xf8] sm:$0xff]
      %v1048 = vld [vmem:[%s1025 + $0x108] sm:$0xff]
      %v1049 = vld [vmem:[%s1025 + $0x110] sm:$0xff]
      %v1050 = vld [vmem:[%s1025 + $0x120] sm:$0xff]
      %v1051 = vld [vmem:[%s1025 + $0x128] sm:$0xff]
      %v1052 = vld [vmem:[%s1025 + $0x138] sm:$0xff]
      %v1053 = vld [vmem:[%s1025 + $0x140] sm:$0xff]
      %v1054 = vld [vmem:[%s1025 + $0x150] sm:$0xff]
      %v1055 = vld [vmem:[%s1025 + $0x158] sm:$0xff]
      %v1056 = vld [vmem:[%s1025 + $0x168] sm:$0xff]
      %v1057 = vld [vmem:[%s1025 + $0x170] sm:$0xff]
      %v1058 = vpack.c.bf16 %v1027, %v1026
      %v1059 = vpack.c.bf16 %v1029, %v1028
      %v1060 = vpack.c.bf16 %v1031, %v1030
      %v1061 = vpack.c.bf16 %v1033, %v1032
      %v1062 = vpack.c.bf16 %v1035, %v1034
      %v1063 = vpack.c.bf16 %v1037, %v1036
      %v1064 = vpack.c.bf16 %v1039, %v1038
      %v1065 = vpack.c.bf16 %v1041, %v1040
      %v1066 = vpack.c.bf16 %v1043, %v1042
      %v1067 = vpack.c.bf16 %v1045, %v1044
      %v1068 = vpack.c.bf16 %v1047, %v1046
      %v1069 = vpack.c.bf16 %v1049, %v1048
      %v1070 = vpack.c.bf16 %v1051, %v1050
      %v1071 = vpack.c.bf16 %v1053, %v1052
      %v1072 = vpack.c.bf16 %v1055, %v1054
      %v1073 = vpack.c.bf16 %v1057, %v1056
      %s1074 = scalar_lea.vmem %s1, 192
      %v1075 = vld [vmem:[%s1074] sm:$0xf]
      %v1076 = vld [vmem:[%s1074 + $0x4] sm:$0xf]
      %v1077 = vld [vmem:[%s1074 + $0x8] sm:$0xf]
      %v1078 = vld [vmem:[%s1074 + $0xc] sm:$0xf]
      %v1079 = vld [vmem:[%s1074 + $0x10] sm:$0xf]
      %v1080 = vld [vmem:[%s1074 + $0x14] sm:$0xf]
      %v1081 = vld [vmem:[%s1074 + $0x18] sm:$0xf]
      %v1082 = vld [vmem:[%s1074 + $0x1c] sm:$0xf]
      %v1083 = vld [vmem:[%s1074 + $0x20] sm:$0xf]
      %v1084 = vld [vmem:[%s1074 + $0x24] sm:$0xf]
      %v1085 = vld [vmem:[%s1074 + $0x28] sm:$0xf]
      %v1086 = vld [vmem:[%s1074 + $0x2c] sm:$0xf]
      %v1087 = vld [vmem:[%s1074 + $0x30] sm:$0xf]
      %v1088 = vld [vmem:[%s1074 + $0x34] sm:$0xf]
      %v1089 = vld [vmem:[%s1074 + $0x38] sm:$0xf]
      %v1090 = vld [vmem:[%s1074 + $0x3c] sm:$0xf]
      %v1107 = vunpack.c.l.b16 %v1075
      %v1108 = vunpack.c.l.b16 %v1076
      %v1109 = vunpack.c.l.b16 %v1077
      %v1110 = vunpack.c.l.b16 %v1078
      %v1111 = vunpack.c.l.b16 %v1079
      %v1112 = vunpack.c.l.b16 %v1080
      %v1113 = vunpack.c.l.b16 %v1081
      %v1114 = vunpack.c.l.b16 %v1082
      %v1115 = vunpack.c.l.b16 %v1083
      %v1116 = vunpack.c.l.b16 %v1084
      %v1117 = vunpack.c.l.b16 %v1085
      %v1118 = vunpack.c.l.b16 %v1086
      %v1119 = vunpack.c.l.b16 %v1087
      %v1120 = vunpack.c.l.b16 %v1088
      %v1121 = vunpack.c.l.b16 %v1089
      %v1122 = vunpack.c.l.b16 %v1090
      %v1123 = vpack.c.b16 %v1108, %v1107
      %v1124 = vpack.c.b16 %v1110, %v1109
      %v1125 = vpack.c.b16 %v1112, %v1111
      %v1126 = vpack.c.b16 %v1114, %v1113
      %v1127 = vpack.c.b16 %v1116, %v1115
      %v1128 = vpack.c.b16 %v1118, %v1117
      %v1129 = vpack.c.b16 %v1120, %v1119
      %v1130 = vpack.c.b16 %v1122, %v1121
      %1139 = vmatprep.subr.bf16.mxu0 0
      %1140 = vmatpush1.bf16.msra.mxu0 %v1123
      %1141 = vmatprep.subr.bf16.mxu0 0
      %1142 = vmatpush1.bf16.msra.mxu0 %v1124
      %1143 = vmatprep.subr.bf16.mxu0 0
      %1144 = vmatpush1.bf16.msra.mxu0 %v1125
      %1145 = vmatprep.subr.bf16.mxu0 0
      %1146 = vmatpush1.bf16.msra.mxu0 %v1126
      %1147 = vmatprep.subr.bf16.mxu0 0
      %1148 = vmatpush1.bf16.msra.mxu0 %v1127
      %1149 = vmatprep.subr.bf16.mxu0 0
      %1150 = vmatpush1.bf16.msra.mxu0 %v1128
      %1151 = vmatprep.subr.bf16.mxu0 0
      %1152 = vmatpush1.bf16.msra.mxu0 %v1129
      %1153 = vmatprep.subr.bf16.mxu0 0
      %1154 = vmatpush1.bf16.msra.mxu0 %v1130
      %1155 = vmatprep.subr.bf16.mxu0 0
      %1156 = vmatpush1.bf16.msra.mxu0 0
      %1157 = vmatprep.subr.bf16.mxu0 0
      %1158 = vmatpush1.bf16.msra.mxu0 0
      %1159 = vmatprep.subr.bf16.mxu0 0
      %1160 = vmatpush1.bf16.msra.mxu0 0
      %1161 = vmatprep.subr.bf16.mxu0 0
      %1162 = vmatpush1.bf16.msra.mxu0 0
      %1163 = vmatprep.subr.bf16.mxu0 0
      %1164 = vmatpush1.bf16.msra.mxu0 0
      %1165 = vmatprep.subr.bf16.mxu0 0
      %1166 = vmatpush1.bf16.msra.mxu0 0
      %1167 = vmatprep.subr.bf16.mxu0 0
      %1168 = vmatpush1.bf16.msra.mxu0 0
      %1169 = vmatprep.subr.bf16.mxu0 0
      %1170 = vmatpush1.bf16.msra.mxu0 0
      %1171 = vmatprep.mubr.bf16.mxu0 0
      %1172 = vmatmul.mubr.bf16.gmra.mrb[0].mxu0 %v1058
      %v1173 = vpop.f32.mrb[0].mxu0
      %v1174 = vadd.f32 0.0, %v1173
      %v1175 = vpop.f32.mrb[0].mxu0
      %v1176 = vpop.f32.mrb[0].mxu0
      %v1177 = vadd.f32 0.0, %v1176
      %v1178 = vpop.f32.mrb[0].mxu0
      %1179 = vmatprep.mubr.bf16.mxu0 0
      %1180 = vmatmul.mubr.bf16.gmra.mrb[0].mxu0 %v1059
      %v1181 = vpop.f32.mrb[0].mxu0
      %v1182 = vadd.f32 0.0, %v1181
      %v1183 = vpop.f32.mrb[0].mxu0
      %v1184 = vpop.f32.mrb[0].mxu0
      %v1185 = vadd.f32 0.0, %v1184
      %v1186 = vpop.f32.mrb[0].mxu0
      %1187 = vmatprep.mubr.bf16.mxu0 0
      %1188 = vmatmul.mubr.bf16.gmra.mrb[0].mxu0 %v1060
      %v1189 = vpop.f32.mrb[0].mxu0
      %v1190 = vadd.f32 0.0, %v1189
      %v1191 = vpop.f32.mrb[0].mxu0
      %v1192 = vpop.f32.mrb[0].mxu0
      %v1193 = vadd.f32 0.0, %v1192
      %v1194 = vpop.f32.mrb[0].mxu0
      %1195 = vmatprep.mubr.bf16.mxu0 0
      %1196 = vmatmul.mubr.bf16.gmra.mrb[0].mxu0 %v1061
      %v1197 = vpop.f32.mrb[0].mxu0
      %v1198 = vadd.f32 0.0, %v1197
      %v1199 = vpop.f32.mrb[0].mxu0
      %v1200 = vpop.f32.mrb[0].mxu0
      %v1201 = vadd.f32 0.0, %v1200
      %v1202 = vpop.f32.mrb[0].mxu0
      %1203 = vmatprep.mubr.bf16.mxu0 0
      %1204 = vmatmul.mubr.bf16.gmra.mrb[0].mxu0 %v1062
      %v1205 = vpop.f32.mrb[0].mxu0
      %v1206 = vadd.f32 0.0, %v1205
      %v1207 = vpop.f32.mrb[0].mxu0
      %v1208 = vpop.f32.mrb[0].mxu0
      %v1209 = vadd.f32 0.0, %v1208
      %v1210 = vpop.f32.mrb[0].mxu0
      %1211 = vmatprep.mubr.bf16.mxu0 0
      %1212 = vmatmul.mubr.bf16.gmra.mrb[0].mxu0 %v1063
      %v1213 = vpop.f32.mrb[0].mxu0
      %v1214 = vadd.f32 0.0, %v1213
      %v1215 = vpop.f32.mrb[0].mxu0
      %v1216 = vpop.f32.mrb[0].mxu0
      %v1217 = vadd.f32 0.0, %v1216
      %v1218 = vpop.f32.mrb[0].mxu0
      %1219 = vmatprep.mubr.bf16.mxu0 0
      %1220 = vmatmul.mubr.bf16.gmra.mrb[0].mxu0 %v1064
      %v1221 = vpop.f32.mrb[0].mxu0
      %v1222 = vadd.f32 0.0, %v1221
      %v1223 = vpop.f32.mrb[0].mxu0
      %v1224 = vpop.f32.mrb[0].mxu0
      %v1225 = vadd.f32 0.0, %v1224
      %v1226 = vpop.f32.mrb[0].mxu0
      %1227 = vmatprep.mubr.bf16.mxu0 0
      %1228 = vmatmul.mubr.bf16.gmra.mrb[0].mxu0 %v1065
      %v1229 = vpop.f32.mrb[0].mxu0
      %v1230 = vadd.f32 0.0, %v1229
      %v1231 = vpop.f32.mrb[0].mxu0
      %v1232 = vpop.f32.mrb[0].mxu0
      %v1233 = vadd.f32 0.0, %v1232
      %v1234 = vpop.f32.mrb[0].mxu0
      %1235 = vmatprep.mubr.bf16.mxu0 0
      %1236 = vmatmul.mubr.bf16.gmra.mrb[0].mxu0 %v1066
      %v1237 = vpop.f32.mrb[0].mxu0
      %v1238 = vadd.f32 0.0, %v1237
      %v1239 = vpop.f32.mrb[0].mxu0
      %v1240 = vpop.f32.mrb[0].mxu0
      %v1241 = vadd.f32 0.0, %v1240
      %v1242 = vpop.f32.mrb[0].mxu0
      %1243 = vmatprep.mubr.bf16.mxu0 0
      %1244 = vmatmul.mubr.bf16.gmra.mrb[0].mxu0 %v1067
      %v1245 = vpop.f32.mrb[0].mxu0
      %v1246 = vadd.f32 0.0, %v1245
      %v1247 = vpop.f32.mrb[0].mxu0
      %v1248 = vpop.f32.mrb[0].mxu0
      %v1249 = vadd.f32 0.0, %v1248
      %v1250 = vpop.f32.mrb[0].mxu0
      %1251 = vmatprep.mubr.bf16.mxu0 0
      %1252 = vmatmul.mubr.bf16.gmra.mrb[0].mxu0 %v1068
      %v1253 = vpop.f32.mrb[0].mxu0
      %v1254 = vadd.f32 0.0, %v1253
      %v1255 = vpop.f32.mrb[0].mxu0
      %v1256 = vpop.f32.mrb[0].mxu0
      %v1257 = vadd.f32 0.0, %v1256
      %v1258 = vpop.f32.mrb[0].mxu0
      %1259 = vmatprep.mubr.bf16.mxu0 0
      %1260 = vmatmul.mubr.bf16.gmra.mrb[0].mxu0 %v1069
      %v1261 = vpop.f32.mrb[0].mxu0
      %v1262 = vadd.f32 0.0, %v1261
      %v1263 = vpop.f32.mrb[0].mxu0
      %v1264 = vpop.f32.mrb[0].mxu0
      %v1265 = vadd.f32 0.0, %v1264
      %v1266 = vpop.f32.mrb[0].mxu0
      %1267 = vmatprep.mubr.bf16.mxu0 0
      %1268 = vmatmul.mubr.bf16.gmra.mrb[0].mxu0 %v1070
      %v1269 = vpop.f32.mrb[0].mxu0
      %v1270 = vadd.f32 0.0, %v1269
      %v1271 = vpop.f32.mrb[0].mxu0
      %v1272 = vpop.f32.mrb[0].mxu0
      %v1273 = vadd.f32 0.0, %v1272
      %v1274 = vpop.f32.mrb[0].mxu0
      %1275 = vmatprep.mubr.bf16.mxu0 0
      %1276 = vmatmul.mubr.bf16.gmra.mrb[0].mxu0 %v1071
      %v1277 = vpop.f32.mrb[0].mxu0
      %v1278 = vadd.f32 0.0, %v1277
      %v1279 = vpop.f32.mrb[0].mxu0
      %v1280 = vpop.f32.mrb[0].mxu0
      %v1281 = vadd.f32 0.0, %v1280
      %v1282 = vpop.f32.mrb[0].mxu0
      %1283 = vmatprep.mubr.bf16.mxu0 0
      %1284 = vmatmul.mubr.bf16.gmra.mrb[0].mxu0 %v1072
      %v1285 = vpop.f32.mrb[0].mxu0
      %v1286 = vadd.f32 0.0, %v1285
      %v1287 = vpop.f32.mrb[0].mxu0
      %v1288 = vpop.f32.mrb[0].mxu0
      %v1289 = vadd.f32 0.0, %v1288
      %v1290 = vpop.f32.mrb[0].mxu0
      %1291 = vmatprep.mubr.bf16.mxu0 0
      %1292 = vmatmul.mubr.bf16.gmra.mrb[0].mxu0 %v1073
      %v1293 = vpop.f32.mrb[0].mxu0
      %v1294 = vadd.f32 0.0, %v1293
      %v1295 = vpop.f32.mrb[0].mxu0
      %v1296 = vpop.f32.mrb[0].mxu0
      %v1297 = vadd.f32 0.0, %v1296
      %v1298 = vpop.f32.mrb[0].mxu0
      %1299 = vdwg.mxu0
      %v1300 = vadd.f32 %v993, %v1174
      %v1301 = vadd.f32 %v994, %v1177
      %v1302 = vadd.f32 %v995, %v1182
      %v1303 = vadd.f32 %v996, %v1185
      %v1304 = vadd.f32 %v997, %v1190
      %v1305 = vadd.f32 %v998, %v1193
      %v1306 = vadd.f32 %v999, %v1198
      %v1307 = vadd.f32 %v1000, %v1201
      %v1308 = vadd.f32 %v1001, %v1206
      %v1309 = vadd.f32 %v1002, %v1209
      %v1310 = vadd.f32 %v1003, %v1214
      %v1311 = vadd.f32 %v1004, %v1217
      %v1312 = vadd.f32 %v1005, %v1222
      %v1313 = vadd.f32 %v1006, %v1225
      %v1314 = vadd.f32 %v1007, %v1230
      %v1315 = vadd.f32 %v1008, %v1233
      %v1316 = vadd.f32 %v1009, %v1238
      %v1317 = vadd.f32 %v1010, %v1241
      %v1318 = vadd.f32 %v1011, %v1246
      %v1319 = vadd.f32 %v1012, %v1249
      %v1320 = vadd.f32 %v1013, %v1254
      %v1321 = vadd.f32 %v1014, %v1257
      %v1322 = vadd.f32 %v1015, %v1262
      %v1323 = vadd.f32 %v1016, %v1265
      %v1324 = vadd.f32 %v1017, %v1270
      %v1325 = vadd.f32 %v1018, %v1273
      %v1326 = vadd.f32 %v1019, %v1278
      %v1327 = vadd.f32 %v1020, %v1281
      %v1328 = vadd.f32 %v1021, %v1286
      %v1329 = vadd.f32 %v1022, %v1289
      %v1330 = vadd.f32 %v1023, %v1294
      %v1331 = vadd.f32 %v1024, %v1297
      %v1332 = vld [vmem:[%s1025 + $0x1] sm:$0xff]
      %v1333 = vld [vmem:[%s1025 + $0x9] sm:$0xff]
      %v1334 = vld [vmem:[%s1025 + $0x19] sm:$0xff]
      %v1335 = vld [vmem:[%s1025 + $0x21] sm:$0xff]
      %v1336 = vld [vmem:[%s1025 + $0x31] sm:$0xff]
      %v1337 = vld [vmem:[%s1025 + $0x39] sm:$0xff]
      %v1338 = vld [vmem:[%s1025 + $0x49] sm:$0xff]
      %v1339 = vld [vmem:[%s1025 + $0x51] sm:$0xff]
      %v1340 = vld [vmem:[%s1025 + $0x61] sm:$0xff]
      %v1341 = vld [vmem:[%s1025 + $0x69] sm:$0xff]
      %v1342 = vld [vmem:[%s1025 + $0x79] sm:$0xff]
      %v1343 = vld [vmem:[%s1025 + $0x81] sm:$0xff]
      %v1344 = vld [vmem:[%s1025 + $0x91] sm:$0xff]
      %v1345 = vld [vmem:[%s1025 + $0x99] sm:$0xff]
      %v1346 = vld [vmem:[%s1025 + $0xa9] sm:$0xff]
      %v1347 = vld [vmem:[%s1025 + $0xb1] sm:$0xff]
      %v1348 = vld [vmem:[%s1025 + $0xc1] sm:$0xff]
      %v1349 = vld [vmem:[%s1025 + $0xc9] sm:$0xff]
      %v1350 = vld [vmem:[%s1025 + $0xd9] sm:$0xff]
      %v1351 = vld [vmem:[%s1025 + $0xe1] sm:$0xff]
      %v1352 = vld [vmem:[%s1025 + $0xf1] sm:$0xff]
      %v1353 = vld [vmem:[%s1025 + $0xf9] sm:$0xff]
      %v1354 = vld [vmem:[%s1025 + $0x109] sm:$0xff]
      %v1355 = vld [vmem:[%s1025 + $0x111] sm:$0xff]
      %v1356 = vld [vmem:[%s1025 + $0x121] sm:$0xff]
      %v1357 = vld [vmem:[%s1025 + $0x129] sm:$0xff]
      %v1358 = vld [vmem:[%s1025 + $0x139] sm:$0xff]
      %v1359 = vld [vmem:[%s1025 + $0x141] sm:$0xff]
      %v1360 = vld [vmem:[%s1025 + $0x151] sm:$0xff]
      %v1361 = vld [vmem:[%s1025 + $0x159] sm:$0xff]
      %v1362 = vld [vmem:[%s1025 + $0x169] sm:$0xff]
      %v1363 = vld [vmem:[%s1025 + $0x171] sm:$0xff]
      %v1364 = vpack.c.bf16 %v1333, %v1332
      %v1365 = vpack.c.bf16 %v1335, %v1334
      %v1366 = vpack.c.bf16 %v1337, %v1336
      %v1367 = vpack.c.bf16 %v1339, %v1338
      %v1368 = vpack.c.bf16 %v1341, %v1340
      %v1369 = vpack.c.bf16 %v1343, %v1342
      %v1370 = vpack.c.bf16 %v1345, %v1344
      %v1371 = vpack.c.bf16 %v1347, %v1346
      %v1372 = vpack.c.bf16 %v1349, %v1348
      %v1373 = vpack.c.bf16 %v1351, %v1350
      %v1374 = vpack.c.bf16 %v1353, %v1352
      %v1375 = vpack.c.bf16 %v1355, %v1354
      %v1376 = vpack.c.bf16 %v1357, %v1356
      %v1377 = vpack.c.bf16 %v1359, %v1358
      %v1378 = vpack.c.bf16 %v1361, %v1360
      %v1379 = vpack.c.bf16 %v1363, %v1362
      %s1380 = scalar_lea.vmem %s1, 256
      %v1381 = vld [vmem:[%s1380] sm:$0xf]
      %v1382 = vld [vmem:[%s1380 + $0x4] sm:$0xf]
      %v1383 = vld [vmem:[%s1380 + $0x8] sm:$0xf]
      %v1384 = vld [vmem:[%s1380 + $0xc] sm:$0xf]
      %v1385 = vld [vmem:[%s1380 + $0x10] sm:$0xf]
      %v1386 = vld [vmem:[%s1380 + $0x14] sm:$0xf]
      %v1387 = vld [vmem:[%s1380 + $0x18] sm:$0xf]
      %v1388 = vld [vmem:[%s1380 + $0x1c] sm:$0xf]
      %v1389 = vld [vmem:[%s1380 + $0x20] sm:$0xf]
      %v1390 = vld [vmem:[%s1380 + $0x24] sm:$0xf]
      %v1391 = vld [vmem:[%s1380 + $0x28] sm:$0xf]
      %v1392 = vld [vmem:[%s1380 + $0x2c] sm:$0xf]
      %v1393 = vld [vmem:[%s1380 + $0x30] sm:$0xf]
      %v1394 = vld [vmem:[%s1380 + $0x34] sm:$0xf]
      %v1395 = vld [vmem:[%s1380 + $0x38] sm:$0xf]
      %v1396 = vld [vmem:[%s1380 + $0x3c] sm:$0xf]
      %v1413 = vunpack.c.l.b16 %v1381
      %v1414 = vunpack.c.l.b16 %v1382
      %v1415 = vunpack.c.l.b16 %v1383
      %v1416 = vunpack.c.l.b16 %v1384
      %v1417 = vunpack.c.l.b16 %v1385
      %v1418 = vunpack.c.l.b16 %v1386
      %v1419 = vunpack.c.l.b16 %v1387
      %v1420 = vunpack.c.l.b16 %v1388
      %v1421 = vunpack.c.l.b16 %v1389
      %v1422 = vunpack.c.l.b16 %v1390
      %v1423 = vunpack.c.l.b16 %v1391
      %v1424 = vunpack.c.l.b16 %v1392
      %v1425 = vunpack.c.l.b16 %v1393
      %v1426 = vunpack.c.l.b16 %v1394
      %v1427 = vunpack.c.l.b16 %v1395
      %v1428 = vunpack.c.l.b16 %v1396
      %v1429 = vpack.c.b16 %v1414, %v1413
      %v1430 = vpack.c.b16 %v1416, %v1415
      %v1431 = vpack.c.b16 %v1418, %v1417
      %v1432 = vpack.c.b16 %v1420, %v1419
      %v1433 = vpack.c.b16 %v1422, %v1421
      %v1434 = vpack.c.b16 %v1424, %v1423
      %v1435 = vpack.c.b16 %v1426, %v1425
      %v1436 = vpack.c.b16 %v1428, %v1427
      %1445 = vmatprep.subr.bf16.mxu0 0
      %1446 = vmatpush1.bf16.msra.mxu0 %v1429
      %1447 = vmatprep.subr.bf16.mxu0 0
      %1448 = vmatpush1.bf16.msra.mxu0 %v1430
      %1449 = vmatprep.subr.bf16.mxu0 0
      %1450 = vmatpush1.bf16.msra.mxu0 %v1431
      %1451 = vmatprep.subr.bf16.mxu0 0
      %1452 = vmatpush1.bf16.msra.mxu0 %v1432
      %1453 = vmatprep.subr.bf16.mxu0 0
      %1454 = vmatpush1.bf16.msra.mxu0 %v1433
      %1455 = vmatprep.subr.bf16.mxu0 0
      %1456 = vmatpush1.bf16.msra.mxu0 %v1434
      %1457 = vmatprep.subr.bf16.mxu0 0
      %1458 = vmatpush1.bf16.msra.mxu0 %v1435
      %1459 = vmatprep.subr.bf16.mxu0 0
      %1460 = vmatpush1.bf16.msra.mxu0 %v1436
      %1461 = vmatprep.subr.bf16.mxu0 0
      %1462 = vmatpush1.bf16.msra.mxu0 0
      %1463 = vmatprep.subr.bf16.mxu0 0
      %1464 = vmatpush1.bf16.msra.mxu0 0
      %1465 = vmatprep.subr.bf16.mxu0 0
      %1466 = vmatpush1.bf16.msra.mxu0 0
      %1467 = vmatprep.subr.bf16.mxu0 0
      %1468 = vmatpush1.bf16.msra.mxu0 0
      %1469 = vmatprep.subr.bf16.mxu0 0
      %1470 = vmatpush1.bf16.msra.mxu0 0
      %1471 = vmatprep.subr.bf16.mxu0 0
      %1472 = vmatpush1.bf16.msra.mxu0 0
      %1473 = vmatprep.subr.bf16.mxu0 0
      %1474 = vmatpush1.bf16.msra.mxu0 0
      %1475 = vmatprep.subr.bf16.mxu0 0
      %1476 = vmatpush1.bf16.msra.mxu0 0
      %1477 = vmatprep.mubr.bf16.mxu0 0
      %1478 = vmatmul.mubr.bf16.gmra.mrb[0].mxu0 %v1364
      %v1479 = vpop.f32.mrb[0].mxu0
      %v1480 = vadd.f32 0.0, %v1479
      %v1481 = vpop.f32.mrb[0].mxu0
      %v1482 = vpop.f32.mrb[0].mxu0
      %v1483 = vadd.f32 0.0, %v1482
      %v1484 = vpop.f32.mrb[0].mxu0
      %1485 = vmatprep.mubr.bf16.mxu0 0
      %1486 = vmatmul.mubr.bf16.gmra.mrb[0].mxu0 %v1365
      %v1487 = vpop.f32.mrb[0].mxu0
      %v1488 = vadd.f32 0.0, %v1487
      %v1489 = vpop.f32.mrb[0].mxu0
      %v1490 = vpop.f32.mrb[0].mxu0
      %v1491 = vadd.f32 0.0, %v1490
      %v1492 = vpop.f32.mrb[0].mxu0
      %1493 = vmatprep.mubr.bf16.mxu0 0
      %1494 = vmatmul.mubr.bf16.gmra.mrb[0].mxu0 %v1366
      %v1495 = vpop.f32.mrb[0].mxu0
      %v1496 = vadd.f32 0.0, %v1495
      %v1497 = vpop.f32.mrb[0].mxu0
      %v1498 = vpop.f32.mrb[0].mxu0
      %v1499 = vadd.f32 0.0, %v1498
      %v1500 = vpop.f32.mrb[0].mxu0
      %1501 = vmatprep.mubr.bf16.mxu0 0
      %1502 = vmatmul.mubr.bf16.gmra.mrb[0].mxu0 %v1367
      %v1503 = vpop.f32.mrb[0].mxu0
      %v1504 = vadd.f32 0.0, %v1503
      %v1505 = vpop.f32.mrb[0].mxu0
      %v1506 = vpop.f32.mrb[0].mxu0
      %v1507 = vadd.f32 0.0, %v1506
      %v1508 = vpop.f32.mrb[0].mxu0
      %1509 = vmatprep.mubr.bf16.mxu0 0
      %1510 = vmatmul.mubr.bf16.gmra.mrb[0].mxu0 %v1368
      %v1511 = vpop.f32.mrb[0].mxu0
      %v1512 = vadd.f32 0.0, %v1511
      %v1513 = vpop.f32.mrb[0].mxu0
      %v1514 = vpop.f32.mrb[0].mxu0
      %v1515 = vadd.f32 0.0, %v1514
      %v1516 = vpop.f32.mrb[0].mxu0
      %1517 = vmatprep.mubr.bf16.mxu0 0
      %1518 = vmatmul.mubr.bf16.gmra.mrb[0].mxu0 %v1369
      %v1519 = vpop.f32.mrb[0].mxu0
      %v1520 = vadd.f32 0.0, %v1519
      %v1521 = vpop.f32.mrb[0].mxu0
      %v1522 = vpop.f32.mrb[0].mxu0
      %v1523 = vadd.f32 0.0, %v1522
      %v1524 = vpop.f32.mrb[0].mxu0
      %1525 = vmatprep.mubr.bf16.mxu0 0
      %1526 = vmatmul.mubr.bf16.gmra.mrb[0].mxu0 %v1370
      %v1527 = vpop.f32.mrb[0].mxu0
      %v1528 = vadd.f32 0.0, %v1527
      %v1529 = vpop.f32.mrb[0].mxu0
      %v1530 = vpop.f32.mrb[0].mxu0
      %v1531 = vadd.f32 0.0, %v1530
      %v1532 = vpop.f32.mrb[0].mxu0
      %1533 = vmatprep.mubr.bf16.mxu0 0
      %1534 = vmatmul.mubr.bf16.gmra.mrb[0].mxu0 %v1371
      %v1535 = vpop.f32.mrb[0].mxu0
      %v1536 = vadd.f32 0.0, %v1535
      %v1537 = vpop.f32.mrb[0].mxu0
      %v1538 = vpop.f32.mrb[0].mxu0
      %v1539 = vadd.f32 0.0, %v1538
      %v1540 = vpop.f32.mrb[0].mxu0
      %1541 = vmatprep.mubr.bf16.mxu0 0
      %1542 = vmatmul.mubr.bf16.gmra.mrb[0].mxu0 %v1372
      %v1543 = vpop.f32.mrb[0].mxu0
      %v1544 = vadd.f32 0.0, %v1543
      %v1545 = vpop.f32.mrb[0].mxu0
      %v1546 = vpop.f32.mrb[0].mxu0
      %v1547 = vadd.f32 0.0, %v1546
      %v1548 = vpop.f32.mrb[0].mxu0
      %1549 = vmatprep.mubr.bf16.mxu0 0
      %1550 = vmatmul.mubr.bf16.gmra.mrb[0].mxu0 %v1373
      %v1551 = vpop.f32.mrb[0].mxu0
      %v1552 = vadd.f32 0.0, %v1551
      %v1553 = vpop.f32.mrb[0].mxu0
      %v1554 = vpop.f32.mrb[0].mxu0
      %v1555 = vadd.f32 0.0, %v1554
      %v1556 = vpop.f32.mrb[0].mxu0
      %1557 = vmatprep.mubr.bf16.mxu0 0
      %1558 = vmatmul.mubr.bf16.gmra.mrb[0].mxu0 %v1374
      %v1559 = vpop.f32.mrb[0].mxu0
      %v1560 = vadd.f32 0.0, %v1559
      %v1561 = vpop.f32.mrb[0].mxu0
      %v1562 = vpop.f32.mrb[0].mxu0
      %v1563 = vadd.f32 0.0, %v1562
      %v1564 = vpop.f32.mrb[0].mxu0
      %1565 = vmatprep.mubr.bf16.mxu0 0
      %1566 = vmatmul.mubr.bf16.gmra.mrb[0].mxu0 %v1375
      %v1567 = vpop.f32.mrb[0].mxu0
      %v1568 = vadd.f32 0.0, %v1567
      %v1569 = vpop.f32.mrb[0].mxu0
      %v1570 = vpop.f32.mrb[0].mxu0
      %v1571 = vadd.f32 0.0, %v1570
      %v1572 = vpop.f32.mrb[0].mxu0
      %1573 = vmatprep.mubr.bf16.mxu0 0
      %1574 = vmatmul.mubr.bf16.gmra.mrb[0].mxu0 %v1376
      %v1575 = vpop.f32.mrb[0].mxu0
      %v1576 = vadd.f32 0.0, %v1575
      %v1577 = vpop.f32.mrb[0].mxu0
      %v1578 = vpop.f32.mrb[0].mxu0
      %v1579 = vadd.f32 0.0, %v1578
      %v1580 = vpop.f32.mrb[0].mxu0
      %1581 = vmatprep.mubr.bf16.mxu0 0
      %1582 = vmatmul.mubr.bf16.gmra.mrb[0].mxu0 %v1377
      %v1583 = vpop.f32.mrb[0].mxu0
      %v1584 = vadd.f32 0.0, %v1583
      %v1585 = vpop.f32.mrb[0].mxu0
      %v1586 = vpop.f32.mrb[0].mxu0
      %v1587 = vadd.f32 0.0, %v1586
      %v1588 = vpop.f32.mrb[0].mxu0
      %1589 = vmatprep.mubr.bf16.mxu0 0
      %1590 = vmatmul.mubr.bf16.gmra.mrb[0].mxu0 %v1378
      %v1591 = vpop.f32.mrb[0].mxu0
      %v1592 = vadd.f32 0.0, %v1591
      %v1593 = vpop.f32.mrb[0].mxu0
      %v1594 = vpop.f32.mrb[0].mxu0
      %v1595 = vadd.f32 0.0, %v1594
      %v1596 = vpop.f32.mrb[0].mxu0
      %1597 = vmatprep.mubr.bf16.mxu0 0
      %1598 = vmatmul.mubr.bf16.gmra.mrb[0].mxu0 %v1379
      %v1599 = vpop.f32.mrb[0].mxu0
      %v1600 = vadd.f32 0.0, %v1599
      %v1601 = vpop.f32.mrb[0].mxu0
      %v1602 = vpop.f32.mrb[0].mxu0
      %v1603 = vadd.f32 0.0, %v1602
      %v1604 = vpop.f32.mrb[0].mxu0
      %1605 = vdwg.mxu0
      %v1606 = vadd.f32 %v1300, %v1480
      %v1607 = vadd.f32 %v1301, %v1483
      %v1608 = vadd.f32 %v1302, %v1488
      %v1609 = vadd.f32 %v1303, %v1491
      %v1610 = vadd.f32 %v1304, %v1496
      %v1611 = vadd.f32 %v1305, %v1499
      %v1612 = vadd.f32 %v1306, %v1504
      %v1613 = vadd.f32 %v1307, %v1507
      %v1614 = vadd.f32 %v1308, %v1512
      %v1615 = vadd.f32 %v1309, %v1515
      %v1616 = vadd.f32 %v1310, %v1520
      %v1617 = vadd.f32 %v1311, %v1523
      %v1618 = vadd.f32 %v1312, %v1528
      %v1619 = vadd.f32 %v1313, %v1531
      %v1620 = vadd.f32 %v1314, %v1536
      %v1621 = vadd.f32 %v1315, %v1539
      %v1622 = vadd.f32 %v1316, %v1544
      %v1623 = vadd.f32 %v1317, %v1547
      %v1624 = vadd.f32 %v1318, %v1552
      %v1625 = vadd.f32 %v1319, %v1555
      %v1626 = vadd.f32 %v1320, %v1560
      %v1627 = vadd.f32 %v1321, %v1563
      %v1628 = vadd.f32 %v1322, %v1568
      %v1629 = vadd.f32 %v1323, %v1571
      %v1630 = vadd.f32 %v1324, %v1576
      %v1631 = vadd.f32 %v1325, %v1579
      %v1632 = vadd.f32 %v1326, %v1584
      %v1633 = vadd.f32 %v1327, %v1587
      %v1634 = vadd.f32 %v1328, %v1592
      %v1635 = vadd.f32 %v1329, %v1595
      %v1636 = vadd.f32 %v1330, %v1600
      %v1637 = vadd.f32 %v1331, %v1603
      %v1638 = vld [vmem:[%s1025 + $0x2] sm:$0xff]
      %v1639 = vld [vmem:[%s1025 + $0xa] sm:$0xff]
      %v1640 = vld [vmem:[%s1025 + $0x1a] sm:$0xff]
      %v1641 = vld [vmem:[%s1025 + $0x22] sm:$0xff]
      %v1642 = vld [vmem:[%s1025 + $0x32] sm:$0xff]
      %v1643 = vld [vmem:[%s1025 + $0x3a] sm:$0xff]
      %v1644 = vld [vmem:[%s1025 + $0x4a] sm:$0xff]
      %v1645 = vld [vmem:[%s1025 + $0x52] sm:$0xff]
      %v1646 = vld [vmem:[%s1025 + $0x62] sm:$0xff]
      %v1647 = vld [vmem:[%s1025 + $0x6a] sm:$0xff]
      %v1648 = vld [vmem:[%s1025 + $0x7a] sm:$0xff]
      %v1649 = vld [vmem:[%s1025 + $0x82] sm:$0xff]
      %v1650 = vld [vmem:[%s1025 + $0x92] sm:$0xff]
      %v1651 = vld [vmem:[%s1025 + $0x9a] sm:$0xff]
      %v1652 = vld [vmem:[%s1025 + $0xaa] sm:$0xff]
      %v1653 = vld [vmem:[%s1025 + $0xb2] sm:$0xff]
      %v1654 = vld [vmem:[%s1025 + $0xc2] sm:$0xff]
      %v1655 = vld [vmem:[%s1025 + $0xca] sm:$0xff]
      %v1656 = vld [vmem:[%s1025 + $0xda] sm:$0xff]
      %v1657 = vld [vmem:[%s1025 + $0xe2] sm:$0xff]
      %v1658 = vld [vmem:[%s1025 + $0xf2] sm:$0xff]
      %v1659 = vld [vmem:[%s1025 + $0xfa] sm:$0xff]
      %v1660 = vld [vmem:[%s1025 + $0x10a] sm:$0xff]
      %v1661 = vld [vmem:[%s1025 + $0x112] sm:$0xff]
      %v1662 = vld [vmem:[%s1025 + $0x122] sm:$0xff]
      %v1663 = vld [vmem:[%s1025 + $0x12a] sm:$0xff]
      %v1664 = vld [vmem:[%s1025 + $0x13a] sm:$0xff]
      %v1665 = vld [vmem:[%s1025 + $0x142] sm:$0xff]
      %v1666 = vld [vmem:[%s1025 + $0x152] sm:$0xff]
      %v1667 = vld [vmem:[%s1025 + $0x15a] sm:$0xff]
      %v1668 = vld [vmem:[%s1025 + $0x16a] sm:$0xff]
      %v1669 = vld [vmem:[%s1025 + $0x172] sm:$0xff]
      %v1670 = vpack.c.bf16 %v1639, %v1638
      %v1671 = vpack.c.bf16 %v1641, %v1640
      %v1672 = vpack.c.bf16 %v1643, %v1642
      %v1673 = vpack.c.bf16 %v1645, %v1644
      %v1674 = vpack.c.bf16 %v1647, %v1646
      %v1675 = vpack.c.bf16 %v1649, %v1648
      %v1676 = vpack.c.bf16 %v1651, %v1650
      %v1677 = vpack.c.bf16 %v1653, %v1652
      %v1678 = vpack.c.bf16 %v1655, %v1654
      %v1679 = vpack.c.bf16 %v1657, %v1656
      %v1680 = vpack.c.bf16 %v1659, %v1658
      %v1681 = vpack.c.bf16 %v1661, %v1660
      %v1682 = vpack.c.bf16 %v1663, %v1662
      %v1683 = vpack.c.bf16 %v1665, %v1664
      %v1684 = vpack.c.bf16 %v1667, %v1666
      %v1685 = vpack.c.bf16 %v1669, %v1668
      %s1686 = scalar_lea.vmem %s1, 320
      %v1687 = vld [vmem:[%s1686] sm:$0xf]
      %v1688 = vld [vmem:[%s1686 + $0x4] sm:$0xf]
      %v1689 = vld [vmem:[%s1686 + $0x8] sm:$0xf]
      %v1690 = vld [vmem:[%s1686 + $0xc] sm:$0xf]
      %v1691 = vld [vmem:[%s1686 + $0x10] sm:$0xf]
      %v1692 = vld [vmem:[%s1686 + $0x14] sm:$0xf]
      %v1693 = vld [vmem:[%s1686 + $0x18] sm:$0xf]
      %v1694 = vld [vmem:[%s1686 + $0x1c] sm:$0xf]
      %v1695 = vld [vmem:[%s1686 + $0x20] sm:$0xf]
      %v1696 = vld [vmem:[%s1686 + $0x24] sm:$0xf]
      %v1697 = vld [vmem:[%s1686 + $0x28] sm:$0xf]
      %v1698 = vld [vmem:[%s1686 + $0x2c] sm:$0xf]
      %v1699 = vld [vmem:[%s1686 + $0x30] sm:$0xf]
      %v1700 = vld [vmem:[%s1686 + $0x34] sm:$0xf]
      %v1701 = vld [vmem:[%s1686 + $0x38] sm:$0xf]
      %v1702 = vld [vmem:[%s1686 + $0x3c] sm:$0xf]
      %v1719 = vunpack.c.l.b16 %v1687
      %v1720 = vunpack.c.l.b16 %v1688
      %v1721 = vunpack.c.l.b16 %v1689
      %v1722 = vunpack.c.l.b16 %v1690
      %v1723 = vunpack.c.l.b16 %v1691
      %v1724 = vunpack.c.l.b16 %v1692
      %v1725 = vunpack.c.l.b16 %v1693
      %v1726 = vunpack.c.l.b16 %v1694
      %v1727 = vunpack.c.l.b16 %v1695
      %v1728 = vunpack.c.l.b16 %v1696
      %v1729 = vunpack.c.l.b16 %v1697
      %v1730 = vunpack.c.l.b16 %v1698
      %v1731 = vunpack.c.l.b16 %v1699
      %v1732 = vunpack.c.l.b16 %v1700
      %v1733 = vunpack.c.l.b16 %v1701
      %v1734 = vunpack.c.l.b16 %v1702
      %v1735 = vpack.c.b16 %v1720, %v1719
      %v1736 = vpack.c.b16 %v1722, %v1721
      %v1737 = vpack.c.b16 %v1724, %v1723
      %v1738 = vpack.c.b16 %v1726, %v1725
      %v1739 = vpack.c.b16 %v1728, %v1727
      %v1740 = vpack.c.b16 %v1730, %v1729
      %v1741 = vpack.c.b16 %v1732, %v1731
      %v1742 = vpack.c.b16 %v1734, %v1733
      %1751 = vmatprep.subr.bf16.mxu0 0
      %1752 = vmatpush1.bf16.msra.mxu0 %v1735
      %1753 = vmatprep.subr.bf16.mxu0 0
      %1754 = vmatpush1.bf16.msra.mxu0 %v1736
      %1755 = vmatprep.subr.bf16.mxu0 0
      %1756 = vmatpush1.bf16.msra.mxu0 %v1737
      %1757 = vmatprep.subr.bf16.mxu0 0
      %1758 = vmatpush1.bf16.msra.mxu0 %v1738
      %1759 = vmatprep.subr.bf16.mxu0 0
      %1760 = vmatpush1.bf16.msra.mxu0 %v1739
      %1761 = vmatprep.subr.bf16.mxu0 0
      %1762 = vmatpush1.bf16.msra.mxu0 %v1740
      %1763 = vmatprep.subr.bf16.mxu0 0
      %1764 = vmatpush1.bf16.msra.mxu0 %v1741
      %1765 = vmatprep.subr.bf16.mxu0 0
      %1766 = vmatpush1.bf16.msra.mxu0 %v1742
      %1767 = vmatprep.subr.bf16.mxu0 0
      %1768 = vmatpush1.bf16.msra.mxu0 0
      %1769 = vmatprep.subr.bf16.mxu0 0
      %1770 = vmatpush1.bf16.msra.mxu0 0
      %1771 = vmatprep.subr.bf16.mxu0 0
      %1772 = vmatpush1.bf16.msra.mxu0 0
      %1773 = vmatprep.subr.bf16.mxu0 0
      %1774 = vmatpush1.bf16.msra.mxu0 0
      %1775 = vmatprep.subr.bf16.mxu0 0
      %1776 = vmatpush1.bf16.msra.mxu0 0
      %1777 = vmatprep.subr.bf16.mxu0 0
      %1778 = vmatpush1.bf16.msra.mxu0 0
      %1779 = vmatprep.subr.bf16.mxu0 0
      %1780 = vmatpush1.bf16.msra.mxu0 0
      %1781 = vmatprep.subr.bf16.mxu0 0
      %1782 = vmatpush1.bf16.msra.mxu0 0
      %1783 = vmatprep.mubr.bf16.mxu0 0
      %1784 = vmatmul.mubr.bf16.gmra.mrb[0].mxu0 %v1670
      %v1785 = vpop.f32.mrb[0].mxu0
      %v1786 = vadd.f32 0.0, %v1785
      %v1787 = vpop.f32.mrb[0].mxu0
      %v1788 = vpop.f32.mrb[0].mxu0
      %v1789 = vadd.f32 0.0, %v1788
      %v1790 = vpop.f32.mrb[0].mxu0
      %1791 = vmatprep.mubr.bf16.mxu0 0
      %1792 = vmatmul.mubr.bf16.gmra.mrb[0].mxu0 %v1671
      %v1793 = vpop.f32.mrb[0].mxu0
      %v1794 = vadd.f32 0.0, %v1793
      %v1795 = vpop.f32.mrb[0].mxu0
      %v1796 = vpop.f32.mrb[0].mxu0
      %v1797 = vadd.f32 0.0, %v1796
      %v1798 = vpop.f32.mrb[0].mxu0
      %1799 = vmatprep.mubr.bf16.mxu0 0
      %1800 = vmatmul.mubr.bf16.gmra.mrb[0].mxu0 %v1672
      %v1801 = vpop.f32.mrb[0].mxu0
      %v1802 = vadd.f32 0.0, %v1801
      %v1803 = vpop.f32.mrb[0].mxu0
      %v1804 = vpop.f32.mrb[0].mxu0
      %v1805 = vadd.f32 0.0, %v1804
      %v1806 = vpop.f32.mrb[0].mxu0
      %1807 = vmatprep.mubr.bf16.mxu0 0
      %1808 = vmatmul.mubr.bf16.gmra.mrb[0].mxu0 %v1673
      %v1809 = vpop.f32.mrb[0].mxu0
      %v1810 = vadd.f32 0.0, %v1809
      %v1811 = vpop.f32.mrb[0].mxu0
      %v1812 = vpop.f32.mrb[0].mxu0
      %v1813 = vadd.f32 0.0, %v1812
      %v1814 = vpop.f32.mrb[0].mxu0
      %1815 = vmatprep.mubr.bf16.mxu0 0
      %1816 = vmatmul.mubr.bf16.gmra.mrb[0].mxu0 %v1674
      %v1817 = vpop.f32.mrb[0].mxu0
      %v1818 = vadd.f32 0.0, %v1817
      %v1819 = vpop.f32.mrb[0].mxu0
      %v1820 = vpop.f32.mrb[0].mxu0
      %v1821 = vadd.f32 0.0, %v1820
      %v1822 = vpop.f32.mrb[0].mxu0
      %1823 = vmatprep.mubr.bf16.mxu0 0
      %1824 = vmatmul.mubr.bf16.gmra.mrb[0].mxu0 %v1675
      %v1825 = vpop.f32.mrb[0].mxu0
      %v1826 = vadd.f32 0.0, %v1825
      %v1827 = vpop.f32.mrb[0].mxu0
      %v1828 = vpop.f32.mrb[0].mxu0
      %v1829 = vadd.f32 0.0, %v1828
      %v1830 = vpop.f32.mrb[0].mxu0
      %1831 = vmatprep.mubr.bf16.mxu0 0
      %1832 = vmatmul.mubr.bf16.gmra.mrb[0].mxu0 %v1676
      %v1833 = vpop.f32.mrb[0].mxu0
      %v1834 = vadd.f32 0.0, %v1833
      %v1835 = vpop.f32.mrb[0].mxu0
      %v1836 = vpop.f32.mrb[0].mxu0
      %v1837 = vadd.f32 0.0, %v1836
      %v1838 = vpop.f32.mrb[0].mxu0
      %1839 = vmatprep.mubr.bf16.mxu0 0
      %1840 = vmatmul.mubr.bf16.gmra.mrb[0].mxu0 %v1677
      %v1841 = vpop.f32.mrb[0].mxu0
      %v1842 = vadd.f32 0.0, %v1841
      %v1843 = vpop.f32.mrb[0].mxu0
      %v1844 = vpop.f32.mrb[0].mxu0
      %v1845 = vadd.f32 0.0, %v1844
      %v1846 = vpop.f32.mrb[0].mxu0
      %1847 = vmatprep.mubr.bf16.mxu0 0
      %1848 = vmatmul.mubr.bf16.gmra.mrb[0].mxu0 %v1678
      %v1849 = vpop.f32.mrb[0].mxu0
      %v1850 = vadd.f32 0.0, %v1849
      %v1851 = vpop.f32.mrb[0].mxu0
      %v1852 = vpop.f32.mrb[0].mxu0
      %v1853 = vadd.f32 0.0, %v1852
      %v1854 = vpop.f32.mrb[0].mxu0
      %1855 = vmatprep.mubr.bf16.mxu0 0
      %1856 = vmatmul.mubr.bf16.gmra.mrb[0].mxu0 %v1679
      %v1857 = vpop.f32.mrb[0].mxu0
      %v1858 = vadd.f32 0.0, %v1857
      %v1859 = vpop.f32.mrb[0].mxu0
      %v1860 = vpop.f32.mrb[0].mxu0
      %v1861 = vadd.f32 0.0, %v1860
      %v1862 = vpop.f32.mrb[0].mxu0
      %1863 = vmatprep.mubr.bf16.mxu0 0
      %1864 = vmatmul.mubr.bf16.gmra.mrb[0].mxu0 %v1680
      %v1865 = vpop.f32.mrb[0].mxu0
      %v1866 = vadd.f32 0.0, %v1865
      %v1867 = vpop.f32.mrb[0].mxu0
      %v1868 = vpop.f32.mrb[0].mxu0
      %v1869 = vadd.f32 0.0, %v1868
      %v1870 = vpop.f32.mrb[0].mxu0
      %1871 = vmatprep.mubr.bf16.mxu0 0
      %1872 = vmatmul.mubr.bf16.gmra.mrb[0].mxu0 %v1681
      %v1873 = vpop.f32.mrb[0].mxu0
      %v1874 = vadd.f32 0.0, %v1873
      %v1875 = vpop.f32.mrb[0].mxu0
      %v1876 = vpop.f32.mrb[0].mxu0
      %v1877 = vadd.f32 0.0, %v1876
      %v1878 = vpop.f32.mrb[0].mxu0
      %1879 = vmatprep.mubr.bf16.mxu0 0
      %1880 = vmatmul.mubr.bf16.gmra.mrb[0].mxu0 %v1682
      %v1881 = vpop.f32.mrb[0].mxu0
      %v1882 = vadd.f32 0.0, %v1881
      %v1883 = vpop.f32.mrb[0].mxu0
      %v1884 = vpop.f32.mrb[0].mxu0
      %v1885 = vadd.f32 0.0, %v1884
      %v1886 = vpop.f32.mrb[0].mxu0
      %1887 = vmatprep.mubr.bf16.mxu0 0
      %1888 = vmatmul.mubr.bf16.gmra.mrb[0].mxu0 %v1683
      %v1889 = vpop.f32.mrb[0].mxu0
      %v1890 = vadd.f32 0.0, %v1889
      %v1891 = vpop.f32.mrb[0].mxu0
      %v1892 = vpop.f32.mrb[0].mxu0
      %v1893 = vadd.f32 0.0, %v1892
      %v1894 = vpop.f32.mrb[0].mxu0
      %1895 = vmatprep.mubr.bf16.mxu0 0
      %1896 = vmatmul.mubr.bf16.gmra.mrb[0].mxu0 %v1684
      %v1897 = vpop.f32.mrb[0].mxu0
      %v1898 = vadd.f32 0.0, %v1897
      %v1899 = vpop.f32.mrb[0].mxu0
      %v1900 = vpop.f32.mrb[0].mxu0
      %v1901 = vadd.f32 0.0, %v1900
      %v1902 = vpop.f32.mrb[0].mxu0
      %1903 = vmatprep.mubr.bf16.mxu0 0
      %1904 = vmatmul.mubr.bf16.gmra.mrb[0].mxu0 %v1685
      %v1905 = vpop.f32.mrb[0].mxu0
      %v1906 = vadd.f32 0.0, %v1905
      %v1907 = vpop.f32.mrb[0].mxu0
      %v1908 = vpop.f32.mrb[0].mxu0
      %v1909 = vadd.f32 0.0, %v1908
      %v1910 = vpop.f32.mrb[0].mxu0
      %1911 = vdwg.mxu0
      %v1912 = vadd.f32 %v1606, %v1786
      %v1913 = vadd.f32 %v1607, %v1789
      %v1914 = vadd.f32 %v1608, %v1794
      %v1915 = vadd.f32 %v1609, %v1797
      %v1916 = vadd.f32 %v1610, %v1802
      %v1917 = vadd.f32 %v1611, %v1805
      %v1918 = vadd.f32 %v1612, %v1810
      %v1919 = vadd.f32 %v1613, %v1813
      %v1920 = vadd.f32 %v1614, %v1818
      %v1921 = vadd.f32 %v1615, %v1821
      %v1922 = vadd.f32 %v1616, %v1826
      %v1923 = vadd.f32 %v1617, %v1829
      %v1924 = vadd.f32 %v1618, %v1834
      %v1925 = vadd.f32 %v1619, %v1837
      %v1926 = vadd.f32 %v1620, %v1842
      %v1927 = vadd.f32 %v1621, %v1845
      %v1928 = vadd.f32 %v1622, %v1850
      %v1929 = vadd.f32 %v1623, %v1853
      %v1930 = vadd.f32 %v1624, %v1858
      %v1931 = vadd.f32 %v1625, %v1861
      %v1932 = vadd.f32 %v1626, %v1866
      %v1933 = vadd.f32 %v1627, %v1869
      %v1934 = vadd.f32 %v1628, %v1874
      %v1935 = vadd.f32 %v1629, %v1877
      %v1936 = vadd.f32 %v1630, %v1882
      %v1937 = vadd.f32 %v1631, %v1885
      %v1938 = vadd.f32 %v1632, %v1890
      %v1939 = vadd.f32 %v1633, %v1893
      %v1940 = vadd.f32 %v1634, %v1898
      %v1941 = vadd.f32 %v1635, %v1901
      %v1942 = vadd.f32 %v1636, %v1906
      %v1943 = vadd.f32 %v1637, %v1909
      %s1944 = scalar_lea.vmem %s165, 48
      %v1945 = vld [vmem:[%s1944] sm:$0xff]
      %v1946 = vld [vmem:[%s1944 + $0x8] sm:$0xff]
      %v1947 = vld [vmem:[%s1944 + $0x18] sm:$0xff]
      %v1948 = vld [vmem:[%s1944 + $0x20] sm:$0xff]
      %v1949 = vld [vmem:[%s1944 + $0x30] sm:$0xff]
      %v1950 = vld [vmem:[%s1944 + $0x38] sm:$0xff]
      %v1951 = vld [vmem:[%s1944 + $0x48] sm:$0xff]
      %v1952 = vld [vmem:[%s1944 + $0x50] sm:$0xff]
      %v1953 = vld [vmem:[%s1944 + $0x60] sm:$0xff]
      %v1954 = vld [vmem:[%s1944 + $0x68] sm:$0xff]
      %v1955 = vld [vmem:[%s1944 + $0x78] sm:$0xff]
      %v1956 = vld [vmem:[%s1944 + $0x80] sm:$0xff]
      %v1957 = vld [vmem:[%s1944 + $0x90] sm:$0xff]
      %v1958 = vld [vmem:[%s1944 + $0x98] sm:$0xff]
      %v1959 = vld [vmem:[%s1944 + $0xa8] sm:$0xff]
      %v1960 = vld [vmem:[%s1944 + $0xb0] sm:$0xff]
      %v1961 = vld [vmem:[%s1944 + $0xc0] sm:$0xff]
      %v1962 = vld [vmem:[%s1944 + $0xc8] sm:$0xff]
      %v1963 = vld [vmem:[%s1944 + $0xd8] sm:$0xff]
      %v1964 = vld [vmem:[%s1944 + $0xe0] sm:$0xff]
      %v1965 = vld [vmem:[%s1944 + $0xf0] sm:$0xff]
      %v1966 = vld [vmem:[%s1944 + $0xf8] sm:$0xff]
      %v1967 = vld [vmem:[%s1944 + $0x108] sm:$0xff]
      %v1968 = vld [vmem:[%s1944 + $0x110] sm:$0xff]
      %v1969 = vld [vmem:[%s1944 + $0x120] sm:$0xff]
      %v1970 = vld [vmem:[%s1944 + $0x128] sm:$0xff]
      %v1971 = vld [vmem:[%s1944 + $0x138] sm:$0xff]
      %v1972 = vld [vmem:[%s1944 + $0x140] sm:$0xff]
      %v1973 = vld [vmem:[%s1944 + $0x150] sm:$0xff]
      %v1974 = vld [vmem:[%s1944 + $0x158] sm:$0xff]
      %v1975 = vld [vmem:[%s1944 + $0x168] sm:$0xff]
      %v1976 = vld [vmem:[%s1944 + $0x170] sm:$0xff]
      %v1977 = vpack.c.bf16 %v1946, %v1945
      %v1978 = vpack.c.bf16 %v1948, %v1947
      %v1979 = vpack.c.bf16 %v1950, %v1949
      %v1980 = vpack.c.bf16 %v1952, %v1951
      %v1981 = vpack.c.bf16 %v1954, %v1953
      %v1982 = vpack.c.bf16 %v1956, %v1955
      %v1983 = vpack.c.bf16 %v1958, %v1957
      %v1984 = vpack.c.bf16 %v1960, %v1959
      %v1985 = vpack.c.bf16 %v1962, %v1961
      %v1986 = vpack.c.bf16 %v1964, %v1963
      %v1987 = vpack.c.bf16 %v1966, %v1965
      %v1988 = vpack.c.bf16 %v1968, %v1967
      %v1989 = vpack.c.bf16 %v1970, %v1969
      %v1990 = vpack.c.bf16 %v1972, %v1971
      %v1991 = vpack.c.bf16 %v1974, %v1973
      %v1992 = vpack.c.bf16 %v1976, %v1975
      %s1993 = scalar_lea.vmem %s1, 384
      %v1994 = vld [vmem:[%s1993] sm:$0xf]
      %v1995 = vld [vmem:[%s1993 + $0x4] sm:$0xf]
      %v1996 = vld [vmem:[%s1993 + $0x8] sm:$0xf]
      %v1997 = vld [vmem:[%s1993 + $0xc] sm:$0xf]
      %v1998 = vld [vmem:[%s1993 + $0x10] sm:$0xf]
      %v1999 = vld [vmem:[%s1993 + $0x14] sm:$0xf]
      %v2000 = vld [vmem:[%s1993 + $0x18] sm:$0xf]
      %v2001 = vld [vmem:[%s1993 + $0x1c] sm:$0xf]
      %v2002 = vld [vmem:[%s1993 + $0x20] sm:$0xf]
      %v2003 = vld [vmem:[%s1993 + $0x24] sm:$0xf]
      %v2004 = vld [vmem:[%s1993 + $0x28] sm:$0xf]
      %v2005 = vld [vmem:[%s1993 + $0x2c] sm:$0xf]
      %v2006 = vld [vmem:[%s1993 + $0x30] sm:$0xf]
      %v2007 = vld [vmem:[%s1993 + $0x34] sm:$0xf]
      %v2008 = vld [vmem:[%s1993 + $0x38] sm:$0xf]
      %v2009 = vld [vmem:[%s1993 + $0x3c] sm:$0xf]
      %v2026 = vunpack.c.l.b16 %v1994
      %v2027 = vunpack.c.l.b16 %v1995
      %v2028 = vunpack.c.l.b16 %v1996
      %v2029 = vunpack.c.l.b16 %v1997
      %v2030 = vunpack.c.l.b16 %v1998
      %v2031 = vunpack.c.l.b16 %v1999
      %v2032 = vunpack.c.l.b16 %v2000
      %v2033 = vunpack.c.l.b16 %v2001
      %v2034 = vunpack.c.l.b16 %v2002
      %v2035 = vunpack.c.l.b16 %v2003
      %v2036 = vunpack.c.l.b16 %v2004
      %v2037 = vunpack.c.l.b16 %v2005
      %v2038 = vunpack.c.l.b16 %v2006
      %v2039 = vunpack.c.l.b16 %v2007
      %v2040 = vunpack.c.l.b16 %v2008
      %v2041 = vunpack.c.l.b16 %v2009
      %v2042 = vpack.c.b16 %v2027, %v2026
      %v2043 = vpack.c.b16 %v2029, %v2028
      %v2044 = vpack.c.b16 %v2031, %v2030
      %v2045 = vpack.c.b16 %v2033, %v2032
      %v2046 = vpack.c.b16 %v2035, %v2034
      %v2047 = vpack.c.b16 %v2037, %v2036
      %v2048 = vpack.c.b16 %v2039, %v2038
      %v2049 = vpack.c.b16 %v2041, %v2040
      %2058 = vmatprep.subr.bf16.mxu0 0
      %2059 = vmatpush1.bf16.msra.mxu0 %v2042
      %2060 = vmatprep.subr.bf16.mxu0 0
      %2061 = vmatpush1.bf16.msra.mxu0 %v2043
      %2062 = vmatprep.subr.bf16.mxu0 0
      %2063 = vmatpush1.bf16.msra.mxu0 %v2044
      %2064 = vmatprep.subr.bf16.mxu0 0
      %2065 = vmatpush1.bf16.msra.mxu0 %v2045
      %2066 = vmatprep.subr.bf16.mxu0 0
      %2067 = vmatpush1.bf16.msra.mxu0 %v2046
      %2068 = vmatprep.subr.bf16.mxu0 0
      %2069 = vmatpush1.bf16.msra.mxu0 %v2047
      %2070 = vmatprep.subr.bf16.mxu0 0
      %2071 = vmatpush1.bf16.msra.mxu0 %v2048
      %2072 = vmatprep.subr.bf16.mxu0 0
      %2073 = vmatpush1.bf16.msra.mxu0 %v2049
      %2074 = vmatprep.subr.bf16.mxu0 0
      %2075 = vmatpush1.bf16.msra.mxu0 0
      %2076 = vmatprep.subr.bf16.mxu0 0
      %2077 = vmatpush1.bf16.msra.mxu0 0
      %2078 = vmatprep.subr.bf16.mxu0 0
      %2079 = vmatpush1.bf16.msra.mxu0 0
      %2080 = vmatprep.subr.bf16.mxu0 0
      %2081 = vmatpush1.bf16.msra.mxu0 0
      %2082 = vmatprep.subr.bf16.mxu0 0
      %2083 = vmatpush1.bf16.msra.mxu0 0
      %2084 = vmatprep.subr.bf16.mxu0 0
      %2085 = vmatpush1.bf16.msra.mxu0 0
      %2086 = vmatprep.subr.bf16.mxu0 0
      %2087 = vmatpush1.bf16.msra.mxu0 0
      %2088 = vmatprep.subr.bf16.mxu0 0
      %2089 = vmatpush1.bf16.msra.mxu0 0
      %2090 = vmatprep.mubr.bf16.mxu0 0
      %2091 = vmatmul.mubr.bf16.gmra.mrb[0].mxu0 %v1977
      %v2092 = vpop.f32.mrb[0].mxu0
      %v2093 = vadd.f32 0.0, %v2092
      %v2094 = vpop.f32.mrb[0].mxu0
      %v2095 = vpop.f32.mrb[0].mxu0
      %v2096 = vadd.f32 0.0, %v2095
      %v2097 = vpop.f32.mrb[0].mxu0
      %2098 = vmatprep.mubr.bf16.mxu0 0
      %2099 = vmatmul.mubr.bf16.gmra.mrb[0].mxu0 %v1978
      %v2100 = vpop.f32.mrb[0].mxu0
      %v2101 = vadd.f32 0.0, %v2100
      %v2102 = vpop.f32.mrb[0].mxu0
      %v2103 = vpop.f32.mrb[0].mxu0
      %v2104 = vadd.f32 0.0, %v2103
      %v2105 = vpop.f32.mrb[0].mxu0
      %2106 = vmatprep.mubr.bf16.mxu0 0
      %2107 = vmatmul.mubr.bf16.gmra.mrb[0].mxu0 %v1979
      %v2108 = vpop.f32.mrb[0].mxu0
      %v2109 = vadd.f32 0.0, %v2108
      %v2110 = vpop.f32.mrb[0].mxu0
      %v2111 = vpop.f32.mrb[0].mxu0
      %v2112 = vadd.f32 0.0, %v2111
      %v2113 = vpop.f32.mrb[0].mxu0
      %2114 = vmatprep.mubr.bf16.mxu0 0
      %2115 = vmatmul.mubr.bf16.gmra.mrb[0].mxu0 %v1980
      %v2116 = vpop.f32.mrb[0].mxu0
      %v2117 = vadd.f32 0.0, %v2116
      %v2118 = vpop.f32.mrb[0].mxu0
      %v2119 = vpop.f32.mrb[0].mxu0
      %v2120 = vadd.f32 0.0, %v2119
      %v2121 = vpop.f32.mrb[0].mxu0
      %2122 = vmatprep.mubr.bf16.mxu0 0
      %2123 = vmatmul.mubr.bf16.gmra.mrb[0].mxu0 %v1981
      %v2124 = vpop.f32.mrb[0].mxu0
      %v2125 = vadd.f32 0.0, %v2124
      %v2126 = vpop.f32.mrb[0].mxu0
      %v2127 = vpop.f32.mrb[0].mxu0
      %v2128 = vadd.f32 0.0, %v2127
      %v2129 = vpop.f32.mrb[0].mxu0
      %2130 = vmatprep.mubr.bf16.mxu0 0
      %2131 = vmatmul.mubr.bf16.gmra.mrb[0].mxu0 %v1982
      %v2132 = vpop.f32.mrb[0].mxu0
      %v2133 = vadd.f32 0.0, %v2132
      %v2134 = vpop.f32.mrb[0].mxu0
      %v2135 = vpop.f32.mrb[0].mxu0
      %v2136 = vadd.f32 0.0, %v2135
      %v2137 = vpop.f32.mrb[0].mxu0
      %2138 = vmatprep.mubr.bf16.mxu0 0
      %2139 = vmatmul.mubr.bf16.gmra.mrb[0].mxu0 %v1983
      %v2140 = vpop.f32.mrb[0].mxu0
      %v2141 = vadd.f32 0.0, %v2140
      %v2142 = vpop.f32.mrb[0].mxu0
      %v2143 = vpop.f32.mrb[0].mxu0
      %v2144 = vadd.f32 0.0, %v2143
      %v2145 = vpop.f32.mrb[0].mxu0
      %2146 = vmatprep.mubr.bf16.mxu0 0
      %2147 = vmatmul.mubr.bf16.gmra.mrb[0].mxu0 %v1984
      %v2148 = vpop.f32.mrb[0].mxu0
      %v2149 = vadd.f32 0.0, %v2148
      %v2150 = vpop.f32.mrb[0].mxu0
      %v2151 = vpop.f32.mrb[0].mxu0
      %v2152 = vadd.f32 0.0, %v2151
      %v2153 = vpop.f32.mrb[0].mxu0
      %2154 = vmatprep.mubr.bf16.mxu0 0
      %2155 = vmatmul.mubr.bf16.gmra.mrb[0].mxu0 %v1985
      %v2156 = vpop.f32.mrb[0].mxu0
      %v2157 = vadd.f32 0.0, %v2156
      %v2158 = vpop.f32.mrb[0].mxu0
      %v2159 = vpop.f32.mrb[0].mxu0
      %v2160 = vadd.f32 0.0, %v2159
      %v2161 = vpop.f32.mrb[0].mxu0
      %2162 = vmatprep.mubr.bf16.mxu0 0
      %2163 = vmatmul.mubr.bf16.gmra.mrb[0].mxu0 %v1986
      %v2164 = vpop.f32.mrb[0].mxu0
      %v2165 = vadd.f32 0.0, %v2164
      %v2166 = vpop.f32.mrb[0].mxu0
      %v2167 = vpop.f32.mrb[0].mxu0
      %v2168 = vadd.f32 0.0, %v2167
      %v2169 = vpop.f32.mrb[0].mxu0
      %2170 = vmatprep.mubr.bf16.mxu0 0
      %2171 = vmatmul.mubr.bf16.gmra.mrb[0].mxu0 %v1987
      %v2172 = vpop.f32.mrb[0].mxu0
      %v2173 = vadd.f32 0.0, %v2172
      %v2174 = vpop.f32.mrb[0].mxu0
      %v2175 = vpop.f32.mrb[0].mxu0
      %v2176 = vadd.f32 0.0, %v2175
      %v2177 = vpop.f32.mrb[0].mxu0
      %2178 = vmatprep.mubr.bf16.mxu0 0
      %2179 = vmatmul.mubr.bf16.gmra.mrb[0].mxu0 %v1988
      %v2180 = vpop.f32.mrb[0].mxu0
      %v2181 = vadd.f32 0.0, %v2180
      %v2182 = vpop.f32.mrb[0].mxu0
      %v2183 = vpop.f32.mrb[0].mxu0
      %v2184 = vadd.f32 0.0, %v2183
      %v2185 = vpop.f32.mrb[0].mxu0
      %2186 = vmatprep.mubr.bf16.mxu0 0
      %2187 = vmatmul.mubr.bf16.gmra.mrb[0].mxu0 %v1989
      %v2188 = vpop.f32.mrb[0].mxu0
      %v2189 = vadd.f32 0.0, %v2188
      %v2190 = vpop.f32.mrb[0].mxu0
      %v2191 = vpop.f32.mrb[0].mxu0
      %v2192 = vadd.f32 0.0, %v2191
      %v2193 = vpop.f32.mrb[0].mxu0
      %2194 = vmatprep.mubr.bf16.mxu0 0
      %2195 = vmatmul.mubr.bf16.gmra.mrb[0].mxu0 %v1990
      %v2196 = vpop.f32.mrb[0].mxu0
      %v2197 = vadd.f32 0.0, %v2196
      %v2198 = vpop.f32.mrb[0].mxu0
      %v2199 = vpop.f32.mrb[0].mxu0
      %v2200 = vadd.f32 0.0, %v2199
      %v2201 = vpop.f32.mrb[0].mxu0
      %2202 = vmatprep.mubr.bf16.mxu0 0
      %2203 = vmatmul.mubr.bf16.gmra.mrb[0].mxu0 %v1991
      %v2204 = vpop.f32.mrb[0].mxu0
      %v2205 = vadd.f32 0.0, %v2204
      %v2206 = vpop.f32.mrb[0].mxu0
      %v2207 = vpop.f32.mrb[0].mxu0
      %v2208 = vadd.f32 0.0, %v2207
      %v2209 = vpop.f32.mrb[0].mxu0
      %2210 = vmatprep.mubr.bf16.mxu0 0
      %2211 = vmatmul.mubr.bf16.gmra.mrb[0].mxu0 %v1992
      %v2212 = vpop.f32.mrb[0].mxu0
      %v2213 = vadd.f32 0.0, %v2212
      %v2214 = vpop.f32.mrb[0].mxu0
      %v2215 = vpop.f32.mrb[0].mxu0
      %v2216 = vadd.f32 0.0, %v2215
      %v2217 = vpop.f32.mrb[0].mxu0
      %2218 = vdwg.mxu0
      %v2219 = vadd.f32 %v1912, %v2093
      %v2220 = vadd.f32 %v1913, %v2096
      %v2221 = vadd.f32 %v1914, %v2101
      %v2222 = vadd.f32 %v1915, %v2104
      %v2223 = vadd.f32 %v1916, %v2109
      %v2224 = vadd.f32 %v1917, %v2112
      %v2225 = vadd.f32 %v1918, %v2117
      %v2226 = vadd.f32 %v1919, %v2120
      %v2227 = vadd.f32 %v1920, %v2125
      %v2228 = vadd.f32 %v1921, %v2128
      %v2229 = vadd.f32 %v1922, %v2133
      %v2230 = vadd.f32 %v1923, %v2136
      %v2231 = vadd.f32 %v1924, %v2141
      %v2232 = vadd.f32 %v1925, %v2144
      %v2233 = vadd.f32 %v1926, %v2149
      %v2234 = vadd.f32 %v1927, %v2152
      %v2235 = vadd.f32 %v1928, %v2157
      %v2236 = vadd.f32 %v1929, %v2160
      %v2237 = vadd.f32 %v1930, %v2165
      %v2238 = vadd.f32 %v1931, %v2168
      %v2239 = vadd.f32 %v1932, %v2173
      %v2240 = vadd.f32 %v1933, %v2176
      %v2241 = vadd.f32 %v1934, %v2181
      %v2242 = vadd.f32 %v1935, %v2184
      %v2243 = vadd.f32 %v1936, %v2189
      %v2244 = vadd.f32 %v1937, %v2192
      %v2245 = vadd.f32 %v1938, %v2197
      %v2246 = vadd.f32 %v1939, %v2200
      %v2247 = vadd.f32 %v1940, %v2205
      %v2248 = vadd.f32 %v1941, %v2208
      %v2249 = vadd.f32 %v1942, %v2213
      %v2250 = vadd.f32 %v1943, %v2216
      %v2251 = vld [vmem:[%s1944 + $0x1] sm:$0xff]
      %v2252 = vld [vmem:[%s1944 + $0x9] sm:$0xff]
      %v2253 = vld [vmem:[%s1944 + $0x19] sm:$0xff]
      %v2254 = vld [vmem:[%s1944 + $0x21] sm:$0xff]
      %v2255 = vld [vmem:[%s1944 + $0x31] sm:$0xff]
      %v2256 = vld [vmem:[%s1944 + $0x39] sm:$0xff]
      %v2257 = vld [vmem:[%s1944 + $0x49] sm:$0xff]
      %v2258 = vld [vmem:[%s1944 + $0x51] sm:$0xff]
      %v2259 = vld [vmem:[%s1944 + $0x61] sm:$0xff]
      %v2260 = vld [vmem:[%s1944 + $0x69] sm:$0xff]
      %v2261 = vld [vmem:[%s1944 + $0x79] sm:$0xff]
      %v2262 = vld [vmem:[%s1944 + $0x81] sm:$0xff]
      %v2263 = vld [vmem:[%s1944 + $0x91] sm:$0xff]
      %v2264 = vld [vmem:[%s1944 + $0x99] sm:$0xff]
      %v2265 = vld [vmem:[%s1944 + $0xa9] sm:$0xff]
      %v2266 = vld [vmem:[%s1944 + $0xb1] sm:$0xff]
      %v2267 = vld [vmem:[%s1944 + $0xc1] sm:$0xff]
      %v2268 = vld [vmem:[%s1944 + $0xc9] sm:$0xff]
      %v2269 = vld [vmem:[%s1944 + $0xd9] sm:$0xff]
      %v2270 = vld [vmem:[%s1944 + $0xe1] sm:$0xff]
      %v2271 = vld [vmem:[%s1944 + $0xf1] sm:$0xff]
      %v2272 = vld [vmem:[%s1944 + $0xf9] sm:$0xff]
      %v2273 = vld [vmem:[%s1944 + $0x109] sm:$0xff]
      %v2274 = vld [vmem:[%s1944 + $0x111] sm:$0xff]
      %v2275 = vld [vmem:[%s1944 + $0x121] sm:$0xff]
      %v2276 = vld [vmem:[%s1944 + $0x129] sm:$0xff]
      %v2277 = vld [vmem:[%s1944 + $0x139] sm:$0xff]
      %v2278 = vld [vmem:[%s1944 + $0x141] sm:$0xff]
      %v2279 = vld [vmem:[%s1944 + $0x151] sm:$0xff]
      %v2280 = vld [vmem:[%s1944 + $0x159] sm:$0xff]
      %v2281 = vld [vmem:[%s1944 + $0x169] sm:$0xff]
      %v2282 = vld [vmem:[%s1944 + $0x171] sm:$0xff]
      %v2283 = vpack.c.bf16 %v2252, %v2251
      %v2284 = vpack.c.bf16 %v2254, %v2253
      %v2285 = vpack.c.bf16 %v2256, %v2255
      %v2286 = vpack.c.bf16 %v2258, %v2257
      %v2287 = vpack.c.bf16 %v2260, %v2259
      %v2288 = vpack.c.bf16 %v2262, %v2261
      %v2289 = vpack.c.bf16 %v2264, %v2263
      %v2290 = vpack.c.bf16 %v2266, %v2265
      %v2291 = vpack.c.bf16 %v2268, %v2267
      %v2292 = vpack.c.bf16 %v2270, %v2269
      %v2293 = vpack.c.bf16 %v2272, %v2271
      %v2294 = vpack.c.bf16 %v2274, %v2273
      %v2295 = vpack.c.bf16 %v2276, %v2275
      %v2296 = vpack.c.bf16 %v2278, %v2277
      %v2297 = vpack.c.bf16 %v2280, %v2279
      %v2298 = vpack.c.bf16 %v2282, %v2281
      %s2299 = scalar_lea.vmem %s1, 448
      %v2300 = vld [vmem:[%s2299] sm:$0xf]
      %v2301 = vld [vmem:[%s2299 + $0x4] sm:$0xf]
      %v2302 = vld [vmem:[%s2299 + $0x8] sm:$0xf]
      %v2303 = vld [vmem:[%s2299 + $0xc] sm:$0xf]
      %v2304 = vld [vmem:[%s2299 + $0x10] sm:$0xf]
      %v2305 = vld [vmem:[%s2299 + $0x14] sm:$0xf]
      %v2306 = vld [vmem:[%s2299 + $0x18] sm:$0xf]
      %v2307 = vld [vmem:[%s2299 + $0x1c] sm:$0xf]
      %v2308 = vld [vmem:[%s2299 + $0x20] sm:$0xf]
      %v2309 = vld [vmem:[%s2299 + $0x24] sm:$0xf]
      %v2310 = vld [vmem:[%s2299 + $0x28] sm:$0xf]
      %v2311 = vld [vmem:[%s2299 + $0x2c] sm:$0xf]
      %v2312 = vld [vmem:[%s2299 + $0x30] sm:$0xf]
      %v2313 = vld [vmem:[%s2299 + $0x34] sm:$0xf]
      %v2314 = vld [vmem:[%s2299 + $0x38] sm:$0xf]
      %v2315 = vld [vmem:[%s2299 + $0x3c] sm:$0xf]
      %v2332 = vunpack.c.l.b16 %v2300
      %v2333 = vunpack.c.l.b16 %v2301
      %v2334 = vunpack.c.l.b16 %v2302
      %v2335 = vunpack.c.l.b16 %v2303
      %v2336 = vunpack.c.l.b16 %v2304
      %v2337 = vunpack.c.l.b16 %v2305
      %v2338 = vunpack.c.l.b16 %v2306
      %v2339 = vunpack.c.l.b16 %v2307
      %v2340 = vunpack.c.l.b16 %v2308
      %v2341 = vunpack.c.l.b16 %v2309
      %v2342 = vunpack.c.l.b16 %v2310
      %v2343 = vunpack.c.l.b16 %v2311
      %v2344 = vunpack.c.l.b16 %v2312
      %v2345 = vunpack.c.l.b16 %v2313
      %v2346 = vunpack.c.l.b16 %v2314
      %v2347 = vunpack.c.l.b16 %v2315
      %v2348 = vpack.c.b16 %v2333, %v2332
      %v2349 = vpack.c.b16 %v2335, %v2334
      %v2350 = vpack.c.b16 %v2337, %v2336
      %v2351 = vpack.c.b16 %v2339, %v2338
      %v2352 = vpack.c.b16 %v2341, %v2340
      %v2353 = vpack.c.b16 %v2343, %v2342
      %v2354 = vpack.c.b16 %v2345, %v2344
      %v2355 = vpack.c.b16 %v2347, %v2346
      %2364 = vmatprep.subr.bf16.mxu0 0
      %2365 = vmatpush1.bf16.msra.mxu0 %v2348
      %2366 = vmatprep.subr.bf16.mxu0 0
      %2367 = vmatpush1.bf16.msra.mxu0 %v2349
      %2368 = vmatprep.subr.bf16.mxu0 0
      %2369 = vmatpush1.bf16.msra.mxu0 %v2350
      %2370 = vmatprep.subr.bf16.mxu0 0
      %2371 = vmatpush1.bf16.msra.mxu0 %v2351
      %2372 = vmatprep.subr.bf16.mxu0 0
      %2373 = vmatpush1.bf16.msra.mxu0 %v2352
      %2374 = vmatprep.subr.bf16.mxu0 0
      %2375 = vmatpush1.bf16.msra.mxu0 %v2353
      %2376 = vmatprep.subr.bf16.mxu0 0
      %2377 = vmatpush1.bf16.msra.mxu0 %v2354
      %2378 = vmatprep.subr.bf16.mxu0 0
      %2379 = vmatpush1.bf16.msra.mxu0 %v2355
      %2380 = vmatprep.subr.bf16.mxu0 0
      %2381 = vmatpush1.bf16.msra.mxu0 0
      %2382 = vmatprep.subr.bf16.mxu0 0
      %2383 = vmatpush1.bf16.msra.mxu0 0
      %2384 = vmatprep.subr.bf16.mxu0 0
      %2385 = vmatpush1.bf16.msra.mxu0 0
      %2386 = vmatprep.subr.bf16.mxu0 0
      %2387 = vmatpush1.bf16.msra.mxu0 0
      %2388 = vmatprep.subr.bf16.mxu0 0
      %2389 = vmatpush1.bf16.msra.mxu0 0
      %2390 = vmatprep.subr.bf16.mxu0 0
      %2391 = vmatpush1.bf16.msra.mxu0 0
      %2392 = vmatprep.subr.bf16.mxu0 0
      %2393 = vmatpush1.bf16.msra.mxu0 0
      %2394 = vmatprep.subr.bf16.mxu0 0
      %2395 = vmatpush1.bf16.msra.mxu0 0
      %2396 = vmatprep.mubr.bf16.mxu0 0
      %2397 = vmatmul.mubr.bf16.gmra.mrb[0].mxu0 %v2283
      %v2398 = vpop.f32.mrb[0].mxu0
      %v2399 = vadd.f32 0.0, %v2398
      %v2400 = vpop.f32.mrb[0].mxu0
      %v2401 = vpop.f32.mrb[0].mxu0
      %v2402 = vadd.f32 0.0, %v2401
      %v2403 = vpop.f32.mrb[0].mxu0
      %2404 = vmatprep.mubr.bf16.mxu0 0
      %2405 = vmatmul.mubr.bf16.gmra.mrb[0].mxu0 %v2284
      %v2406 = vpop.f32.mrb[0].mxu0
      %v2407 = vadd.f32 0.0, %v2406
      %v2408 = vpop.f32.mrb[0].mxu0
      %v2409 = vpop.f32.mrb[0].mxu0
      %v2410 = vadd.f32 0.0, %v2409
      %v2411 = vpop.f32.mrb[0].mxu0
      %2412 = vmatprep.mubr.bf16.mxu0 0
      %2413 = vmatmul.mubr.bf16.gmra.mrb[0].mxu0 %v2285
      %v2414 = vpop.f32.mrb[0].mxu0
      %v2415 = vadd.f32 0.0, %v2414
      %v2416 = vpop.f32.mrb[0].mxu0
      %v2417 = vpop.f32.mrb[0].mxu0
      %v2418 = vadd.f32 0.0, %v2417
      %v2419 = vpop.f32.mrb[0].mxu0
      %2420 = vmatprep.mubr.bf16.mxu0 0
      %2421 = vmatmul.mubr.bf16.gmra.mrb[0].mxu0 %v2286
      %v2422 = vpop.f32.mrb[0].mxu0
      %v2423 = vadd.f32 0.0, %v2422
      %v2424 = vpop.f32.mrb[0].mxu0
      %v2425 = vpop.f32.mrb[0].mxu0
      %v2426 = vadd.f32 0.0, %v2425
      %v2427 = vpop.f32.mrb[0].mxu0
      %2428 = vmatprep.mubr.bf16.mxu0 0
      %2429 = vmatmul.mubr.bf16.gmra.mrb[0].mxu0 %v2287
      %v2430 = vpop.f32.mrb[0].mxu0
      %v2431 = vadd.f32 0.0, %v2430
      %v2432 = vpop.f32.mrb[0].mxu0
      %v2433 = vpop.f32.mrb[0].mxu0
      %v2434 = vadd.f32 0.0, %v2433
      %v2435 = vpop.f32.mrb[0].mxu0
      %2436 = vmatprep.mubr.bf16.mxu0 0
      %2437 = vmatmul.mubr.bf16.gmra.mrb[0].mxu0 %v2288
      %v2438 = vpop.f32.mrb[0].mxu0
      %v2439 = vadd.f32 0.0, %v2438
      %v2440 = vpop.f32.mrb[0].mxu0
      %v2441 = vpop.f32.mrb[0].mxu0
      %v2442 = vadd.f32 0.0, %v2441
      %v2443 = vpop.f32.mrb[0].mxu0
      %2444 = vmatprep.mubr.bf16.mxu0 0
      %2445 = vmatmul.mubr.bf16.gmra.mrb[0].mxu0 %v2289
      %v2446 = vpop.f32.mrb[0].mxu0
      %v2447 = vadd.f32 0.0, %v2446
      %v2448 = vpop.f32.mrb[0].mxu0
      %v2449 = vpop.f32.mrb[0].mxu0
      %v2450 = vadd.f32 0.0, %v2449
      %v2451 = vpop.f32.mrb[0].mxu0
      %2452 = vmatprep.mubr.bf16.mxu0 0
      %2453 = vmatmul.mubr.bf16.gmra.mrb[0].mxu0 %v2290
      %v2454 = vpop.f32.mrb[0].mxu0
      %v2455 = vadd.f32 0.0, %v2454
      %v2456 = vpop.f32.mrb[0].mxu0
      %v2457 = vpop.f32.mrb[0].mxu0
      %v2458 = vadd.f32 0.0, %v2457
      %v2459 = vpop.f32.mrb[0].mxu0
      %2460 = vmatprep.mubr.bf16.mxu0 0
      %2461 = vmatmul.mubr.bf16.gmra.mrb[0].mxu0 %v2291
      %v2462 = vpop.f32.mrb[0].mxu0
      %v2463 = vadd.f32 0.0, %v2462
      %v2464 = vpop.f32.mrb[0].mxu0
      %v2465 = vpop.f32.mrb[0].mxu0
      %v2466 = vadd.f32 0.0, %v2465
      %v2467 = vpop.f32.mrb[0].mxu0
      %2468 = vmatprep.mubr.bf16.mxu0 0
      %2469 = vmatmul.mubr.bf16.gmra.mrb[0].mxu0 %v2292
      %v2470 = vpop.f32.mrb[0].mxu0
      %v2471 = vadd.f32 0.0, %v2470
      %v2472 = vpop.f32.mrb[0].mxu0
      %v2473 = vpop.f32.mrb[0].mxu0
      %v2474 = vadd.f32 0.0, %v2473
      %v2475 = vpop.f32.mrb[0].mxu0
      %2476 = vmatprep.mubr.bf16.mxu0 0
      %2477 = vmatmul.mubr.bf16.gmra.mrb[0].mxu0 %v2293
      %v2478 = vpop.f32.mrb[0].mxu0
      %v2479 = vadd.f32 0.0, %v2478
      %v2480 = vpop.f32.mrb[0].mxu0
      %v2481 = vpop.f32.mrb[0].mxu0
      %v2482 = vadd.f32 0.0, %v2481
      %v2483 = vpop.f32.mrb[0].mxu0
      %2484 = vmatprep.mubr.bf16.mxu0 0
      %2485 = vmatmul.mubr.bf16.gmra.mrb[0].mxu0 %v2294
      %v2486 = vpop.f32.mrb[0].mxu0
      %v2487 = vadd.f32 0.0, %v2486
      %v2488 = vpop.f32.mrb[0].mxu0
      %v2489 = vpop.f32.mrb[0].mxu0
      %v2490 = vadd.f32 0.0, %v2489
      %v2491 = vpop.f32.mrb[0].mxu0
      %2492 = vmatprep.mubr.bf16.mxu0 0
      %2493 = vmatmul.mubr.bf16.gmra.mrb[0].mxu0 %v2295
      %v2494 = vpop.f32.mrb[0].mxu0
      %v2495 = vadd.f32 0.0, %v2494
      %v2496 = vpop.f32.mrb[0].mxu0
      %v2497 = vpop.f32.mrb[0].mxu0
      %v2498 = vadd.f32 0.0, %v2497
      %v2499 = vpop.f32.mrb[0].mxu0
      %2500 = vmatprep.mubr.bf16.mxu0 0
      %2501 = vmatmul.mubr.bf16.gmra.mrb[0].mxu0 %v2296
      %v2502 = vpop.f32.mrb[0].mxu0
      %v2503 = vadd.f32 0.0, %v2502
      %v2504 = vpop.f32.mrb[0].mxu0
      %v2505 = vpop.f32.mrb[0].mxu0
      %v2506 = vadd.f32 0.0, %v2505
      %v2507 = vpop.f32.mrb[0].mxu0
      %2508 = vmatprep.mubr.bf16.mxu0 0
      %2509 = vmatmul.mubr.bf16.gmra.mrb[0].mxu0 %v2297
      %v2510 = vpop.f32.mrb[0].mxu0
      %v2511 = vadd.f32 0.0, %v2510
      %v2512 = vpop.f32.mrb[0].mxu0
      %v2513 = vpop.f32.mrb[0].mxu0
      %v2514 = vadd.f32 0.0, %v2513
      %v2515 = vpop.f32.mrb[0].mxu0
      %2516 = vmatprep.mubr.bf16.mxu0 0
      %2517 = vmatmul.mubr.bf16.gmra.mrb[0].mxu0 %v2298
      %v2518 = vpop.f32.mrb[0].mxu0
      %v2519 = vadd.f32 0.0, %v2518
      %v2520 = vpop.f32.mrb[0].mxu0
      %v2521 = vpop.f32.mrb[0].mxu0
      %v2522 = vadd.f32 0.0, %v2521
      %v2523 = vpop.f32.mrb[0].mxu0
      %2524 = vdwg.mxu0
      %v2525 = vadd.f32 %v2219, %v2399
      %v2526 = vadd.f32 %v2220, %v2402
      %v2527 = vadd.f32 %v2221, %v2407
      %v2528 = vadd.f32 %v2222, %v2410
      %v2529 = vadd.f32 %v2223, %v2415
      %v2530 = vadd.f32 %v2224, %v2418
      %v2531 = vadd.f32 %v2225, %v2423
      %v2532 = vadd.f32 %v2226, %v2426
      %v2533 = vadd.f32 %v2227, %v2431
      %v2534 = vadd.f32 %v2228, %v2434
      %v2535 = vadd.f32 %v2229, %v2439
      %v2536 = vadd.f32 %v2230, %v2442
      %v2537 = vadd.f32 %v2231, %v2447
      %v2538 = vadd.f32 %v2232, %v2450
      %v2539 = vadd.f32 %v2233, %v2455
      %v2540 = vadd.f32 %v2234, %v2458
      %v2541 = vadd.f32 %v2235, %v2463
      %v2542 = vadd.f32 %v2236, %v2466
      %v2543 = vadd.f32 %v2237, %v2471
      %v2544 = vadd.f32 %v2238, %v2474
      %v2545 = vadd.f32 %v2239, %v2479
      %v2546 = vadd.f32 %v2240, %v2482
      %v2547 = vadd.f32 %v2241, %v2487
      %v2548 = vadd.f32 %v2242, %v2490
      %v2549 = vadd.f32 %v2243, %v2495
      %v2550 = vadd.f32 %v2244, %v2498
      %v2551 = vadd.f32 %v2245, %v2503
      %v2552 = vadd.f32 %v2246, %v2506
      %v2553 = vadd.f32 %v2247, %v2511
      %v2554 = vadd.f32 %v2248, %v2514
      %v2555 = vadd.f32 %v2249, %v2519
      %v2556 = vadd.f32 %v2250, %v2522
      %v2557 = vld [vmem:[%s1944 + $0x2] sm:$0xff]
      %v2558 = vld [vmem:[%s1944 + $0xa] sm:$0xff]
      %v2559 = vld [vmem:[%s1944 + $0x1a] sm:$0xff]
      %v2560 = vld [vmem:[%s1944 + $0x22] sm:$0xff]
      %v2561 = vld [vmem:[%s1944 + $0x32] sm:$0xff]
      %v2562 = vld [vmem:[%s1944 + $0x3a] sm:$0xff]
      %v2563 = vld [vmem:[%s1944 + $0x4a] sm:$0xff]
      %v2564 = vld [vmem:[%s1944 + $0x52] sm:$0xff]
      %v2565 = vld [vmem:[%s1944 + $0x62] sm:$0xff]
      %v2566 = vld [vmem:[%s1944 + $0x6a] sm:$0xff]
      %v2567 = vld [vmem:[%s1944 + $0x7a] sm:$0xff]
      %v2568 = vld [vmem:[%s1944 + $0x82] sm:$0xff]
      %v2569 = vld [vmem:[%s1944 + $0x92] sm:$0xff]
      %v2570 = vld [vmem:[%s1944 + $0x9a] sm:$0xff]
      %v2571 = vld [vmem:[%s1944 + $0xaa] sm:$0xff]
      %v2572 = vld [vmem:[%s1944 + $0xb2] sm:$0xff]
      %v2573 = vld [vmem:[%s1944 + $0xc2] sm:$0xff]
      %v2574 = vld [vmem:[%s1944 + $0xca] sm:$0xff]
      %v2575 = vld [vmem:[%s1944 + $0xda] sm:$0xff]
      %v2576 = vld [vmem:[%s1944 + $0xe2] sm:$0xff]
      %v2577 = vld [vmem:[%s1944 + $0xf2] sm:$0xff]
      %v2578 = vld [vmem:[%s1944 + $0xfa] sm:$0xff]
      %v2579 = vld [vmem:[%s1944 + $0x10a] sm:$0xff]
      %v2580 = vld [vmem:[%s1944 + $0x112] sm:$0xff]
      %v2581 = vld [vmem:[%s1944 + $0x122] sm:$0xff]
      %v2582 = vld [vmem:[%s1944 + $0x12a] sm:$0xff]
      %v2583 = vld [vmem:[%s1944 + $0x13a] sm:$0xff]
      %v2584 = vld [vmem:[%s1944 + $0x142] sm:$0xff]
      %v2585 = vld [vmem:[%s1944 + $0x152] sm:$0xff]
      %v2586 = vld [vmem:[%s1944 + $0x15a] sm:$0xff]
      %v2587 = vld [vmem:[%s1944 + $0x16a] sm:$0xff]
      %v2588 = vld [vmem:[%s1944 + $0x172] sm:$0xff]
      %v2589 = vpack.c.bf16 %v2558, %v2557
      %v2590 = vpack.c.bf16 %v2560, %v2559
      %v2591 = vpack.c.bf16 %v2562, %v2561
      %v2592 = vpack.c.bf16 %v2564, %v2563
      %v2593 = vpack.c.bf16 %v2566, %v2565
      %v2594 = vpack.c.bf16 %v2568, %v2567
      %v2595 = vpack.c.bf16 %v2570, %v2569
      %v2596 = vpack.c.bf16 %v2572, %v2571
      %v2597 = vpack.c.bf16 %v2574, %v2573
      %v2598 = vpack.c.bf16 %v2576, %v2575
      %v2599 = vpack.c.bf16 %v2578, %v2577
      %v2600 = vpack.c.bf16 %v2580, %v2579
      %v2601 = vpack.c.bf16 %v2582, %v2581
      %v2602 = vpack.c.bf16 %v2584, %v2583
      %v2603 = vpack.c.bf16 %v2586, %v2585
      %v2604 = vpack.c.bf16 %v2588, %v2587
      %s2605 = scalar_lea.vmem %s1, 512
      %v2606 = vld [vmem:[%s2605] sm:$0xf]
      %v2607 = vld [vmem:[%s2605 + $0x4] sm:$0xf]
      %v2608 = vld [vmem:[%s2605 + $0x8] sm:$0xf]
      %v2609 = vld [vmem:[%s2605 + $0xc] sm:$0xf]
      %v2610 = vld [vmem:[%s2605 + $0x10] sm:$0xf]
      %v2611 = vld [vmem:[%s2605 + $0x14] sm:$0xf]
      %v2612 = vld [vmem:[%s2605 + $0x18] sm:$0xf]
      %v2613 = vld [vmem:[%s2605 + $0x1c] sm:$0xf]
      %v2614 = vld [vmem:[%s2605 + $0x20] sm:$0xf]
      %v2615 = vld [vmem:[%s2605 + $0x24] sm:$0xf]
      %v2616 = vld [vmem:[%s2605 + $0x28] sm:$0xf]
      %v2617 = vld [vmem:[%s2605 + $0x2c] sm:$0xf]
      %v2618 = vld [vmem:[%s2605 + $0x30] sm:$0xf]
      %v2619 = vld [vmem:[%s2605 + $0x34] sm:$0xf]
      %v2620 = vld [vmem:[%s2605 + $0x38] sm:$0xf]
      %v2621 = vld [vmem:[%s2605 + $0x3c] sm:$0xf]
      %v2638 = vunpack.c.l.b16 %v2606
      %v2639 = vunpack.c.l.b16 %v2607
      %v2640 = vunpack.c.l.b16 %v2608
      %v2641 = vunpack.c.l.b16 %v2609
      %v2642 = vunpack.c.l.b16 %v2610
      %v2643 = vunpack.c.l.b16 %v2611
      %v2644 = vunpack.c.l.b16 %v2612
      %v2645 = vunpack.c.l.b16 %v2613
      %v2646 = vunpack.c.l.b16 %v2614
      %v2647 = vunpack.c.l.b16 %v2615
      %v2648 = vunpack.c.l.b16 %v2616
      %v2649 = vunpack.c.l.b16 %v2617
      %v2650 = vunpack.c.l.b16 %v2618
      %v2651 = vunpack.c.l.b16 %v2619
      %v2652 = vunpack.c.l.b16 %v2620
      %v2653 = vunpack.c.l.b16 %v2621
      %v2654 = vpack.c.b16 %v2639, %v2638
      %v2655 = vpack.c.b16 %v2641, %v2640
      %v2656 = vpack.c.b16 %v2643, %v2642
      %v2657 = vpack.c.b16 %v2645, %v2644
      %v2658 = vpack.c.b16 %v2647, %v2646
      %v2659 = vpack.c.b16 %v2649, %v2648
      %v2660 = vpack.c.b16 %v2651, %v2650
      %v2661 = vpack.c.b16 %v2653, %v2652
      %2670 = vmatprep.subr.bf16.mxu0 0
      %2671 = vmatpush1.bf16.msra.mxu0 %v2654
      %2672 = vmatprep.subr.bf16.mxu0 0
      %2673 = vmatpush1.bf16.msra.mxu0 %v2655
      %2674 = vmatprep.subr.bf16.mxu0 0
      %2675 = vmatpush1.bf16.msra.mxu0 %v2656
      %2676 = vmatprep.subr.bf16.mxu0 0
      %2677 = vmatpush1.bf16.msra.mxu0 %v2657
      %2678 = vmatprep.subr.bf16.mxu0 0
      %2679 = vmatpush1.bf16.msra.mxu0 %v2658
      %2680 = vmatprep.subr.bf16.mxu0 0
      %2681 = vmatpush1.bf16.msra.mxu0 %v2659
      %2682 = vmatprep.subr.bf16.mxu0 0
      %2683 = vmatpush1.bf16.msra.mxu0 %v2660
      %2684 = vmatprep.subr.bf16.mxu0 0
      %2685 = vmatpush1.bf16.msra.mxu0 %v2661
      %2686 = vmatprep.subr.bf16.mxu0 0
      %2687 = vmatpush1.bf16.msra.mxu0 0
      %2688 = vmatprep.subr.bf16.mxu0 0
      %2689 = vmatpush1.bf16.msra.mxu0 0
      %2690 = vmatprep.subr.bf16.mxu0 0
      %2691 = vmatpush1.bf16.msra.mxu0 0
      %2692 = vmatprep.subr.bf16.mxu0 0
      %2693 = vmatpush1.bf16.msra.mxu0 0
      %2694 = vmatprep.subr.bf16.mxu0 0
      %2695 = vmatpush1.bf16.msra.mxu0 0
      %2696 = vmatprep.subr.bf16.mxu0 0
      %2697 = vmatpush1.bf16.msra.mxu0 0
      %2698 = vmatprep.subr.bf16.mxu0 0
      %2699 = vmatpush1.bf16.msra.mxu0 0
      %2700 = vmatprep.subr.bf16.mxu0 0
      %2701 = vmatpush1.bf16.msra.mxu0 0
      %2702 = vmatprep.mubr.bf16.mxu0 0
      %2703 = vmatmul.mubr.bf16.gmra.mrb[0].mxu0 %v2589
      %v2704 = vpop.f32.mrb[0].mxu0
      %v2705 = vadd.f32 0.0, %v2704
      %v2706 = vpop.f32.mrb[0].mxu0
      %v2707 = vpop.f32.mrb[0].mxu0
      %v2708 = vadd.f32 0.0, %v2707
      %v2709 = vpop.f32.mrb[0].mxu0
      %2710 = vmatprep.mubr.bf16.mxu0 0
      %2711 = vmatmul.mubr.bf16.gmra.mrb[0].mxu0 %v2590
      %v2712 = vpop.f32.mrb[0].mxu0
      %v2713 = vadd.f32 0.0, %v2712
      %v2714 = vpop.f32.mrb[0].mxu0
      %v2715 = vpop.f32.mrb[0].mxu0
      %v2716 = vadd.f32 0.0, %v2715
      %v2717 = vpop.f32.mrb[0].mxu0
      %2718 = vmatprep.mubr.bf16.mxu0 0
      %2719 = vmatmul.mubr.bf16.gmra.mrb[0].mxu0 %v2591
      %v2720 = vpop.f32.mrb[0].mxu0
      %v2721 = vadd.f32 0.0, %v2720
      %v2722 = vpop.f32.mrb[0].mxu0
      %v2723 = vpop.f32.mrb[0].mxu0
      %v2724 = vadd.f32 0.0, %v2723
      %v2725 = vpop.f32.mrb[0].mxu0
      %2726 = vmatprep.mubr.bf16.mxu0 0
      %2727 = vmatmul.mubr.bf16.gmra.mrb[0].mxu0 %v2592
      %v2728 = vpop.f32.mrb[0].mxu0
      %v2729 = vadd.f32 0.0, %v2728
      %v2730 = vpop.f32.mrb[0].mxu0
      %v2731 = vpop.f32.mrb[0].mxu0
      %v2732 = vadd.f32 0.0, %v2731
      %v2733 = vpop.f32.mrb[0].mxu0
      %2734 = vmatprep.mubr.bf16.mxu0 0
      %2735 = vmatmul.mubr.bf16.gmra.mrb[0].mxu0 %v2593
      %v2736 = vpop.f32.mrb[0].mxu0
      %v2737 = vadd.f32 0.0, %v2736
      %v2738 = vpop.f32.mrb[0].mxu0
      %v2739 = vpop.f32.mrb[0].mxu0
      %v2740 = vadd.f32 0.0, %v2739
      %v2741 = vpop.f32.mrb[0].mxu0
      %2742 = vmatprep.mubr.bf16.mxu0 0
      %2743 = vmatmul.mubr.bf16.gmra.mrb[0].mxu0 %v2594
      %v2744 = vpop.f32.mrb[0].mxu0
      %v2745 = vadd.f32 0.0, %v2744
      %v2746 = vpop.f32.mrb[0].mxu0
      %v2747 = vpop.f32.mrb[0].mxu0
      %v2748 = vadd.f32 0.0, %v2747
      %v2749 = vpop.f32.mrb[0].mxu0
      %2750 = vmatprep.mubr.bf16.mxu0 0
      %2751 = vmatmul.mubr.bf16.gmra.mrb[0].mxu0 %v2595
      %v2752 = vpop.f32.mrb[0].mxu0
      %v2753 = vadd.f32 0.0, %v2752
      %v2754 = vpop.f32.mrb[0].mxu0
      %v2755 = vpop.f32.mrb[0].mxu0
      %v2756 = vadd.f32 0.0, %v2755
      %v2757 = vpop.f32.mrb[0].mxu0
      %2758 = vmatprep.mubr.bf16.mxu0 0
      %2759 = vmatmul.mubr.bf16.gmra.mrb[0].mxu0 %v2596
      %v2760 = vpop.f32.mrb[0].mxu0
      %v2761 = vadd.f32 0.0, %v2760
      %v2762 = vpop.f32.mrb[0].mxu0
      %v2763 = vpop.f32.mrb[0].mxu0
      %v2764 = vadd.f32 0.0, %v2763
      %v2765 = vpop.f32.mrb[0].mxu0
      %2766 = vmatprep.mubr.bf16.mxu0 0
      %2767 = vmatmul.mubr.bf16.gmra.mrb[0].mxu0 %v2597
      %v2768 = vpop.f32.mrb[0].mxu0
      %v2769 = vadd.f32 0.0, %v2768
      %v2770 = vpop.f32.mrb[0].mxu0
      %v2771 = vpop.f32.mrb[0].mxu0
      %v2772 = vadd.f32 0.0, %v2771
      %v2773 = vpop.f32.mrb[0].mxu0
      %2774 = vmatprep.mubr.bf16.mxu0 0
      %2775 = vmatmul.mubr.bf16.gmra.mrb[0].mxu0 %v2598
      %v2776 = vpop.f32.mrb[0].mxu0
      %v2777 = vadd.f32 0.0, %v2776
      %v2778 = vpop.f32.mrb[0].mxu0
      %v2779 = vpop.f32.mrb[0].mxu0
      %v2780 = vadd.f32 0.0, %v2779
      %v2781 = vpop.f32.mrb[0].mxu0
      %2782 = vmatprep.mubr.bf16.mxu0 0
      %2783 = vmatmul.mubr.bf16.gmra.mrb[0].mxu0 %v2599
      %v2784 = vpop.f32.mrb[0].mxu0
      %v2785 = vadd.f32 0.0, %v2784
      %v2786 = vpop.f32.mrb[0].mxu0
      %v2787 = vpop.f32.mrb[0].mxu0
      %v2788 = vadd.f32 0.0, %v2787
      %v2789 = vpop.f32.mrb[0].mxu0
      %2790 = vmatprep.mubr.bf16.mxu0 0
      %2791 = vmatmul.mubr.bf16.gmra.mrb[0].mxu0 %v2600
      %v2792 = vpop.f32.mrb[0].mxu0
      %v2793 = vadd.f32 0.0, %v2792
      %v2794 = vpop.f32.mrb[0].mxu0
      %v2795 = vpop.f32.mrb[0].mxu0
      %v2796 = vadd.f32 0.0, %v2795
      %v2797 = vpop.f32.mrb[0].mxu0
      %2798 = vmatprep.mubr.bf16.mxu0 0
      %2799 = vmatmul.mubr.bf16.gmra.mrb[0].mxu0 %v2601
      %v2800 = vpop.f32.mrb[0].mxu0
      %v2801 = vadd.f32 0.0, %v2800
      %v2802 = vpop.f32.mrb[0].mxu0
      %v2803 = vpop.f32.mrb[0].mxu0
      %v2804 = vadd.f32 0.0, %v2803
      %v2805 = vpop.f32.mrb[0].mxu0
      %2806 = vmatprep.mubr.bf16.mxu0 0
      %2807 = vmatmul.mubr.bf16.gmra.mrb[0].mxu0 %v2602
      %v2808 = vpop.f32.mrb[0].mxu0
      %v2809 = vadd.f32 0.0, %v2808
      %v2810 = vpop.f32.mrb[0].mxu0
      %v2811 = vpop.f32.mrb[0].mxu0
      %v2812 = vadd.f32 0.0, %v2811
      %v2813 = vpop.f32.mrb[0].mxu0
      %2814 = vmatprep.mubr.bf16.mxu0 0
      %2815 = vmatmul.mubr.bf16.gmra.mrb[0].mxu0 %v2603
      %v2816 = vpop.f32.mrb[0].mxu0
      %v2817 = vadd.f32 0.0, %v2816
      %v2818 = vpop.f32.mrb[0].mxu0
      %v2819 = vpop.f32.mrb[0].mxu0
      %v2820 = vadd.f32 0.0, %v2819
      %v2821 = vpop.f32.mrb[0].mxu0
      %2822 = vmatprep.mubr.bf16.mxu0 0
      %2823 = vmatmul.mubr.bf16.gmra.mrb[0].mxu0 %v2604
      %v2824 = vpop.f32.mrb[0].mxu0
      %v2825 = vadd.f32 0.0, %v2824
      %v2826 = vpop.f32.mrb[0].mxu0
      %v2827 = vpop.f32.mrb[0].mxu0
      %v2828 = vadd.f32 0.0, %v2827
      %v2829 = vpop.f32.mrb[0].mxu0
      %2830 = vdwg.mxu0
      %v2831 = vadd.f32 %v2525, %v2705
      %v2832 = vadd.f32 %v2526, %v2708
      %v2833 = vadd.f32 %v2527, %v2713
      %v2834 = vadd.f32 %v2528, %v2716
      %v2835 = vadd.f32 %v2529, %v2721
      %v2836 = vadd.f32 %v2530, %v2724
      %v2837 = vadd.f32 %v2531, %v2729
      %v2838 = vadd.f32 %v2532, %v2732
      %v2839 = vadd.f32 %v2533, %v2737
      %v2840 = vadd.f32 %v2534, %v2740
      %v2841 = vadd.f32 %v2535, %v2745
      %v2842 = vadd.f32 %v2536, %v2748
      %v2843 = vadd.f32 %v2537, %v2753
      %v2844 = vadd.f32 %v2538, %v2756
      %v2845 = vadd.f32 %v2539, %v2761
      %v2846 = vadd.f32 %v2540, %v2764
      %v2847 = vadd.f32 %v2541, %v2769
      %v2848 = vadd.f32 %v2542, %v2772
      %v2849 = vadd.f32 %v2543, %v2777
      %v2850 = vadd.f32 %v2544, %v2780
      %v2851 = vadd.f32 %v2545, %v2785
      %v2852 = vadd.f32 %v2546, %v2788
      %v2853 = vadd.f32 %v2547, %v2793
      %v2854 = vadd.f32 %v2548, %v2796
      %v2855 = vadd.f32 %v2549, %v2801
      %v2856 = vadd.f32 %v2550, %v2804
      %v2857 = vadd.f32 %v2551, %v2809
      %v2858 = vadd.f32 %v2552, %v2812
      %v2859 = vadd.f32 %v2553, %v2817
      %v2860 = vadd.f32 %v2554, %v2820
      %v2861 = vadd.f32 %v2555, %v2825
      %v2862 = vadd.f32 %v2556, %v2828
      %v2863 = vadd.f32 %v2831, %v2832
      %v2864 = vadd.f32 %v2863, %v2833
      %v2865 = vadd.f32 %v2864, %v2834
      %v2866 = vadd.f32 %v2865, %v2835
      %v2867 = vadd.f32 %v2866, %v2836
      %v2868 = vadd.f32 %v2867, %v2837
      %v2869 = vadd.f32 %v2868, %v2838
      %v2870 = vadd.f32 %v2869, %v2839
      %v2871 = vadd.f32 %v2870, %v2840
      %v2872 = vadd.f32 %v2871, %v2841
      %v2873 = vadd.f32 %v2872, %v2842
      %v2874 = vadd.f32 %v2873, %v2843
      %v2875 = vadd.f32 %v2874, %v2844
      %v2876 = vadd.f32 %v2875, %v2845
      %v2877 = vadd.f32 %v2876, %v2846
      %v2878 = vadd.f32 %v2877, %v2847
      %v2879 = vadd.f32 %v2878, %v2848
      %v2880 = vadd.f32 %v2879, %v2849
      %v2881 = vadd.f32 %v2880, %v2850
      %v2882 = vadd.f32 %v2881, %v2851
      %v2883 = vadd.f32 %v2882, %v2852
      %v2884 = vadd.f32 %v2883, %v2853
      %v2885 = vadd.f32 %v2884, %v2854
      %v2886 = vadd.f32 %v2885, %v2855
      %v2887 = vadd.f32 %v2886, %v2856
      %v2888 = vadd.f32 %v2887, %v2857
      %v2889 = vadd.f32 %v2888, %v2858
      %v2890 = vadd.f32 %v2889, %v2859
      %v2891 = vadd.f32 %v2890, %v2860
      %v2892 = vadd.f32 %v2891, %v2861
      %v2893 = vadd.f32 %v2892, %v2862
      %v2894 = vrot.slane %v2893, 4
      %v2895 = vadd.f32 %v2893, %v2894
      %v2896 = vrot.slane %v2895, 2
      %v2897 = vadd.f32 %v2895, %v2896
      %v2898 = vrot.slane %v2897, 1
      %v2899 = vadd.f32 %v2897, %v2898
      %v2900 = vrcp.pop 256.0
      %v2901 = vmul.f32 %v2899, %v2900
      %v2902 = vsub.f32 %v2831, %v2901
      %v2903 = vsub.f32 %v2832, %v2901
      %v2904 = vsub.f32 %v2833, %v2901
      %v2905 = vsub.f32 %v2834, %v2901
      %v2906 = vsub.f32 %v2835, %v2901
      %v2907 = vsub.f32 %v2836, %v2901
      %v2908 = vsub.f32 %v2837, %v2901
      %v2909 = vsub.f32 %v2838, %v2901
      %v2910 = vsub.f32 %v2839, %v2901
      %v2911 = vsub.f32 %v2840, %v2901
      %v2912 = vsub.f32 %v2841, %v2901
      %v2913 = vsub.f32 %v2842, %v2901
      %v2914 = vsub.f32 %v2843, %v2901
      %v2915 = vsub.f32 %v2844, %v2901
      %v2916 = vsub.f32 %v2845, %v2901
      %v2917 = vsub.f32 %v2846, %v2901
      %v2918 = vsub.f32 %v2847, %v2901
      %v2919 = vsub.f32 %v2848, %v2901
      %v2920 = vsub.f32 %v2849, %v2901
      %v2921 = vsub.f32 %v2850, %v2901
      %v2922 = vsub.f32 %v2851, %v2901
      %v2923 = vsub.f32 %v2852, %v2901
      %v2924 = vsub.f32 %v2853, %v2901
      %v2925 = vsub.f32 %v2854, %v2901
      %v2926 = vsub.f32 %v2855, %v2901
      %v2927 = vsub.f32 %v2856, %v2901
      %v2928 = vsub.f32 %v2857, %v2901
      %v2929 = vsub.f32 %v2858, %v2901
      %v2930 = vsub.f32 %v2859, %v2901
      %v2931 = vsub.f32 %v2860, %v2901
      %v2932 = vsub.f32 %v2861, %v2901
      %v2933 = vsub.f32 %v2862, %v2901
      %v2934 = vmul.f32 %v2902, %v2902
      %v2935 = vmul.f32 %v2903, %v2903
      %v2936 = vmul.f32 %v2904, %v2904
      %v2937 = vmul.f32 %v2905, %v2905
      %v2938 = vmul.f32 %v2906, %v2906
      %v2939 = vmul.f32 %v2907, %v2907
      %v2940 = vmul.f32 %v2908, %v2908
      %v2941 = vmul.f32 %v2909, %v2909
      %v2942 = vmul.f32 %v2910, %v2910
      %v2943 = vmul.f32 %v2911, %v2911
      %v2944 = vmul.f32 %v2912, %v2912
      %v2945 = vmul.f32 %v2913, %v2913
      %v2946 = vmul.f32 %v2914, %v2914
      %v2947 = vmul.f32 %v2915, %v2915
      %v2948 = vmul.f32 %v2916, %v2916
      %v2949 = vmul.f32 %v2917, %v2917
      %v2950 = vmul.f32 %v2918, %v2918
      %v2951 = vmul.f32 %v2919, %v2919
      %v2952 = vmul.f32 %v2920, %v2920
      %v2953 = vmul.f32 %v2921, %v2921
      %v2954 = vmul.f32 %v2922, %v2922
      %v2955 = vmul.f32 %v2923, %v2923
      %v2956 = vmul.f32 %v2924, %v2924
      %v2957 = vmul.f32 %v2925, %v2925
      %v2958 = vmul.f32 %v2926, %v2926
      %v2959 = vmul.f32 %v2927, %v2927
      %v2960 = vmul.f32 %v2928, %v2928
      %v2961 = vmul.f32 %v2929, %v2929
      %v2962 = vmul.f32 %v2930, %v2930
      %v2963 = vmul.f32 %v2931, %v2931
      %v2964 = vmul.f32 %v2932, %v2932
      %v2965 = vmul.f32 %v2933, %v2933
      %v2966 = vadd.f32 %v2934, %v2935
      %v2967 = vadd.f32 %v2966, %v2936
      %v2968 = vadd.f32 %v2967, %v2937
      %v2969 = vadd.f32 %v2968, %v2938
      %v2970 = vadd.f32 %v2969, %v2939
      %v2971 = vadd.f32 %v2970, %v2940
      %v2972 = vadd.f32 %v2971, %v2941
      %v2973 = vadd.f32 %v2972, %v2942
      %v2974 = vadd.f32 %v2973, %v2943
      %v2975 = vadd.f32 %v2974, %v2944
      %v2976 = vadd.f32 %v2975, %v2945
      %v2977 = vadd.f32 %v2976, %v2946
      %v2978 = vadd.f32 %v2977, %v2947
      %v2979 = vadd.f32 %v2978, %v2948
      %v2980 = vadd.f32 %v2979, %v2949
      %v2981 = vadd.f32 %v2980, %v2950
      %v2982 = vadd.f32 %v2981, %v2951
      %v2983 = vadd.f32 %v2982, %v2952
      %v2984 = vadd.f32 %v2983, %v2953
      %v2985 = vadd.f32 %v2984, %v2954
      %v2986 = vadd.f32 %v2985, %v2955
      %v2987 = vadd.f32 %v2986, %v2956
      %v2988 = vadd.f32 %v2987, %v2957
      %v2989 = vadd.f32 %v2988, %v2958
      %v2990 = vadd.f32 %v2989, %v2959
      %v2991 = vadd.f32 %v2990, %v2960
      %v2992 = vadd.f32 %v2991, %v2961
      %v2993 = vadd.f32 %v2992, %v2962
      %v2994 = vadd.f32 %v2993, %v2963
      %v2995 = vadd.f32 %v2994, %v2964
      %v2996 = vadd.f32 %v2995, %v2965
      %v2997 = vrot.slane %v2996, 4
      %v2998 = vadd.f32 %v2996, %v2997
      %v2999 = vrot.slane %v2998, 2
      %v3000 = vadd.f32 %v2998, %v2999
      %v3001 = vrot.slane %v3000, 1
      %v3002 = vadd.f32 %v3000, %v3001
      %v3003 = vmul.f32 %v3002, %v2900
      %v3004 = vadd.f32 %v3003, 1e-05
      %v3005 = vrsqrt.pop %v3004
      %v3006 = vmul.f32 %v2902, %v3005
      %v3007 = vmul.f32 %v2903, %v3005
      %v3008 = vmul.f32 %v2904, %v3005
      %v3009 = vmul.f32 %v2905, %v3005
      %v3010 = vmul.f32 %v2906, %v3005
      %v3011 = vmul.f32 %v2907, %v3005
      %v3012 = vmul.f32 %v2908, %v3005
      %v3013 = vmul.f32 %v2909, %v3005
      %v3014 = vmul.f32 %v2910, %v3005
      %v3015 = vmul.f32 %v2911, %v3005
      %v3016 = vmul.f32 %v2912, %v3005
      %v3017 = vmul.f32 %v2913, %v3005
      %v3018 = vmul.f32 %v2914, %v3005
      %v3019 = vmul.f32 %v2915, %v3005
      %v3020 = vmul.f32 %v2916, %v3005
      %v3021 = vmul.f32 %v2917, %v3005
      %v3022 = vmul.f32 %v2918, %v3005
      %v3023 = vmul.f32 %v2919, %v3005
      %v3024 = vmul.f32 %v2920, %v3005
      %v3025 = vmul.f32 %v2921, %v3005
      %v3026 = vmul.f32 %v2922, %v3005
      %v3027 = vmul.f32 %v2923, %v3005
      %v3028 = vmul.f32 %v2924, %v3005
      %v3029 = vmul.f32 %v2925, %v3005
      %v3030 = vmul.f32 %v2926, %v3005
      %v3031 = vmul.f32 %v2927, %v3005
      %v3032 = vmul.f32 %v2928, %v3005
      %v3033 = vmul.f32 %v2929, %v3005
      %v3034 = vmul.f32 %v2930, %v3005
      %v3035 = vmul.f32 %v2931, %v3005
      %v3036 = vmul.f32 %v2932, %v3005
      %v3037 = vmul.f32 %v2933, %v3005
      %v3038 = vmax.f32 %v3006, 0.0
      %v3039 = vmax.f32 %v3007, 0.0
      %v3040 = vmax.f32 %v3008, 0.0
      %v3041 = vmax.f32 %v3009, 0.0
      %v3042 = vmax.f32 %v3010, 0.0
      %v3043 = vmax.f32 %v3011, 0.0
      %v3044 = vmax.f32 %v3012, 0.0
      %v3045 = vmax.f32 %v3013, 0.0
      %v3046 = vmax.f32 %v3014, 0.0
      %v3047 = vmax.f32 %v3015, 0.0
      %v3048 = vmax.f32 %v3016, 0.0
      %v3049 = vmax.f32 %v3017, 0.0
      %v3050 = vmax.f32 %v3018, 0.0
      %v3051 = vmax.f32 %v3019, 0.0
      %v3052 = vmax.f32 %v3020, 0.0
      %v3053 = vmax.f32 %v3021, 0.0
      %v3054 = vmax.f32 %v3022, 0.0
      %v3055 = vmax.f32 %v3023, 0.0
      %v3056 = vmax.f32 %v3024, 0.0
      %v3057 = vmax.f32 %v3025, 0.0
      %v3058 = vmax.f32 %v3026, 0.0
      %v3059 = vmax.f32 %v3027, 0.0
      %v3060 = vmax.f32 %v3028, 0.0
      %v3061 = vmax.f32 %v3029, 0.0
      %v3062 = vmax.f32 %v3030, 0.0
      %v3063 = vmax.f32 %v3031, 0.0
      %v3064 = vmax.f32 %v3032, 0.0
      %v3065 = vmax.f32 %v3033, 0.0
      %v3066 = vmax.f32 %v3034, 0.0
      %v3067 = vmax.f32 %v3035, 0.0
      %v3068 = vmax.f32 %v3036, 0.0
      %v3069 = vmax.f32 %v3037, 0.0
      %3070 = vst [vmem:[#allocation2] sm:$0xff] 0.0
      %3071 = vst [vmem:[#allocation2 + $0x8] sm:$0xff] 0.0
      %3072 = vst [vmem:[#allocation2 + $0x10] sm:$0xff] 0.0
      %3073 = vst [vmem:[#allocation2 + $0x18] sm:$0xff] 0.0
      %3074 = vst [vmem:[#allocation2 + $0x20] sm:$0xff] 0.0
      %3075 = vst [vmem:[#allocation2 + $0x28] sm:$0xff] 0.0
      %3076 = vst [vmem:[#allocation2 + $0x30] sm:$0xff] 0.0
      %3077 = vst [vmem:[#allocation2 + $0x38] sm:$0xff] 0.0
      %3078 = vst [vmem:[#allocation2 + $0x40] sm:$0xff] 0.0
      %3079 = vst [vmem:[#allocation2 + $0x48] sm:$0xff] 0.0
      %3080 = vst [vmem:[#allocation2 + $0x50] sm:$0xff] 0.0
      %3081 = vst [vmem:[#allocation2 + $0x58] sm:$0xff] 0.0
      %3082 = vst [vmem:[#allocation2 + $0x60] sm:$0xff] 0.0
      %3083 = vst [vmem:[#allocation2 + $0x68] sm:$0xff] 0.0
      %3084 = vst [vmem:[#allocation2 + $0x70] sm:$0xff] 0.0
      %3085 = vst [vmem:[#allocation2 + $0x78] sm:$0xff] 0.0
      %3086 = vst [vmem:[#allocation2 + $0x80] sm:$0xff] 0.0
      %3087 = vst [vmem:[#allocation2 + $0x88] sm:$0xff] 0.0
      %3088 = vst [vmem:[#allocation2 + $0x90] sm:$0xff] 0.0
      %3089 = vst [vmem:[#allocation2 + $0x98] sm:$0xff] 0.0
      %3090 = vst [vmem:[#allocation2 + $0xa0] sm:$0xff] 0.0
      %3091 = vst [vmem:[#allocation2 + $0xa8] sm:$0xff] 0.0
      %3092 = vst [vmem:[#allocation2 + $0xb0] sm:$0xff] 0.0
      %3093 = vst [vmem:[#allocation2 + $0xb8] sm:$0xff] 0.0
      %3094 = vst [vmem:[#allocation2 + $0xc0] sm:$0xff] 0.0
      %3095 = vst [vmem:[#allocation2 + $0xc8] sm:$0xff] 0.0
      %3096 = vst [vmem:[#allocation2 + $0xd0] sm:$0xff] 0.0
      %3097 = vst [vmem:[#allocation2 + $0xd8] sm:$0xff] 0.0
      %3098 = vst [vmem:[#allocation2 + $0xe0] sm:$0xff] 0.0
      %3099 = vst [vmem:[#allocation2 + $0xe8] sm:$0xff] 0.0
      %3100 = vst [vmem:[#allocation2 + $0xf0] sm:$0xff] 0.0
      %3101 = vst [vmem:[#allocation2 + $0xf8] sm:$0xff] 0.0
      %3102 = vst [vmem:[#allocation2 + $0x100] sm:$0xff] 0.0
      %3103 = vst [vmem:[#allocation2 + $0x108] sm:$0xff] 0.0
      %3104 = vst [vmem:[#allocation2 + $0x110] sm:$0xff] 0.0
      %3105 = vst [vmem:[#allocation2 + $0x118] sm:$0xff] 0.0
      %3106 = vst [vmem:[#allocation2 + $0x120] sm:$0xff] 0.0
      %3107 = vst [vmem:[#allocation2 + $0x128] sm:$0xff] 0.0
      %3108 = vst [vmem:[#allocation2 + $0x130] sm:$0xff] 0.0
      %3109 = vst [vmem:[#allocation2 + $0x138] sm:$0xff] 0.0
      %3110 = vst [vmem:[#allocation2 + $0x140] sm:$0xff] 0.0
      %3111 = vst [vmem:[#allocation2 + $0x148] sm:$0xff] 0.0
      %3112 = vst [vmem:[#allocation2 + $0x150] sm:$0xff] 0.0
      %3113 = vst [vmem:[#allocation2 + $0x158] sm:$0xff] 0.0
      %3114 = vst [vmem:[#allocation2 + $0x160] sm:$0xff] 0.0
      %3115 = vst [vmem:[#allocation2 + $0x168] sm:$0xff] 0.0
      %3116 = vst [vmem:[#allocation2 + $0x170] sm:$0xff] 0.0
      %3117 = vst [vmem:[#allocation2 + $0x178] sm:$0xff] 0.0
      %3118 = vst [vmem:[#allocation2 + $0x180] sm:$0xff] 0.0
      %3119 = vst [vmem:[#allocation2 + $0x188] sm:$0xff] 0.0
      %3120 = vst [vmem:[#allocation2 + $0x190] sm:$0xff] 0.0
      %3121 = vst [vmem:[#allocation2 + $0x198] sm:$0xff] 0.0
      %3122 = vst [vmem:[#allocation2 + $0x1a0] sm:$0xff] 0.0
      %3123 = vst [vmem:[#allocation2 + $0x1a8] sm:$0xff] 0.0
      %3124 = vst [vmem:[#allocation2 + $0x1b0] sm:$0xff] 0.0
      %3125 = vst [vmem:[#allocation2 + $0x1b8] sm:$0xff] 0.0
      %3126 = vst [vmem:[#allocation2 + $0x1c0] sm:$0xff] 0.0
      %3127 = vst [vmem:[#allocation2 + $0x1c8] sm:$0xff] 0.0
      %3128 = vst [vmem:[#allocation2 + $0x1d0] sm:$0xff] 0.0
      %3129 = vst [vmem:[#allocation2 + $0x1d8] sm:$0xff] 0.0
      %3130 = vst [vmem:[#allocation2 + $0x1e0] sm:$0xff] 0.0
      %3131 = vst [vmem:[#allocation2 + $0x1e8] sm:$0xff] 0.0
      %3132 = vst [vmem:[#allocation2 + $0x1f0] sm:$0xff] 0.0
      %3133 = vst [vmem:[#allocation2 + $0x1f8] sm:$0xff] 0.0
      %3134 = vst [vmem:[#allocation2 + $0x200] sm:$0xff] 0.0
      %3135 = vst [vmem:[#allocation2 + $0x208] sm:$0xff] 0.0
      %3136 = vst [vmem:[#allocation2 + $0x210] sm:$0xff] 0.0
      %3137 = vst [vmem:[#allocation2 + $0x218] sm:$0xff] 0.0
      %3138 = vst [vmem:[#allocation2 + $0x220] sm:$0xff] 0.0
      %3139 = vst [vmem:[#allocation2 + $0x228] sm:$0xff] 0.0
      %3140 = vst [vmem:[#allocation2 + $0x230] sm:$0xff] 0.0
      %3141 = vst [vmem:[#allocation2 + $0x238] sm:$0xff] 0.0
      %s3142 = scalar_lea.vmem [#allocation2], 32
      %3143 = vst [vmem:[%s3142 + $0x8] sm:$0xff] %v3038
      %3144 = vst [vmem:[%s3142 + $0x10] sm:$0xff] %v3039
      %3145 = vst [vmem:[%s3142 + $0x28] sm:$0xff] %v3040
      %3146 = vst [vmem:[%s3142 + $0x30] sm:$0xff] %v3041
      %3147 = vst [vmem:[%s3142 + $0x48] sm:$0xff] %v3042
      %3148 = vst [vmem:[%s3142 + $0x50] sm:$0xff] %v3043
      %3149 = vst [vmem:[%s3142 + $0x68] sm:$0xff] %v3044
      %3150 = vst [vmem:[%s3142 + $0x70] sm:$0xff] %v3045
      %3151 = vst [vmem:[%s3142 + $0x88] sm:$0xff] %v3046
      %3152 = vst [vmem:[%s3142 + $0x90] sm:$0xff] %v3047
      %3153 = vst [vmem:[%s3142 + $0xa8] sm:$0xff] %v3048
      %3154 = vst [vmem:[%s3142 + $0xb0] sm:$0xff] %v3049
      %3155 = vst [vmem:[%s3142 + $0xc8] sm:$0xff] %v3050
      %3156 = vst [vmem:[%s3142 + $0xd0] sm:$0xff] %v3051
      %3157 = vst [vmem:[%s3142 + $0xe8] sm:$0xff] %v3052
      %3158 = vst [vmem:[%s3142 + $0xf0] sm:$0xff] %v3053
      %3159 = vst [vmem:[%s3142 + $0x108] sm:$0xff] %v3054
      %3160 = vst [vmem:[%s3142 + $0x110] sm:$0xff] %v3055
      %3161 = vst [vmem:[%s3142 + $0x128] sm:$0xff] %v3056
      %3162 = vst [vmem:[%s3142 + $0x130] sm:$0xff] %v3057
      %3163 = vst [vmem:[%s3142 + $0x148] sm:$0xff] %v3058
      %3164 = vst [vmem:[%s3142 + $0x150] sm:$0xff] %v3059
      %3165 = vst [vmem:[%s3142 + $0x168] sm:$0xff] %v3060
      %3166 = vst [vmem:[%s3142 + $0x170] sm:$0xff] %v3061
      %3167 = vst [vmem:[%s3142 + $0x188] sm:$0xff] %v3062
      %3168 = vst [vmem:[%s3142 + $0x190] sm:$0xff] %v3063
      %3169 = vst [vmem:[%s3142 + $0x1a8] sm:$0xff] %v3064
      %3170 = vst [vmem:[%s3142 + $0x1b0] sm:$0xff] %v3065
      %3171 = vst [vmem:[%s3142 + $0x1c8] sm:$0xff] %v3066
      %3172 = vst [vmem:[%s3142 + $0x1d0] sm:$0xff] %v3067
      %3173 = vst [vmem:[%s3142 + $0x1e8] sm:$0xff] %v3068
      %3174 = vst [vmem:[%s3142 + $0x1f0] sm:$0xff] %v3069
      %v3175 = vld [vmem:[#allocation2 + $0x7] sm:$0xff]
      %v3176 = vld [vmem:[#allocation2 + $0xf] sm:$0xff]
      %v3177 = vld [vmem:[#allocation2 + $0x27] sm:$0xff]
      %v3178 = vld [vmem:[#allocation2 + $0x2f] sm:$0xff]
      %v3179 = vld [vmem:[#allocation2 + $0x47] sm:$0xff]
      %v3180 = vld [vmem:[#allocation2 + $0x4f] sm:$0xff]
      %v3181 = vld [vmem:[#allocation2 + $0x67] sm:$0xff]
      %v3182 = vld [vmem:[#allocation2 + $0x6f] sm:$0xff]
      %v3183 = vld [vmem:[#allocation2 + $0x87] sm:$0xff]
      %v3184 = vld [vmem:[#allocation2 + $0x8f] sm:$0xff]
      %v3185 = vld [vmem:[#allocation2 + $0xa7] sm:$0xff]
      %v3186 = vld [vmem:[#allocation2 + $0xaf] sm:$0xff]
      %v3187 = vld [vmem:[#allocation2 + $0xc7] sm:$0xff]
      %v3188 = vld [vmem:[#allocation2 + $0xcf] sm:$0xff]
      %v3189 = vld [vmem:[#allocation2 + $0xe7] sm:$0xff]
      %v3190 = vld [vmem:[#allocation2 + $0xef] sm:$0xff]
      %v3191 = vld [vmem:[#allocation2 + $0x107] sm:$0xff]
      %v3192 = vld [vmem:[#allocation2 + $0x10f] sm:$0xff]
      %v3193 = vld [vmem:[#allocation2 + $0x127] sm:$0xff]
      %v3194 = vld [vmem:[#allocation2 + $0x12f] sm:$0xff]
      %v3195 = vld [vmem:[#allocation2 + $0x147] sm:$0xff]
      %v3196 = vld [vmem:[#allocation2 + $0x14f] sm:$0xff]
      %v3197 = vld [vmem:[#allocation2 + $0x167] sm:$0xff]
      %v3198 = vld [vmem:[#allocation2 + $0x16f] sm:$0xff]
      %v3199 = vld [vmem:[#allocation2 + $0x187] sm:$0xff]
      %v3200 = vld [vmem:[#allocation2 + $0x18f] sm:$0xff]
      %v3201 = vld [vmem:[#allocation2 + $0x1a7] sm:$0xff]
      %v3202 = vld [vmem:[#allocation2 + $0x1af] sm:$0xff]
      %v3203 = vld [vmem:[#allocation2 + $0x1c7] sm:$0xff]
      %v3204 = vld [vmem:[#allocation2 + $0x1cf] sm:$0xff]
      %v3205 = vld [vmem:[#allocation2 + $0x1e7] sm:$0xff]
      %v3206 = vld [vmem:[#allocation2 + $0x1ef] sm:$0xff]
      %v3207 = vpack.c.bf16 %v3176, %v3175
      %v3208 = vpack.c.bf16 %v3178, %v3177
      %v3209 = vpack.c.bf16 %v3180, %v3179
      %v3210 = vpack.c.bf16 %v3182, %v3181
      %v3211 = vpack.c.bf16 %v3184, %v3183
      %v3212 = vpack.c.bf16 %v3186, %v3185
      %v3213 = vpack.c.bf16 %v3188, %v3187
      %v3214 = vpack.c.bf16 %v3190, %v3189
      %v3215 = vpack.c.bf16 %v3192, %v3191
      %v3216 = vpack.c.bf16 %v3194, %v3193
      %v3217 = vpack.c.bf16 %v3196, %v3195
      %v3218 = vpack.c.bf16 %v3198, %v3197
      %v3219 = vpack.c.bf16 %v3200, %v3199
      %v3220 = vpack.c.bf16 %v3202, %v3201
      %v3221 = vpack.c.bf16 %v3204, %v3203
      %v3222 = vpack.c.bf16 %v3206, %v3205
      %v3223 = vld [vmem:[%s2] sm:$0xf]
      %v3224 = vld [vmem:[%s2 + $0x4] sm:$0xf]
      %v3225 = vld [vmem:[%s2 + $0x8] sm:$0xf]
      %v3226 = vld [vmem:[%s2 + $0xc] sm:$0xf]
      %v3227 = vld [vmem:[%s2 + $0x10] sm:$0xf]
      %v3228 = vld [vmem:[%s2 + $0x14] sm:$0xf]
      %v3229 = vld [vmem:[%s2 + $0x18] sm:$0xf]
      %v3230 = vld [vmem:[%s2 + $0x1c] sm:$0xf]
      %v3231 = vld [vmem:[%s2 + $0x20] sm:$0xf]
      %v3232 = vld [vmem:[%s2 + $0x24] sm:$0xf]
      %v3233 = vld [vmem:[%s2 + $0x28] sm:$0xf]
      %v3234 = vld [vmem:[%s2 + $0x2c] sm:$0xf]
      %v3235 = vld [vmem:[%s2 + $0x30] sm:$0xf]
      %v3236 = vld [vmem:[%s2 + $0x34] sm:$0xf]
      %v3237 = vld [vmem:[%s2 + $0x38] sm:$0xf]
      %v3238 = vld [vmem:[%s2 + $0x3c] sm:$0xf]
      %v3239 = vld [vmem:[#allocation2 + $0x8] sm:$0xff]
      %v3240 = vld [vmem:[#allocation2 + $0x10] sm:$0xff]
      %v3241 = vld [vmem:[#allocation2 + $0x28] sm:$0xff]
      %v3242 = vld [vmem:[#allocation2 + $0x30] sm:$0xff]
      %v3243 = vld [vmem:[#allocation2 + $0x48] sm:$0xff]
      %v3244 = vld [vmem:[#allocation2 + $0x50] sm:$0xff]
      %v3245 = vld [vmem:[#allocation2 + $0x68] sm:$0xff]
      %v3246 = vld [vmem:[#allocation2 + $0x70] sm:$0xff]
      %v3247 = vld [vmem:[#allocation2 + $0x88] sm:$0xff]
      %v3248 = vld [vmem:[#allocation2 + $0x90] sm:$0xff]
      %v3249 = vld [vmem:[#allocation2 + $0xa8] sm:$0xff]
      %v3250 = vld [vmem:[#allocation2 + $0xb0] sm:$0xff]
      %v3251 = vld [vmem:[#allocation2 + $0xc8] sm:$0xff]
      %v3252 = vld [vmem:[#allocation2 + $0xd0] sm:$0xff]
      %v3253 = vld [vmem:[#allocation2 + $0xe8] sm:$0xff]
      %v3254 = vld [vmem:[#allocation2 + $0xf0] sm:$0xff]
      %v3255 = vld [vmem:[#allocation2 + $0x108] sm:$0xff]
      %v3256 = vld [vmem:[#allocation2 + $0x110] sm:$0xff]
      %v3257 = vld [vmem:[#allocation2 + $0x128] sm:$0xff]
      %v3258 = vld [vmem:[#allocation2 + $0x130] sm:$0xff]
      %v3259 = vld [vmem:[#allocation2 + $0x148] sm:$0xff]
      %v3260 = vld [vmem:[#allocation2 + $0x150] sm:$0xff]
      %v3261 = vld [vmem:[#allocation2 + $0x168] sm:$0xff]
      %v3262 = vld [vmem:[#allocation2 + $0x170] sm:$0xff]
      %v3263 = vld [vmem:[#allocation2 + $0x188] sm:$0xff]
      %v3264 = vld [vmem:[#allocation2 + $0x190] sm:$0xff]
      %v3265 = vld [vmem:[#allocation2 + $0x1a8] sm:$0xff]
      %v3266 = vld [vmem:[#allocation2 + $0x1b0] sm:$0xff]
      %v3267 = vld [vmem:[#allocation2 + $0x1c8] sm:$0xff]
      %v3268 = vld [vmem:[#allocation2 + $0x1d0] sm:$0xff]
      %v3269 = vld [vmem:[#allocation2 + $0x1e8] sm:$0xff]
      %v3270 = vld [vmem:[#allocation2 + $0x1f0] sm:$0xff]
      %v3271 = vpack.c.bf16 %v3240, %v3239
      %v3272 = vpack.c.bf16 %v3242, %v3241
      %v3273 = vpack.c.bf16 %v3244, %v3243
      %v3274 = vpack.c.bf16 %v3246, %v3245
      %v3275 = vpack.c.bf16 %v3248, %v3247
      %v3276 = vpack.c.bf16 %v3250, %v3249
      %v3277 = vpack.c.bf16 %v3252, %v3251
      %v3278 = vpack.c.bf16 %v3254, %v3253
      %v3279 = vpack.c.bf16 %v3256, %v3255
      %v3280 = vpack.c.bf16 %v3258, %v3257
      %v3281 = vpack.c.bf16 %v3260, %v3259
      %v3282 = vpack.c.bf16 %v3262, %v3261
      %v3283 = vpack.c.bf16 %v3264, %v3263
      %v3284 = vpack.c.bf16 %v3266, %v3265
      %v3285 = vpack.c.bf16 %v3268, %v3267
      %v3286 = vpack.c.bf16 %v3270, %v3269
      %s3287 = scalar_lea.vmem %s2, 64
      %v3288 = vld [vmem:[%s3287] sm:$0xf]
      %v3289 = vld [vmem:[%s3287 + $0x4] sm:$0xf]
      %v3290 = vld [vmem:[%s3287 + $0x8] sm:$0xf]
      %v3291 = vld [vmem:[%s3287 + $0xc] sm:$0xf]
      %v3292 = vld [vmem:[%s3287 + $0x10] sm:$0xf]
      %v3293 = vld [vmem:[%s3287 + $0x14] sm:$0xf]
      %v3294 = vld [vmem:[%s3287 + $0x18] sm:$0xf]
      %v3295 = vld [vmem:[%s3287 + $0x1c] sm:$0xf]
      %v3296 = vld [vmem:[%s3287 + $0x20] sm:$0xf]
      %v3297 = vld [vmem:[%s3287 + $0x24] sm:$0xf]
      %v3298 = vld [vmem:[%s3287 + $0x28] sm:$0xf]
      %v3299 = vld [vmem:[%s3287 + $0x2c] sm:$0xf]
      %v3300 = vld [vmem:[%s3287 + $0x30] sm:$0xf]
      %v3301 = vld [vmem:[%s3287 + $0x34] sm:$0xf]
      %v3302 = vld [vmem:[%s3287 + $0x38] sm:$0xf]
      %v3303 = vld [vmem:[%s3287 + $0x3c] sm:$0xf]
      %v3320 = vunpack.c.l.b16 %v3288
      %v3321 = vunpack.c.l.b16 %v3289
      %v3322 = vunpack.c.l.b16 %v3290
      %v3323 = vunpack.c.l.b16 %v3291
      %v3324 = vunpack.c.l.b16 %v3292
      %v3325 = vunpack.c.l.b16 %v3293
      %v3326 = vunpack.c.l.b16 %v3294
      %v3327 = vunpack.c.l.b16 %v3295
      %v3328 = vunpack.c.l.b16 %v3296
      %v3329 = vunpack.c.l.b16 %v3297
      %v3330 = vunpack.c.l.b16 %v3298
      %v3331 = vunpack.c.l.b16 %v3299
      %v3332 = vunpack.c.l.b16 %v3300
      %v3333 = vunpack.c.l.b16 %v3301
      %v3334 = vunpack.c.l.b16 %v3302
      %v3335 = vunpack.c.l.b16 %v3303
      %v3336 = vpack.c.b16 %v3321, %v3320
      %v3337 = vpack.c.b16 %v3323, %v3322
      %v3338 = vpack.c.b16 %v3325, %v3324
      %v3339 = vpack.c.b16 %v3327, %v3326
      %v3340 = vpack.c.b16 %v3329, %v3328
      %v3341 = vpack.c.b16 %v3331, %v3330
      %v3342 = vpack.c.b16 %v3333, %v3332
      %v3343 = vpack.c.b16 %v3335, %v3334
      %3352 = vmatprep.subr.bf16.mxu0 0
      %3353 = vmatpush1.bf16.msra.mxu0 %v3336
      %3354 = vmatprep.subr.bf16.mxu0 0
      %3355 = vmatpush1.bf16.msra.mxu0 %v3337
      %3356 = vmatprep.subr.bf16.mxu0 0
      %3357 = vmatpush1.bf16.msra.mxu0 %v3338
      %3358 = vmatprep.subr.bf16.mxu0 0
      %3359 = vmatpush1.bf16.msra.mxu0 %v3339
      %3360 = vmatprep.subr.bf16.mxu0 0
      %3361 = vmatpush1.bf16.msra.mxu0 %v3340
      %3362 = vmatprep.subr.bf16.mxu0 0
      %3363 = vmatpush1.bf16.msra.mxu0 %v3341
      %3364 = vmatprep.subr.bf16.mxu0 0
      %3365 = vmatpush1.bf16.msra.mxu0 %v3342
      %3366 = vmatprep.subr.bf16.mxu0 0
      %3367 = vmatpush1.bf16.msra.mxu0 %v3343
      %3368 = vmatprep.subr.bf16.mxu0 0
      %3369 = vmatpush1.bf16.msra.mxu0 0
      %3370 = vmatprep.subr.bf16.mxu0 0
      %3371 = vmatpush1.bf16.msra.mxu0 0
      %3372 = vmatprep.subr.bf16.mxu0 0
      %3373 = vmatpush1.bf16.msra.mxu0 0
      %3374 = vmatprep.subr.bf16.mxu0 0
      %3375 = vmatpush1.bf16.msra.mxu0 0
      %3376 = vmatprep.subr.bf16.mxu0 0
      %3377 = vmatpush1.bf16.msra.mxu0 0
      %3378 = vmatprep.subr.bf16.mxu0 0
      %3379 = vmatpush1.bf16.msra.mxu0 0
      %3380 = vmatprep.subr.bf16.mxu0 0
      %3381 = vmatpush1.bf16.msra.mxu0 0
      %3382 = vmatprep.subr.bf16.mxu0 0
      %3383 = vmatpush1.bf16.msra.mxu0 0
      %3384 = vmatprep.mubr.bf16.mxu0 0
      %3385 = vmatmul.mubr.bf16.gmra.mrb[0].mxu0 %v3271
      %v3386 = vpop.f32.mrb[0].mxu0
      %v3387 = vadd.f32 0.0, %v3386
      %v3388 = vpop.f32.mrb[0].mxu0
      %v3389 = vpop.f32.mrb[0].mxu0
      %v3390 = vadd.f32 0.0, %v3389
      %v3391 = vpop.f32.mrb[0].mxu0
      %3392 = vmatprep.mubr.bf16.mxu0 0
      %3393 = vmatmul.mubr.bf16.gmra.mrb[0].mxu0 %v3272
      %v3394 = vpop.f32.mrb[0].mxu0
      %v3395 = vadd.f32 0.0, %v3394
      %v3396 = vpop.f32.mrb[0].mxu0
      %v3397 = vpop.f32.mrb[0].mxu0
      %v3398 = vadd.f32 0.0, %v3397
      %v3399 = vpop.f32.mrb[0].mxu0
      %3400 = vmatprep.mubr.bf16.mxu0 0
      %3401 = vmatmul.mubr.bf16.gmra.mrb[0].mxu0 %v3273
      %v3402 = vpop.f32.mrb[0].mxu0
      %v3403 = vadd.f32 0.0, %v3402
      %v3404 = vpop.f32.mrb[0].mxu0
      %v3405 = vpop.f32.mrb[0].mxu0
      %v3406 = vadd.f32 0.0, %v3405
      %v3407 = vpop.f32.mrb[0].mxu0
      %3408 = vmatprep.mubr.bf16.mxu0 0
      %3409 = vmatmul.mubr.bf16.gmra.mrb[0].mxu0 %v3274
      %v3410 = vpop.f32.mrb[0].mxu0
      %v3411 = vadd.f32 0.0, %v3410
      %v3412 = vpop.f32.mrb[0].mxu0
      %v3413 = vpop.f32.mrb[0].mxu0
      %v3414 = vadd.f32 0.0, %v3413
      %v3415 = vpop.f32.mrb[0].mxu0
      %3416 = vmatprep.mubr.bf16.mxu0 0
      %3417 = vmatmul.mubr.bf16.gmra.mrb[0].mxu0 %v3275
      %v3418 = vpop.f32.mrb[0].mxu0
      %v3419 = vadd.f32 0.0, %v3418
      %v3420 = vpop.f32.mrb[0].mxu0
      %v3421 = vpop.f32.mrb[0].mxu0
      %v3422 = vadd.f32 0.0, %v3421
      %v3423 = vpop.f32.mrb[0].mxu0
      %3424 = vmatprep.mubr.bf16.mxu0 0
      %3425 = vmatmul.mubr.bf16.gmra.mrb[0].mxu0 %v3276
      %v3426 = vpop.f32.mrb[0].mxu0
      %v3427 = vadd.f32 0.0, %v3426
      %v3428 = vpop.f32.mrb[0].mxu0
      %v3429 = vpop.f32.mrb[0].mxu0
      %v3430 = vadd.f32 0.0, %v3429
      %v3431 = vpop.f32.mrb[0].mxu0
      %3432 = vmatprep.mubr.bf16.mxu0 0
      %3433 = vmatmul.mubr.bf16.gmra.mrb[0].mxu0 %v3277
      %v3434 = vpop.f32.mrb[0].mxu0
      %v3435 = vadd.f32 0.0, %v3434
      %v3436 = vpop.f32.mrb[0].mxu0
      %v3437 = vpop.f32.mrb[0].mxu0
      %v3438 = vadd.f32 0.0, %v3437
      %v3439 = vpop.f32.mrb[0].mxu0
      %3440 = vmatprep.mubr.bf16.mxu0 0
      %3441 = vmatmul.mubr.bf16.gmra.mrb[0].mxu0 %v3278
      %v3442 = vpop.f32.mrb[0].mxu0
      %v3443 = vadd.f32 0.0, %v3442
      %v3444 = vpop.f32.mrb[0].mxu0
      %v3445 = vpop.f32.mrb[0].mxu0
      %v3446 = vadd.f32 0.0, %v3445
      %v3447 = vpop.f32.mrb[0].mxu0
      %3448 = vmatprep.mubr.bf16.mxu0 0
      %3449 = vmatmul.mubr.bf16.gmra.mrb[0].mxu0 %v3279
      %v3450 = vpop.f32.mrb[0].mxu0
      %v3451 = vadd.f32 0.0, %v3450
      %v3452 = vpop.f32.mrb[0].mxu0
      %v3453 = vpop.f32.mrb[0].mxu0
      %v3454 = vadd.f32 0.0, %v3453
      %v3455 = vpop.f32.mrb[0].mxu0
      %3456 = vmatprep.mubr.bf16.mxu0 0
      %3457 = vmatmul.mubr.bf16.gmra.mrb[0].mxu0 %v3280
      %v3458 = vpop.f32.mrb[0].mxu0
      %v3459 = vadd.f32 0.0, %v3458
      %v3460 = vpop.f32.mrb[0].mxu0
      %v3461 = vpop.f32.mrb[0].mxu0
      %v3462 = vadd.f32 0.0, %v3461
      %v3463 = vpop.f32.mrb[0].mxu0
      %3464 = vmatprep.mubr.bf16.mxu0 0
      %3465 = vmatmul.mubr.bf16.gmra.mrb[0].mxu0 %v3281
      %v3466 = vpop.f32.mrb[0].mxu0
      %v3467 = vadd.f32 0.0, %v3466
      %v3468 = vpop.f32.mrb[0].mxu0
      %v3469 = vpop.f32.mrb[0].mxu0
      %v3470 = vadd.f32 0.0, %v3469
      %v3471 = vpop.f32.mrb[0].mxu0
      %3472 = vmatprep.mubr.bf16.mxu0 0
      %3473 = vmatmul.mubr.bf16.gmra.mrb[0].mxu0 %v3282
      %v3474 = vpop.f32.mrb[0].mxu0
      %v3475 = vadd.f32 0.0, %v3474
      %v3476 = vpop.f32.mrb[0].mxu0
      %v3477 = vpop.f32.mrb[0].mxu0
      %v3478 = vadd.f32 0.0, %v3477
      %v3479 = vpop.f32.mrb[0].mxu0
      %3480 = vmatprep.mubr.bf16.mxu0 0
      %3481 = vmatmul.mubr.bf16.gmra.mrb[0].mxu0 %v3283
      %v3482 = vpop.f32.mrb[0].mxu0
      %v3483 = vadd.f32 0.0, %v3482
      %v3484 = vpop.f32.mrb[0].mxu0
      %v3485 = vpop.f32.mrb[0].mxu0
      %v3486 = vadd.f32 0.0, %v3485
      %v3487 = vpop.f32.mrb[0].mxu0
      %3488 = vmatprep.mubr.bf16.mxu0 0
      %3489 = vmatmul.mubr.bf16.gmra.mrb[0].mxu0 %v3284
      %v3490 = vpop.f32.mrb[0].mxu0
      %v3491 = vadd.f32 0.0, %v3490
      %v3492 = vpop.f32.mrb[0].mxu0
      %v3493 = vpop.f32.mrb[0].mxu0
      %v3494 = vadd.f32 0.0, %v3493
      %v3495 = vpop.f32.mrb[0].mxu0
      %3496 = vmatprep.mubr.bf16.mxu0 0
      %3497 = vmatmul.mubr.bf16.gmra.mrb[0].mxu0 %v3285
      %v3498 = vpop.f32.mrb[0].mxu0
      %v3499 = vadd.f32 0.0, %v3498
      %v3500 = vpop.f32.mrb[0].mxu0
      %v3501 = vpop.f32.mrb[0].mxu0
      %v3502 = vadd.f32 0.0, %v3501
      %v3503 = vpop.f32.mrb[0].mxu0
      %3504 = vmatprep.mubr.bf16.mxu0 0
      %3505 = vmatmul.mubr.bf16.gmra.mrb[0].mxu0 %v3286
      %v3506 = vpop.f32.mrb[0].mxu0
      %v3507 = vadd.f32 0.0, %v3506
      %v3508 = vpop.f32.mrb[0].mxu0
      %v3509 = vpop.f32.mrb[0].mxu0
      %v3510 = vadd.f32 0.0, %v3509
      %v3511 = vpop.f32.mrb[0].mxu0
      %3512 = vdwg.mxu0
      %v3529 = vunpack.c.l.b16 %v3223
      %v3530 = vunpack.c.l.b16 %v3224
      %v3531 = vunpack.c.l.b16 %v3225
      %v3532 = vunpack.c.l.b16 %v3226
      %v3533 = vunpack.c.l.b16 %v3227
      %v3534 = vunpack.c.l.b16 %v3228
      %v3535 = vunpack.c.l.b16 %v3229
      %v3536 = vunpack.c.l.b16 %v3230
      %v3537 = vunpack.c.l.b16 %v3231
      %v3538 = vunpack.c.l.b16 %v3232
      %v3539 = vunpack.c.l.b16 %v3233
      %v3540 = vunpack.c.l.b16 %v3234
      %v3541 = vunpack.c.l.b16 %v3235
      %v3542 = vunpack.c.l.b16 %v3236
      %v3543 = vunpack.c.l.b16 %v3237
      %v3544 = vunpack.c.l.b16 %v3238
      %v3545 = vpack.c.b16 %v3530, %v3529
      %v3546 = vpack.c.b16 %v3532, %v3531
      %v3547 = vpack.c.b16 %v3534, %v3533
      %v3548 = vpack.c.b16 %v3536, %v3535
      %v3549 = vpack.c.b16 %v3538, %v3537
      %v3550 = vpack.c.b16 %v3540, %v3539
      %v3551 = vpack.c.b16 %v3542, %v3541
      %v3552 = vpack.c.b16 %v3544, %v3543
      %3561 = vmatprep.subr.bf16.mxu0 0
      %3562 = vmatpush1.bf16.msra.mxu0 %v3545
      %3563 = vmatprep.subr.bf16.mxu0 0
      %3564 = vmatpush1.bf16.msra.mxu0 %v3546
      %3565 = vmatprep.subr.bf16.mxu0 0
      %3566 = vmatpush1.bf16.msra.mxu0 %v3547
      %3567 = vmatprep.subr.bf16.mxu0 0
      %3568 = vmatpush1.bf16.msra.mxu0 %v3548
      %3569 = vmatprep.subr.bf16.mxu0 0
      %3570 = vmatpush1.bf16.msra.mxu0 %v3549
      %3571 = vmatprep.subr.bf16.mxu0 0
      %3572 = vmatpush1.bf16.msra.mxu0 %v3550
      %3573 = vmatprep.subr.bf16.mxu0 0
      %3574 = vmatpush1.bf16.msra.mxu0 %v3551
      %3575 = vmatprep.subr.bf16.mxu0 0
      %3576 = vmatpush1.bf16.msra.mxu0 %v3552
      %3577 = vmatprep.subr.bf16.mxu0 0
      %3578 = vmatpush1.bf16.msra.mxu0 0
      %3579 = vmatprep.subr.bf16.mxu0 0
      %3580 = vmatpush1.bf16.msra.mxu0 0
      %3581 = vmatprep.subr.bf16.mxu0 0
      %3582 = vmatpush1.bf16.msra.mxu0 0
      %3583 = vmatprep.subr.bf16.mxu0 0
      %3584 = vmatpush1.bf16.msra.mxu0 0
      %3585 = vmatprep.subr.bf16.mxu0 0
      %3586 = vmatpush1.bf16.msra.mxu0 0
      %3587 = vmatprep.subr.bf16.mxu0 0
      %3588 = vmatpush1.bf16.msra.mxu0 0
      %3589 = vmatprep.subr.bf16.mxu0 0
      %3590 = vmatpush1.bf16.msra.mxu0 0
      %3591 = vmatprep.subr.bf16.mxu0 0
      %3592 = vmatpush1.bf16.msra.mxu0 0
      %3593 = vmatprep.mubr.bf16.mxu0 0
      %3594 = vmatmul.mubr.bf16.gmra.mrb[0].mxu0 %v3207
      %v3595 = vpop.f32.mrb[0].mxu0
      %v3596 = vadd.f32 %v3387, %v3595
      %v3597 = vpop.f32.mrb[0].mxu0
      %v3598 = vpop.f32.mrb[0].mxu0
      %v3599 = vadd.f32 %v3390, %v3598
      %v3600 = vpop.f32.mrb[0].mxu0
      %3601 = vmatprep.mubr.bf16.mxu0 0
      %3602 = vmatmul.mubr.bf16.gmra.mrb[0].mxu0 %v3208
      %v3603 = vpop.f32.mrb[0].mxu0
      %v3604 = vadd.f32 %v3395, %v3603
      %v3605 = vpop.f32.mrb[0].mxu0
      %v3606 = vpop.f32.mrb[0].mxu0
      %v3607 = vadd.f32 %v3398, %v3606
      %v3608 = vpop.f32.mrb[0].mxu0
      %3609 = vmatprep.mubr.bf16.mxu0 0
      %3610 = vmatmul.mubr.bf16.gmra.mrb[0].mxu0 %v3209
      %v3611 = vpop.f32.mrb[0].mxu0
      %v3612 = vadd.f32 %v3403, %v3611
      %v3613 = vpop.f32.mrb[0].mxu0
      %v3614 = vpop.f32.mrb[0].mxu0
      %v3615 = vadd.f32 %v3406, %v3614
      %v3616 = vpop.f32.mrb[0].mxu0
      %3617 = vmatprep.mubr.bf16.mxu0 0
      %3618 = vmatmul.mubr.bf16.gmra.mrb[0].mxu0 %v3210
      %v3619 = vpop.f32.mrb[0].mxu0
      %v3620 = vadd.f32 %v3411, %v3619
      %v3621 = vpop.f32.mrb[0].mxu0
      %v3622 = vpop.f32.mrb[0].mxu0
      %v3623 = vadd.f32 %v3414, %v3622
      %v3624 = vpop.f32.mrb[0].mxu0
      %3625 = vmatprep.mubr.bf16.mxu0 0
      %3626 = vmatmul.mubr.bf16.gmra.mrb[0].mxu0 %v3211
      %v3627 = vpop.f32.mrb[0].mxu0
      %v3628 = vadd.f32 %v3419, %v3627
      %v3629 = vpop.f32.mrb[0].mxu0
      %v3630 = vpop.f32.mrb[0].mxu0
      %v3631 = vadd.f32 %v3422, %v3630
      %v3632 = vpop.f32.mrb[0].mxu0
      %3633 = vmatprep.mubr.bf16.mxu0 0
      %3634 = vmatmul.mubr.bf16.gmra.mrb[0].mxu0 %v3212
      %v3635 = vpop.f32.mrb[0].mxu0
      %v3636 = vadd.f32 %v3427, %v3635
      %v3637 = vpop.f32.mrb[0].mxu0
      %v3638 = vpop.f32.mrb[0].mxu0
      %v3639 = vadd.f32 %v3430, %v3638
      %v3640 = vpop.f32.mrb[0].mxu0
      %3641 = vmatprep.mubr.bf16.mxu0 0
      %3642 = vmatmul.mubr.bf16.gmra.mrb[0].mxu0 %v3213
      %v3643 = vpop.f32.mrb[0].mxu0
      %v3644 = vadd.f32 %v3435, %v3643
      %v3645 = vpop.f32.mrb[0].mxu0
      %v3646 = vpop.f32.mrb[0].mxu0
      %v3647 = vadd.f32 %v3438, %v3646
      %v3648 = vpop.f32.mrb[0].mxu0
      %3649 = vmatprep.mubr.bf16.mxu0 0
      %3650 = vmatmul.mubr.bf16.gmra.mrb[0].mxu0 %v3214
      %v3651 = vpop.f32.mrb[0].mxu0
      %v3652 = vadd.f32 %v3443, %v3651
      %v3653 = vpop.f32.mrb[0].mxu0
      %v3654 = vpop.f32.mrb[0].mxu0
      %v3655 = vadd.f32 %v3446, %v3654
      %v3656 = vpop.f32.mrb[0].mxu0
      %3657 = vmatprep.mubr.bf16.mxu0 0
      %3658 = vmatmul.mubr.bf16.gmra.mrb[0].mxu0 %v3215
      %v3659 = vpop.f32.mrb[0].mxu0
      %v3660 = vadd.f32 %v3451, %v3659
      %v3661 = vpop.f32.mrb[0].mxu0
      %v3662 = vpop.f32.mrb[0].mxu0
      %v3663 = vadd.f32 %v3454, %v3662
      %v3664 = vpop.f32.mrb[0].mxu0
      %3665 = vmatprep.mubr.bf16.mxu0 0
      %3666 = vmatmul.mubr.bf16.gmra.mrb[0].mxu0 %v3216
      %v3667 = vpop.f32.mrb[0].mxu0
      %v3668 = vadd.f32 %v3459, %v3667
      %v3669 = vpop.f32.mrb[0].mxu0
      %v3670 = vpop.f32.mrb[0].mxu0
      %v3671 = vadd.f32 %v3462, %v3670
      %v3672 = vpop.f32.mrb[0].mxu0
      %3673 = vmatprep.mubr.bf16.mxu0 0
      %3674 = vmatmul.mubr.bf16.gmra.mrb[0].mxu0 %v3217
      %v3675 = vpop.f32.mrb[0].mxu0
      %v3676 = vadd.f32 %v3467, %v3675
      %v3677 = vpop.f32.mrb[0].mxu0
      %v3678 = vpop.f32.mrb[0].mxu0
      %v3679 = vadd.f32 %v3470, %v3678
      %v3680 = vpop.f32.mrb[0].mxu0
      %3681 = vmatprep.mubr.bf16.mxu0 0
      %3682 = vmatmul.mubr.bf16.gmra.mrb[0].mxu0 %v3218
      %v3683 = vpop.f32.mrb[0].mxu0
      %v3684 = vadd.f32 %v3475, %v3683
      %v3685 = vpop.f32.mrb[0].mxu0
      %v3686 = vpop.f32.mrb[0].mxu0
      %v3687 = vadd.f32 %v3478, %v3686
      %v3688 = vpop.f32.mrb[0].mxu0
      %3689 = vmatprep.mubr.bf16.mxu0 0
      %3690 = vmatmul.mubr.bf16.gmra.mrb[0].mxu0 %v3219
      %v3691 = vpop.f32.mrb[0].mxu0
      %v3692 = vadd.f32 %v3483, %v3691
      %v3693 = vpop.f32.mrb[0].mxu0
      %v3694 = vpop.f32.mrb[0].mxu0
      %v3695 = vadd.f32 %v3486, %v3694
      %v3696 = vpop.f32.mrb[0].mxu0
      %3697 = vmatprep.mubr.bf16.mxu0 0
      %3698 = vmatmul.mubr.bf16.gmra.mrb[0].mxu0 %v3220
      %v3699 = vpop.f32.mrb[0].mxu0
      %v3700 = vadd.f32 %v3491, %v3699
      %v3701 = vpop.f32.mrb[0].mxu0
      %v3702 = vpop.f32.mrb[0].mxu0
      %v3703 = vadd.f32 %v3494, %v3702
      %v3704 = vpop.f32.mrb[0].mxu0
      %3705 = vmatprep.mubr.bf16.mxu0 0
      %3706 = vmatmul.mubr.bf16.gmra.mrb[0].mxu0 %v3221
      %v3707 = vpop.f32.mrb[0].mxu0
      %v3708 = vadd.f32 %v3499, %v3707
      %v3709 = vpop.f32.mrb[0].mxu0
      %v3710 = vpop.f32.mrb[0].mxu0
      %v3711 = vadd.f32 %v3502, %v3710
      %v3712 = vpop.f32.mrb[0].mxu0
      %3713 = vmatprep.mubr.bf16.mxu0 0
      %3714 = vmatmul.mubr.bf16.gmra.mrb[0].mxu0 %v3222
      %v3715 = vpop.f32.mrb[0].mxu0
      %v3716 = vadd.f32 %v3507, %v3715
      %v3717 = vpop.f32.mrb[0].mxu0
      %v3718 = vpop.f32.mrb[0].mxu0
      %v3719 = vadd.f32 %v3510, %v3718
      %v3720 = vpop.f32.mrb[0].mxu0
      %3721 = vdwg.mxu0
      %v3722 = vld [vmem:[#allocation2 + $0x9] sm:$0xff]
      %v3723 = vld [vmem:[#allocation2 + $0x11] sm:$0xff]
      %v3724 = vld [vmem:[#allocation2 + $0x29] sm:$0xff]
      %v3725 = vld [vmem:[#allocation2 + $0x31] sm:$0xff]
      %v3726 = vld [vmem:[#allocation2 + $0x49] sm:$0xff]
      %v3727 = vld [vmem:[#allocation2 + $0x51] sm:$0xff]
      %v3728 = vld [vmem:[#allocation2 + $0x69] sm:$0xff]
      %v3729 = vld [vmem:[#allocation2 + $0x71] sm:$0xff]
      %v3730 = vld [vmem:[#allocation2 + $0x89] sm:$0xff]
      %v3731 = vld [vmem:[#allocation2 + $0x91] sm:$0xff]
      %v3732 = vld [vmem:[#allocation2 + $0xa9] sm:$0xff]
      %v3733 = vld [vmem:[#allocation2 + $0xb1] sm:$0xff]
      %v3734 = vld [vmem:[#allocation2 + $0xc9] sm:$0xff]
      %v3735 = vld [vmem:[#allocation2 + $0xd1] sm:$0xff]
      %v3736 = vld [vmem:[#allocation2 + $0xe9] sm:$0xff]
      %v3737 = vld [vmem:[#allocation2 + $0xf1] sm:$0xff]
      %v3738 = vld [vmem:[#allocation2 + $0x109] sm:$0xff]
      %v3739 = vld [vmem:[#allocation2 + $0x111] sm:$0xff]
      %v3740 = vld [vmem:[#allocation2 + $0x129] sm:$0xff]
      %v3741 = vld [vmem:[#allocation2 + $0x131] sm:$0xff]
      %v3742 = vld [vmem:[#allocation2 + $0x149] sm:$0xff]
      %v3743 = vld [vmem:[#allocation2 + $0x151] sm:$0xff]
      %v3744 = vld [vmem:[#allocation2 + $0x169] sm:$0xff]
      %v3745 = vld [vmem:[#allocation2 + $0x171] sm:$0xff]
      %v3746 = vld [vmem:[#allocation2 + $0x189] sm:$0xff]
      %v3747 = vld [vmem:[#allocation2 + $0x191] sm:$0xff]
      %v3748 = vld [vmem:[#allocation2 + $0x1a9] sm:$0xff]
      %v3749 = vld [vmem:[#allocation2 + $0x1b1] sm:$0xff]
      %v3750 = vld [vmem:[#allocation2 + $0x1c9] sm:$0xff]
      %v3751 = vld [vmem:[#allocation2 + $0x1d1] sm:$0xff]
      %v3752 = vld [vmem:[#allocation2 + $0x1e9] sm:$0xff]
      %v3753 = vld [vmem:[#allocation2 + $0x1f1] sm:$0xff]
      %v3754 = vpack.c.bf16 %v3723, %v3722
      %v3755 = vpack.c.bf16 %v3725, %v3724
      %v3756 = vpack.c.bf16 %v3727, %v3726
      %v3757 = vpack.c.bf16 %v3729, %v3728
      %v3758 = vpack.c.bf16 %v3731, %v3730
      %v3759 = vpack.c.bf16 %v3733, %v3732
      %v3760 = vpack.c.bf16 %v3735, %v3734
      %v3761 = vpack.c.bf16 %v3737, %v3736
      %v3762 = vpack.c.bf16 %v3739, %v3738
      %v3763 = vpack.c.bf16 %v3741, %v3740
      %v3764 = vpack.c.bf16 %v3743, %v3742
      %v3765 = vpack.c.bf16 %v3745, %v3744
      %v3766 = vpack.c.bf16 %v3747, %v3746
      %v3767 = vpack.c.bf16 %v3749, %v3748
      %v3768 = vpack.c.bf16 %v3751, %v3750
      %v3769 = vpack.c.bf16 %v3753, %v3752
      %s3770 = scalar_lea.vmem %s2, 128
      %v3771 = vld [vmem:[%s3770] sm:$0xf]
      %v3772 = vld [vmem:[%s3770 + $0x4] sm:$0xf]
      %v3773 = vld [vmem:[%s3770 + $0x8] sm:$0xf]
      %v3774 = vld [vmem:[%s3770 + $0xc] sm:$0xf]
      %v3775 = vld [vmem:[%s3770 + $0x10] sm:$0xf]
      %v3776 = vld [vmem:[%s3770 + $0x14] sm:$0xf]
      %v3777 = vld [vmem:[%s3770 + $0x18] sm:$0xf]
      %v3778 = vld [vmem:[%s3770 + $0x1c] sm:$0xf]
      %v3779 = vld [vmem:[%s3770 + $0x20] sm:$0xf]
      %v3780 = vld [vmem:[%s3770 + $0x24] sm:$0xf]
      %v3781 = vld [vmem:[%s3770 + $0x28] sm:$0xf]
      %v3782 = vld [vmem:[%s3770 + $0x2c] sm:$0xf]
      %v3783 = vld [vmem:[%s3770 + $0x30] sm:$0xf]
      %v3784 = vld [vmem:[%s3770 + $0x34] sm:$0xf]
      %v3785 = vld [vmem:[%s3770 + $0x38] sm:$0xf]
      %v3786 = vld [vmem:[%s3770 + $0x3c] sm:$0xf]
      %v3803 = vunpack.c.l.b16 %v3771
      %v3804 = vunpack.c.l.b16 %v3772
      %v3805 = vunpack.c.l.b16 %v3773
      %v3806 = vunpack.c.l.b16 %v3774
      %v3807 = vunpack.c.l.b16 %v3775
      %v3808 = vunpack.c.l.b16 %v3776
      %v3809 = vunpack.c.l.b16 %v3777
      %v3810 = vunpack.c.l.b16 %v3778
      %v3811 = vunpack.c.l.b16 %v3779
      %v3812 = vunpack.c.l.b16 %v3780
      %v3813 = vunpack.c.l.b16 %v3781
      %v3814 = vunpack.c.l.b16 %v3782
      %v3815 = vunpack.c.l.b16 %v3783
      %v3816 = vunpack.c.l.b16 %v3784
      %v3817 = vunpack.c.l.b16 %v3785
      %v3818 = vunpack.c.l.b16 %v3786
      %v3819 = vpack.c.b16 %v3804, %v3803
      %v3820 = vpack.c.b16 %v3806, %v3805
      %v3821 = vpack.c.b16 %v3808, %v3807
      %v3822 = vpack.c.b16 %v3810, %v3809
      %v3823 = vpack.c.b16 %v3812, %v3811
      %v3824 = vpack.c.b16 %v3814, %v3813
      %v3825 = vpack.c.b16 %v3816, %v3815
      %v3826 = vpack.c.b16 %v3818, %v3817
      %3835 = vmatprep.subr.bf16.mxu0 0
      %3836 = vmatpush1.bf16.msra.mxu0 %v3819
      %3837 = vmatprep.subr.bf16.mxu0 0
      %3838 = vmatpush1.bf16.msra.mxu0 %v3820
      %3839 = vmatprep.subr.bf16.mxu0 0
      %3840 = vmatpush1.bf16.msra.mxu0 %v3821
      %3841 = vmatprep.subr.bf16.mxu0 0
      %3842 = vmatpush1.bf16.msra.mxu0 %v3822
      %3843 = vmatprep.subr.bf16.mxu0 0
      %3844 = vmatpush1.bf16.msra.mxu0 %v3823
      %3845 = vmatprep.subr.bf16.mxu0 0
      %3846 = vmatpush1.bf16.msra.mxu0 %v3824
      %3847 = vmatprep.subr.bf16.mxu0 0
      %3848 = vmatpush1.bf16.msra.mxu0 %v3825
      %3849 = vmatprep.subr.bf16.mxu0 0
      %3850 = vmatpush1.bf16.msra.mxu0 %v3826
      %3851 = vmatprep.subr.bf16.mxu0 0
      %3852 = vmatpush1.bf16.msra.mxu0 0
      %3853 = vmatprep.subr.bf16.mxu0 0
      %3854 = vmatpush1.bf16.msra.mxu0 0
      %3855 = vmatprep.subr.bf16.mxu0 0
      %3856 = vmatpush1.bf16.msra.mxu0 0
      %3857 = vmatprep.subr.bf16.mxu0 0
      %3858 = vmatpush1.bf16.msra.mxu0 0
      %3859 = vmatprep.subr.bf16.mxu0 0
      %3860 = vmatpush1.bf16.msra.mxu0 0
      %3861 = vmatprep.subr.bf16.mxu0 0
      %3862 = vmatpush1.bf16.msra.mxu0 0
      %3863 = vmatprep.subr.bf16.mxu0 0
      %3864 = vmatpush1.bf16.msra.mxu0 0
      %3865 = vmatprep.subr.bf16.mxu0 0
      %3866 = vmatpush1.bf16.msra.mxu0 0
      %3867 = vmatprep.mubr.bf16.mxu0 0
      %3868 = vmatmul.mubr.bf16.gmra.mrb[0].mxu0 %v3754
      %v3869 = vpop.f32.mrb[0].mxu0
      %v3870 = vadd.f32 0.0, %v3869
      %v3871 = vpop.f32.mrb[0].mxu0
      %v3872 = vpop.f32.mrb[0].mxu0
      %v3873 = vadd.f32 0.0, %v3872
      %v3874 = vpop.f32.mrb[0].mxu0
      %3875 = vmatprep.mubr.bf16.mxu0 0
      %3876 = vmatmul.mubr.bf16.gmra.mrb[0].mxu0 %v3755
      %v3877 = vpop.f32.mrb[0].mxu0
      %v3878 = vadd.f32 0.0, %v3877
      %v3879 = vpop.f32.mrb[0].mxu0
      %v3880 = vpop.f32.mrb[0].mxu0
      %v3881 = vadd.f32 0.0, %v3880
      %v3882 = vpop.f32.mrb[0].mxu0
      %3883 = vmatprep.mubr.bf16.mxu0 0
      %3884 = vmatmul.mubr.bf16.gmra.mrb[0].mxu0 %v3756
      %v3885 = vpop.f32.mrb[0].mxu0
      %v3886 = vadd.f32 0.0, %v3885
      %v3887 = vpop.f32.mrb[0].mxu0
      %v3888 = vpop.f32.mrb[0].mxu0
      %v3889 = vadd.f32 0.0, %v3888
      %v3890 = vpop.f32.mrb[0].mxu0
      %3891 = vmatprep.mubr.bf16.mxu0 0
      %3892 = vmatmul.mubr.bf16.gmra.mrb[0].mxu0 %v3757
      %v3893 = vpop.f32.mrb[0].mxu0
      %v3894 = vadd.f32 0.0, %v3893
      %v3895 = vpop.f32.mrb[0].mxu0
      %v3896 = vpop.f32.mrb[0].mxu0
      %v3897 = vadd.f32 0.0, %v3896
      %v3898 = vpop.f32.mrb[0].mxu0
      %3899 = vmatprep.mubr.bf16.mxu0 0
      %3900 = vmatmul.mubr.bf16.gmra.mrb[0].mxu0 %v3758
      %v3901 = vpop.f32.mrb[0].mxu0
      %v3902 = vadd.f32 0.0, %v3901
      %v3903 = vpop.f32.mrb[0].mxu0
      %v3904 = vpop.f32.mrb[0].mxu0
      %v3905 = vadd.f32 0.0, %v3904
      %v3906 = vpop.f32.mrb[0].mxu0
      %3907 = vmatprep.mubr.bf16.mxu0 0
      %3908 = vmatmul.mubr.bf16.gmra.mrb[0].mxu0 %v3759
      %v3909 = vpop.f32.mrb[0].mxu0
      %v3910 = vadd.f32 0.0, %v3909
      %v3911 = vpop.f32.mrb[0].mxu0
      %v3912 = vpop.f32.mrb[0].mxu0
      %v3913 = vadd.f32 0.0, %v3912
      %v3914 = vpop.f32.mrb[0].mxu0
      %3915 = vmatprep.mubr.bf16.mxu0 0
      %3916 = vmatmul.mubr.bf16.gmra.mrb[0].mxu0 %v3760
      %v3917 = vpop.f32.mrb[0].mxu0
      %v3918 = vadd.f32 0.0, %v3917
      %v3919 = vpop.f32.mrb[0].mxu0
      %v3920 = vpop.f32.mrb[0].mxu0
      %v3921 = vadd.f32 0.0, %v3920
      %v3922 = vpop.f32.mrb[0].mxu0
      %3923 = vmatprep.mubr.bf16.mxu0 0
      %3924 = vmatmul.mubr.bf16.gmra.mrb[0].mxu0 %v3761
      %v3925 = vpop.f32.mrb[0].mxu0
      %v3926 = vadd.f32 0.0, %v3925
      %v3927 = vpop.f32.mrb[0].mxu0
      %v3928 = vpop.f32.mrb[0].mxu0
      %v3929 = vadd.f32 0.0, %v3928
      %v3930 = vpop.f32.mrb[0].mxu0
      %3931 = vmatprep.mubr.bf16.mxu0 0
      %3932 = vmatmul.mubr.bf16.gmra.mrb[0].mxu0 %v3762
      %v3933 = vpop.f32.mrb[0].mxu0
      %v3934 = vadd.f32 0.0, %v3933
      %v3935 = vpop.f32.mrb[0].mxu0
      %v3936 = vpop.f32.mrb[0].mxu0
      %v3937 = vadd.f32 0.0, %v3936
      %v3938 = vpop.f32.mrb[0].mxu0
      %3939 = vmatprep.mubr.bf16.mxu0 0
      %3940 = vmatmul.mubr.bf16.gmra.mrb[0].mxu0 %v3763
      %v3941 = vpop.f32.mrb[0].mxu0
      %v3942 = vadd.f32 0.0, %v3941
      %v3943 = vpop.f32.mrb[0].mxu0
      %v3944 = vpop.f32.mrb[0].mxu0
      %v3945 = vadd.f32 0.0, %v3944
      %v3946 = vpop.f32.mrb[0].mxu0
      %3947 = vmatprep.mubr.bf16.mxu0 0
      %3948 = vmatmul.mubr.bf16.gmra.mrb[0].mxu0 %v3764
      %v3949 = vpop.f32.mrb[0].mxu0
      %v3950 = vadd.f32 0.0, %v3949
      %v3951 = vpop.f32.mrb[0].mxu0
      %v3952 = vpop.f32.mrb[0].mxu0
      %v3953 = vadd.f32 0.0, %v3952
      %v3954 = vpop.f32.mrb[0].mxu0
      %3955 = vmatprep.mubr.bf16.mxu0 0
      %3956 = vmatmul.mubr.bf16.gmra.mrb[0].mxu0 %v3765
      %v3957 = vpop.f32.mrb[0].mxu0
      %v3958 = vadd.f32 0.0, %v3957
      %v3959 = vpop.f32.mrb[0].mxu0
      %v3960 = vpop.f32.mrb[0].mxu0
      %v3961 = vadd.f32 0.0, %v3960
      %v3962 = vpop.f32.mrb[0].mxu0
      %3963 = vmatprep.mubr.bf16.mxu0 0
      %3964 = vmatmul.mubr.bf16.gmra.mrb[0].mxu0 %v3766
      %v3965 = vpop.f32.mrb[0].mxu0
      %v3966 = vadd.f32 0.0, %v3965
      %v3967 = vpop.f32.mrb[0].mxu0
      %v3968 = vpop.f32.mrb[0].mxu0
      %v3969 = vadd.f32 0.0, %v3968
      %v3970 = vpop.f32.mrb[0].mxu0
      %3971 = vmatprep.mubr.bf16.mxu0 0
      %3972 = vmatmul.mubr.bf16.gmra.mrb[0].mxu0 %v3767
      %v3973 = vpop.f32.mrb[0].mxu0
      %v3974 = vadd.f32 0.0, %v3973
      %v3975 = vpop.f32.mrb[0].mxu0
      %v3976 = vpop.f32.mrb[0].mxu0
      %v3977 = vadd.f32 0.0, %v3976
      %v3978 = vpop.f32.mrb[0].mxu0
      %3979 = vmatprep.mubr.bf16.mxu0 0
      %3980 = vmatmul.mubr.bf16.gmra.mrb[0].mxu0 %v3768
      %v3981 = vpop.f32.mrb[0].mxu0
      %v3982 = vadd.f32 0.0, %v3981
      %v3983 = vpop.f32.mrb[0].mxu0
      %v3984 = vpop.f32.mrb[0].mxu0
      %v3985 = vadd.f32 0.0, %v3984
      %v3986 = vpop.f32.mrb[0].mxu0
      %3987 = vmatprep.mubr.bf16.mxu0 0
      %3988 = vmatmul.mubr.bf16.gmra.mrb[0].mxu0 %v3769
      %v3989 = vpop.f32.mrb[0].mxu0
      %v3990 = vadd.f32 0.0, %v3989
      %v3991 = vpop.f32.mrb[0].mxu0
      %v3992 = vpop.f32.mrb[0].mxu0
      %v3993 = vadd.f32 0.0, %v3992
      %v3994 = vpop.f32.mrb[0].mxu0
      %3995 = vdwg.mxu0
      %v3996 = vadd.f32 %v3596, %v3870
      %v3997 = vadd.f32 %v3599, %v3873
      %v3998 = vadd.f32 %v3604, %v3878
      %v3999 = vadd.f32 %v3607, %v3881
      %v4000 = vadd.f32 %v3612, %v3886
      %v4001 = vadd.f32 %v3615, %v3889
      %v4002 = vadd.f32 %v3620, %v3894
      %v4003 = vadd.f32 %v3623, %v3897
      %v4004 = vadd.f32 %v3628, %v3902
      %v4005 = vadd.f32 %v3631, %v3905
      %v4006 = vadd.f32 %v3636, %v3910
      %v4007 = vadd.f32 %v3639, %v3913
      %v4008 = vadd.f32 %v3644, %v3918
      %v4009 = vadd.f32 %v3647, %v3921
      %v4010 = vadd.f32 %v3652, %v3926
      %v4011 = vadd.f32 %v3655, %v3929
      %v4012 = vadd.f32 %v3660, %v3934
      %v4013 = vadd.f32 %v3663, %v3937
      %v4014 = vadd.f32 %v3668, %v3942
      %v4015 = vadd.f32 %v3671, %v3945
      %v4016 = vadd.f32 %v3676, %v3950
      %v4017 = vadd.f32 %v3679, %v3953
      %v4018 = vadd.f32 %v3684, %v3958
      %v4019 = vadd.f32 %v3687, %v3961
      %v4020 = vadd.f32 %v3692, %v3966
      %v4021 = vadd.f32 %v3695, %v3969
      %v4022 = vadd.f32 %v3700, %v3974
      %v4023 = vadd.f32 %v3703, %v3977
      %v4024 = vadd.f32 %v3708, %v3982
      %v4025 = vadd.f32 %v3711, %v3985
      %v4026 = vadd.f32 %v3716, %v3990
      %v4027 = vadd.f32 %v3719, %v3993
      %v4028 = vld [vmem:[%s3142 + $0x7] sm:$0xff]
      %v4029 = vld [vmem:[%s3142 + $0xf] sm:$0xff]
      %v4030 = vld [vmem:[%s3142 + $0x27] sm:$0xff]
      %v4031 = vld [vmem:[%s3142 + $0x2f] sm:$0xff]
      %v4032 = vld [vmem:[%s3142 + $0x47] sm:$0xff]
      %v4033 = vld [vmem:[%s3142 + $0x4f] sm:$0xff]
      %v4034 = vld [vmem:[%s3142 + $0x67] sm:$0xff]
      %v4035 = vld [vmem:[%s3142 + $0x6f] sm:$0xff]
      %v4036 = vld [vmem:[%s3142 + $0x87] sm:$0xff]
      %v4037 = vld [vmem:[%s3142 + $0x8f] sm:$0xff]
      %v4038 = vld [vmem:[%s3142 + $0xa7] sm:$0xff]
      %v4039 = vld [vmem:[%s3142 + $0xaf] sm:$0xff]
      %v4040 = vld [vmem:[%s3142 + $0xc7] sm:$0xff]
      %v4041 = vld [vmem:[%s3142 + $0xcf] sm:$0xff]
      %v4042 = vld [vmem:[%s3142 + $0xe7] sm:$0xff]
      %v4043 = vld [vmem:[%s3142 + $0xef] sm:$0xff]
      %v4044 = vld [vmem:[%s3142 + $0x107] sm:$0xff]
      %v4045 = vld [vmem:[%s3142 + $0x10f] sm:$0xff]
      %v4046 = vld [vmem:[%s3142 + $0x127] sm:$0xff]
      %v4047 = vld [vmem:[%s3142 + $0x12f] sm:$0xff]
      %v4048 = vld [vmem:[%s3142 + $0x147] sm:$0xff]
      %v4049 = vld [vmem:[%s3142 + $0x14f] sm:$0xff]
      %v4050 = vld [vmem:[%s3142 + $0x167] sm:$0xff]
      %v4051 = vld [vmem:[%s3142 + $0x16f] sm:$0xff]
      %v4052 = vld [vmem:[%s3142 + $0x187] sm:$0xff]
      %v4053 = vld [vmem:[%s3142 + $0x18f] sm:$0xff]
      %v4054 = vld [vmem:[%s3142 + $0x1a7] sm:$0xff]
      %v4055 = vld [vmem:[%s3142 + $0x1af] sm:$0xff]
      %v4056 = vld [vmem:[%s3142 + $0x1c7] sm:$0xff]
      %v4057 = vld [vmem:[%s3142 + $0x1cf] sm:$0xff]
      %v4058 = vld [vmem:[%s3142 + $0x1e7] sm:$0xff]
      %v4059 = vld [vmem:[%s3142 + $0x1ef] sm:$0xff]
      %v4060 = vpack.c.bf16 %v4029, %v4028
      %v4061 = vpack.c.bf16 %v4031, %v4030
      %v4062 = vpack.c.bf16 %v4033, %v4032
      %v4063 = vpack.c.bf16 %v4035, %v4034
      %v4064 = vpack.c.bf16 %v4037, %v4036
      %v4065 = vpack.c.bf16 %v4039, %v4038
      %v4066 = vpack.c.bf16 %v4041, %v4040
      %v4067 = vpack.c.bf16 %v4043, %v4042
      %v4068 = vpack.c.bf16 %v4045, %v4044
      %v4069 = vpack.c.bf16 %v4047, %v4046
      %v4070 = vpack.c.bf16 %v4049, %v4048
      %v4071 = vpack.c.bf16 %v4051, %v4050
      %v4072 = vpack.c.bf16 %v4053, %v4052
      %v4073 = vpack.c.bf16 %v4055, %v4054
      %v4074 = vpack.c.bf16 %v4057, %v4056
      %v4075 = vpack.c.bf16 %v4059, %v4058
      %s4076 = scalar_lea.vmem %s2, 192
      %v4077 = vld [vmem:[%s4076] sm:$0xf]
      %v4078 = vld [vmem:[%s4076 + $0x4] sm:$0xf]
      %v4079 = vld [vmem:[%s4076 + $0x8] sm:$0xf]
      %v4080 = vld [vmem:[%s4076 + $0xc] sm:$0xf]
      %v4081 = vld [vmem:[%s4076 + $0x10] sm:$0xf]
      %v4082 = vld [vmem:[%s4076 + $0x14] sm:$0xf]
      %v4083 = vld [vmem:[%s4076 + $0x18] sm:$0xf]
      %v4084 = vld [vmem:[%s4076 + $0x1c] sm:$0xf]
      %v4085 = vld [vmem:[%s4076 + $0x20] sm:$0xf]
      %v4086 = vld [vmem:[%s4076 + $0x24] sm:$0xf]
      %v4087 = vld [vmem:[%s4076 + $0x28] sm:$0xf]
      %v4088 = vld [vmem:[%s4076 + $0x2c] sm:$0xf]
      %v4089 = vld [vmem:[%s4076 + $0x30] sm:$0xf]
      %v4090 = vld [vmem:[%s4076 + $0x34] sm:$0xf]
      %v4091 = vld [vmem:[%s4076 + $0x38] sm:$0xf]
      %v4092 = vld [vmem:[%s4076 + $0x3c] sm:$0xf]
      %v4109 = vunpack.c.l.b16 %v4077
      %v4110 = vunpack.c.l.b16 %v4078
      %v4111 = vunpack.c.l.b16 %v4079
      %v4112 = vunpack.c.l.b16 %v4080
      %v4113 = vunpack.c.l.b16 %v4081
      %v4114 = vunpack.c.l.b16 %v4082
      %v4115 = vunpack.c.l.b16 %v4083
      %v4116 = vunpack.c.l.b16 %v4084
      %v4117 = vunpack.c.l.b16 %v4085
      %v4118 = vunpack.c.l.b16 %v4086
      %v4119 = vunpack.c.l.b16 %v4087
      %v4120 = vunpack.c.l.b16 %v4088
      %v4121 = vunpack.c.l.b16 %v4089
      %v4122 = vunpack.c.l.b16 %v4090
      %v4123 = vunpack.c.l.b16 %v4091
      %v4124 = vunpack.c.l.b16 %v4092
      %v4125 = vpack.c.b16 %v4110, %v4109
      %v4126 = vpack.c.b16 %v4112, %v4111
      %v4127 = vpack.c.b16 %v4114, %v4113
      %v4128 = vpack.c.b16 %v4116, %v4115
      %v4129 = vpack.c.b16 %v4118, %v4117
      %v4130 = vpack.c.b16 %v4120, %v4119
      %v4131 = vpack.c.b16 %v4122, %v4121
      %v4132 = vpack.c.b16 %v4124, %v4123
      %4141 = vmatprep.subr.bf16.mxu0 0
      %4142 = vmatpush1.bf16.msra.mxu0 %v4125
      %4143 = vmatprep.subr.bf16.mxu0 0
      %4144 = vmatpush1.bf16.msra.mxu0 %v4126
      %4145 = vmatprep.subr.bf16.mxu0 0
      %4146 = vmatpush1.bf16.msra.mxu0 %v4127
      %4147 = vmatprep.subr.bf16.mxu0 0
      %4148 = vmatpush1.bf16.msra.mxu0 %v4128
      %4149 = vmatprep.subr.bf16.mxu0 0
      %4150 = vmatpush1.bf16.msra.mxu0 %v4129
      %4151 = vmatprep.subr.bf16.mxu0 0
      %4152 = vmatpush1.bf16.msra.mxu0 %v4130
      %4153 = vmatprep.subr.bf16.mxu0 0
      %4154 = vmatpush1.bf16.msra.mxu0 %v4131
      %4155 = vmatprep.subr.bf16.mxu0 0
      %4156 = vmatpush1.bf16.msra.mxu0 %v4132
      %4157 = vmatprep.subr.bf16.mxu0 0
      %4158 = vmatpush1.bf16.msra.mxu0 0
      %4159 = vmatprep.subr.bf16.mxu0 0
      %4160 = vmatpush1.bf16.msra.mxu0 0
      %4161 = vmatprep.subr.bf16.mxu0 0
      %4162 = vmatpush1.bf16.msra.mxu0 0
      %4163 = vmatprep.subr.bf16.mxu0 0
      %4164 = vmatpush1.bf16.msra.mxu0 0
      %4165 = vmatprep.subr.bf16.mxu0 0
      %4166 = vmatpush1.bf16.msra.mxu0 0
      %4167 = vmatprep.subr.bf16.mxu0 0
      %4168 = vmatpush1.bf16.msra.mxu0 0
      %4169 = vmatprep.subr.bf16.mxu0 0
      %4170 = vmatpush1.bf16.msra.mxu0 0
      %4171 = vmatprep.subr.bf16.mxu0 0
      %4172 = vmatpush1.bf16.msra.mxu0 0
      %4173 = vmatprep.mubr.bf16.mxu0 0
      %4174 = vmatmul.mubr.bf16.gmra.mrb[0].mxu0 %v4060
      %v4175 = vpop.f32.mrb[0].mxu0
      %v4176 = vadd.f32 0.0, %v4175
      %v4177 = vpop.f32.mrb[0].mxu0
      %v4178 = vpop.f32.mrb[0].mxu0
      %v4179 = vadd.f32 0.0, %v4178
      %v4180 = vpop.f32.mrb[0].mxu0
      %4181 = vmatprep.mubr.bf16.mxu0 0
      %4182 = vmatmul.mubr.bf16.gmra.mrb[0].mxu0 %v4061
      %v4183 = vpop.f32.mrb[0].mxu0
      %v4184 = vadd.f32 0.0, %v4183
      %v4185 = vpop.f32.mrb[0].mxu0
      %v4186 = vpop.f32.mrb[0].mxu0
      %v4187 = vadd.f32 0.0, %v4186
      %v4188 = vpop.f32.mrb[0].mxu0
      %4189 = vmatprep.mubr.bf16.mxu0 0
      %4190 = vmatmul.mubr.bf16.gmra.mrb[0].mxu0 %v4062
      %v4191 = vpop.f32.mrb[0].mxu0
      %v4192 = vadd.f32 0.0, %v4191
      %v4193 = vpop.f32.mrb[0].mxu0
      %v4194 = vpop.f32.mrb[0].mxu0
      %v4195 = vadd.f32 0.0, %v4194
      %v4196 = vpop.f32.mrb[0].mxu0
      %4197 = vmatprep.mubr.bf16.mxu0 0
      %4198 = vmatmul.mubr.bf16.gmra.mrb[0].mxu0 %v4063
      %v4199 = vpop.f32.mrb[0].mxu0
      %v4200 = vadd.f32 0.0, %v4199
      %v4201 = vpop.f32.mrb[0].mxu0
      %v4202 = vpop.f32.mrb[0].mxu0
      %v4203 = vadd.f32 0.0, %v4202
      %v4204 = vpop.f32.mrb[0].mxu0
      %4205 = vmatprep.mubr.bf16.mxu0 0
      %4206 = vmatmul.mubr.bf16.gmra.mrb[0].mxu0 %v4064
      %v4207 = vpop.f32.mrb[0].mxu0
      %v4208 = vadd.f32 0.0, %v4207
      %v4209 = vpop.f32.mrb[0].mxu0
      %v4210 = vpop.f32.mrb[0].mxu0
      %v4211 = vadd.f32 0.0, %v4210
      %v4212 = vpop.f32.mrb[0].mxu0
      %4213 = vmatprep.mubr.bf16.mxu0 0
      %4214 = vmatmul.mubr.bf16.gmra.mrb[0].mxu0 %v4065
      %v4215 = vpop.f32.mrb[0].mxu0
      %v4216 = vadd.f32 0.0, %v4215
      %v4217 = vpop.f32.mrb[0].mxu0
      %v4218 = vpop.f32.mrb[0].mxu0
      %v4219 = vadd.f32 0.0, %v4218
      %v4220 = vpop.f32.mrb[0].mxu0
      %4221 = vmatprep.mubr.bf16.mxu0 0
      %4222 = vmatmul.mubr.bf16.gmra.mrb[0].mxu0 %v4066
      %v4223 = vpop.f32.mrb[0].mxu0
      %v4224 = vadd.f32 0.0, %v4223
      %v4225 = vpop.f32.mrb[0].mxu0
      %v4226 = vpop.f32.mrb[0].mxu0
      %v4227 = vadd.f32 0.0, %v4226
      %v4228 = vpop.f32.mrb[0].mxu0
      %4229 = vmatprep.mubr.bf16.mxu0 0
      %4230 = vmatmul.mubr.bf16.gmra.mrb[0].mxu0 %v4067
      %v4231 = vpop.f32.mrb[0].mxu0
      %v4232 = vadd.f32 0.0, %v4231
      %v4233 = vpop.f32.mrb[0].mxu0
      %v4234 = vpop.f32.mrb[0].mxu0
      %v4235 = vadd.f32 0.0, %v4234
      %v4236 = vpop.f32.mrb[0].mxu0
      %4237 = vmatprep.mubr.bf16.mxu0 0
      %4238 = vmatmul.mubr.bf16.gmra.mrb[0].mxu0 %v4068
      %v4239 = vpop.f32.mrb[0].mxu0
      %v4240 = vadd.f32 0.0, %v4239
      %v4241 = vpop.f32.mrb[0].mxu0
      %v4242 = vpop.f32.mrb[0].mxu0
      %v4243 = vadd.f32 0.0, %v4242
      %v4244 = vpop.f32.mrb[0].mxu0
      %4245 = vmatprep.mubr.bf16.mxu0 0
      %4246 = vmatmul.mubr.bf16.gmra.mrb[0].mxu0 %v4069
      %v4247 = vpop.f32.mrb[0].mxu0
      %v4248 = vadd.f32 0.0, %v4247
      %v4249 = vpop.f32.mrb[0].mxu0
      %v4250 = vpop.f32.mrb[0].mxu0
      %v4251 = vadd.f32 0.0, %v4250
      %v4252 = vpop.f32.mrb[0].mxu0
      %4253 = vmatprep.mubr.bf16.mxu0 0
      %4254 = vmatmul.mubr.bf16.gmra.mrb[0].mxu0 %v4070
      %v4255 = vpop.f32.mrb[0].mxu0
      %v4256 = vadd.f32 0.0, %v4255
      %v4257 = vpop.f32.mrb[0].mxu0
      %v4258 = vpop.f32.mrb[0].mxu0
      %v4259 = vadd.f32 0.0, %v4258
      %v4260 = vpop.f32.mrb[0].mxu0
      %4261 = vmatprep.mubr.bf16.mxu0 0
      %4262 = vmatmul.mubr.bf16.gmra.mrb[0].mxu0 %v4071
      %v4263 = vpop.f32.mrb[0].mxu0
      %v4264 = vadd.f32 0.0, %v4263
      %v4265 = vpop.f32.mrb[0].mxu0
      %v4266 = vpop.f32.mrb[0].mxu0
      %v4267 = vadd.f32 0.0, %v4266
      %v4268 = vpop.f32.mrb[0].mxu0
      %4269 = vmatprep.mubr.bf16.mxu0 0
      %4270 = vmatmul.mubr.bf16.gmra.mrb[0].mxu0 %v4072
      %v4271 = vpop.f32.mrb[0].mxu0
      %v4272 = vadd.f32 0.0, %v4271
      %v4273 = vpop.f32.mrb[0].mxu0
      %v4274 = vpop.f32.mrb[0].mxu0
      %v4275 = vadd.f32 0.0, %v4274
      %v4276 = vpop.f32.mrb[0].mxu0
      %4277 = vmatprep.mubr.bf16.mxu0 0
      %4278 = vmatmul.mubr.bf16.gmra.mrb[0].mxu0 %v4073
      %v4279 = vpop.f32.mrb[0].mxu0
      %v4280 = vadd.f32 0.0, %v4279
      %v4281 = vpop.f32.mrb[0].mxu0
      %v4282 = vpop.f32.mrb[0].mxu0
      %v4283 = vadd.f32 0.0, %v4282
      %v4284 = vpop.f32.mrb[0].mxu0
      %4285 = vmatprep.mubr.bf16.mxu0 0
      %4286 = vmatmul.mubr.bf16.gmra.mrb[0].mxu0 %v4074
      %v4287 = vpop.f32.mrb[0].mxu0
      %v4288 = vadd.f32 0.0, %v4287
      %v4289 = vpop.f32.mrb[0].mxu0
      %v4290 = vpop.f32.mrb[0].mxu0
      %v4291 = vadd.f32 0.0, %v4290
      %v4292 = vpop.f32.mrb[0].mxu0
      %4293 = vmatprep.mubr.bf16.mxu0 0
      %4294 = vmatmul.mubr.bf16.gmra.mrb[0].mxu0 %v4075
      %v4295 = vpop.f32.mrb[0].mxu0
      %v4296 = vadd.f32 0.0, %v4295
      %v4297 = vpop.f32.mrb[0].mxu0
      %v4298 = vpop.f32.mrb[0].mxu0
      %v4299 = vadd.f32 0.0, %v4298
      %v4300 = vpop.f32.mrb[0].mxu0
      %4301 = vdwg.mxu0
      %v4302 = vadd.f32 %v3996, %v4176
      %v4303 = vadd.f32 %v3997, %v4179
      %v4304 = vadd.f32 %v3998, %v4184
      %v4305 = vadd.f32 %v3999, %v4187
      %v4306 = vadd.f32 %v4000, %v4192
      %v4307 = vadd.f32 %v4001, %v4195
      %v4308 = vadd.f32 %v4002, %v4200
      %v4309 = vadd.f32 %v4003, %v4203
      %v4310 = vadd.f32 %v4004, %v4208
      %v4311 = vadd.f32 %v4005, %v4211
      %v4312 = vadd.f32 %v4006, %v4216
      %v4313 = vadd.f32 %v4007, %v4219
      %v4314 = vadd.f32 %v4008, %v4224
      %v4315 = vadd.f32 %v4009, %v4227
      %v4316 = vadd.f32 %v4010, %v4232
      %v4317 = vadd.f32 %v4011, %v4235
      %v4318 = vadd.f32 %v4012, %v4240
      %v4319 = vadd.f32 %v4013, %v4243
      %v4320 = vadd.f32 %v4014, %v4248
      %v4321 = vadd.f32 %v4015, %v4251
      %v4322 = vadd.f32 %v4016, %v4256
      %v4323 = vadd.f32 %v4017, %v4259
      %v4324 = vadd.f32 %v4018, %v4264
      %v4325 = vadd.f32 %v4019, %v4267
      %v4326 = vadd.f32 %v4020, %v4272
      %v4327 = vadd.f32 %v4021, %v4275
      %v4328 = vadd.f32 %v4022, %v4280
      %v4329 = vadd.f32 %v4023, %v4283
      %v4330 = vadd.f32 %v4024, %v4288
      %v4331 = vadd.f32 %v4025, %v4291
      %v4332 = vadd.f32 %v4026, %v4296
      %v4333 = vadd.f32 %v4027, %v4299
      %v4334 = vld [vmem:[%s3142 + $0x8] sm:$0xff]
      %v4335 = vld [vmem:[%s3142 + $0x10] sm:$0xff]
      %v4336 = vld [vmem:[%s3142 + $0x28] sm:$0xff]
      %v4337 = vld [vmem:[%s3142 + $0x30] sm:$0xff]
      %v4338 = vld [vmem:[%s3142 + $0x48] sm:$0xff]
      %v4339 = vld [vmem:[%s3142 + $0x50] sm:$0xff]
      %v4340 = vld [vmem:[%s3142 + $0x68] sm:$0xff]
      %v4341 = vld [vmem:[%s3142 + $0x70] sm:$0xff]
      %v4342 = vld [vmem:[%s3142 + $0x88] sm:$0xff]
      %v4343 = vld [vmem:[%s3142 + $0x90] sm:$0xff]
      %v4344 = vld [vmem:[%s3142 + $0xa8] sm:$0xff]
      %v4345 = vld [vmem:[%s3142 + $0xb0] sm:$0xff]
      %v4346 = vld [vmem:[%s3142 + $0xc8] sm:$0xff]
      %v4347 = vld [vmem:[%s3142 + $0xd0] sm:$0xff]
      %v4348 = vld [vmem:[%s3142 + $0xe8] sm:$0xff]
      %v4349 = vld [vmem:[%s3142 + $0xf0] sm:$0xff]
      %v4350 = vld [vmem:[%s3142 + $0x108] sm:$0xff]
      %v4351 = vld [vmem:[%s3142 + $0x110] sm:$0xff]
      %v4352 = vld [vmem:[%s3142 + $0x128] sm:$0xff]
      %v4353 = vld [vmem:[%s3142 + $0x130] sm:$0xff]
      %v4354 = vld [vmem:[%s3142 + $0x148] sm:$0xff]
      %v4355 = vld [vmem:[%s3142 + $0x150] sm:$0xff]
      %v4356 = vld [vmem:[%s3142 + $0x168] sm:$0xff]
      %v4357 = vld [vmem:[%s3142 + $0x170] sm:$0xff]
      %v4358 = vld [vmem:[%s3142 + $0x188] sm:$0xff]
      %v4359 = vld [vmem:[%s3142 + $0x190] sm:$0xff]
      %v4360 = vld [vmem:[%s3142 + $0x1a8] sm:$0xff]
      %v4361 = vld [vmem:[%s3142 + $0x1b0] sm:$0xff]
      %v4362 = vld [vmem:[%s3142 + $0x1c8] sm:$0xff]
      %v4363 = vld [vmem:[%s3142 + $0x1d0] sm:$0xff]
      %v4364 = vld [vmem:[%s3142 + $0x1e8] sm:$0xff]
      %v4365 = vld [vmem:[%s3142 + $0x1f0] sm:$0xff]
      %v4366 = vpack.c.bf16 %v4335, %v4334
      %v4367 = vpack.c.bf16 %v4337, %v4336
      %v4368 = vpack.c.bf16 %v4339, %v4338
      %v4369 = vpack.c.bf16 %v4341, %v4340
      %v4370 = vpack.c.bf16 %v4343, %v4342
      %v4371 = vpack.c.bf16 %v4345, %v4344
      %v4372 = vpack.c.bf16 %v4347, %v4346
      %v4373 = vpack.c.bf16 %v4349, %v4348
      %v4374 = vpack.c.bf16 %v4351, %v4350
      %v4375 = vpack.c.bf16 %v4353, %v4352
      %v4376 = vpack.c.bf16 %v4355, %v4354
      %v4377 = vpack.c.bf16 %v4357, %v4356
      %v4378 = vpack.c.bf16 %v4359, %v4358
      %v4379 = vpack.c.bf16 %v4361, %v4360
      %v4380 = vpack.c.bf16 %v4363, %v4362
      %v4381 = vpack.c.bf16 %v4365, %v4364
      %s4382 = scalar_lea.vmem %s2, 256
      %v4383 = vld [vmem:[%s4382] sm:$0xf]
      %v4384 = vld [vmem:[%s4382 + $0x4] sm:$0xf]
      %v4385 = vld [vmem:[%s4382 + $0x8] sm:$0xf]
      %v4386 = vld [vmem:[%s4382 + $0xc] sm:$0xf]
      %v4387 = vld [vmem:[%s4382 + $0x10] sm:$0xf]
      %v4388 = vld [vmem:[%s4382 + $0x14] sm:$0xf]
      %v4389 = vld [vmem:[%s4382 + $0x18] sm:$0xf]
      %v4390 = vld [vmem:[%s4382 + $0x1c] sm:$0xf]
      %v4391 = vld [vmem:[%s4382 + $0x20] sm:$0xf]
      %v4392 = vld [vmem:[%s4382 + $0x24] sm:$0xf]
      %v4393 = vld [vmem:[%s4382 + $0x28] sm:$0xf]
      %v4394 = vld [vmem:[%s4382 + $0x2c] sm:$0xf]
      %v4395 = vld [vmem:[%s4382 + $0x30] sm:$0xf]
      %v4396 = vld [vmem:[%s4382 + $0x34] sm:$0xf]
      %v4397 = vld [vmem:[%s4382 + $0x38] sm:$0xf]
      %v4398 = vld [vmem:[%s4382 + $0x3c] sm:$0xf]
      %v4415 = vunpack.c.l.b16 %v4383
      %v4416 = vunpack.c.l.b16 %v4384
      %v4417 = vunpack.c.l.b16 %v4385
      %v4418 = vunpack.c.l.b16 %v4386
      %v4419 = vunpack.c.l.b16 %v4387
      %v4420 = vunpack.c.l.b16 %v4388
      %v4421 = vunpack.c.l.b16 %v4389
      %v4422 = vunpack.c.l.b16 %v4390
      %v4423 = vunpack.c.l.b16 %v4391
      %v4424 = vunpack.c.l.b16 %v4392
      %v4425 = vunpack.c.l.b16 %v4393
      %v4426 = vunpack.c.l.b16 %v4394
      %v4427 = vunpack.c.l.b16 %v4395
      %v4428 = vunpack.c.l.b16 %v4396
      %v4429 = vunpack.c.l.b16 %v4397
      %v4430 = vunpack.c.l.b16 %v4398
      %v4431 = vpack.c.b16 %v4416, %v4415
      %v4432 = vpack.c.b16 %v4418, %v4417
      %v4433 = vpack.c.b16 %v4420, %v4419
      %v4434 = vpack.c.b16 %v4422, %v4421
      %v4435 = vpack.c.b16 %v4424, %v4423
      %v4436 = vpack.c.b16 %v4426, %v4425
      %v4437 = vpack.c.b16 %v4428, %v4427
      %v4438 = vpack.c.b16 %v4430, %v4429
      %4447 = vmatprep.subr.bf16.mxu0 0
      %4448 = vmatpush1.bf16.msra.mxu0 %v4431
      %4449 = vmatprep.subr.bf16.mxu0 0
      %4450 = vmatpush1.bf16.msra.mxu0 %v4432
      %4451 = vmatprep.subr.bf16.mxu0 0
      %4452 = vmatpush1.bf16.msra.mxu0 %v4433
      %4453 = vmatprep.subr.bf16.mxu0 0
      %4454 = vmatpush1.bf16.msra.mxu0 %v4434
      %4455 = vmatprep.subr.bf16.mxu0 0
      %4456 = vmatpush1.bf16.msra.mxu0 %v4435
      %4457 = vmatprep.subr.bf16.mxu0 0
      %4458 = vmatpush1.bf16.msra.mxu0 %v4436
      %4459 = vmatprep.subr.bf16.mxu0 0
      %4460 = vmatpush1.bf16.msra.mxu0 %v4437
      %4461 = vmatprep.subr.bf16.mxu0 0
      %4462 = vmatpush1.bf16.msra.mxu0 %v4438
      %4463 = vmatprep.subr.bf16.mxu0 0
      %4464 = vmatpush1.bf16.msra.mxu0 0
      %4465 = vmatprep.subr.bf16.mxu0 0
      %4466 = vmatpush1.bf16.msra.mxu0 0
      %4467 = vmatprep.subr.bf16.mxu0 0
      %4468 = vmatpush1.bf16.msra.mxu0 0
      %4469 = vmatprep.subr.bf16.mxu0 0
      %4470 = vmatpush1.bf16.msra.mxu0 0
      %4471 = vmatprep.subr.bf16.mxu0 0
      %4472 = vmatpush1.bf16.msra.mxu0 0
      %4473 = vmatprep.subr.bf16.mxu0 0
      %4474 = vmatpush1.bf16.msra.mxu0 0
      %4475 = vmatprep.subr.bf16.mxu0 0
      %4476 = vmatpush1.bf16.msra.mxu0 0
      %4477 = vmatprep.subr.bf16.mxu0 0
      %4478 = vmatpush1.bf16.msra.mxu0 0
      %4479 = vmatprep.mubr.bf16.mxu0 0
      %4480 = vmatmul.mubr.bf16.gmra.mrb[0].mxu0 %v4366
      %v4481 = vpop.f32.mrb[0].mxu0
      %v4482 = vadd.f32 0.0, %v4481
      %v4483 = vpop.f32.mrb[0].mxu0
      %v4484 = vpop.f32.mrb[0].mxu0
      %v4485 = vadd.f32 0.0, %v4484
      %v4486 = vpop.f32.mrb[0].mxu0
      %4487 = vmatprep.mubr.bf16.mxu0 0
      %4488 = vmatmul.mubr.bf16.gmra.mrb[0].mxu0 %v4367
      %v4489 = vpop.f32.mrb[0].mxu0
      %v4490 = vadd.f32 0.0, %v4489
      %v4491 = vpop.f32.mrb[0].mxu0
      %v4492 = vpop.f32.mrb[0].mxu0
      %v4493 = vadd.f32 0.0, %v4492
      %v4494 = vpop.f32.mrb[0].mxu0
      %4495 = vmatprep.mubr.bf16.mxu0 0
      %4496 = vmatmul.mubr.bf16.gmra.mrb[0].mxu0 %v4368
      %v4497 = vpop.f32.mrb[0].mxu0
      %v4498 = vadd.f32 0.0, %v4497
      %v4499 = vpop.f32.mrb[0].mxu0
      %v4500 = vpop.f32.mrb[0].mxu0
      %v4501 = vadd.f32 0.0, %v4500
      %v4502 = vpop.f32.mrb[0].mxu0
      %4503 = vmatprep.mubr.bf16.mxu0 0
      %4504 = vmatmul.mubr.bf16.gmra.mrb[0].mxu0 %v4369
      %v4505 = vpop.f32.mrb[0].mxu0
      %v4506 = vadd.f32 0.0, %v4505
      %v4507 = vpop.f32.mrb[0].mxu0
      %v4508 = vpop.f32.mrb[0].mxu0
      %v4509 = vadd.f32 0.0, %v4508
      %v4510 = vpop.f32.mrb[0].mxu0
      %4511 = vmatprep.mubr.bf16.mxu0 0
      %4512 = vmatmul.mubr.bf16.gmra.mrb[0].mxu0 %v4370
      %v4513 = vpop.f32.mrb[0].mxu0
      %v4514 = vadd.f32 0.0, %v4513
      %v4515 = vpop.f32.mrb[0].mxu0
      %v4516 = vpop.f32.mrb[0].mxu0
      %v4517 = vadd.f32 0.0, %v4516
      %v4518 = vpop.f32.mrb[0].mxu0
      %4519 = vmatprep.mubr.bf16.mxu0 0
      %4520 = vmatmul.mubr.bf16.gmra.mrb[0].mxu0 %v4371
      %v4521 = vpop.f32.mrb[0].mxu0
      %v4522 = vadd.f32 0.0, %v4521
      %v4523 = vpop.f32.mrb[0].mxu0
      %v4524 = vpop.f32.mrb[0].mxu0
      %v4525 = vadd.f32 0.0, %v4524
      %v4526 = vpop.f32.mrb[0].mxu0
      %4527 = vmatprep.mubr.bf16.mxu0 0
      %4528 = vmatmul.mubr.bf16.gmra.mrb[0].mxu0 %v4372
      %v4529 = vpop.f32.mrb[0].mxu0
      %v4530 = vadd.f32 0.0, %v4529
      %v4531 = vpop.f32.mrb[0].mxu0
      %v4532 = vpop.f32.mrb[0].mxu0
      %v4533 = vadd.f32 0.0, %v4532
      %v4534 = vpop.f32.mrb[0].mxu0
      %4535 = vmatprep.mubr.bf16.mxu0 0
      %4536 = vmatmul.mubr.bf16.gmra.mrb[0].mxu0 %v4373
      %v4537 = vpop.f32.mrb[0].mxu0
      %v4538 = vadd.f32 0.0, %v4537
      %v4539 = vpop.f32.mrb[0].mxu0
      %v4540 = vpop.f32.mrb[0].mxu0
      %v4541 = vadd.f32 0.0, %v4540
      %v4542 = vpop.f32.mrb[0].mxu0
      %4543 = vmatprep.mubr.bf16.mxu0 0
      %4544 = vmatmul.mubr.bf16.gmra.mrb[0].mxu0 %v4374
      %v4545 = vpop.f32.mrb[0].mxu0
      %v4546 = vadd.f32 0.0, %v4545
      %v4547 = vpop.f32.mrb[0].mxu0
      %v4548 = vpop.f32.mrb[0].mxu0
      %v4549 = vadd.f32 0.0, %v4548
      %v4550 = vpop.f32.mrb[0].mxu0
      %4551 = vmatprep.mubr.bf16.mxu0 0
      %4552 = vmatmul.mubr.bf16.gmra.mrb[0].mxu0 %v4375
      %v4553 = vpop.f32.mrb[0].mxu0
      %v4554 = vadd.f32 0.0, %v4553
      %v4555 = vpop.f32.mrb[0].mxu0
      %v4556 = vpop.f32.mrb[0].mxu0
      %v4557 = vadd.f32 0.0, %v4556
      %v4558 = vpop.f32.mrb[0].mxu0
      %4559 = vmatprep.mubr.bf16.mxu0 0
      %4560 = vmatmul.mubr.bf16.gmra.mrb[0].mxu0 %v4376
      %v4561 = vpop.f32.mrb[0].mxu0
      %v4562 = vadd.f32 0.0, %v4561
      %v4563 = vpop.f32.mrb[0].mxu0
      %v4564 = vpop.f32.mrb[0].mxu0
      %v4565 = vadd.f32 0.0, %v4564
      %v4566 = vpop.f32.mrb[0].mxu0
      %4567 = vmatprep.mubr.bf16.mxu0 0
      %4568 = vmatmul.mubr.bf16.gmra.mrb[0].mxu0 %v4377
      %v4569 = vpop.f32.mrb[0].mxu0
      %v4570 = vadd.f32 0.0, %v4569
      %v4571 = vpop.f32.mrb[0].mxu0
      %v4572 = vpop.f32.mrb[0].mxu0
      %v4573 = vadd.f32 0.0, %v4572
      %v4574 = vpop.f32.mrb[0].mxu0
      %4575 = vmatprep.mubr.bf16.mxu0 0
      %4576 = vmatmul.mubr.bf16.gmra.mrb[0].mxu0 %v4378
      %v4577 = vpop.f32.mrb[0].mxu0
      %v4578 = vadd.f32 0.0, %v4577
      %v4579 = vpop.f32.mrb[0].mxu0
      %v4580 = vpop.f32.mrb[0].mxu0
      %v4581 = vadd.f32 0.0, %v4580
      %v4582 = vpop.f32.mrb[0].mxu0
      %4583 = vmatprep.mubr.bf16.mxu0 0
      %4584 = vmatmul.mubr.bf16.gmra.mrb[0].mxu0 %v4379
      %v4585 = vpop.f32.mrb[0].mxu0
      %v4586 = vadd.f32 0.0, %v4585
      %v4587 = vpop.f32.mrb[0].mxu0
      %v4588 = vpop.f32.mrb[0].mxu0
      %v4589 = vadd.f32 0.0, %v4588
      %v4590 = vpop.f32.mrb[0].mxu0
      %4591 = vmatprep.mubr.bf16.mxu0 0
      %4592 = vmatmul.mubr.bf16.gmra.mrb[0].mxu0 %v4380
      %v4593 = vpop.f32.mrb[0].mxu0
      %v4594 = vadd.f32 0.0, %v4593
      %v4595 = vpop.f32.mrb[0].mxu0
      %v4596 = vpop.f32.mrb[0].mxu0
      %v4597 = vadd.f32 0.0, %v4596
      %v4598 = vpop.f32.mrb[0].mxu0
      %4599 = vmatprep.mubr.bf16.mxu0 0
      %4600 = vmatmul.mubr.bf16.gmra.mrb[0].mxu0 %v4381
      %v4601 = vpop.f32.mrb[0].mxu0
      %v4602 = vadd.f32 0.0, %v4601
      %v4603 = vpop.f32.mrb[0].mxu0
      %v4604 = vpop.f32.mrb[0].mxu0
      %v4605 = vadd.f32 0.0, %v4604
      %v4606 = vpop.f32.mrb[0].mxu0
      %4607 = vdwg.mxu0
      %v4608 = vadd.f32 %v4302, %v4482
      %v4609 = vadd.f32 %v4303, %v4485
      %v4610 = vadd.f32 %v4304, %v4490
      %v4611 = vadd.f32 %v4305, %v4493
      %v4612 = vadd.f32 %v4306, %v4498
      %v4613 = vadd.f32 %v4307, %v4501
      %v4614 = vadd.f32 %v4308, %v4506
      %v4615 = vadd.f32 %v4309, %v4509
      %v4616 = vadd.f32 %v4310, %v4514
      %v4617 = vadd.f32 %v4311, %v4517
      %v4618 = vadd.f32 %v4312, %v4522
      %v4619 = vadd.f32 %v4313, %v4525
      %v4620 = vadd.f32 %v4314, %v4530
      %v4621 = vadd.f32 %v4315, %v4533
      %v4622 = vadd.f32 %v4316, %v4538
      %v4623 = vadd.f32 %v4317, %v4541
      %v4624 = vadd.f32 %v4318, %v4546
      %v4625 = vadd.f32 %v4319, %v4549
      %v4626 = vadd.f32 %v4320, %v4554
      %v4627 = vadd.f32 %v4321, %v4557
      %v4628 = vadd.f32 %v4322, %v4562
      %v4629 = vadd.f32 %v4323, %v4565
      %v4630 = vadd.f32 %v4324, %v4570
      %v4631 = vadd.f32 %v4325, %v4573
      %v4632 = vadd.f32 %v4326, %v4578
      %v4633 = vadd.f32 %v4327, %v4581
      %v4634 = vadd.f32 %v4328, %v4586
      %v4635 = vadd.f32 %v4329, %v4589
      %v4636 = vadd.f32 %v4330, %v4594
      %v4637 = vadd.f32 %v4331, %v4597
      %v4638 = vadd.f32 %v4332, %v4602
      %v4639 = vadd.f32 %v4333, %v4605
      %v4640 = vld [vmem:[%s3142 + $0x9] sm:$0xff]
      %v4641 = vld [vmem:[%s3142 + $0x11] sm:$0xff]
      %v4642 = vld [vmem:[%s3142 + $0x29] sm:$0xff]
      %v4643 = vld [vmem:[%s3142 + $0x31] sm:$0xff]
      %v4644 = vld [vmem:[%s3142 + $0x49] sm:$0xff]
      %v4645 = vld [vmem:[%s3142 + $0x51] sm:$0xff]
      %v4646 = vld [vmem:[%s3142 + $0x69] sm:$0xff]
      %v4647 = vld [vmem:[%s3142 + $0x71] sm:$0xff]
      %v4648 = vld [vmem:[%s3142 + $0x89] sm:$0xff]
      %v4649 = vld [vmem:[%s3142 + $0x91] sm:$0xff]
      %v4650 = vld [vmem:[%s3142 + $0xa9] sm:$0xff]
      %v4651 = vld [vmem:[%s3142 + $0xb1] sm:$0xff]
      %v4652 = vld [vmem:[%s3142 + $0xc9] sm:$0xff]
      %v4653 = vld [vmem:[%s3142 + $0xd1] sm:$0xff]
      %v4654 = vld [vmem:[%s3142 + $0xe9] sm:$0xff]
      %v4655 = vld [vmem:[%s3142 + $0xf1] sm:$0xff]
      %v4656 = vld [vmem:[%s3142 + $0x109] sm:$0xff]
      %v4657 = vld [vmem:[%s3142 + $0x111] sm:$0xff]
      %v4658 = vld [vmem:[%s3142 + $0x129] sm:$0xff]
      %v4659 = vld [vmem:[%s3142 + $0x131] sm:$0xff]
      %v4660 = vld [vmem:[%s3142 + $0x149] sm:$0xff]
      %v4661 = vld [vmem:[%s3142 + $0x151] sm:$0xff]
      %v4662 = vld [vmem:[%s3142 + $0x169] sm:$0xff]
      %v4663 = vld [vmem:[%s3142 + $0x171] sm:$0xff]
      %v4664 = vld [vmem:[%s3142 + $0x189] sm:$0xff]
      %v4665 = vld [vmem:[%s3142 + $0x191] sm:$0xff]
      %v4666 = vld [vmem:[%s3142 + $0x1a9] sm:$0xff]
      %v4667 = vld [vmem:[%s3142 + $0x1b1] sm:$0xff]
      %v4668 = vld [vmem:[%s3142 + $0x1c9] sm:$0xff]
      %v4669 = vld [vmem:[%s3142 + $0x1d1] sm:$0xff]
      %v4670 = vld [vmem:[%s3142 + $0x1e9] sm:$0xff]
      %v4671 = vld [vmem:[%s3142 + $0x1f1] sm:$0xff]
      %v4672 = vpack.c.bf16 %v4641, %v4640
      %v4673 = vpack.c.bf16 %v4643, %v4642
      %v4674 = vpack.c.bf16 %v4645, %v4644
      %v4675 = vpack.c.bf16 %v4647, %v4646
      %v4676 = vpack.c.bf16 %v4649, %v4648
      %v4677 = vpack.c.bf16 %v4651, %v4650
      %v4678 = vpack.c.bf16 %v4653, %v4652
      %v4679 = vpack.c.bf16 %v4655, %v4654
      %v4680 = vpack.c.bf16 %v4657, %v4656
      %v4681 = vpack.c.bf16 %v4659, %v4658
      %v4682 = vpack.c.bf16 %v4661, %v4660
      %v4683 = vpack.c.bf16 %v4663, %v4662
      %v4684 = vpack.c.bf16 %v4665, %v4664
      %v4685 = vpack.c.bf16 %v4667, %v4666
      %v4686 = vpack.c.bf16 %v4669, %v4668
      %v4687 = vpack.c.bf16 %v4671, %v4670
      %s4688 = scalar_lea.vmem %s2, 320
      %v4689 = vld [vmem:[%s4688] sm:$0xf]
      %v4690 = vld [vmem:[%s4688 + $0x4] sm:$0xf]
      %v4691 = vld [vmem:[%s4688 + $0x8] sm:$0xf]
      %v4692 = vld [vmem:[%s4688 + $0xc] sm:$0xf]
      %v4693 = vld [vmem:[%s4688 + $0x10] sm:$0xf]
      %v4694 = vld [vmem:[%s4688 + $0x14] sm:$0xf]
      %v4695 = vld [vmem:[%s4688 + $0x18] sm:$0xf]
      %v4696 = vld [vmem:[%s4688 + $0x1c] sm:$0xf]
      %v4697 = vld [vmem:[%s4688 + $0x20] sm:$0xf]
      %v4698 = vld [vmem:[%s4688 + $0x24] sm:$0xf]
      %v4699 = vld [vmem:[%s4688 + $0x28] sm:$0xf]
      %v4700 = vld [vmem:[%s4688 + $0x2c] sm:$0xf]
      %v4701 = vld [vmem:[%s4688 + $0x30] sm:$0xf]
      %v4702 = vld [vmem:[%s4688 + $0x34] sm:$0xf]
      %v4703 = vld [vmem:[%s4688 + $0x38] sm:$0xf]
      %v4704 = vld [vmem:[%s4688 + $0x3c] sm:$0xf]
      %v4721 = vunpack.c.l.b16 %v4689
      %v4722 = vunpack.c.l.b16 %v4690
      %v4723 = vunpack.c.l.b16 %v4691
      %v4724 = vunpack.c.l.b16 %v4692
      %v4725 = vunpack.c.l.b16 %v4693
      %v4726 = vunpack.c.l.b16 %v4694
      %v4727 = vunpack.c.l.b16 %v4695
      %v4728 = vunpack.c.l.b16 %v4696
      %v4729 = vunpack.c.l.b16 %v4697
      %v4730 = vunpack.c.l.b16 %v4698
      %v4731 = vunpack.c.l.b16 %v4699
      %v4732 = vunpack.c.l.b16 %v4700
      %v4733 = vunpack.c.l.b16 %v4701
      %v4734 = vunpack.c.l.b16 %v4702
      %v4735 = vunpack.c.l.b16 %v4703
      %v4736 = vunpack.c.l.b16 %v4704
      %v4737 = vpack.c.b16 %v4722, %v4721
      %v4738 = vpack.c.b16 %v4724, %v4723
      %v4739 = vpack.c.b16 %v4726, %v4725
      %v4740 = vpack.c.b16 %v4728, %v4727
      %v4741 = vpack.c.b16 %v4730, %v4729
      %v4742 = vpack.c.b16 %v4732, %v4731
      %v4743 = vpack.c.b16 %v4734, %v4733
      %v4744 = vpack.c.b16 %v4736, %v4735
      %4753 = vmatprep.subr.bf16.mxu0 0
      %4754 = vmatpush1.bf16.msra.mxu0 %v4737
      %4755 = vmatprep.subr.bf16.mxu0 0
      %4756 = vmatpush1.bf16.msra.mxu0 %v4738
      %4757 = vmatprep.subr.bf16.mxu0 0
      %4758 = vmatpush1.bf16.msra.mxu0 %v4739
      %4759 = vmatprep.subr.bf16.mxu0 0
      %4760 = vmatpush1.bf16.msra.mxu0 %v4740
      %4761 = vmatprep.subr.bf16.mxu0 0
      %4762 = vmatpush1.bf16.msra.mxu0 %v4741
      %4763 = vmatprep.subr.bf16.mxu0 0
      %4764 = vmatpush1.bf16.msra.mxu0 %v4742
      %4765 = vmatprep.subr.bf16.mxu0 0
      %4766 = vmatpush1.bf16.msra.mxu0 %v4743
      %4767 = vmatprep.subr.bf16.mxu0 0
      %4768 = vmatpush1.bf16.msra.mxu0 %v4744
      %4769 = vmatprep.subr.bf16.mxu0 0
      %4770 = vmatpush1.bf16.msra.mxu0 0
      %4771 = vmatprep.subr.bf16.mxu0 0
      %4772 = vmatpush1.bf16.msra.mxu0 0
      %4773 = vmatprep.subr.bf16.mxu0 0
      %4774 = vmatpush1.bf16.msra.mxu0 0
      %4775 = vmatprep.subr.bf16.mxu0 0
      %4776 = vmatpush1.bf16.msra.mxu0 0
      %4777 = vmatprep.subr.bf16.mxu0 0
      %4778 = vmatpush1.bf16.msra.mxu0 0
      %4779 = vmatprep.subr.bf16.mxu0 0
      %4780 = vmatpush1.bf16.msra.mxu0 0
      %4781 = vmatprep.subr.bf16.mxu0 0
      %4782 = vmatpush1.bf16.msra.mxu0 0
      %4783 = vmatprep.subr.bf16.mxu0 0
      %4784 = vmatpush1.bf16.msra.mxu0 0
      %4785 = vmatprep.mubr.bf16.mxu0 0
      %4786 = vmatmul.mubr.bf16.gmra.mrb[0].mxu0 %v4672
      %v4787 = vpop.f32.mrb[0].mxu0
      %v4788 = vadd.f32 0.0, %v4787
      %v4789 = vpop.f32.mrb[0].mxu0
      %v4790 = vpop.f32.mrb[0].mxu0
      %v4791 = vadd.f32 0.0, %v4790
      %v4792 = vpop.f32.mrb[0].mxu0
      %4793 = vmatprep.mubr.bf16.mxu0 0
      %4794 = vmatmul.mubr.bf16.gmra.mrb[0].mxu0 %v4673
      %v4795 = vpop.f32.mrb[0].mxu0
      %v4796 = vadd.f32 0.0, %v4795
      %v4797 = vpop.f32.mrb[0].mxu0
      %v4798 = vpop.f32.mrb[0].mxu0
      %v4799 = vadd.f32 0.0, %v4798
      %v4800 = vpop.f32.mrb[0].mxu0
      %4801 = vmatprep.mubr.bf16.mxu0 0
      %4802 = vmatmul.mubr.bf16.gmra.mrb[0].mxu0 %v4674
      %v4803 = vpop.f32.mrb[0].mxu0
      %v4804 = vadd.f32 0.0, %v4803
      %v4805 = vpop.f32.mrb[0].mxu0
      %v4806 = vpop.f32.mrb[0].mxu0
      %v4807 = vadd.f32 0.0, %v4806
      %v4808 = vpop.f32.mrb[0].mxu0
      %4809 = vmatprep.mubr.bf16.mxu0 0
      %4810 = vmatmul.mubr.bf16.gmra.mrb[0].mxu0 %v4675
      %v4811 = vpop.f32.mrb[0].mxu0
      %v4812 = vadd.f32 0.0, %v4811
      %v4813 = vpop.f32.mrb[0].mxu0
      %v4814 = vpop.f32.mrb[0].mxu0
      %v4815 = vadd.f32 0.0, %v4814
      %v4816 = vpop.f32.mrb[0].mxu0
      %4817 = vmatprep.mubr.bf16.mxu0 0
      %4818 = vmatmul.mubr.bf16.gmra.mrb[0].mxu0 %v4676
      %v4819 = vpop.f32.mrb[0].mxu0
      %v4820 = vadd.f32 0.0, %v4819
      %v4821 = vpop.f32.mrb[0].mxu0
      %v4822 = vpop.f32.mrb[0].mxu0
      %v4823 = vadd.f32 0.0, %v4822
      %v4824 = vpop.f32.mrb[0].mxu0
      %4825 = vmatprep.mubr.bf16.mxu0 0
      %4826 = vmatmul.mubr.bf16.gmra.mrb[0].mxu0 %v4677
      %v4827 = vpop.f32.mrb[0].mxu0
      %v4828 = vadd.f32 0.0, %v4827
      %v4829 = vpop.f32.mrb[0].mxu0
      %v4830 = vpop.f32.mrb[0].mxu0
      %v4831 = vadd.f32 0.0, %v4830
      %v4832 = vpop.f32.mrb[0].mxu0
      %4833 = vmatprep.mubr.bf16.mxu0 0
      %4834 = vmatmul.mubr.bf16.gmra.mrb[0].mxu0 %v4678
      %v4835 = vpop.f32.mrb[0].mxu0
      %v4836 = vadd.f32 0.0, %v4835
      %v4837 = vpop.f32.mrb[0].mxu0
      %v4838 = vpop.f32.mrb[0].mxu0
      %v4839 = vadd.f32 0.0, %v4838
      %v4840 = vpop.f32.mrb[0].mxu0
      %4841 = vmatprep.mubr.bf16.mxu0 0
      %4842 = vmatmul.mubr.bf16.gmra.mrb[0].mxu0 %v4679
      %v4843 = vpop.f32.mrb[0].mxu0
      %v4844 = vadd.f32 0.0, %v4843
      %v4845 = vpop.f32.mrb[0].mxu0
      %v4846 = vpop.f32.mrb[0].mxu0
      %v4847 = vadd.f32 0.0, %v4846
      %v4848 = vpop.f32.mrb[0].mxu0
      %4849 = vmatprep.mubr.bf16.mxu0 0
      %4850 = vmatmul.mubr.bf16.gmra.mrb[0].mxu0 %v4680
      %v4851 = vpop.f32.mrb[0].mxu0
      %v4852 = vadd.f32 0.0, %v4851
      %v4853 = vpop.f32.mrb[0].mxu0
      %v4854 = vpop.f32.mrb[0].mxu0
      %v4855 = vadd.f32 0.0, %v4854
      %v4856 = vpop.f32.mrb[0].mxu0
      %4857 = vmatprep.mubr.bf16.mxu0 0
      %4858 = vmatmul.mubr.bf16.gmra.mrb[0].mxu0 %v4681
      %v4859 = vpop.f32.mrb[0].mxu0
      %v4860 = vadd.f32 0.0, %v4859
      %v4861 = vpop.f32.mrb[0].mxu0
      %v4862 = vpop.f32.mrb[0].mxu0
      %v4863 = vadd.f32 0.0, %v4862
      %v4864 = vpop.f32.mrb[0].mxu0
      %4865 = vmatprep.mubr.bf16.mxu0 0
      %4866 = vmatmul.mubr.bf16.gmra.mrb[0].mxu0 %v4682
      %v4867 = vpop.f32.mrb[0].mxu0
      %v4868 = vadd.f32 0.0, %v4867
      %v4869 = vpop.f32.mrb[0].mxu0
      %v4870 = vpop.f32.mrb[0].mxu0
      %v4871 = vadd.f32 0.0, %v4870
      %v4872 = vpop.f32.mrb[0].mxu0
      %4873 = vmatprep.mubr.bf16.mxu0 0
      %4874 = vmatmul.mubr.bf16.gmra.mrb[0].mxu0 %v4683
      %v4875 = vpop.f32.mrb[0].mxu0
      %v4876 = vadd.f32 0.0, %v4875
      %v4877 = vpop.f32.mrb[0].mxu0
      %v4878 = vpop.f32.mrb[0].mxu0
      %v4879 = vadd.f32 0.0, %v4878
      %v4880 = vpop.f32.mrb[0].mxu0
      %4881 = vmatprep.mubr.bf16.mxu0 0
      %4882 = vmatmul.mubr.bf16.gmra.mrb[0].mxu0 %v4684
      %v4883 = vpop.f32.mrb[0].mxu0
      %v4884 = vadd.f32 0.0, %v4883
      %v4885 = vpop.f32.mrb[0].mxu0
      %v4886 = vpop.f32.mrb[0].mxu0
      %v4887 = vadd.f32 0.0, %v4886
      %v4888 = vpop.f32.mrb[0].mxu0
      %4889 = vmatprep.mubr.bf16.mxu0 0
      %4890 = vmatmul.mubr.bf16.gmra.mrb[0].mxu0 %v4685
      %v4891 = vpop.f32.mrb[0].mxu0
      %v4892 = vadd.f32 0.0, %v4891
      %v4893 = vpop.f32.mrb[0].mxu0
      %v4894 = vpop.f32.mrb[0].mxu0
      %v4895 = vadd.f32 0.0, %v4894
      %v4896 = vpop.f32.mrb[0].mxu0
      %4897 = vmatprep.mubr.bf16.mxu0 0
      %4898 = vmatmul.mubr.bf16.gmra.mrb[0].mxu0 %v4686
      %v4899 = vpop.f32.mrb[0].mxu0
      %v4900 = vadd.f32 0.0, %v4899
      %v4901 = vpop.f32.mrb[0].mxu0
      %v4902 = vpop.f32.mrb[0].mxu0
      %v4903 = vadd.f32 0.0, %v4902
      %v4904 = vpop.f32.mrb[0].mxu0
      %4905 = vmatprep.mubr.bf16.mxu0 0
      %4906 = vmatmul.mubr.bf16.gmra.mrb[0].mxu0 %v4687
      %v4907 = vpop.f32.mrb[0].mxu0
      %v4908 = vadd.f32 0.0, %v4907
      %v4909 = vpop.f32.mrb[0].mxu0
      %v4910 = vpop.f32.mrb[0].mxu0
      %v4911 = vadd.f32 0.0, %v4910
      %v4912 = vpop.f32.mrb[0].mxu0
      %4913 = vdwg.mxu0
      %v4914 = vadd.f32 %v4608, %v4788
      %v4915 = vadd.f32 %v4609, %v4791
      %v4916 = vadd.f32 %v4610, %v4796
      %v4917 = vadd.f32 %v4611, %v4799
      %v4918 = vadd.f32 %v4612, %v4804
      %v4919 = vadd.f32 %v4613, %v4807
      %v4920 = vadd.f32 %v4614, %v4812
      %v4921 = vadd.f32 %v4615, %v4815
      %v4922 = vadd.f32 %v4616, %v4820
      %v4923 = vadd.f32 %v4617, %v4823
      %v4924 = vadd.f32 %v4618, %v4828
      %v4925 = vadd.f32 %v4619, %v4831
      %v4926 = vadd.f32 %v4620, %v4836
      %v4927 = vadd.f32 %v4621, %v4839
      %v4928 = vadd.f32 %v4622, %v4844
      %v4929 = vadd.f32 %v4623, %v4847
      %v4930 = vadd.f32 %v4624, %v4852
      %v4931 = vadd.f32 %v4625, %v4855
      %v4932 = vadd.f32 %v4626, %v4860
      %v4933 = vadd.f32 %v4627, %v4863
      %v4934 = vadd.f32 %v4628, %v4868
      %v4935 = vadd.f32 %v4629, %v4871
      %v4936 = vadd.f32 %v4630, %v4876
      %v4937 = vadd.f32 %v4631, %v4879
      %v4938 = vadd.f32 %v4632, %v4884
      %v4939 = vadd.f32 %v4633, %v4887
      %v4940 = vadd.f32 %v4634, %v4892
      %v4941 = vadd.f32 %v4635, %v4895
      %v4942 = vadd.f32 %v4636, %v4900
      %v4943 = vadd.f32 %v4637, %v4903
      %v4944 = vadd.f32 %v4638, %v4908
      %v4945 = vadd.f32 %v4639, %v4911
      %s4946 = scalar_lea.vmem [#allocation2], 64
      %v4947 = vld [vmem:[%s4946 + $0x7] sm:$0xff]
      %v4948 = vld [vmem:[%s4946 + $0xf] sm:$0xff]
      %v4949 = vld [vmem:[%s4946 + $0x27] sm:$0xff]
      %v4950 = vld [vmem:[%s4946 + $0x2f] sm:$0xff]
      %v4951 = vld [vmem:[%s4946 + $0x47] sm:$0xff]
      %v4952 = vld [vmem:[%s4946 + $0x4f] sm:$0xff]
      %v4953 = vld [vmem:[%s4946 + $0x67] sm:$0xff]
      %v4954 = vld [vmem:[%s4946 + $0x6f] sm:$0xff]
      %v4955 = vld [vmem:[%s4946 + $0x87] sm:$0xff]
      %v4956 = vld [vmem:[%s4946 + $0x8f] sm:$0xff]
      %v4957 = vld [vmem:[%s4946 + $0xa7] sm:$0xff]
      %v4958 = vld [vmem:[%s4946 + $0xaf] sm:$0xff]
      %v4959 = vld [vmem:[%s4946 + $0xc7] sm:$0xff]
      %v4960 = vld [vmem:[%s4946 + $0xcf] sm:$0xff]
      %v4961 = vld [vmem:[%s4946 + $0xe7] sm:$0xff]
      %v4962 = vld [vmem:[%s4946 + $0xef] sm:$0xff]
      %v4963 = vld [vmem:[%s4946 + $0x107] sm:$0xff]
      %v4964 = vld [vmem:[%s4946 + $0x10f] sm:$0xff]
      %v4965 = vld [vmem:[%s4946 + $0x127] sm:$0xff]
      %v4966 = vld [vmem:[%s4946 + $0x12f] sm:$0xff]
      %v4967 = vld [vmem:[%s4946 + $0x147] sm:$0xff]
      %v4968 = vld [vmem:[%s4946 + $0x14f] sm:$0xff]
      %v4969 = vld [vmem:[%s4946 + $0x167] sm:$0xff]
      %v4970 = vld [vmem:[%s4946 + $0x16f] sm:$0xff]
      %v4971 = vld [vmem:[%s4946 + $0x187] sm:$0xff]
      %v4972 = vld [vmem:[%s4946 + $0x18f] sm:$0xff]
      %v4973 = vld [vmem:[%s4946 + $0x1a7] sm:$0xff]
      %v4974 = vld [vmem:[%s4946 + $0x1af] sm:$0xff]
      %v4975 = vld [vmem:[%s4946 + $0x1c7] sm:$0xff]
      %v4976 = vld [vmem:[%s4946 + $0x1cf] sm:$0xff]
      %v4977 = vld [vmem:[%s4946 + $0x1e7] sm:$0xff]
      %v4978 = vld [vmem:[%s4946 + $0x1ef] sm:$0xff]
      %v4979 = vpack.c.bf16 %v4948, %v4947
      %v4980 = vpack.c.bf16 %v4950, %v4949
      %v4981 = vpack.c.bf16 %v4952, %v4951
      %v4982 = vpack.c.bf16 %v4954, %v4953
      %v4983 = vpack.c.bf16 %v4956, %v4955
      %v4984 = vpack.c.bf16 %v4958, %v4957
      %v4985 = vpack.c.bf16 %v4960, %v4959
      %v4986 = vpack.c.bf16 %v4962, %v4961
      %v4987 = vpack.c.bf16 %v4964, %v4963
      %v4988 = vpack.c.bf16 %v4966, %v4965
      %v4989 = vpack.c.bf16 %v4968, %v4967
      %v4990 = vpack.c.bf16 %v4970, %v4969
      %v4991 = vpack.c.bf16 %v4972, %v4971
      %v4992 = vpack.c.bf16 %v4974, %v4973
      %v4993 = vpack.c.bf16 %v4976, %v4975
      %v4994 = vpack.c.bf16 %v4978, %v4977
      %s4995 = scalar_lea.vmem %s2, 384
      %v4996 = vld [vmem:[%s4995] sm:$0xf]
      %v4997 = vld [vmem:[%s4995 + $0x4] sm:$0xf]
      %v4998 = vld [vmem:[%s4995 + $0x8] sm:$0xf]
      %v4999 = vld [vmem:[%s4995 + $0xc] sm:$0xf]
      %v5000 = vld [vmem:[%s4995 + $0x10] sm:$0xf]
      %v5001 = vld [vmem:[%s4995 + $0x14] sm:$0xf]
      %v5002 = vld [vmem:[%s4995 + $0x18] sm:$0xf]
      %v5003 = vld [vmem:[%s4995 + $0x1c] sm:$0xf]
      %v5004 = vld [vmem:[%s4995 + $0x20] sm:$0xf]
      %v5005 = vld [vmem:[%s4995 + $0x24] sm:$0xf]
      %v5006 = vld [vmem:[%s4995 + $0x28] sm:$0xf]
      %v5007 = vld [vmem:[%s4995 + $0x2c] sm:$0xf]
      %v5008 = vld [vmem:[%s4995 + $0x30] sm:$0xf]
      %v5009 = vld [vmem:[%s4995 + $0x34] sm:$0xf]
      %v5010 = vld [vmem:[%s4995 + $0x38] sm:$0xf]
      %v5011 = vld [vmem:[%s4995 + $0x3c] sm:$0xf]
      %v5028 = vunpack.c.l.b16 %v4996
      %v5029 = vunpack.c.l.b16 %v4997
      %v5030 = vunpack.c.l.b16 %v4998
      %v5031 = vunpack.c.l.b16 %v4999
      %v5032 = vunpack.c.l.b16 %v5000
      %v5033 = vunpack.c.l.b16 %v5001
      %v5034 = vunpack.c.l.b16 %v5002
      %v5035 = vunpack.c.l.b16 %v5003
      %v5036 = vunpack.c.l.b16 %v5004
      %v5037 = vunpack.c.l.b16 %v5005
      %v5038 = vunpack.c.l.b16 %v5006
      %v5039 = vunpack.c.l.b16 %v5007
      %v5040 = vunpack.c.l.b16 %v5008
      %v5041 = vunpack.c.l.b16 %v5009
      %v5042 = vunpack.c.l.b16 %v5010
      %v5043 = vunpack.c.l.b16 %v5011
      %v5044 = vpack.c.b16 %v5029, %v5028
      %v5045 = vpack.c.b16 %v5031, %v5030
      %v5046 = vpack.c.b16 %v5033, %v5032
      %v5047 = vpack.c.b16 %v5035, %v5034
      %v5048 = vpack.c.b16 %v5037, %v5036
      %v5049 = vpack.c.b16 %v5039, %v5038
      %v5050 = vpack.c.b16 %v5041, %v5040
      %v5051 = vpack.c.b16 %v5043, %v5042
      %5060 = vmatprep.subr.bf16.mxu0 0
      %5061 = vmatpush1.bf16.msra.mxu0 %v5044
      %5062 = vmatprep.subr.bf16.mxu0 0
      %5063 = vmatpush1.bf16.msra.mxu0 %v5045
      %5064 = vmatprep.subr.bf16.mxu0 0
      %5065 = vmatpush1.bf16.msra.mxu0 %v5046
      %5066 = vmatprep.subr.bf16.mxu0 0
      %5067 = vmatpush1.bf16.msra.mxu0 %v5047
      %5068 = vmatprep.subr.bf16.mxu0 0
      %5069 = vmatpush1.bf16.msra.mxu0 %v5048
      %5070 = vmatprep.subr.bf16.mxu0 0
      %5071 = vmatpush1.bf16.msra.mxu0 %v5049
      %5072 = vmatprep.subr.bf16.mxu0 0
      %5073 = vmatpush1.bf16.msra.mxu0 %v5050
      %5074 = vmatprep.subr.bf16.mxu0 0
      %5075 = vmatpush1.bf16.msra.mxu0 %v5051
      %5076 = vmatprep.subr.bf16.mxu0 0
      %5077 = vmatpush1.bf16.msra.mxu0 0
      %5078 = vmatprep.subr.bf16.mxu0 0
      %5079 = vmatpush1.bf16.msra.mxu0 0
      %5080 = vmatprep.subr.bf16.mxu0 0
      %5081 = vmatpush1.bf16.msra.mxu0 0
      %5082 = vmatprep.subr.bf16.mxu0 0
      %5083 = vmatpush1.bf16.msra.mxu0 0
      %5084 = vmatprep.subr.bf16.mxu0 0
      %5085 = vmatpush1.bf16.msra.mxu0 0
      %5086 = vmatprep.subr.bf16.mxu0 0
      %5087 = vmatpush1.bf16.msra.mxu0 0
      %5088 = vmatprep.subr.bf16.mxu0 0
      %5089 = vmatpush1.bf16.msra.mxu0 0
      %5090 = vmatprep.subr.bf16.mxu0 0
      %5091 = vmatpush1.bf16.msra.mxu0 0
      %5092 = vmatprep.mubr.bf16.mxu0 0
      %5093 = vmatmul.mubr.bf16.gmra.mrb[0].mxu0 %v4979
      %v5094 = vpop.f32.mrb[0].mxu0
      %v5095 = vadd.f32 0.0, %v5094
      %v5096 = vpop.f32.mrb[0].mxu0
      %v5097 = vpop.f32.mrb[0].mxu0
      %v5098 = vadd.f32 0.0, %v5097
      %v5099 = vpop.f32.mrb[0].mxu0
      %5100 = vmatprep.mubr.bf16.mxu0 0
      %5101 = vmatmul.mubr.bf16.gmra.mrb[0].mxu0 %v4980
      %v5102 = vpop.f32.mrb[0].mxu0
      %v5103 = vadd.f32 0.0, %v5102
      %v5104 = vpop.f32.mrb[0].mxu0
      %v5105 = vpop.f32.mrb[0].mxu0
      %v5106 = vadd.f32 0.0, %v5105
      %v5107 = vpop.f32.mrb[0].mxu0
      %5108 = vmatprep.mubr.bf16.mxu0 0
      %5109 = vmatmul.mubr.bf16.gmra.mrb[0].mxu0 %v4981
      %v5110 = vpop.f32.mrb[0].mxu0
      %v5111 = vadd.f32 0.0, %v5110
      %v5112 = vpop.f32.mrb[0].mxu0
      %v5113 = vpop.f32.mrb[0].mxu0
      %v5114 = vadd.f32 0.0, %v5113
      %v5115 = vpop.f32.mrb[0].mxu0
      %5116 = vmatprep.mubr.bf16.mxu0 0
      %5117 = vmatmul.mubr.bf16.gmra.mrb[0].mxu0 %v4982
      %v5118 = vpop.f32.mrb[0].mxu0
      %v5119 = vadd.f32 0.0, %v5118
      %v5120 = vpop.f32.mrb[0].mxu0
      %v5121 = vpop.f32.mrb[0].mxu0
      %v5122 = vadd.f32 0.0, %v5121
      %v5123 = vpop.f32.mrb[0].mxu0
      %5124 = vmatprep.mubr.bf16.mxu0 0
      %5125 = vmatmul.mubr.bf16.gmra.mrb[0].mxu0 %v4983
      %v5126 = vpop.f32.mrb[0].mxu0
      %v5127 = vadd.f32 0.0, %v5126
      %v5128 = vpop.f32.mrb[0].mxu0
      %v5129 = vpop.f32.mrb[0].mxu0
      %v5130 = vadd.f32 0.0, %v5129
      %v5131 = vpop.f32.mrb[0].mxu0
      %5132 = vmatprep.mubr.bf16.mxu0 0
      %5133 = vmatmul.mubr.bf16.gmra.mrb[0].mxu0 %v4984
      %v5134 = vpop.f32.mrb[0].mxu0
      %v5135 = vadd.f32 0.0, %v5134
      %v5136 = vpop.f32.mrb[0].mxu0
      %v5137 = vpop.f32.mrb[0].mxu0
      %v5138 = vadd.f32 0.0, %v5137
      %v5139 = vpop.f32.mrb[0].mxu0
      %5140 = vmatprep.mubr.bf16.mxu0 0
      %5141 = vmatmul.mubr.bf16.gmra.mrb[0].mxu0 %v4985
      %v5142 = vpop.f32.mrb[0].mxu0
      %v5143 = vadd.f32 0.0, %v5142
      %v5144 = vpop.f32.mrb[0].mxu0
      %v5145 = vpop.f32.mrb[0].mxu0
      %v5146 = vadd.f32 0.0, %v5145
      %v5147 = vpop.f32.mrb[0].mxu0
      %5148 = vmatprep.mubr.bf16.mxu0 0
      %5149 = vmatmul.mubr.bf16.gmra.mrb[0].mxu0 %v4986
      %v5150 = vpop.f32.mrb[0].mxu0
      %v5151 = vadd.f32 0.0, %v5150
      %v5152 = vpop.f32.mrb[0].mxu0
      %v5153 = vpop.f32.mrb[0].mxu0
      %v5154 = vadd.f32 0.0, %v5153
      %v5155 = vpop.f32.mrb[0].mxu0
      %5156 = vmatprep.mubr.bf16.mxu0 0
      %5157 = vmatmul.mubr.bf16.gmra.mrb[0].mxu0 %v4987
      %v5158 = vpop.f32.mrb[0].mxu0
      %v5159 = vadd.f32 0.0, %v5158
      %v5160 = vpop.f32.mrb[0].mxu0
      %v5161 = vpop.f32.mrb[0].mxu0
      %v5162 = vadd.f32 0.0, %v5161
      %v5163 = vpop.f32.mrb[0].mxu0
      %5164 = vmatprep.mubr.bf16.mxu0 0
      %5165 = vmatmul.mubr.bf16.gmra.mrb[0].mxu0 %v4988
      %v5166 = vpop.f32.mrb[0].mxu0
      %v5167 = vadd.f32 0.0, %v5166
      %v5168 = vpop.f32.mrb[0].mxu0
      %v5169 = vpop.f32.mrb[0].mxu0
      %v5170 = vadd.f32 0.0, %v5169
      %v5171 = vpop.f32.mrb[0].mxu0
      %5172 = vmatprep.mubr.bf16.mxu0 0
      %5173 = vmatmul.mubr.bf16.gmra.mrb[0].mxu0 %v4989
      %v5174 = vpop.f32.mrb[0].mxu0
      %v5175 = vadd.f32 0.0, %v5174
      %v5176 = vpop.f32.mrb[0].mxu0
      %v5177 = vpop.f32.mrb[0].mxu0
      %v5178 = vadd.f32 0.0, %v5177
      %v5179 = vpop.f32.mrb[0].mxu0
      %5180 = vmatprep.mubr.bf16.mxu0 0
      %5181 = vmatmul.mubr.bf16.gmra.mrb[0].mxu0 %v4990
      %v5182 = vpop.f32.mrb[0].mxu0
      %v5183 = vadd.f32 0.0, %v5182
      %v5184 = vpop.f32.mrb[0].mxu0
      %v5185 = vpop.f32.mrb[0].mxu0
      %v5186 = vadd.f32 0.0, %v5185
      %v5187 = vpop.f32.mrb[0].mxu0
      %5188 = vmatprep.mubr.bf16.mxu0 0
      %5189 = vmatmul.mubr.bf16.gmra.mrb[0].mxu0 %v4991
      %v5190 = vpop.f32.mrb[0].mxu0
      %v5191 = vadd.f32 0.0, %v5190
      %v5192 = vpop.f32.mrb[0].mxu0
      %v5193 = vpop.f32.mrb[0].mxu0
      %v5194 = vadd.f32 0.0, %v5193
      %v5195 = vpop.f32.mrb[0].mxu0
      %5196 = vmatprep.mubr.bf16.mxu0 0
      %5197 = vmatmul.mubr.bf16.gmra.mrb[0].mxu0 %v4992
      %v5198 = vpop.f32.mrb[0].mxu0
      %v5199 = vadd.f32 0.0, %v5198
      %v5200 = vpop.f32.mrb[0].mxu0
      %v5201 = vpop.f32.mrb[0].mxu0
      %v5202 = vadd.f32 0.0, %v5201
      %v5203 = vpop.f32.mrb[0].mxu0
      %5204 = vmatprep.mubr.bf16.mxu0 0
      %5205 = vmatmul.mubr.bf16.gmra.mrb[0].mxu0 %v4993
      %v5206 = vpop.f32.mrb[0].mxu0
      %v5207 = vadd.f32 0.0, %v5206
      %v5208 = vpop.f32.mrb[0].mxu0
      %v5209 = vpop.f32.mrb[0].mxu0
      %v5210 = vadd.f32 0.0, %v5209
      %v5211 = vpop.f32.mrb[0].mxu0
      %5212 = vmatprep.mubr.bf16.mxu0 0
      %5213 = vmatmul.mubr.bf16.gmra.mrb[0].mxu0 %v4994
      %v5214 = vpop.f32.mrb[0].mxu0
      %v5215 = vadd.f32 0.0, %v5214
      %v5216 = vpop.f32.mrb[0].mxu0
      %v5217 = vpop.f32.mrb[0].mxu0
      %v5218 = vadd.f32 0.0, %v5217
      %v5219 = vpop.f32.mrb[0].mxu0
      %5220 = vdwg.mxu0
      %v5221 = vadd.f32 %v4914, %v5095
      %v5222 = vadd.f32 %v4915, %v5098
      %v5223 = vadd.f32 %v4916, %v5103
      %v5224 = vadd.f32 %v4917, %v5106
      %v5225 = vadd.f32 %v4918, %v5111
      %v5226 = vadd.f32 %v4919, %v5114
      %v5227 = vadd.f32 %v4920, %v5119
      %v5228 = vadd.f32 %v4921, %v5122
      %v5229 = vadd.f32 %v4922, %v5127
      %v5230 = vadd.f32 %v4923, %v5130
      %v5231 = vadd.f32 %v4924, %v5135
      %v5232 = vadd.f32 %v4925, %v5138
      %v5233 = vadd.f32 %v4926, %v5143
      %v5234 = vadd.f32 %v4927, %v5146
      %v5235 = vadd.f32 %v4928, %v5151
      %v5236 = vadd.f32 %v4929, %v5154
      %v5237 = vadd.f32 %v4930, %v5159
      %v5238 = vadd.f32 %v4931, %v5162
      %v5239 = vadd.f32 %v4932, %v5167
      %v5240 = vadd.f32 %v4933, %v5170
      %v5241 = vadd.f32 %v4934, %v5175
      %v5242 = vadd.f32 %v4935, %v5178
      %v5243 = vadd.f32 %v4936, %v5183
      %v5244 = vadd.f32 %v4937, %v5186
      %v5245 = vadd.f32 %v4938, %v5191
      %v5246 = vadd.f32 %v4939, %v5194
      %v5247 = vadd.f32 %v4940, %v5199
      %v5248 = vadd.f32 %v4941, %v5202
      %v5249 = vadd.f32 %v4942, %v5207
      %v5250 = vadd.f32 %v4943, %v5210
      %v5251 = vadd.f32 %v4944, %v5215
      %v5252 = vadd.f32 %v4945, %v5218
      %v5253 = vld [vmem:[%s4946 + $0x8] sm:$0xff]
      %v5254 = vld [vmem:[%s4946 + $0x10] sm:$0xff]
      %v5255 = vld [vmem:[%s4946 + $0x28] sm:$0xff]
      %v5256 = vld [vmem:[%s4946 + $0x30] sm:$0xff]
      %v5257 = vld [vmem:[%s4946 + $0x48] sm:$0xff]
      %v5258 = vld [vmem:[%s4946 + $0x50] sm:$0xff]
      %v5259 = vld [vmem:[%s4946 + $0x68] sm:$0xff]
      %v5260 = vld [vmem:[%s4946 + $0x70] sm:$0xff]
      %v5261 = vld [vmem:[%s4946 + $0x88] sm:$0xff]
      %v5262 = vld [vmem:[%s4946 + $0x90] sm:$0xff]
      %v5263 = vld [vmem:[%s4946 + $0xa8] sm:$0xff]
      %v5264 = vld [vmem:[%s4946 + $0xb0] sm:$0xff]
      %v5265 = vld [vmem:[%s4946 + $0xc8] sm:$0xff]
      %v5266 = vld [vmem:[%s4946 + $0xd0] sm:$0xff]
      %v5267 = vld [vmem:[%s4946 + $0xe8] sm:$0xff]
      %v5268 = vld [vmem:[%s4946 + $0xf0] sm:$0xff]
      %v5269 = vld [vmem:[%s4946 + $0x108] sm:$0xff]
      %v5270 = vld [vmem:[%s4946 + $0x110] sm:$0xff]
      %v5271 = vld [vmem:[%s4946 + $0x128] sm:$0xff]
      %v5272 = vld [vmem:[%s4946 + $0x130] sm:$0xff]
      %v5273 = vld [vmem:[%s4946 + $0x148] sm:$0xff]
      %v5274 = vld [vmem:[%s4946 + $0x150] sm:$0xff]
      %v5275 = vld [vmem:[%s4946 + $0x168] sm:$0xff]
      %v5276 = vld [vmem:[%s4946 + $0x170] sm:$0xff]
      %v5277 = vld [vmem:[%s4946 + $0x188] sm:$0xff]
      %v5278 = vld [vmem:[%s4946 + $0x190] sm:$0xff]
      %v5279 = vld [vmem:[%s4946 + $0x1a8] sm:$0xff]
      %v5280 = vld [vmem:[%s4946 + $0x1b0] sm:$0xff]
      %v5281 = vld [vmem:[%s4946 + $0x1c8] sm:$0xff]
      %v5282 = vld [vmem:[%s4946 + $0x1d0] sm:$0xff]
      %v5283 = vld [vmem:[%s4946 + $0x1e8] sm:$0xff]
      %v5284 = vld [vmem:[%s4946 + $0x1f0] sm:$0xff]
      %v5285 = vpack.c.bf16 %v5254, %v5253
      %v5286 = vpack.c.bf16 %v5256, %v5255
      %v5287 = vpack.c.bf16 %v5258, %v5257
      %v5288 = vpack.c.bf16 %v5260, %v5259
      %v5289 = vpack.c.bf16 %v5262, %v5261
      %v5290 = vpack.c.bf16 %v5264, %v5263
      %v5291 = vpack.c.bf16 %v5266, %v5265
      %v5292 = vpack.c.bf16 %v5268, %v5267
      %v5293 = vpack.c.bf16 %v5270, %v5269
      %v5294 = vpack.c.bf16 %v5272, %v5271
      %v5295 = vpack.c.bf16 %v5274, %v5273
      %v5296 = vpack.c.bf16 %v5276, %v5275
      %v5297 = vpack.c.bf16 %v5278, %v5277
      %v5298 = vpack.c.bf16 %v5280, %v5279
      %v5299 = vpack.c.bf16 %v5282, %v5281
      %v5300 = vpack.c.bf16 %v5284, %v5283
      %s5301 = scalar_lea.vmem %s2, 448
      %v5302 = vld [vmem:[%s5301] sm:$0xf]
      %v5303 = vld [vmem:[%s5301 + $0x4] sm:$0xf]
      %v5304 = vld [vmem:[%s5301 + $0x8] sm:$0xf]
      %v5305 = vld [vmem:[%s5301 + $0xc] sm:$0xf]
      %v5306 = vld [vmem:[%s5301 + $0x10] sm:$0xf]
      %v5307 = vld [vmem:[%s5301 + $0x14] sm:$0xf]
      %v5308 = vld [vmem:[%s5301 + $0x18] sm:$0xf]
      %v5309 = vld [vmem:[%s5301 + $0x1c] sm:$0xf]
      %v5310 = vld [vmem:[%s5301 + $0x20] sm:$0xf]
      %v5311 = vld [vmem:[%s5301 + $0x24] sm:$0xf]
      %v5312 = vld [vmem:[%s5301 + $0x28] sm:$0xf]
      %v5313 = vld [vmem:[%s5301 + $0x2c] sm:$0xf]
      %v5314 = vld [vmem:[%s5301 + $0x30] sm:$0xf]
      %v5315 = vld [vmem:[%s5301 + $0x34] sm:$0xf]
      %v5316 = vld [vmem:[%s5301 + $0x38] sm:$0xf]
      %v5317 = vld [vmem:[%s5301 + $0x3c] sm:$0xf]
      %v5334 = vunpack.c.l.b16 %v5302
      %v5335 = vunpack.c.l.b16 %v5303
      %v5336 = vunpack.c.l.b16 %v5304
      %v5337 = vunpack.c.l.b16 %v5305
      %v5338 = vunpack.c.l.b16 %v5306
      %v5339 = vunpack.c.l.b16 %v5307
      %v5340 = vunpack.c.l.b16 %v5308
      %v5341 = vunpack.c.l.b16 %v5309
      %v5342 = vunpack.c.l.b16 %v5310
      %v5343 = vunpack.c.l.b16 %v5311
      %v5344 = vunpack.c.l.b16 %v5312
      %v5345 = vunpack.c.l.b16 %v5313
      %v5346 = vunpack.c.l.b16 %v5314
      %v5347 = vunpack.c.l.b16 %v5315
      %v5348 = vunpack.c.l.b16 %v5316
      %v5349 = vunpack.c.l.b16 %v5317
      %v5350 = vpack.c.b16 %v5335, %v5334
      %v5351 = vpack.c.b16 %v5337, %v5336
      %v5352 = vpack.c.b16 %v5339, %v5338
      %v5353 = vpack.c.b16 %v5341, %v5340
      %v5354 = vpack.c.b16 %v5343, %v5342
      %v5355 = vpack.c.b16 %v5345, %v5344
      %v5356 = vpack.c.b16 %v5347, %v5346
      %v5357 = vpack.c.b16 %v5349, %v5348
      %5366 = vmatprep.subr.bf16.mxu0 0
      %5367 = vmatpush1.bf16.msra.mxu0 %v5350
      %5368 = vmatprep.subr.bf16.mxu0 0
      %5369 = vmatpush1.bf16.msra.mxu0 %v5351
      %5370 = vmatprep.subr.bf16.mxu0 0
      %5371 = vmatpush1.bf16.msra.mxu0 %v5352
      %5372 = vmatprep.subr.bf16.mxu0 0
      %5373 = vmatpush1.bf16.msra.mxu0 %v5353
      %5374 = vmatprep.subr.bf16.mxu0 0
      %5375 = vmatpush1.bf16.msra.mxu0 %v5354
      %5376 = vmatprep.subr.bf16.mxu0 0
      %5377 = vmatpush1.bf16.msra.mxu0 %v5355
      %5378 = vmatprep.subr.bf16.mxu0 0
      %5379 = vmatpush1.bf16.msra.mxu0 %v5356
      %5380 = vmatprep.subr.bf16.mxu0 0
      %5381 = vmatpush1.bf16.msra.mxu0 %v5357
      %5382 = vmatprep.subr.bf16.mxu0 0
      %5383 = vmatpush1.bf16.msra.mxu0 0
      %5384 = vmatprep.subr.bf16.mxu0 0
      %5385 = vmatpush1.bf16.msra.mxu0 0
      %5386 = vmatprep.subr.bf16.mxu0 0
      %5387 = vmatpush1.bf16.msra.mxu0 0
      %5388 = vmatprep.subr.bf16.mxu0 0
      %5389 = vmatpush1.bf16.msra.mxu0 0
      %5390 = vmatprep.subr.bf16.mxu0 0
      %5391 = vmatpush1.bf16.msra.mxu0 0
      %5392 = vmatprep.subr.bf16.mxu0 0
      %5393 = vmatpush1.bf16.msra.mxu0 0
      %5394 = vmatprep.subr.bf16.mxu0 0
      %5395 = vmatpush1.bf16.msra.mxu0 0
      %5396 = vmatprep.subr.bf16.mxu0 0
      %5397 = vmatpush1.bf16.msra.mxu0 0
      %5398 = vmatprep.mubr.bf16.mxu0 0
      %5399 = vmatmul.mubr.bf16.gmra.mrb[0].mxu0 %v5285
      %v5400 = vpop.f32.mrb[0].mxu0
      %v5401 = vadd.f32 0.0, %v5400
      %v5402 = vpop.f32.mrb[0].mxu0
      %v5403 = vpop.f32.mrb[0].mxu0
      %v5404 = vadd.f32 0.0, %v5403
      %v5405 = vpop.f32.mrb[0].mxu0
      %5406 = vmatprep.mubr.bf16.mxu0 0
      %5407 = vmatmul.mubr.bf16.gmra.mrb[0].mxu0 %v5286
      %v5408 = vpop.f32.mrb[0].mxu0
      %v5409 = vadd.f32 0.0, %v5408
      %v5410 = vpop.f32.mrb[0].mxu0
      %v5411 = vpop.f32.mrb[0].mxu0
      %v5412 = vadd.f32 0.0, %v5411
      %v5413 = vpop.f32.mrb[0].mxu0
      %5414 = vmatprep.mubr.bf16.mxu0 0
      %5415 = vmatmul.mubr.bf16.gmra.mrb[0].mxu0 %v5287
      %v5416 = vpop.f32.mrb[0].mxu0
      %v5417 = vadd.f32 0.0, %v5416
      %v5418 = vpop.f32.mrb[0].mxu0
      %v5419 = vpop.f32.mrb[0].mxu0
      %v5420 = vadd.f32 0.0, %v5419
      %v5421 = vpop.f32.mrb[0].mxu0
      %5422 = vmatprep.mubr.bf16.mxu0 0
      %5423 = vmatmul.mubr.bf16.gmra.mrb[0].mxu0 %v5288
      %v5424 = vpop.f32.mrb[0].mxu0
      %v5425 = vadd.f32 0.0, %v5424
      %v5426 = vpop.f32.mrb[0].mxu0
      %v5427 = vpop.f32.mrb[0].mxu0
      %v5428 = vadd.f32 0.0, %v5427
      %v5429 = vpop.f32.mrb[0].mxu0
      %5430 = vmatprep.mubr.bf16.mxu0 0
      %5431 = vmatmul.mubr.bf16.gmra.mrb[0].mxu0 %v5289
      %v5432 = vpop.f32.mrb[0].mxu0
      %v5433 = vadd.f32 0.0, %v5432
      %v5434 = vpop.f32.mrb[0].mxu0
      %v5435 = vpop.f32.mrb[0].mxu0
      %v5436 = vadd.f32 0.0, %v5435
      %v5437 = vpop.f32.mrb[0].mxu0
      %5438 = vmatprep.mubr.bf16.mxu0 0
      %5439 = vmatmul.mubr.bf16.gmra.mrb[0].mxu0 %v5290
      %v5440 = vpop.f32.mrb[0].mxu0
      %v5441 = vadd.f32 0.0, %v5440
      %v5442 = vpop.f32.mrb[0].mxu0
      %v5443 = vpop.f32.mrb[0].mxu0
      %v5444 = vadd.f32 0.0, %v5443
      %v5445 = vpop.f32.mrb[0].mxu0
      %5446 = vmatprep.mubr.bf16.mxu0 0
      %5447 = vmatmul.mubr.bf16.gmra.mrb[0].mxu0 %v5291
      %v5448 = vpop.f32.mrb[0].mxu0
      %v5449 = vadd.f32 0.0, %v5448
      %v5450 = vpop.f32.mrb[0].mxu0
      %v5451 = vpop.f32.mrb[0].mxu0
      %v5452 = vadd.f32 0.0, %v5451
      %v5453 = vpop.f32.mrb[0].mxu0
      %5454 = vmatprep.mubr.bf16.mxu0 0
      %5455 = vmatmul.mubr.bf16.gmra.mrb[0].mxu0 %v5292
      %v5456 = vpop.f32.mrb[0].mxu0
      %v5457 = vadd.f32 0.0, %v5456
      %v5458 = vpop.f32.mrb[0].mxu0
      %v5459 = vpop.f32.mrb[0].mxu0
      %v5460 = vadd.f32 0.0, %v5459
      %v5461 = vpop.f32.mrb[0].mxu0
      %5462 = vmatprep.mubr.bf16.mxu0 0
      %5463 = vmatmul.mubr.bf16.gmra.mrb[0].mxu0 %v5293
      %v5464 = vpop.f32.mrb[0].mxu0
      %v5465 = vadd.f32 0.0, %v5464
      %v5466 = vpop.f32.mrb[0].mxu0
      %v5467 = vpop.f32.mrb[0].mxu0
      %v5468 = vadd.f32 0.0, %v5467
      %v5469 = vpop.f32.mrb[0].mxu0
      %5470 = vmatprep.mubr.bf16.mxu0 0
      %5471 = vmatmul.mubr.bf16.gmra.mrb[0].mxu0 %v5294
      %v5472 = vpop.f32.mrb[0].mxu0
      %v5473 = vadd.f32 0.0, %v5472
      %v5474 = vpop.f32.mrb[0].mxu0
      %v5475 = vpop.f32.mrb[0].mxu0
      %v5476 = vadd.f32 0.0, %v5475
      %v5477 = vpop.f32.mrb[0].mxu0
      %5478 = vmatprep.mubr.bf16.mxu0 0
      %5479 = vmatmul.mubr.bf16.gmra.mrb[0].mxu0 %v5295
      %v5480 = vpop.f32.mrb[0].mxu0
      %v5481 = vadd.f32 0.0, %v5480
      %v5482 = vpop.f32.mrb[0].mxu0
      %v5483 = vpop.f32.mrb[0].mxu0
      %v5484 = vadd.f32 0.0, %v5483
      %v5485 = vpop.f32.mrb[0].mxu0
      %5486 = vmatprep.mubr.bf16.mxu0 0
      %5487 = vmatmul.mubr.bf16.gmra.mrb[0].mxu0 %v5296
      %v5488 = vpop.f32.mrb[0].mxu0
      %v5489 = vadd.f32 0.0, %v5488
      %v5490 = vpop.f32.mrb[0].mxu0
      %v5491 = vpop.f32.mrb[0].mxu0
      %v5492 = vadd.f32 0.0, %v5491
      %v5493 = vpop.f32.mrb[0].mxu0
      %5494 = vmatprep.mubr.bf16.mxu0 0
      %5495 = vmatmul.mubr.bf16.gmra.mrb[0].mxu0 %v5297
      %v5496 = vpop.f32.mrb[0].mxu0
      %v5497 = vadd.f32 0.0, %v5496
      %v5498 = vpop.f32.mrb[0].mxu0
      %v5499 = vpop.f32.mrb[0].mxu0
      %v5500 = vadd.f32 0.0, %v5499
      %v5501 = vpop.f32.mrb[0].mxu0
      %5502 = vmatprep.mubr.bf16.mxu0 0
      %5503 = vmatmul.mubr.bf16.gmra.mrb[0].mxu0 %v5298
      %v5504 = vpop.f32.mrb[0].mxu0
      %v5505 = vadd.f32 0.0, %v5504
      %v5506 = vpop.f32.mrb[0].mxu0
      %v5507 = vpop.f32.mrb[0].mxu0
      %v5508 = vadd.f32 0.0, %v5507
      %v5509 = vpop.f32.mrb[0].mxu0
      %5510 = vmatprep.mubr.bf16.mxu0 0
      %5511 = vmatmul.mubr.bf16.gmra.mrb[0].mxu0 %v5299
      %v5512 = vpop.f32.mrb[0].mxu0
      %v5513 = vadd.f32 0.0, %v5512
      %v5514 = vpop.f32.mrb[0].mxu0
      %v5515 = vpop.f32.mrb[0].mxu0
      %v5516 = vadd.f32 0.0, %v5515
      %v5517 = vpop.f32.mrb[0].mxu0
      %5518 = vmatprep.mubr.bf16.mxu0 0
      %5519 = vmatmul.mubr.bf16.gmra.mrb[0].mxu0 %v5300
      %v5520 = vpop.f32.mrb[0].mxu0
      %v5521 = vadd.f32 0.0, %v5520
      %v5522 = vpop.f32.mrb[0].mxu0
      %v5523 = vpop.f32.mrb[0].mxu0
      %v5524 = vadd.f32 0.0, %v5523
      %v5525 = vpop.f32.mrb[0].mxu0
      %5526 = vdwg.mxu0
      %v5527 = vadd.f32 %v5221, %v5401
      %v5528 = vadd.f32 %v5222, %v5404
      %v5529 = vadd.f32 %v5223, %v5409
      %v5530 = vadd.f32 %v5224, %v5412
      %v5531 = vadd.f32 %v5225, %v5417
      %v5532 = vadd.f32 %v5226, %v5420
      %v5533 = vadd.f32 %v5227, %v5425
      %v5534 = vadd.f32 %v5228, %v5428
      %v5535 = vadd.f32 %v5229, %v5433
      %v5536 = vadd.f32 %v5230, %v5436
      %v5537 = vadd.f32 %v5231, %v5441
      %v5538 = vadd.f32 %v5232, %v5444
      %v5539 = vadd.f32 %v5233, %v5449
      %v5540 = vadd.f32 %v5234, %v5452
      %v5541 = vadd.f32 %v5235, %v5457
      %v5542 = vadd.f32 %v5236, %v5460
      %v5543 = vadd.f32 %v5237, %v5465
      %v5544 = vadd.f32 %v5238, %v5468
      %v5545 = vadd.f32 %v5239, %v5473
      %v5546 = vadd.f32 %v5240, %v5476
      %v5547 = vadd.f32 %v5241, %v5481
      %v5548 = vadd.f32 %v5242, %v5484
      %v5549 = vadd.f32 %v5243, %v5489
      %v5550 = vadd.f32 %v5244, %v5492
      %v5551 = vadd.f32 %v5245, %v5497
      %v5552 = vadd.f32 %v5246, %v5500
      %v5553 = vadd.f32 %v5247, %v5505
      %v5554 = vadd.f32 %v5248, %v5508
      %v5555 = vadd.f32 %v5249, %v5513
      %v5556 = vadd.f32 %v5250, %v5516
      %v5557 = vadd.f32 %v5251, %v5521
      %v5558 = vadd.f32 %v5252, %v5524
      %v5559 = vld [vmem:[%s4946 + $0x9] sm:$0xff]
      %v5560 = vld [vmem:[%s4946 + $0x11] sm:$0xff]
      %v5561 = vld [vmem:[%s4946 + $0x29] sm:$0xff]
      %v5562 = vld [vmem:[%s4946 + $0x31] sm:$0xff]
      %v5563 = vld [vmem:[%s4946 + $0x49] sm:$0xff]
      %v5564 = vld [vmem:[%s4946 + $0x51] sm:$0xff]
      %v5565 = vld [vmem:[%s4946 + $0x69] sm:$0xff]
      %v5566 = vld [vmem:[%s4946 + $0x71] sm:$0xff]
      %v5567 = vld [vmem:[%s4946 + $0x89] sm:$0xff]
      %v5568 = vld [vmem:[%s4946 + $0x91] sm:$0xff]
      %v5569 = vld [vmem:[%s4946 + $0xa9] sm:$0xff]
      %v5570 = vld [vmem:[%s4946 + $0xb1] sm:$0xff]
      %v5571 = vld [vmem:[%s4946 + $0xc9] sm:$0xff]
      %v5572 = vld [vmem:[%s4946 + $0xd1] sm:$0xff]
      %v5573 = vld [vmem:[%s4946 + $0xe9] sm:$0xff]
      %v5574 = vld [vmem:[%s4946 + $0xf1] sm:$0xff]
      %v5575 = vld [vmem:[%s4946 + $0x109] sm:$0xff]
      %v5576 = vld [vmem:[%s4946 + $0x111] sm:$0xff]
      %v5577 = vld [vmem:[%s4946 + $0x129] sm:$0xff]
      %v5578 = vld [vmem:[%s4946 + $0x131] sm:$0xff]
      %v5579 = vld [vmem:[%s4946 + $0x149] sm:$0xff]
      %v5580 = vld [vmem:[%s4946 + $0x151] sm:$0xff]
      %v5581 = vld [vmem:[%s4946 + $0x169] sm:$0xff]
      %v5582 = vld [vmem:[%s4946 + $0x171] sm:$0xff]
      %v5583 = vld [vmem:[%s4946 + $0x189] sm:$0xff]
      %v5584 = vld [vmem:[%s4946 + $0x191] sm:$0xff]
      %v5585 = vld [vmem:[%s4946 + $0x1a9] sm:$0xff]
      %v5586 = vld [vmem:[%s4946 + $0x1b1] sm:$0xff]
      %v5587 = vld [vmem:[%s4946 + $0x1c9] sm:$0xff]
      %v5588 = vld [vmem:[%s4946 + $0x1d1] sm:$0xff]
      %v5589 = vld [vmem:[%s4946 + $0x1e9] sm:$0xff]
      %v5590 = vld [vmem:[%s4946 + $0x1f1] sm:$0xff]
      %v5591 = vpack.c.bf16 %v5560, %v5559
      %v5592 = vpack.c.bf16 %v5562, %v5561
      %v5593 = vpack.c.bf16 %v5564, %v5563
      %v5594 = vpack.c.bf16 %v5566, %v5565
      %v5595 = vpack.c.bf16 %v5568, %v5567
      %v5596 = vpack.c.bf16 %v5570, %v5569
      %v5597 = vpack.c.bf16 %v5572, %v5571
      %v5598 = vpack.c.bf16 %v5574, %v5573
      %v5599 = vpack.c.bf16 %v5576, %v5575
      %v5600 = vpack.c.bf16 %v5578, %v5577
      %v5601 = vpack.c.bf16 %v5580, %v5579
      %v5602 = vpack.c.bf16 %v5582, %v5581
      %v5603 = vpack.c.bf16 %v5584, %v5583
      %v5604 = vpack.c.bf16 %v5586, %v5585
      %v5605 = vpack.c.bf16 %v5588, %v5587
      %v5606 = vpack.c.bf16 %v5590, %v5589
      %s5607 = scalar_lea.vmem %s2, 512
      %v5608 = vld [vmem:[%s5607] sm:$0xf]
      %v5609 = vld [vmem:[%s5607 + $0x4] sm:$0xf]
      %v5610 = vld [vmem:[%s5607 + $0x8] sm:$0xf]
      %v5611 = vld [vmem:[%s5607 + $0xc] sm:$0xf]
      %v5612 = vld [vmem:[%s5607 + $0x10] sm:$0xf]
      %v5613 = vld [vmem:[%s5607 + $0x14] sm:$0xf]
      %v5614 = vld [vmem:[%s5607 + $0x18] sm:$0xf]
      %v5615 = vld [vmem:[%s5607 + $0x1c] sm:$0xf]
      %v5616 = vld [vmem:[%s5607 + $0x20] sm:$0xf]
      %v5617 = vld [vmem:[%s5607 + $0x24] sm:$0xf]
      %v5618 = vld [vmem:[%s5607 + $0x28] sm:$0xf]
      %v5619 = vld [vmem:[%s5607 + $0x2c] sm:$0xf]
      %v5620 = vld [vmem:[%s5607 + $0x30] sm:$0xf]
      %v5621 = vld [vmem:[%s5607 + $0x34] sm:$0xf]
      %v5622 = vld [vmem:[%s5607 + $0x38] sm:$0xf]
      %v5623 = vld [vmem:[%s5607 + $0x3c] sm:$0xf]
      %v5640 = vunpack.c.l.b16 %v5608
      %v5641 = vunpack.c.l.b16 %v5609
      %v5642 = vunpack.c.l.b16 %v5610
      %v5643 = vunpack.c.l.b16 %v5611
      %v5644 = vunpack.c.l.b16 %v5612
      %v5645 = vunpack.c.l.b16 %v5613
      %v5646 = vunpack.c.l.b16 %v5614
      %v5647 = vunpack.c.l.b16 %v5615
      %v5648 = vunpack.c.l.b16 %v5616
      %v5649 = vunpack.c.l.b16 %v5617
      %v5650 = vunpack.c.l.b16 %v5618
      %v5651 = vunpack.c.l.b16 %v5619
      %v5652 = vunpack.c.l.b16 %v5620
      %v5653 = vunpack.c.l.b16 %v5621
      %v5654 = vunpack.c.l.b16 %v5622
      %v5655 = vunpack.c.l.b16 %v5623
      %v5656 = vpack.c.b16 %v5641, %v5640
      %v5657 = vpack.c.b16 %v5643, %v5642
      %v5658 = vpack.c.b16 %v5645, %v5644
      %v5659 = vpack.c.b16 %v5647, %v5646
      %v5660 = vpack.c.b16 %v5649, %v5648
      %v5661 = vpack.c.b16 %v5651, %v5650
      %v5662 = vpack.c.b16 %v5653, %v5652
      %v5663 = vpack.c.b16 %v5655, %v5654
      %5672 = vmatprep.subr.bf16.mxu0 0
      %5673 = vmatpush1.bf16.msra.mxu0 %v5656
      %5674 = vmatprep.subr.bf16.mxu0 0
      %5675 = vmatpush1.bf16.msra.mxu0 %v5657
      %5676 = vmatprep.subr.bf16.mxu0 0
      %5677 = vmatpush1.bf16.msra.mxu0 %v5658
      %5678 = vmatprep.subr.bf16.mxu0 0
      %5679 = vmatpush1.bf16.msra.mxu0 %v5659
      %5680 = vmatprep.subr.bf16.mxu0 0
      %5681 = vmatpush1.bf16.msra.mxu0 %v5660
      %5682 = vmatprep.subr.bf16.mxu0 0
      %5683 = vmatpush1.bf16.msra.mxu0 %v5661
      %5684 = vmatprep.subr.bf16.mxu0 0
      %5685 = vmatpush1.bf16.msra.mxu0 %v5662
      %5686 = vmatprep.subr.bf16.mxu0 0
      %5687 = vmatpush1.bf16.msra.mxu0 %v5663
      %5688 = vmatprep.subr.bf16.mxu0 0
      %5689 = vmatpush1.bf16.msra.mxu0 0
      %5690 = vmatprep.subr.bf16.mxu0 0
      %5691 = vmatpush1.bf16.msra.mxu0 0
      %5692 = vmatprep.subr.bf16.mxu0 0
      %5693 = vmatpush1.bf16.msra.mxu0 0
      %5694 = vmatprep.subr.bf16.mxu0 0
      %5695 = vmatpush1.bf16.msra.mxu0 0
      %5696 = vmatprep.subr.bf16.mxu0 0
      %5697 = vmatpush1.bf16.msra.mxu0 0
      %5698 = vmatprep.subr.bf16.mxu0 0
      %5699 = vmatpush1.bf16.msra.mxu0 0
      %5700 = vmatprep.subr.bf16.mxu0 0
      %5701 = vmatpush1.bf16.msra.mxu0 0
      %5702 = vmatprep.subr.bf16.mxu0 0
      %5703 = vmatpush1.bf16.msra.mxu0 0
      %5704 = vmatprep.mubr.bf16.mxu0 0
      %5705 = vmatmul.mubr.bf16.gmra.mrb[0].mxu0 %v5591
      %v5706 = vpop.f32.mrb[0].mxu0
      %v5707 = vadd.f32 0.0, %v5706
      %v5708 = vpop.f32.mrb[0].mxu0
      %v5709 = vpop.f32.mrb[0].mxu0
      %v5710 = vadd.f32 0.0, %v5709
      %v5711 = vpop.f32.mrb[0].mxu0
      %5712 = vmatprep.mubr.bf16.mxu0 0
      %5713 = vmatmul.mubr.bf16.gmra.mrb[0].mxu0 %v5592
      %v5714 = vpop.f32.mrb[0].mxu0
      %v5715 = vadd.f32 0.0, %v5714
      %v5716 = vpop.f32.mrb[0].mxu0
      %v5717 = vpop.f32.mrb[0].mxu0
      %v5718 = vadd.f32 0.0, %v5717
      %v5719 = vpop.f32.mrb[0].mxu0
      %5720 = vmatprep.mubr.bf16.mxu0 0
      %5721 = vmatmul.mubr.bf16.gmra.mrb[0].mxu0 %v5593
      %v5722 = vpop.f32.mrb[0].mxu0
      %v5723 = vadd.f32 0.0, %v5722
      %v5724 = vpop.f32.mrb[0].mxu0
      %v5725 = vpop.f32.mrb[0].mxu0
      %v5726 = vadd.f32 0.0, %v5725
      %v5727 = vpop.f32.mrb[0].mxu0
      %5728 = vmatprep.mubr.bf16.mxu0 0
      %5729 = vmatmul.mubr.bf16.gmra.mrb[0].mxu0 %v5594
      %v5730 = vpop.f32.mrb[0].mxu0
      %v5731 = vadd.f32 0.0, %v5730
      %v5732 = vpop.f32.mrb[0].mxu0
      %v5733 = vpop.f32.mrb[0].mxu0
      %v5734 = vadd.f32 0.0, %v5733
      %v5735 = vpop.f32.mrb[0].mxu0
      %5736 = vmatprep.mubr.bf16.mxu0 0
      %5737 = vmatmul.mubr.bf16.gmra.mrb[0].mxu0 %v5595
      %v5738 = vpop.f32.mrb[0].mxu0
      %v5739 = vadd.f32 0.0, %v5738
      %v5740 = vpop.f32.mrb[0].mxu0
      %v5741 = vpop.f32.mrb[0].mxu0
      %v5742 = vadd.f32 0.0, %v5741
      %v5743 = vpop.f32.mrb[0].mxu0
      %5744 = vmatprep.mubr.bf16.mxu0 0
      %5745 = vmatmul.mubr.bf16.gmra.mrb[0].mxu0 %v5596
      %v5746 = vpop.f32.mrb[0].mxu0
      %v5747 = vadd.f32 0.0, %v5746
      %v5748 = vpop.f32.mrb[0].mxu0
      %v5749 = vpop.f32.mrb[0].mxu0
      %v5750 = vadd.f32 0.0, %v5749
      %v5751 = vpop.f32.mrb[0].mxu0
      %5752 = vmatprep.mubr.bf16.mxu0 0
      %5753 = vmatmul.mubr.bf16.gmra.mrb[0].mxu0 %v5597
      %v5754 = vpop.f32.mrb[0].mxu0
      %v5755 = vadd.f32 0.0, %v5754
      %v5756 = vpop.f32.mrb[0].mxu0
      %v5757 = vpop.f32.mrb[0].mxu0
      %v5758 = vadd.f32 0.0, %v5757
      %v5759 = vpop.f32.mrb[0].mxu0
      %5760 = vmatprep.mubr.bf16.mxu0 0
      %5761 = vmatmul.mubr.bf16.gmra.mrb[0].mxu0 %v5598
      %v5762 = vpop.f32.mrb[0].mxu0
      %v5763 = vadd.f32 0.0, %v5762
      %v5764 = vpop.f32.mrb[0].mxu0
      %v5765 = vpop.f32.mrb[0].mxu0
      %v5766 = vadd.f32 0.0, %v5765
      %v5767 = vpop.f32.mrb[0].mxu0
      %5768 = vmatprep.mubr.bf16.mxu0 0
      %5769 = vmatmul.mubr.bf16.gmra.mrb[0].mxu0 %v5599
      %v5770 = vpop.f32.mrb[0].mxu0
      %v5771 = vadd.f32 0.0, %v5770
      %v5772 = vpop.f32.mrb[0].mxu0
      %v5773 = vpop.f32.mrb[0].mxu0
      %v5774 = vadd.f32 0.0, %v5773
      %v5775 = vpop.f32.mrb[0].mxu0
      %5776 = vmatprep.mubr.bf16.mxu0 0
      %5777 = vmatmul.mubr.bf16.gmra.mrb[0].mxu0 %v5600
      %v5778 = vpop.f32.mrb[0].mxu0
      %v5779 = vadd.f32 0.0, %v5778
      %v5780 = vpop.f32.mrb[0].mxu0
      %v5781 = vpop.f32.mrb[0].mxu0
      %v5782 = vadd.f32 0.0, %v5781
      %v5783 = vpop.f32.mrb[0].mxu0
      %5784 = vmatprep.mubr.bf16.mxu0 0
      %5785 = vmatmul.mubr.bf16.gmra.mrb[0].mxu0 %v5601
      %v5786 = vpop.f32.mrb[0].mxu0
      %v5787 = vadd.f32 0.0, %v5786
      %v5788 = vpop.f32.mrb[0].mxu0
      %v5789 = vpop.f32.mrb[0].mxu0
      %v5790 = vadd.f32 0.0, %v5789
      %v5791 = vpop.f32.mrb[0].mxu0
      %5792 = vmatprep.mubr.bf16.mxu0 0
      %5793 = vmatmul.mubr.bf16.gmra.mrb[0].mxu0 %v5602
      %v5794 = vpop.f32.mrb[0].mxu0
      %v5795 = vadd.f32 0.0, %v5794
      %v5796 = vpop.f32.mrb[0].mxu0
      %v5797 = vpop.f32.mrb[0].mxu0
      %v5798 = vadd.f32 0.0, %v5797
      %v5799 = vpop.f32.mrb[0].mxu0
      %5800 = vmatprep.mubr.bf16.mxu0 0
      %5801 = vmatmul.mubr.bf16.gmra.mrb[0].mxu0 %v5603
      %v5802 = vpop.f32.mrb[0].mxu0
      %v5803 = vadd.f32 0.0, %v5802
      %v5804 = vpop.f32.mrb[0].mxu0
      %v5805 = vpop.f32.mrb[0].mxu0
      %v5806 = vadd.f32 0.0, %v5805
      %v5807 = vpop.f32.mrb[0].mxu0
      %5808 = vmatprep.mubr.bf16.mxu0 0
      %5809 = vmatmul.mubr.bf16.gmra.mrb[0].mxu0 %v5604
      %v5810 = vpop.f32.mrb[0].mxu0
      %v5811 = vadd.f32 0.0, %v5810
      %v5812 = vpop.f32.mrb[0].mxu0
      %v5813 = vpop.f32.mrb[0].mxu0
      %v5814 = vadd.f32 0.0, %v5813
      %v5815 = vpop.f32.mrb[0].mxu0
      %5816 = vmatprep.mubr.bf16.mxu0 0
      %5817 = vmatmul.mubr.bf16.gmra.mrb[0].mxu0 %v5605
      %v5818 = vpop.f32.mrb[0].mxu0
      %v5819 = vadd.f32 0.0, %v5818
      %v5820 = vpop.f32.mrb[0].mxu0
      %v5821 = vpop.f32.mrb[0].mxu0
      %v5822 = vadd.f32 0.0, %v5821
      %v5823 = vpop.f32.mrb[0].mxu0
      %5824 = vmatprep.mubr.bf16.mxu0 0
      %5825 = vmatmul.mubr.bf16.gmra.mrb[0].mxu0 %v5606
      %v5826 = vpop.f32.mrb[0].mxu0
      %v5827 = vadd.f32 0.0, %v5826
      %v5828 = vpop.f32.mrb[0].mxu0
      %v5829 = vpop.f32.mrb[0].mxu0
      %v5830 = vadd.f32 0.0, %v5829
      %v5831 = vpop.f32.mrb[0].mxu0
      %5832 = vdwg.mxu0
      %v5833 = vadd.f32 %v5527, %v5707
      %v5834 = vadd.f32 %v5528, %v5710
      %v5835 = vadd.f32 %v5529, %v5715
      %v5836 = vadd.f32 %v5530, %v5718
      %v5837 = vadd.f32 %v5531, %v5723
      %v5838 = vadd.f32 %v5532, %v5726
      %v5839 = vadd.f32 %v5533, %v5731
      %v5840 = vadd.f32 %v5534, %v5734
      %v5841 = vadd.f32 %v5535, %v5739
      %v5842 = vadd.f32 %v5536, %v5742
      %v5843 = vadd.f32 %v5537, %v5747
      %v5844 = vadd.f32 %v5538, %v5750
      %v5845 = vadd.f32 %v5539, %v5755
      %v5846 = vadd.f32 %v5540, %v5758
      %v5847 = vadd.f32 %v5541, %v5763
      %v5848 = vadd.f32 %v5542, %v5766
      %v5849 = vadd.f32 %v5543, %v5771
      %v5850 = vadd.f32 %v5544, %v5774
      %v5851 = vadd.f32 %v5545, %v5779
      %v5852 = vadd.f32 %v5546, %v5782
      %v5853 = vadd.f32 %v5547, %v5787
      %v5854 = vadd.f32 %v5548, %v5790
      %v5855 = vadd.f32 %v5549, %v5795
      %v5856 = vadd.f32 %v5550, %v5798
      %v5857 = vadd.f32 %v5551, %v5803
      %v5858 = vadd.f32 %v5552, %v5806
      %v5859 = vadd.f32 %v5553, %v5811
      %v5860 = vadd.f32 %v5554, %v5814
      %v5861 = vadd.f32 %v5555, %v5819
      %v5862 = vadd.f32 %v5556, %v5822
      %v5863 = vadd.f32 %v5557, %v5827
      %v5864 = vadd.f32 %v5558, %v5830
      %v5865 = vadd.f32 %v5833, %v5834
      %v5866 = vadd.f32 %v5865, %v5835
      %v5867 = vadd.f32 %v5866, %v5836
      %v5868 = vadd.f32 %v5867, %v5837
      %v5869 = vadd.f32 %v5868, %v5838
      %v5870 = vadd.f32 %v5869, %v5839
      %v5871 = vadd.f32 %v5870, %v5840
      %v5872 = vadd.f32 %v5871, %v5841
      %v5873 = vadd.f32 %v5872, %v5842
      %v5874 = vadd.f32 %v5873, %v5843
      %v5875 = vadd.f32 %v5874, %v5844
      %v5876 = vadd.f32 %v5875, %v5845
      %v5877 = vadd.f32 %v5876, %v5846
      %v5878 = vadd.f32 %v5877, %v5847
      %v5879 = vadd.f32 %v5878, %v5848
      %v5880 = vadd.f32 %v5879, %v5849
      %v5881 = vadd.f32 %v5880, %v5850
      %v5882 = vadd.f32 %v5881, %v5851
      %v5883 = vadd.f32 %v5882, %v5852
      %v5884 = vadd.f32 %v5883, %v5853
      %v5885 = vadd.f32 %v5884, %v5854
      %v5886 = vadd.f32 %v5885, %v5855
      %v5887 = vadd.f32 %v5886, %v5856
      %v5888 = vadd.f32 %v5887, %v5857
      %v5889 = vadd.f32 %v5888, %v5858
      %v5890 = vadd.f32 %v5889, %v5859
      %v5891 = vadd.f32 %v5890, %v5860
      %v5892 = vadd.f32 %v5891, %v5861
      %v5893 = vadd.f32 %v5892, %v5862
      %v5894 = vadd.f32 %v5893, %v5863
      %v5895 = vadd.f32 %v5894, %v5864
      %v5896 = vrot.slane %v5895, 4
      %v5897 = vadd.f32 %v5895, %v5896
      %v5898 = vrot.slane %v5897, 2
      %v5899 = vadd.f32 %v5897, %v5898
      %v5900 = vrot.slane %v5899, 1
      %v5901 = vadd.f32 %v5899, %v5900
      %v5902 = vmul.f32 %v5901, %v2900
      %v5903 = vsub.f32 %v5833, %v5902
      %v5904 = vsub.f32 %v5834, %v5902
      %v5905 = vsub.f32 %v5835, %v5902
      %v5906 = vsub.f32 %v5836, %v5902
      %v5907 = vsub.f32 %v5837, %v5902
      %v5908 = vsub.f32 %v5838, %v5902
      %v5909 = vsub.f32 %v5839, %v5902
      %v5910 = vsub.f32 %v5840, %v5902
      %v5911 = vsub.f32 %v5841, %v5902
      %v5912 = vsub.f32 %v5842, %v5902
      %v5913 = vsub.f32 %v5843, %v5902
      %v5914 = vsub.f32 %v5844, %v5902
      %v5915 = vsub.f32 %v5845, %v5902
      %v5916 = vsub.f32 %v5846, %v5902
      %v5917 = vsub.f32 %v5847, %v5902
      %v5918 = vsub.f32 %v5848, %v5902
      %v5919 = vsub.f32 %v5849, %v5902
      %v5920 = vsub.f32 %v5850, %v5902
      %v5921 = vsub.f32 %v5851, %v5902
      %v5922 = vsub.f32 %v5852, %v5902
      %v5923 = vsub.f32 %v5853, %v5902
      %v5924 = vsub.f32 %v5854, %v5902
      %v5925 = vsub.f32 %v5855, %v5902
      %v5926 = vsub.f32 %v5856, %v5902
      %v5927 = vsub.f32 %v5857, %v5902
      %v5928 = vsub.f32 %v5858, %v5902
      %v5929 = vsub.f32 %v5859, %v5902
      %v5930 = vsub.f32 %v5860, %v5902
      %v5931 = vsub.f32 %v5861, %v5902
      %v5932 = vsub.f32 %v5862, %v5902
      %v5933 = vsub.f32 %v5863, %v5902
      %v5934 = vsub.f32 %v5864, %v5902
      %v5935 = vmul.f32 %v5903, %v5903
      %v5936 = vmul.f32 %v5904, %v5904
      %v5937 = vmul.f32 %v5905, %v5905
      %v5938 = vmul.f32 %v5906, %v5906
      %v5939 = vmul.f32 %v5907, %v5907
      %v5940 = vmul.f32 %v5908, %v5908
      %v5941 = vmul.f32 %v5909, %v5909
      %v5942 = vmul.f32 %v5910, %v5910
      %v5943 = vmul.f32 %v5911, %v5911
      %v5944 = vmul.f32 %v5912, %v5912
      %v5945 = vmul.f32 %v5913, %v5913
      %v5946 = vmul.f32 %v5914, %v5914
      %v5947 = vmul.f32 %v5915, %v5915
      %v5948 = vmul.f32 %v5916, %v5916
      %v5949 = vmul.f32 %v5917, %v5917
      %v5950 = vmul.f32 %v5918, %v5918
      %v5951 = vmul.f32 %v5919, %v5919
      %v5952 = vmul.f32 %v5920, %v5920
      %v5953 = vmul.f32 %v5921, %v5921
      %v5954 = vmul.f32 %v5922, %v5922
      %v5955 = vmul.f32 %v5923, %v5923
      %v5956 = vmul.f32 %v5924, %v5924
      %v5957 = vmul.f32 %v5925, %v5925
      %v5958 = vmul.f32 %v5926, %v5926
      %v5959 = vmul.f32 %v5927, %v5927
      %v5960 = vmul.f32 %v5928, %v5928
      %v5961 = vmul.f32 %v5929, %v5929
      %v5962 = vmul.f32 %v5930, %v5930
      %v5963 = vmul.f32 %v5931, %v5931
      %v5964 = vmul.f32 %v5932, %v5932
      %v5965 = vmul.f32 %v5933, %v5933
      %v5966 = vmul.f32 %v5934, %v5934
      %v5967 = vadd.f32 %v5935, %v5936
      %v5968 = vadd.f32 %v5967, %v5937
      %v5969 = vadd.f32 %v5968, %v5938
      %v5970 = vadd.f32 %v5969, %v5939
      %v5971 = vadd.f32 %v5970, %v5940
      %v5972 = vadd.f32 %v5971, %v5941
      %v5973 = vadd.f32 %v5972, %v5942
      %v5974 = vadd.f32 %v5973, %v5943
      %v5975 = vadd.f32 %v5974, %v5944
      %v5976 = vadd.f32 %v5975, %v5945
      %v5977 = vadd.f32 %v5976, %v5946
      %v5978 = vadd.f32 %v5977, %v5947
      %v5979 = vadd.f32 %v5978, %v5948
      %v5980 = vadd.f32 %v5979, %v5949
      %v5981 = vadd.f32 %v5980, %v5950
      %v5982 = vadd.f32 %v5981, %v5951
      %v5983 = vadd.f32 %v5982, %v5952
      %v5984 = vadd.f32 %v5983, %v5953
      %v5985 = vadd.f32 %v5984, %v5954
      %v5986 = vadd.f32 %v5985, %v5955
      %v5987 = vadd.f32 %v5986, %v5956
      %v5988 = vadd.f32 %v5987, %v5957
      %v5989 = vadd.f32 %v5988, %v5958
      %v5990 = vadd.f32 %v5989, %v5959
      %v5991 = vadd.f32 %v5990, %v5960
      %v5992 = vadd.f32 %v5991, %v5961
      %v5993 = vadd.f32 %v5992, %v5962
      %v5994 = vadd.f32 %v5993, %v5963
      %v5995 = vadd.f32 %v5994, %v5964
      %v5996 = vadd.f32 %v5995, %v5965
      %v5997 = vadd.f32 %v5996, %v5966
      %v5998 = vrot.slane %v5997, 4
      %v5999 = vadd.f32 %v5997, %v5998
      %v6000 = vrot.slane %v5999, 2
      %v6001 = vadd.f32 %v5999, %v6000
      %v6002 = vrot.slane %v6001, 1
      %v6003 = vadd.f32 %v6001, %v6002
      %v6004 = vmul.f32 %v6003, %v2900
      %v6005 = vadd.f32 %v6004, 1e-05
      %v6006 = vrsqrt.pop %v6005
      %v6007 = vmul.f32 %v5903, %v6006
      %v6008 = vmul.f32 %v5904, %v6006
      %v6009 = vmul.f32 %v5905, %v6006
      %v6010 = vmul.f32 %v5906, %v6006
      %v6011 = vmul.f32 %v5907, %v6006
      %v6012 = vmul.f32 %v5908, %v6006
      %v6013 = vmul.f32 %v5909, %v6006
      %v6014 = vmul.f32 %v5910, %v6006
      %v6015 = vmul.f32 %v5911, %v6006
      %v6016 = vmul.f32 %v5912, %v6006
      %v6017 = vmul.f32 %v5913, %v6006
      %v6018 = vmul.f32 %v5914, %v6006
      %v6019 = vmul.f32 %v5915, %v6006
      %v6020 = vmul.f32 %v5916, %v6006
      %v6021 = vmul.f32 %v5917, %v6006
      %v6022 = vmul.f32 %v5918, %v6006
      %v6023 = vmul.f32 %v5919, %v6006
      %v6024 = vmul.f32 %v5920, %v6006
      %v6025 = vmul.f32 %v5921, %v6006
      %v6026 = vmul.f32 %v5922, %v6006
      %v6027 = vmul.f32 %v5923, %v6006
      %v6028 = vmul.f32 %v5924, %v6006
      %v6029 = vmul.f32 %v5925, %v6006
      %v6030 = vmul.f32 %v5926, %v6006
      %v6031 = vmul.f32 %v5927, %v6006
      %v6032 = vmul.f32 %v5928, %v6006
      %v6033 = vmul.f32 %v5929, %v6006
      %v6034 = vmul.f32 %v5930, %v6006
      %v6035 = vmul.f32 %v5931, %v6006
      %v6036 = vmul.f32 %v5932, %v6006
      %v6037 = vmul.f32 %v5933, %v6006
      %v6038 = vmul.f32 %v5934, %v6006
      %v6039 = vld [vmem:[%s1025 + $0x1] sm:$0xff]
      %v6040 = vld [vmem:[%s1025 + $0x9] sm:$0xff]
      %v6041 = vld [vmem:[%s1025 + $0x19] sm:$0xff]
      %v6042 = vld [vmem:[%s1025 + $0x21] sm:$0xff]
      %v6043 = vld [vmem:[%s1025 + $0x31] sm:$0xff]
      %v6044 = vld [vmem:[%s1025 + $0x39] sm:$0xff]
      %v6045 = vld [vmem:[%s1025 + $0x49] sm:$0xff]
      %v6046 = vld [vmem:[%s1025 + $0x51] sm:$0xff]
      %v6047 = vld [vmem:[%s1025 + $0x61] sm:$0xff]
      %v6048 = vld [vmem:[%s1025 + $0x69] sm:$0xff]
      %v6049 = vld [vmem:[%s1025 + $0x79] sm:$0xff]
      %v6050 = vld [vmem:[%s1025 + $0x81] sm:$0xff]
      %v6051 = vld [vmem:[%s1025 + $0x91] sm:$0xff]
      %v6052 = vld [vmem:[%s1025 + $0x99] sm:$0xff]
      %v6053 = vld [vmem:[%s1025 + $0xa9] sm:$0xff]
      %v6054 = vld [vmem:[%s1025 + $0xb1] sm:$0xff]
      %v6055 = vld [vmem:[%s1025 + $0xc1] sm:$0xff]
      %v6056 = vld [vmem:[%s1025 + $0xc9] sm:$0xff]
      %v6057 = vld [vmem:[%s1025 + $0xd9] sm:$0xff]
      %v6058 = vld [vmem:[%s1025 + $0xe1] sm:$0xff]
      %v6059 = vld [vmem:[%s1025 + $0xf1] sm:$0xff]
      %v6060 = vld [vmem:[%s1025 + $0xf9] sm:$0xff]
      %v6061 = vld [vmem:[%s1025 + $0x109] sm:$0xff]
      %v6062 = vld [vmem:[%s1025 + $0x111] sm:$0xff]
      %v6063 = vld [vmem:[%s1025 + $0x121] sm:$0xff]
      %v6064 = vld [vmem:[%s1025 + $0x129] sm:$0xff]
      %v6065 = vld [vmem:[%s1025 + $0x139] sm:$0xff]
      %v6066 = vld [vmem:[%s1025 + $0x141] sm:$0xff]
      %v6067 = vld [vmem:[%s1025 + $0x151] sm:$0xff]
      %v6068 = vld [vmem:[%s1025 + $0x159] sm:$0xff]
      %v6069 = vld [vmem:[%s1025 + $0x169] sm:$0xff]
      %v6070 = vld [vmem:[%s1025 + $0x171] sm:$0xff]
      %v6071 = vadd.f32 %v6039, %v6007
      %v6072 = vadd.f32 %v6040, %v6008
      %v6073 = vadd.f32 %v6041, %v6009
      %v6074 = vadd.f32 %v6042, %v6010
      %v6075 = vadd.f32 %v6043, %v6011
      %v6076 = vadd.f32 %v6044, %v6012
      %v6077 = vadd.f32 %v6045, %v6013
      %v6078 = vadd.f32 %v6046, %v6014
      %v6079 = vadd.f32 %v6047, %v6015
      %v6080 = vadd.f32 %v6048, %v6016
      %v6081 = vadd.f32 %v6049, %v6017
      %v6082 = vadd.f32 %v6050, %v6018
      %v6083 = vadd.f32 %v6051, %v6019
      %v6084 = vadd.f32 %v6052, %v6020
      %v6085 = vadd.f32 %v6053, %v6021
      %v6086 = vadd.f32 %v6054, %v6022
      %v6087 = vadd.f32 %v6055, %v6023
      %v6088 = vadd.f32 %v6056, %v6024
      %v6089 = vadd.f32 %v6057, %v6025
      %v6090 = vadd.f32 %v6058, %v6026
      %v6091 = vadd.f32 %v6059, %v6027
      %v6092 = vadd.f32 %v6060, %v6028
      %v6093 = vadd.f32 %v6061, %v6029
      %v6094 = vadd.f32 %v6062, %v6030
      %v6095 = vadd.f32 %v6063, %v6031
      %v6096 = vadd.f32 %v6064, %v6032
      %v6097 = vadd.f32 %v6065, %v6033
      %v6098 = vadd.f32 %v6066, %v6034
      %v6099 = vadd.f32 %v6067, %v6035
      %v6100 = vadd.f32 %v6068, %v6036
      %v6101 = vadd.f32 %v6069, %v6037
      %v6102 = vadd.f32 %v6070, %v6038
      %6103 = vst [vmem:[%s170] sm:$0xff] %v6071
      %6104 = vst [vmem:[%s170 + $0x8] sm:$0xff] %v6072
      %6105 = vst [vmem:[%s170 + $0x10] sm:$0xff] %v6073
      %6106 = vst [vmem:[%s170 + $0x18] sm:$0xff] %v6074
      %6107 = vst [vmem:[%s170 + $0x20] sm:$0xff] %v6075
      %6108 = vst [vmem:[%s170 + $0x28] sm:$0xff] %v6076
      %6109 = vst [vmem:[%s170 + $0x30] sm:$0xff] %v6077
      %6110 = vst [vmem:[%s170 + $0x38] sm:$0xff] %v6078
      %6111 = vst [vmem:[%s170 + $0x40] sm:$0xff] %v6079
      %6112 = vst [vmem:[%s170 + $0x48] sm:$0xff] %v6080
      %6113 = vst [vmem:[%s170 + $0x50] sm:$0xff] %v6081
      %6114 = vst [vmem:[%s170 + $0x58] sm:$0xff] %v6082
      %6115 = vst [vmem:[%s170 + $0x60] sm:$0xff] %v6083
      %6116 = vst [vmem:[%s170 + $0x68] sm:$0xff] %v6084
      %6117 = vst [vmem:[%s170 + $0x70] sm:$0xff] %v6085
      %6118 = vst [vmem:[%s170 + $0x78] sm:$0xff] %v6086
      %6119 = vst [vmem:[%s170 + $0x80] sm:$0xff] %v6087
      %6120 = vst [vmem:[%s170 + $0x88] sm:$0xff] %v6088
      %6121 = vst [vmem:[%s170 + $0x90] sm:$0xff] %v6089
      %6122 = vst [vmem:[%s170 + $0x98] sm:$0xff] %v6090
      %6123 = vst [vmem:[%s170 + $0xa0] sm:$0xff] %v6091
      %6124 = vst [vmem:[%s170 + $0xa8] sm:$0xff] %v6092
      %6125 = vst [vmem:[%s170 + $0xb0] sm:$0xff] %v6093
      %6126 = vst [vmem:[%s170 + $0xb8] sm:$0xff] %v6094
      %6127 = vst [vmem:[%s170 + $0xc0] sm:$0xff] %v6095
      %6128 = vst [vmem:[%s170 + $0xc8] sm:$0xff] %v6096
      %6129 = vst [vmem:[%s170 + $0xd0] sm:$0xff] %v6097
      %6130 = vst [vmem:[%s170 + $0xd8] sm:$0xff] %v6098
      %6131 = vst [vmem:[%s170 + $0xe0] sm:$0xff] %v6099
      %6132 = vst [vmem:[%s170 + $0xe8] sm:$0xff] %v6100
      %6133 = vst [vmem:[%s170 + $0xf0] sm:$0xff] %v6101
      %6134 = vst [vmem:[%s170 + $0xf8] sm:$0xff] %v6102
      %p6135 = scmp.lt.s32.totalorder %s14, 1
      %s6136 = scalar_select %p6135, %s14, 1
      %s6137 = smul.addr %s6136, 32
      %s6138 = smul.addr %s6137, 8
      %s6139 = scalar_lea.vmem %s3, %s6138
      // Predicated region
      $region33: #{res_block_forward.1} parent=31 // pred_check
        %p6140 = pneg %p100
      $region34: #{res_block_forward.1} parent=31 // pred_check_branch
        %6142 = sbr.rel (%p6140) target = $region36
      $region35: #{res_block_forward.1} parent=31 // pred_region
        _
      $region36: #{res_block_forward.1} parent=31 // pred_fallthru
        _
    $region32: #{res_block_forward.1} parent=5 // pred_fallthru
      _
    %p6143 = scmp.le.s32.totalorder 2, %s9
    // Predicated region
    $region37: #{res_block_forward.1} parent=5 // pred_check
      %p6144 = pneg %p6143
    $region38: #{res_block_forward.1} parent=5 // pred_check_branch
      %6146 = sbr.rel (%p6144) target = $region40
    $region39: #{res_block_forward.1} parent=5 // pred_region
      %s6147 = ssub.s32 %s9, 2
      // Predicated region
      $region41: #{res_block_forward.1} parent=39 // pred_check
        %p6148 = pneg %p106
      $region42: #{res_block_forward.1} parent=39 // pred_check_branch
        %6150 = sbr.rel (%p6148) target = $region44
      $region43: #{res_block_forward.1} parent=39 // pred_region
        %p6151 = scmp.lt.s32.totalorder %s15, 1
        %s6152 = scalar_select %p6151, %s15, 1
        %s6153 = smul.addr %s6152, 32
        %s6154 = smul.addr %s6153, 8
        %s6155 = scalar_lea.vmem %s3, %s6154
      $region44: #{res_block_forward.1} parent=39 // pred_fallthru
        _
    $region40: #{res_block_forward.1} parent=5 // pred_fallthru
      _
  $region6: #{res_block_forward.1} parent=0 // loop_footer
    %s13 = sadd.s32 1, %s9
  $region7: #{res_block_forward.1} parent=0 // loop_footer_branch
    %8 = sbr.rel target = $region3
  $region8: #{res_block_forward.1} parent=0 // loop_exit
    _

</llo_original>
